<compile_context>
chip_gen: v7x
topology: tpu7x:2x2x1
jax: 0.10.0
libtpu: 0.0.40
codegen_flags: <defaults>
</compile_context>

<pallas_src>
import functools

import jax
import jax.numpy as jnp
from jax import lax
from jax.experimental import pallas as pl
from jax.experimental.pallas import tpu as pltpu

# ----- small DAE config (scaled-down AEConfig) -----
T = 8          # sequence length
B = 2          # batch
B_PAD = 8      # batch padded to a full sublane group
E = 32         # dim_emb
H = 128        # dim_h  (lane-aligned gate blocks)
Z = 16         # dim_z
V = 100        # vocab_size
V_PAD = 128    # lane-dense padded projection width

_VMEM = pl.BlockSpec(memory_space=pltpu.MemorySpace.VMEM)


# ---------------- fused Pallas kernel ----------------

def _dae_kernel(emb_ref, eps_ref,
                enc_wih_ref, enc_whh_ref, enc_b_ref,
                muvar_w_ref, muvar_b_ref, z2emb_w_ref, z2emb_b_ref,
                gen_wih_ref, gen_whh_ref, gen_b_ref,
                proj_w_ref, proj_b_ref,
                mu_ref, logvar_ref, z_ref, logits_ref,
                egx_sc, dgx_sc, out_sc,
                *, hidden, t_len, bpad, dim_z):
    """Whole DAE forward in one kernel.

    emb_ref:(T*B_PAD,E) bf16 time-major rows, eps_ref:(B_PAD,Z) f32.
    Encoder weights are packed for both directions:
      enc_wih:(E,8H)   cols [0:4H]=fwd, [4H:8H]=bwd
      enc_whh:(2H,8H)  block-diagonal (rows[0:H]->fwd cols, rows[H:2H]->bwd cols)
      enc_b:(1,8H)
    Outputs: mu/logvar/z:(B_PAD,Z), logits:(T*B_PAD,V_PAD) lane-dense.
    """
    h4 = 4 * hidden

    # ---- encoder: hoisted input projection for BOTH directions (one matmul) ----
    egx_sc[...] = (jnp.dot(emb_ref[...], enc_wih_ref[...],
                           preferred_element_type=jnp.float32)
                   + enc_b_ref[...])                                # (T*BP, 8H) f32

    def enc_step(t, carry):
        h_cat, c = carry                                            # (BP, 2H) f32
        # One MXU pass (K=2H=256) produces the recurrent gates of both directions.
        rec = jnp.dot(h_cat.astype(jnp.bfloat16), enc_whh_ref[...],
                      preferred_element_type=jnp.float32)           # (BP, 8H)
        row_f = pl.multiple_of(t * bpad, bpad)                      # fwd: time t
        row_b = pl.multiple_of((t_len - 1 - t) * bpad, bpad)        # bwd: time T-1-t
        gates_f = egx_sc[pl.ds(row_f, bpad), 0:h4] + rec[:, 0:h4]
        gates_b = egx_sc[pl.ds(row_b, bpad), h4:2 * h4] + rec[:, h4:2 * h4]
        i = jax.nn.sigmoid(jnp.concatenate(
            [gates_f[:, 0 * hidden:1 * hidden], gates_b[:, 0 * hidden:1 * hidden]], axis=1))
        f = jax.nn.sigmoid(jnp.concatenate(
            [gates_f[:, 1 * hidden:2 * hidden], gates_b[:, 1 * hidden:2 * hidden]], axis=1))
        g = jnp.tanh(jnp.concatenate(
            [gates_f[:, 2 * hidden:3 * hidden], gates_b[:, 2 * hidden:3 * hidden]], axis=1))
        o = jax.nn.sigmoid(jnp.concatenate(
            [gates_f[:, 3 * hidden:4 * hidden], gates_b[:, 3 * hidden:4 * hidden]], axis=1))
        c_new = f * c + i * g                                       # f32 cell state
        h_new = o * jnp.tanh(c_new)                                 # (BP, 2H) = [h_fwd, h_bwd]
        return h_new, c_new

    hc0 = jnp.zeros((bpad, 2 * hidden), jnp.float32)
    h_enc, _ = lax.fori_loop(0, t_len, enc_step, (hc0, hc0), unroll=True)

    # ---- latent heads (fused h2mu|h2logvar) + reparameterize, all f32 ----
    muvar = (jnp.dot(h_enc, muvar_w_ref[...],
                     preferred_element_type=jnp.float32)
             + muvar_b_ref[...])                                    # (BP, 2Z)
    mu = muvar[:, :dim_z]
    logvar = muvar[:, dim_z:]
    z = mu + eps_ref[...] * jnp.exp(0.5 * logvar)
    mu_ref[...] = mu
    logvar_ref[...] = logvar
    z_ref[...] = z

    # ---- generator input gates, hoisted out of the recurrence ----
    # (emb + z2emb(z)) @ W_ih = emb @ W_ih + z2emb(z) @ W_ih (linearity): the z
    # contribution is a single loop-invariant (BP,4H) add.
    z_emb = (jnp.dot(z, z2emb_w_ref[...], preferred_element_type=jnp.float32)
             + z2emb_b_ref[...])                                    # (BP, E) f32
    zg = jnp.dot(z_emb.astype(jnp.bfloat16), gen_wih_ref[...],
                 preferred_element_type=jnp.float32)                # (BP, 4H)
    dgx_sc[...] = (jnp.dot(emb_ref[...], gen_wih_ref[...],
                           preferred_element_type=jnp.float32)
                   + gen_b_ref[...])                                # (T*BP, 4H)

    def dec_step(t, carry):
        h, c = carry                                                # (BP, H) f32
        row = pl.multiple_of(t * bpad, bpad)
        gates = (dgx_sc[pl.ds(row, bpad), :] + zg
                 + jnp.dot(h.astype(jnp.bfloat16), gen_whh_ref[...],
                           preferred_element_type=jnp.float32))     # (BP, 4H)
        i = jax.nn.sigmoid(gates[:, 0 * hidden:1 * hidden])
        f = jax.nn.sigmoid(gates[:, 1 * hidden:2 * hidden])
        g = jnp.tanh(gates[:, 2 * hidden:3 * hidden])
        o = jax.nn.sigmoid(gates[:, 3 * hidden:4 * hidden])
        c_new = f * c + i * g
        h_new = o * jnp.tanh(c_new)
        out_sc[pl.ds(row, bpad), :] = h_new                         # full-vreg store
        return h_new, c_new

    hz0 = jnp.zeros((bpad, hidden), jnp.float32)
    lax.fori_loop(0, t_len, dec_step, (hz0, hz0), unroll=True)

    # ---- fused output projection: one (T*BP,H)@(H,V_PAD) lane-dense matmul ----
    logits_ref[...] = (jnp.dot(out_sc[...].astype(jnp.bfloat16), proj_w_ref[...],
                               preferred_element_type=jnp.float32)
                       + proj_b_ref[...])


# ---------------- Pallas wrapper ----------------

def pallas_dae(emb2d, eps_pad, p):
    """Single fused pallas_call for the whole DAE forward."""
    tb, _ = emb2d.shape
    bpad, dim_z = eps_pad.shape
    hid = p["gen_whh"].shape[0]
    vp = p["proj_w"].shape[1]
    t_len = tb // bpad
    kernel = functools.partial(_dae_kernel, hidden=hid, t_len=t_len,
                               bpad=bpad, dim_z=dim_z)
    out_shape = (
        jax.ShapeDtypeStruct((bpad, dim_z), jnp.float32),   # mu
        jax.ShapeDtypeStruct((bpad, dim_z), jnp.float32),   # logvar
        jax.ShapeDtypeStruct((bpad, dim_z), jnp.float32),   # z
        jax.ShapeDtypeStruct((tb, vp), jnp.float32),        # logits (padded V)
    )
    return pl.pallas_call(
        kernel,
        out_shape=out_shape,
        in_specs=[_VMEM] * 14,
        out_specs=(_VMEM,) * 4,
        scratch_shapes=[
            pltpu.VMEM((tb, 8 * hid), jnp.float32),   # encoder gates_x (both dirs)
            pltpu.VMEM((tb, 4 * hid), jnp.float32),   # generator gates_x
            pltpu.VMEM((tb, hid), jnp.float32),       # generator hidden seq (for proj)
        ],
    )(emb2d, eps_pad,
      p["enc_wih"], p["enc_whh"], p["enc_b"],
      p["muvar_w"], p["muvar_b"], p["z2emb_w"], p["z2emb_b"],
      p["gen_wih"], p["gen_whh"], p["gen_b"], p["proj_w"], p["proj_b"])


# ---------------- parameters & forward ----------------

def init_params(key):
    ks = jax.random.split(key, 16)
    u = lambda k, shape, s=0.1: jax.random.uniform(k, shape, jnp.float32, -s, s)
    p = {}
    p["embed"] = u(ks[0], (V, E))                          # nn.Embedding, U(-0.1, 0.1)

    # encoder: bidirectional single-layer LSTM, both directions packed.
    wih_f, wih_b = u(ks[1], (E, 4 * H)), u(ks[2], (E, 4 * H))
    p["enc_wih"] = jnp.concatenate([wih_f, wih_b], axis=1).astype(jnp.bfloat16)  # (E, 8H)
    whh_f, whh_b = u(ks[3], (H, 4 * H)), u(ks[4], (H, 4 * H))
    whh_bd = jnp.zeros((2 * H, 8 * H), jnp.float32)
    whh_bd = whh_bd.at[:H, :4 * H].set(whh_f).at[H:, 4 * H:].set(whh_b)          # block-diag
    p["enc_whh"] = whh_bd.astype(jnp.bfloat16)                                   # (2H, 8H)
    p["enc_b"] = jnp.concatenate([u(ks[5], (1, 4 * H)), u(ks[6], (1, 4 * H))],
                                 axis=1)                   # b_ih + b_hh folded, (1, 8H)

    # generator: unidirectional single-layer LSTM
    p["gen_wih"] = u(ks[7], (E, 4 * H)).astype(jnp.bfloat16)
    p["gen_whh"] = u(ks[8], (H, 4 * H)).astype(jnp.bfloat16)
    p["gen_b"] = u(ks[9], (1, 4 * H))

    # h2mu & h2logvar fused: columns [0:Z] -> mu head, [Z:2Z] -> logvar head (f32)
    p["muvar_w"] = u(ks[10], (2 * H, 2 * Z))
    p["muvar_b"] = jnp.zeros((1, 2 * Z), jnp.float32)
    p["z2emb_w"] = u(ks[11], (Z, E))
    p["z2emb_b"] = jnp.zeros((1, E), jnp.float32)

    # proj padded to lane-dense V_PAD (zero columns beyond V), bias zero
    p["proj_w"] = jnp.pad(u(ks[12], (H, V)),
                          ((0, 0), (0, V_PAD - V))).astype(jnp.bfloat16)
    p["proj_b"] = jnp.zeros((1, V_PAD), jnp.float32)
    return p


@jax.jit
def dae_forward(params, tokens, eps):
    """DAE.forward(input, is_train=False): tokens (T, B) -> (mu, logvar, z, logits)."""
    t_len, bsz = tokens.shape
    # Single embedding gather, reused for encoder and decoder (dropout = identity).
    emb = params["embed"][tokens]                                   # (T, B, E) f32
    emb_pad = jnp.zeros((t_len, B_PAD, E), jnp.float32).at[:, :bsz, :].set(emb)
    emb2d = emb_pad.reshape(t_len * B_PAD, E).astype(jnp.bfloat16)  # (T*BP, E) bf16
    eps_pad = jnp.zeros((B_PAD, Z), jnp.float32).at[:bsz, :].set(eps)

    mu, logvar, z, logits_p = pallas_dae(emb2d, eps_pad, params)

    logits = logits_p.reshape(t_len, B_PAD, V_PAD)[:, :bsz, :V]     # drop padding
    return mu[:bsz], logvar[:bsz], z[:bsz], logits


if __name__ == "__main__":
    key = jax.random.PRNGKey(0)
    k_param, k_tok, k_eps = jax.random.split(key, 3)
    params = init_params(k_param)
    tokens = jax.random.randint(k_tok, (T, B), 0, V, dtype=jnp.int32)   # input: (T, B)
    eps = jax.random.normal(k_eps, (B, Z), jnp.float32)                 # randn_like(std)

    mu, logvar, z, logits = dae_forward(params, tokens, eps)
    jax.block_until_ready((mu, logvar, z, logits))

    assert mu.shape == (B, Z) and logvar.shape == (B, Z)
    assert z.shape == (B, Z) and logits.shape == (T, B, V)
    assert bool(jnp.all(jnp.isfinite(logits)))
    print("KERNEL_OK")
</pallas_src>

<mosaic_0001>
module attributes {stable_mosaic.version = 11 : i64} {
  func.func @_dae_kernel(%arg0: memref<64x32xbf16, #tpu.memory_space<vmem>>, %arg1: memref<8x16xf32, #tpu.memory_space<vmem>>, %arg2: memref<32x1024xbf16, #tpu.memory_space<vmem>>, %arg3: memref<256x1024xbf16, #tpu.memory_space<vmem>>, %arg4: memref<1x1024xf32, #tpu.memory_space<vmem>>, %arg5: memref<256x32xf32, #tpu.memory_space<vmem>>, %arg6: memref<1x32xf32, #tpu.memory_space<vmem>>, %arg7: memref<16x32xf32, #tpu.memory_space<vmem>>, %arg8: memref<1x32xf32, #tpu.memory_space<vmem>>, %arg9: memref<32x512xbf16, #tpu.memory_space<vmem>>, %arg10: memref<128x512xbf16, #tpu.memory_space<vmem>>, %arg11: memref<1x512xf32, #tpu.memory_space<vmem>>, %arg12: memref<128x128xbf16, #tpu.memory_space<vmem>>, %arg13: memref<1x128xf32, #tpu.memory_space<vmem>>, %arg14: memref<8x16xf32, #tpu.memory_space<vmem>>, %arg15: memref<8x16xf32, #tpu.memory_space<vmem>>, %arg16: memref<8x16xf32, #tpu.memory_space<vmem>>, %arg17: memref<64x128xf32, #tpu.memory_space<vmem>>, %arg18: memref<64x1024xf32, #tpu.memory_space<vmem>>, %arg19: memref<64x512xf32, #tpu.memory_space<vmem>>, %arg20: memref<64x128xf32, #tpu.memory_space<vmem>>) attributes {dimension_semantics = [], scalar_prefetch = 0 : i64, scratch_operands = 3 : i64, tpu.core_type = #tpu.core_type<tc>} {
    %c0 = arith.constant 0 : index
    %c0_0 = arith.constant 0 : index
    %0 = vector.load %arg0[%c0, %c0_0] : memref<64x32xbf16, #tpu.memory_space<vmem>>, vector<64x32xbf16>
    %c0_1 = arith.constant 0 : index
    %c0_2 = arith.constant 0 : index
    %1 = vector.load %arg2[%c0_1, %c0_2] : memref<32x1024xbf16, #tpu.memory_space<vmem>>, vector<32x1024xbf16>
    %cst = arith.constant dense<0.000000e+00> : vector<64x1024xf32>
    %2 = tpu.matmul %0, %1, %cst {dimension_numbers = #tpu.dot_dimension_numbers<[1], [0], [0], [1], [0, 0, 1, 1], [], []>} : vector<64x32xbf16>, vector<32x1024xbf16>, vector<64x1024xf32> -> vector<64x1024xf32>
    %c0_3 = arith.constant 0 : index
    %c0_4 = arith.constant 0 : index
    %3 = vector.load %arg4[%c0_3, %c0_4] : memref<1x1024xf32, #tpu.memory_space<vmem>>, vector<1x1024xf32>
    %4 = vector.broadcast %3 : vector<1x1024xf32> to vector<64x1024xf32>
    %5 = arith.addf %2, %4 : vector<64x1024xf32>
    %c0_5 = arith.constant 0 : index
    %c0_6 = arith.constant 0 : index
    %6 = vector.load %arg18[%c0_5, %c0_6] : memref<64x1024xf32, #tpu.memory_space<vmem>>, vector<64x1024xf32>
    tpu.vector_store %arg18[%c0_5, %c0_6], %5 {strides = array<i32>} : memref<64x1024xf32, #tpu.memory_space<vmem>>, vector<64x1024xf32>,
    %cst_7 = arith.constant 0.000000e+00 : f32
    %7 = vector.broadcast %cst_7 : f32 to vector<8x256xf32>
    %c0_i32 = arith.constant 0 : i32
    %8 = arith.truncf %7 : vector<8x256xf32> to vector<8x256xbf16>
    %c0_8 = arith.constant 0 : index
    %c0_9 = arith.constant 0 : index
    %9 = vector.load %arg3[%c0_8, %c0_9] : memref<256x1024xbf16, #tpu.memory_space<vmem>>, vector<256x1024xbf16>
    %cst_10 = arith.constant dense<0.000000e+00> : vector<8x1024xf32>
    %10 = tpu.matmul %8, %9, %cst_10 {dimension_numbers = #tpu.dot_dimension_numbers<[1], [0], [0], [1], [0, 0, 1, 1], [], []>} : vector<8x256xbf16>, vector<256x1024xbf16>, vector<8x1024xf32> -> vector<8x1024xf32>
    %c8_i32 = arith.constant 8 : i32
    %11 = arith.muli %c0_i32, %c8_i32 : i32
    %12 = tpu.assume_multiple %11, 8 : i32
    %c7_i32 = arith.constant 7 : i32
    %13 = arith.subi %c7_i32, %c0_i32 : i32
    %c8_i32_11 = arith.constant 8 : i32
    %14 = arith.muli %13, %c8_i32_11 : i32
    %15 = tpu.assume_multiple %14, 8 : i32
    %16 = arith.index_cast %12 : i32 to index
    %c0_12 = arith.constant 0 : index
    %17 = vector.load %arg18[%16, %c0_12] : memref<64x1024xf32, #tpu.memory_space<vmem>>, vector<8x512xf32>
    %18 = vector.extract_strided_slice %10 {offsets = [0, 0], sizes = [8, 512], strides = [1, 1]} : vector<8x1024xf32> to vector<8x512xf32>
    %19 = arith.addf %17, %18 : vector<8x512xf32>
    %20 = arith.index_cast %15 : i32 to index
    %c512 = arith.constant 512 : index
    %21 = vector.load %arg18[%20, %c512] : memref<64x1024xf32, #tpu.memory_space<vmem>>, vector<8x512xf32>
    %22 = vector.extract_strided_slice %10 {offsets = [0, 512], sizes = [8, 512], strides = [1, 1]} : vector<8x1024xf32> to vector<8x512xf32>
    %23 = arith.addf %21, %22 : vector<8x512xf32>
    %24 = vector.extract_strided_slice %19 {offsets = [0, 0], sizes = [8, 128], strides = [1, 1]} : vector<8x512xf32> to vector<8x128xf32>
    %25 = vector.extract_strided_slice %23 {offsets = [0, 0], sizes = [8, 128], strides = [1, 1]} : vector<8x512xf32> to vector<8x128xf32>
    %26 = tpu.concatenate %24, %25 in 1 : vector<8x128xf32>, vector<8x128xf32> -> vector<8x256xf32>
    %27 = arith.negf %26 : vector<8x256xf32>
    %28 = math.exp %27 : vector<8x256xf32>
    %cst_13 = arith.constant 1.000000e+00 : f32
    %29 = vector.broadcast %cst_13 : f32 to vector<8x256xf32>
    %30 = arith.addf %29, %28 : vector<8x256xf32>
    %31 = arith.divf %29, %30 : vector<8x256xf32>
    %32 = vector.extract_strided_slice %19 {offsets = [0, 128], sizes = [8, 128], strides = [1, 1]} : vector<8x512xf32> to vector<8x128xf32>
    %33 = vector.extract_strided_slice %23 {offsets = [0, 128], sizes = [8, 128], strides = [1, 1]} : vector<8x512xf32> to vector<8x128xf32>
    %34 = tpu.concatenate %32, %33 in 1 : vector<8x128xf32>, vector<8x128xf32> -> vector<8x256xf32>
    %35 = arith.negf %34 : vector<8x256xf32>
    %36 = math.exp %35 : vector<8x256xf32>
    %cst_14 = arith.constant 1.000000e+00 : f32
    %37 = vector.broadcast %cst_14 : f32 to vector<8x256xf32>
    %38 = arith.addf %37, %36 : vector<8x256xf32>
    %39 = arith.divf %37, %38 : vector<8x256xf32>
    %40 = vector.extract_strided_slice %19 {offsets = [0, 256], sizes = [8, 128], strides = [1, 1]} : vector<8x512xf32> to vector<8x128xf32>
    %41 = vector.extract_strided_slice %23 {offsets = [0, 256], sizes = [8, 128], strides = [1, 1]} : vector<8x512xf32> to vector<8x128xf32>
    %42 = tpu.concatenate %40, %41 in 1 : vector<8x128xf32>, vector<8x128xf32> -> vector<8x256xf32>
    %43 = math.tanh %42 : vector<8x256xf32>
    %44 = vector.extract_strided_slice %19 {offsets = [0, 384], sizes = [8, 128], strides = [1, 1]} : vector<8x512xf32> to vector<8x128xf32>
    %45 = vector.extract_strided_slice %23 {offsets = [0, 384], sizes = [8, 128], strides = [1, 1]} : vector<8x512xf32> to vector<8x128xf32>
    %46 = tpu.concatenate %44, %45 in 1 : vector<8x128xf32>, vector<8x128xf32> -> vector<8x256xf32>
    %47 = arith.negf %46 : vector<8x256xf32>
    %48 = math.exp %47 : vector<8x256xf32>
    %cst_15 = arith.constant 1.000000e+00 : f32
    %49 = vector.broadcast %cst_15 : f32 to vector<8x256xf32>
    %50 = arith.addf %49, %48 : vector<8x256xf32>
    %51 = arith.divf %49, %50 : vector<8x256xf32>
    %52 = arith.mulf %39, %7 : vector<8x256xf32>
    %53 = arith.mulf %31, %43 : vector<8x256xf32>
    %54 = arith.addf %52, %53 : vector<8x256xf32>
    %55 = math.tanh %54 : vector<8x256xf32>
    %56 = arith.mulf %51, %55 : vector<8x256xf32>
    %c1_i32 = arith.constant 1 : i32
    %57 = arith.truncf %56 : vector<8x256xf32> to vector<8x256xbf16>
    %c0_16 = arith.constant 0 : index
    %c0_17 = arith.constant 0 : index
    %58 = vector.load %arg3[%c0_16, %c0_17] : memref<256x1024xbf16, #tpu.memory_space<vmem>>, vector<256x1024xbf16>
    %cst_18 = arith.constant dense<0.000000e+00> : vector<8x1024xf32>
    %59 = tpu.matmul %57, %58, %cst_18 {dimension_numbers = #tpu.dot_dimension_numbers<[1], [0], [0], [1], [0, 0, 1, 1], [], []>} : vector<8x256xbf16>, vector<256x1024xbf16>, vector<8x1024xf32> -> vector<8x1024xf32>
    %c8_i32_19 = arith.constant 8 : i32
    %60 = arith.muli %c1_i32, %c8_i32_19 : i32
    %61 = tpu.assume_multiple %60, 8 : i32
    %c7_i32_20 = arith.constant 7 : i32
    %62 = arith.subi %c7_i32_20, %c1_i32 : i32
    %c8_i32_21 = arith.constant 8 : i32
    %63 = arith.muli %62, %c8_i32_21 : i32
    %64 = tpu.assume_multiple %63, 8 : i32
    %65 = arith.index_cast %61 : i32 to index
    %c0_22 = arith.constant 0 : index
    %66 = vector.load %arg18[%65, %c0_22] : memref<64x1024xf32, #tpu.memory_space<vmem>>, vector<8x512xf32>
    %67 = vector.extract_strided_slice %59 {offsets = [0, 0], sizes = [8, 512], strides = [1, 1]} : vector<8x1024xf32> to vector<8x512xf32>
    %68 = arith.addf %66, %67 : vector<8x512xf32>
    %69 = arith.index_cast %64 : i32 to index
    %c512_23 = arith.constant 512 : index
    %70 = vector.load %arg18[%69, %c512_23] : memref<64x1024xf32, #tpu.memory_space<vmem>>, vector<8x512xf32>
    %71 = vector.extract_strided_slice %59 {offsets = [0, 512], sizes = [8, 512], strides = [1, 1]} : vector<8x1024xf32> to vector<8x512xf32>
    %72 = arith.addf %70, %71 : vector<8x512xf32>
    %73 = vector.extract_strided_slice %68 {offsets = [0, 0], sizes = [8, 128], strides = [1, 1]} : vector<8x512xf32> to vector<8x128xf32>
    %74 = vector.extract_strided_slice %72 {offsets = [0, 0], sizes = [8, 128], strides = [1, 1]} : vector<8x512xf32> to vector<8x128xf32>
    %75 = tpu.concatenate %73, %74 in 1 : vector<8x128xf32>, vector<8x128xf32> -> vector<8x256xf32>
    %76 = arith.negf %75 : vector<8x256xf32>
    %77 = math.exp %76 : vector<8x256xf32>
    %cst_24 = arith.constant 1.000000e+00 : f32
    %78 = vector.broadcast %cst_24 : f32 to vector<8x256xf32>
    %79 = arith.addf %78, %77 : vector<8x256xf32>
    %80 = arith.divf %78, %79 : vector<8x256xf32>
    %81 = vector.extract_strided_slice %68 {offsets = [0, 128], sizes = [8, 128], strides = [1, 1]} : vector<8x512xf32> to vector<8x128xf32>
    %82 = vector.extract_strided_slice %72 {offsets = [0, 128], sizes = [8, 128], strides = [1, 1]} : vector<8x512xf32> to vector<8x128xf32>
    %83 = tpu.concatenate %81, %82 in 1 : vector<8x128xf32>, vector<8x128xf32> -> vector<8x256xf32>
    %84 = arith.negf %83 : vector<8x256xf32>
    %85 = math.exp %84 : vector<8x256xf32>
    %cst_25 = arith.constant 1.000000e+00 : f32
    %86 = vector.broadcast %cst_25 : f32 to vector<8x256xf32>
    %87 = arith.addf %86, %85 : vector<8x256xf32>
    %88 = arith.divf %86, %87 : vector<8x256xf32>
    %89 = vector.extract_strided_slice %68 {offsets = [0, 256], sizes = [8, 128], strides = [1, 1]} : vector<8x512xf32> to vector<8x128xf32>
    %90 = vector.extract_strided_slice %72 {offsets = [0, 256], sizes = [8, 128], strides = [1, 1]} : vector<8x512xf32> to vector<8x128xf32>
    %91 = tpu.concatenate %89, %90 in 1 : vector<8x128xf32>, vector<8x128xf32> -> vector<8x256xf32>
    %92 = math.tanh %91 : vector<8x256xf32>
    %93 = vector.extract_strided_slice %68 {offsets = [0, 384], sizes = [8, 128], strides = [1, 1]} : vector<8x512xf32> to vector<8x128xf32>
    %94 = vector.extract_strided_slice %72 {offsets = [0, 384], sizes = [8, 128], strides = [1, 1]} : vector<8x512xf32> to vector<8x128xf32>
    %95 = tpu.concatenate %93, %94 in 1 : vector<8x128xf32>, vector<8x128xf32> -> vector<8x256xf32>
    %96 = arith.negf %95 : vector<8x256xf32>
    %97 = math.exp %96 : vector<8x256xf32>
    %cst_26 = arith.constant 1.000000e+00 : f32
    %98 = vector.broadcast %cst_26 : f32 to vector<8x256xf32>
    %99 = arith.addf %98, %97 : vector<8x256xf32>
    %100 = arith.divf %98, %99 : vector<8x256xf32>
    %101 = arith.mulf %88, %54 : vector<8x256xf32>
    %102 = arith.mulf %80, %92 : vector<8x256xf32>
    %103 = arith.addf %101, %102 : vector<8x256xf32>
    %104 = math.tanh %103 : vector<8x256xf32>
    %105 = arith.mulf %100, %104 : vector<8x256xf32>
    %c2_i32 = arith.constant 2 : i32
    %106 = arith.truncf %105 : vector<8x256xf32> to vector<8x256xbf16>
    %c0_27 = arith.constant 0 : index
    %c0_28 = arith.constant 0 : index
    %107 = vector.load %arg3[%c0_27, %c0_28] : memref<256x1024xbf16, #tpu.memory_space<vmem>>, vector<256x1024xbf16>
    %cst_29 = arith.constant dense<0.000000e+00> : vector<8x1024xf32>
    %108 = tpu.matmul %106, %107, %cst_29 {dimension_numbers = #tpu.dot_dimension_numbers<[1], [0], [0], [1], [0, 0, 1, 1], [], []>} : vector<8x256xbf16>, vector<256x1024xbf16>, vector<8x1024xf32> -> vector<8x1024xf32>
    %c8_i32_30 = arith.constant 8 : i32
    %109 = arith.muli %c2_i32, %c8_i32_30 : i32
    %110 = tpu.assume_multiple %109, 8 : i32
    %c7_i32_31 = arith.constant 7 : i32
    %111 = arith.subi %c7_i32_31, %c2_i32 : i32
    %c8_i32_32 = arith.constant 8 : i32
    %112 = arith.muli %111, %c8_i32_32 : i32
    %113 = tpu.assume_multiple %112, 8 : i32
    %114 = arith.index_cast %110 : i32 to index
    %c0_33 = arith.constant 0 : index
    %115 = vector.load %arg18[%114, %c0_33] : memref<64x1024xf32, #tpu.memory_space<vmem>>, vector<8x512xf32>
    %116 = vector.extract_strided_slice %108 {offsets = [0, 0], sizes = [8, 512], strides = [1, 1]} : vector<8x1024xf32> to vector<8x512xf32>
    %117 = arith.addf %115, %116 : vector<8x512xf32>
    %118 = arith.index_cast %113 : i32 to index
    %c512_34 = arith.constant 512 : index
    %119 = vector.load %arg18[%118, %c512_34] : memref<64x1024xf32, #tpu.memory_space<vmem>>, vector<8x512xf32>
    %120 = vector.extract_strided_slice %108 {offsets = [0, 512], sizes = [8, 512], strides = [1, 1]} : vector<8x1024xf32> to vector<8x512xf32>
    %121 = arith.addf %119, %120 : vector<8x512xf32>
    %122 = vector.extract_strided_slice %117 {offsets = [0, 0], sizes = [8, 128], strides = [1, 1]} : vector<8x512xf32> to vector<8x128xf32>
    %123 = vector.extract_strided_slice %121 {offsets = [0, 0], sizes = [8, 128], strides = [1, 1]} : vector<8x512xf32> to vector<8x128xf32>
    %124 = tpu.concatenate %122, %123 in 1 : vector<8x128xf32>, vector<8x128xf32> -> vector<8x256xf32>
    %125 = arith.negf %124 : vector<8x256xf32>
    %126 = math.exp %125 : vector<8x256xf32>
    %cst_35 = arith.constant 1.000000e+00 : f32
    %127 = vector.broadcast %cst_35 : f32 to vector<8x256xf32>
    %128 = arith.addf %127, %126 : vector<8x256xf32>
    %129 = arith.divf %127, %128 : vector<8x256xf32>
    %130 = vector.extract_strided_slice %117 {offsets = [0, 128], sizes = [8, 128], strides = [1, 1]} : vector<8x512xf32> to vector<8x128xf32>
    %131 = vector.extract_strided_slice %121 {offsets = [0, 128], sizes = [8, 128], strides = [1, 1]} : vector<8x512xf32> to vector<8x128xf32>
    %132 = tpu.concatenate %130, %131 in 1 : vector<8x128xf32>, vector<8x128xf32> -> vector<8x256xf32>
    %133 = arith.negf %132 : vector<8x256xf32>
    %134 = math.exp %133 : vector<8x256xf32>
    %cst_36 = arith.constant 1.000000e+00 : f32
    %135 = vector.broadcast %cst_36 : f32 to vector<8x256xf32>
    %136 = arith.addf %135, %134 : vector<8x256xf32>
    %137 = arith.divf %135, %136 : vector<8x256xf32>
    %138 = vector.extract_strided_slice %117 {offsets = [0, 256], sizes = [8, 128], strides = [1, 1]} : vector<8x512xf32> to vector<8x128xf32>
    %139 = vector.extract_strided_slice %121 {offsets = [0, 256], sizes = [8, 128], strides = [1, 1]} : vector<8x512xf32> to vector<8x128xf32>
    %140 = tpu.concatenate %138, %139 in 1 : vector<8x128xf32>, vector<8x128xf32> -> vector<8x256xf32>
    %141 = math.tanh %140 : vector<8x256xf32>
    %142 = vector.extract_strided_slice %117 {offsets = [0, 384], sizes = [8, 128], strides = [1, 1]} : vector<8x512xf32> to vector<8x128xf32>
    %143 = vector.extract_strided_slice %121 {offsets = [0, 384], sizes = [8, 128], strides = [1, 1]} : vector<8x512xf32> to vector<8x128xf32>
    %144 = tpu.concatenate %142, %143 in 1 : vector<8x128xf32>, vector<8x128xf32> -> vector<8x256xf32>
    %145 = arith.negf %144 : vector<8x256xf32>
    %146 = math.exp %145 : vector<8x256xf32>
    %cst_37 = arith.constant 1.000000e+00 : f32
    %147 = vector.broadcast %cst_37 : f32 to vector<8x256xf32>
    %148 = arith.addf %147, %146 : vector<8x256xf32>
    %149 = arith.divf %147, %148 : vector<8x256xf32>
    %150 = arith.mulf %137, %103 : vector<8x256xf32>
    %151 = arith.mulf %129, %141 : vector<8x256xf32>
    %152 = arith.addf %150, %151 : vector<8x256xf32>
    %153 = math.tanh %152 : vector<8x256xf32>
    %154 = arith.mulf %149, %153 : vector<8x256xf32>
    %c3_i32 = arith.constant 3 : i32
    %155 = arith.truncf %154 : vector<8x256xf32> to vector<8x256xbf16>
    %c0_38 = arith.constant 0 : index
    %c0_39 = arith.constant 0 : index
    %156 = vector.load %arg3[%c0_38, %c0_39] : memref<256x1024xbf16, #tpu.memory_space<vmem>>, vector<256x1024xbf16>
    %cst_40 = arith.constant dense<0.000000e+00> : vector<8x1024xf32>
    %157 = tpu.matmul %155, %156, %cst_40 {dimension_numbers = #tpu.dot_dimension_numbers<[1], [0], [0], [1], [0, 0, 1, 1], [], []>} : vector<8x256xbf16>, vector<256x1024xbf16>, vector<8x1024xf32> -> vector<8x1024xf32>
    %c8_i32_41 = arith.constant 8 : i32
    %158 = arith.muli %c3_i32, %c8_i32_41 : i32
    %159 = tpu.assume_multiple %158, 8 : i32
    %c7_i32_42 = arith.constant 7 : i32
    %160 = arith.subi %c7_i32_42, %c3_i32 : i32
    %c8_i32_43 = arith.constant 8 : i32
    %161 = arith.muli %160, %c8_i32_43 : i32
    %162 = tpu.assume_multiple %161, 8 : i32
    %163 = arith.index_cast %159 : i32 to index
    %c0_44 = arith.constant 0 : index
    %164 = vector.load %arg18[%163, %c0_44] : memref<64x1024xf32, #tpu.memory_space<vmem>>, vector<8x512xf32>
    %165 = vector.extract_strided_slice %157 {offsets = [0, 0], sizes = [8, 512], strides = [1, 1]} : vector<8x1024xf32> to vector<8x512xf32>
    %166 = arith.addf %164, %165 : vector<8x512xf32>
    %167 = arith.index_cast %162 : i32 to index
    %c512_45 = arith.constant 512 : index
    %168 = vector.load %arg18[%167, %c512_45] : memref<64x1024xf32, #tpu.memory_space<vmem>>, vector<8x512xf32>
    %169 = vector.extract_strided_slice %157 {offsets = [0, 512], sizes = [8, 512], strides = [1, 1]} : vector<8x1024xf32> to vector<8x512xf32>
    %170 = arith.addf %168, %169 : vector<8x512xf32>
    %171 = vector.extract_strided_slice %166 {offsets = [0, 0], sizes = [8, 128], strides = [1, 1]} : vector<8x512xf32> to vector<8x128xf32>
    %172 = vector.extract_strided_slice %170 {offsets = [0, 0], sizes = [8, 128], strides = [1, 1]} : vector<8x512xf32> to vector<8x128xf32>
    %173 = tpu.concatenate %171, %172 in 1 : vector<8x128xf32>, vector<8x128xf32> -> vector<8x256xf32>
    %174 = arith.negf %173 : vector<8x256xf32>
    %175 = math.exp %174 : vector<8x256xf32>
    %cst_46 = arith.constant 1.000000e+00 : f32
    %176 = vector.broadcast %cst_46 : f32 to vector<8x256xf32>
    %177 = arith.addf %176, %175 : vector<8x256xf32>
    %178 = arith.divf %176, %177 : vector<8x256xf32>
    %179 = vector.extract_strided_slice %166 {offsets = [0, 128], sizes = [8, 128], strides = [1, 1]} : vector<8x512xf32> to vector<8x128xf32>
    %180 = vector.extract_strided_slice %170 {offsets = [0, 128], sizes = [8, 128], strides = [1, 1]} : vector<8x512xf32> to vector<8x128xf32>
    %181 = tpu.concatenate %179, %180 in 1 : vector<8x128xf32>, vector<8x128xf32> -> vector<8x256xf32>
    %182 = arith.negf %181 : vector<8x256xf32>
    %183 = math.exp %182 : vector<8x256xf32>
    %cst_47 = arith.constant 1.000000e+00 : f32
    %184 = vector.broadcast %cst_47 : f32 to vector<8x256xf32>
    %185 = arith.addf %184, %183 : vector<8x256xf32>
    %186 = arith.divf %184, %185 : vector<8x256xf32>
    %187 = vector.extract_strided_slice %166 {offsets = [0, 256], sizes = [8, 128], strides = [1, 1]} : vector<8x512xf32> to vector<8x128xf32>
    %188 = vector.extract_strided_slice %170 {offsets = [0, 256], sizes = [8, 128], strides = [1, 1]} : vector<8x512xf32> to vector<8x128xf32>
    %189 = tpu.concatenate %187, %188 in 1 : vector<8x128xf32>, vector<8x128xf32> -> vector<8x256xf32>
    %190 = math.tanh %189 : vector<8x256xf32>
    %191 = vector.extract_strided_slice %166 {offsets = [0, 384], sizes = [8, 128], strides = [1, 1]} : vector<8x512xf32> to vector<8x128xf32>
    %192 = vector.extract_strided_slice %170 {offsets = [0, 384], sizes = [8, 128], strides = [1, 1]} : vector<8x512xf32> to vector<8x128xf32>
    %193 = tpu.concatenate %191, %192 in 1 : vector<8x128xf32>, vector<8x128xf32> -> vector<8x256xf32>
    %194 = arith.negf %193 : vector<8x256xf32>
    %195 = math.exp %194 : vector<8x256xf32>
    %cst_48 = arith.constant 1.000000e+00 : f32
    %196 = vector.broadcast %cst_48 : f32 to vector<8x256xf32>
    %197 = arith.addf %196, %195 : vector<8x256xf32>
    %198 = arith.divf %196, %197 : vector<8x256xf32>
    %199 = arith.mulf %186, %152 : vector<8x256xf32>
    %200 = arith.mulf %178, %190 : vector<8x256xf32>
    %201 = arith.addf %199, %200 : vector<8x256xf32>
    %202 = math.tanh %201 : vector<8x256xf32>
    %203 = arith.mulf %198, %202 : vector<8x256xf32>
    %c4_i32 = arith.constant 4 : i32
    %204 = arith.truncf %203 : vector<8x256xf32> to vector<8x256xbf16>
    %c0_49 = arith.constant 0 : index
    %c0_50 = arith.constant 0 : index
    %205 = vector.load %arg3[%c0_49, %c0_50] : memref<256x1024xbf16, #tpu.memory_space<vmem>>, vector<256x1024xbf16>
    %cst_51 = arith.constant dense<0.000000e+00> : vector<8x1024xf32>
    %206 = tpu.matmul %204, %205, %cst_51 {dimension_numbers = #tpu.dot_dimension_numbers<[1], [0], [0], [1], [0, 0, 1, 1], [], []>} : vector<8x256xbf16>, vector<256x1024xbf16>, vector<8x1024xf32> -> vector<8x1024xf32>
    %c8_i32_52 = arith.constant 8 : i32
    %207 = arith.muli %c4_i32, %c8_i32_52 : i32
    %208 = tpu.assume_multiple %207, 8 : i32
    %c7_i32_53 = arith.constant 7 : i32
    %209 = arith.subi %c7_i32_53, %c4_i32 : i32
    %c8_i32_54 = arith.constant 8 : i32
    %210 = arith.muli %209, %c8_i32_54 : i32
    %211 = tpu.assume_multiple %210, 8 : i32
    %212 = arith.index_cast %208 : i32 to index
    %c0_55 = arith.constant 0 : index
    %213 = vector.load %arg18[%212, %c0_55] : memref<64x1024xf32, #tpu.memory_space<vmem>>, vector<8x512xf32>
    %214 = vector.extract_strided_slice %206 {offsets = [0, 0], sizes = [8, 512], strides = [1, 1]} : vector<8x1024xf32> to vector<8x512xf32>
    %215 = arith.addf %213, %214 : vector<8x512xf32>
    %216 = arith.index_cast %211 : i32 to index
    %c512_56 = arith.constant 512 : index
    %217 = vector.load %arg18[%216, %c512_56] : memref<64x1024xf32, #tpu.memory_space<vmem>>, vector<8x512xf32>
    %218 = vector.extract_strided_slice %206 {offsets = [0, 512], sizes = [8, 512], strides = [1, 1]} : vector<8x1024xf32> to vector<8x512xf32>
    %219 = arith.addf %217, %218 : vector<8x512xf32>
    %220 = vector.extract_strided_slice %215 {offsets = [0, 0], sizes = [8, 128], strides = [1, 1]} : vector<8x512xf32> to vector<8x128xf32>
    %221 = vector.extract_strided_slice %219 {offsets = [0, 0], sizes = [8, 128], strides = [1, 1]} : vector<8x512xf32> to vector<8x128xf32>
    %222 = tpu.concatenate %220, %221 in 1 : vector<8x128xf32>, vector<8x128xf32> -> vector<8x256xf32>
    %223 = arith.negf %222 : vector<8x256xf32>
    %224 = math.exp %223 : vector<8x256xf32>
    %cst_57 = arith.constant 1.000000e+00 : f32
    %225 = vector.broadcast %cst_57 : f32 to vector<8x256xf32>
    %226 = arith.addf %225, %224 : vector<8x256xf32>
    %227 = arith.divf %225, %226 : vector<8x256xf32>
    %228 = vector.extract_strided_slice %215 {offsets = [0, 128], sizes = [8, 128], strides = [1, 1]} : vector<8x512xf32> to vector<8x128xf32>
    %229 = vector.extract_strided_slice %219 {offsets = [0, 128], sizes = [8, 128], strides = [1, 1]} : vector<8x512xf32> to vector<8x128xf32>
    %230 = tpu.concatenate %228, %229 in 1 : vector<8x128xf32>, vector<8x128xf32> -> vector<8x256xf32>
    %231 = arith.negf %230 : vector<8x256xf32>
    %232 = math.exp %231 : vector<8x256xf32>
    %cst_58 = arith.constant 1.000000e+00 : f32
    %233 = vector.broadcast %cst_58 : f32 to vector<8x256xf32>
    %234 = arith.addf %233, %232 : vector<8x256xf32>
    %235 = arith.divf %233, %234 : vector<8x256xf32>
    %236 = vector.extract_strided_slice %215 {offsets = [0, 256], sizes = [8, 128], strides = [1, 1]} : vector<8x512xf32> to vector<8x128xf32>
    %237 = vector.extract_strided_slice %219 {offsets = [0, 256], sizes = [8, 128], strides = [1, 1]} : vector<8x512xf32> to vector<8x128xf32>
    %238 = tpu.concatenate %236, %237 in 1 : vector<8x128xf32>, vector<8x128xf32> -> vector<8x256xf32>
    %239 = math.tanh %238 : vector<8x256xf32>
    %240 = vector.extract_strided_slice %215 {offsets = [0, 384], sizes = [8, 128], strides = [1, 1]} : vector<8x512xf32> to vector<8x128xf32>
    %241 = vector.extract_strided_slice %219 {offsets = [0, 384], sizes = [8, 128], strides = [1, 1]} : vector<8x512xf32> to vector<8x128xf32>
    %242 = tpu.concatenate %240, %241 in 1 : vector<8x128xf32>, vector<8x128xf32> -> vector<8x256xf32>
    %243 = arith.negf %242 : vector<8x256xf32>
    %244 = math.exp %243 : vector<8x256xf32>
    %cst_59 = arith.constant 1.000000e+00 : f32
    %245 = vector.broadcast %cst_59 : f32 to vector<8x256xf32>
    %246 = arith.addf %245, %244 : vector<8x256xf32>
    %247 = arith.divf %245, %246 : vector<8x256xf32>
    %248 = arith.mulf %235, %201 : vector<8x256xf32>
    %249 = arith.mulf %227, %239 : vector<8x256xf32>
    %250 = arith.addf %248, %249 : vector<8x256xf32>
    %251 = math.tanh %250 : vector<8x256xf32>
    %252 = arith.mulf %247, %251 : vector<8x256xf32>
    %c5_i32 = arith.constant 5 : i32
    %253 = arith.truncf %252 : vector<8x256xf32> to vector<8x256xbf16>
    %c0_60 = arith.constant 0 : index
    %c0_61 = arith.constant 0 : index
    %254 = vector.load %arg3[%c0_60, %c0_61] : memref<256x1024xbf16, #tpu.memory_space<vmem>>, vector<256x1024xbf16>
    %cst_62 = arith.constant dense<0.000000e+00> : vector<8x1024xf32>
    %255 = tpu.matmul %253, %254, %cst_62 {dimension_numbers = #tpu.dot_dimension_numbers<[1], [0], [0], [1], [0, 0, 1, 1], [], []>} : vector<8x256xbf16>, vector<256x1024xbf16>, vector<8x1024xf32> -> vector<8x1024xf32>
    %c8_i32_63 = arith.constant 8 : i32
    %256 = arith.muli %c5_i32, %c8_i32_63 : i32
    %257 = tpu.assume_multiple %256, 8 : i32
    %c7_i32_64 = arith.constant 7 : i32
    %258 = arith.subi %c7_i32_64, %c5_i32 : i32
    %c8_i32_65 = arith.constant 8 : i32
    %259 = arith.muli %258, %c8_i32_65 : i32
    %260 = tpu.assume_multiple %259, 8 : i32
    %261 = arith.index_cast %257 : i32 to index
    %c0_66 = arith.constant 0 : index
    %262 = vector.load %arg18[%261, %c0_66] : memref<64x1024xf32, #tpu.memory_space<vmem>>, vector<8x512xf32>
    %263 = vector.extract_strided_slice %255 {offsets = [0, 0], sizes = [8, 512], strides = [1, 1]} : vector<8x1024xf32> to vector<8x512xf32>
    %264 = arith.addf %262, %263 : vector<8x512xf32>
    %265 = arith.index_cast %260 : i32 to index
    %c512_67 = arith.constant 512 : index
    %266 = vector.load %arg18[%265, %c512_67] : memref<64x1024xf32, #tpu.memory_space<vmem>>, vector<8x512xf32>
    %267 = vector.extract_strided_slice %255 {offsets = [0, 512], sizes = [8, 512], strides = [1, 1]} : vector<8x1024xf32> to vector<8x512xf32>
    %268 = arith.addf %266, %267 : vector<8x512xf32>
    %269 = vector.extract_strided_slice %264 {offsets = [0, 0], sizes = [8, 128], strides = [1, 1]} : vector<8x512xf32> to vector<8x128xf32>
    %270 = vector.extract_strided_slice %268 {offsets = [0, 0], sizes = [8, 128], strides = [1, 1]} : vector<8x512xf32> to vector<8x128xf32>
    %271 = tpu.concatenate %269, %270 in 1 : vector<8x128xf32>, vector<8x128xf32> -> vector<8x256xf32>
    %272 = arith.negf %271 : vector<8x256xf32>
    %273 = math.exp %272 : vector<8x256xf32>
    %cst_68 = arith.constant 1.000000e+00 : f32
    %274 = vector.broadcast %cst_68 : f32 to vector<8x256xf32>
    %275 = arith.addf %274, %273 : vector<8x256xf32>
    %276 = arith.divf %274, %275 : vector<8x256xf32>
    %277 = vector.extract_strided_slice %264 {offsets = [0, 128], sizes = [8, 128], strides = [1, 1]} : vector<8x512xf32> to vector<8x128xf32>
    %278 = vector.extract_strided_slice %268 {offsets = [0, 128], sizes = [8, 128], strides = [1, 1]} : vector<8x512xf32> to vector<8x128xf32>
    %279 = tpu.concatenate %277, %278 in 1 : vector<8x128xf32>, vector<8x128xf32> -> vector<8x256xf32>
    %280 = arith.negf %279 : vector<8x256xf32>
    %281 = math.exp %280 : vector<8x256xf32>
    %cst_69 = arith.constant 1.000000e+00 : f32
    %282 = vector.broadcast %cst_69 : f32 to vector<8x256xf32>
    %283 = arith.addf %282, %281 : vector<8x256xf32>
    %284 = arith.divf %282, %283 : vector<8x256xf32>
    %285 = vector.extract_strided_slice %264 {offsets = [0, 256], sizes = [8, 128], strides = [1, 1]} : vector<8x512xf32> to vector<8x128xf32>
    %286 = vector.extract_strided_slice %268 {offsets = [0, 256], sizes = [8, 128], strides = [1, 1]} : vector<8x512xf32> to vector<8x128xf32>
    %287 = tpu.concatenate %285, %286 in 1 : vector<8x128xf32>, vector<8x128xf32> -> vector<8x256xf32>
    %288 = math.tanh %287 : vector<8x256xf32>
    %289 = vector.extract_strided_slice %264 {offsets = [0, 384], sizes = [8, 128], strides = [1, 1]} : vector<8x512xf32> to vector<8x128xf32>
    %290 = vector.extract_strided_slice %268 {offsets = [0, 384], sizes = [8, 128], strides = [1, 1]} : vector<8x512xf32> to vector<8x128xf32>
    %291 = tpu.concatenate %289, %290 in 1 : vector<8x128xf32>, vector<8x128xf32> -> vector<8x256xf32>
    %292 = arith.negf %291 : vector<8x256xf32>
    %293 = math.exp %292 : vector<8x256xf32>
    %cst_70 = arith.constant 1.000000e+00 : f32
    %294 = vector.broadcast %cst_70 : f32 to vector<8x256xf32>
    %295 = arith.addf %294, %293 : vector<8x256xf32>
    %296 = arith.divf %294, %295 : vector<8x256xf32>
    %297 = arith.mulf %284, %250 : vector<8x256xf32>
    %298 = arith.mulf %276, %288 : vector<8x256xf32>
    %299 = arith.addf %297, %298 : vector<8x256xf32>
    %300 = math.tanh %299 : vector<8x256xf32>
    %301 = arith.mulf %296, %300 : vector<8x256xf32>
    %c6_i32 = arith.constant 6 : i32
    %302 = arith.truncf %301 : vector<8x256xf32> to vector<8x256xbf16>
    %c0_71 = arith.constant 0 : index
    %c0_72 = arith.constant 0 : index
    %303 = vector.load %arg3[%c0_71, %c0_72] : memref<256x1024xbf16, #tpu.memory_space<vmem>>, vector<256x1024xbf16>
    %cst_73 = arith.constant dense<0.000000e+00> : vector<8x1024xf32>
    %304 = tpu.matmul %302, %303, %cst_73 {dimension_numbers = #tpu.dot_dimension_numbers<[1], [0], [0], [1], [0, 0, 1, 1], [], []>} : vector<8x256xbf16>, vector<256x1024xbf16>, vector<8x1024xf32> -> vector<8x1024xf32>
    %c8_i32_74 = arith.constant 8 : i32
    %305 = arith.muli %c6_i32, %c8_i32_74 : i32
    %306 = tpu.assume_multiple %305, 8 : i32
    %c7_i32_75 = arith.constant 7 : i32
    %307 = arith.subi %c7_i32_75, %c6_i32 : i32
    %c8_i32_76 = arith.constant 8 : i32
    %308 = arith.muli %307, %c8_i32_76 : i32
    %309 = tpu.assume_multiple %308, 8 : i32
    %310 = arith.index_cast %306 : i32 to index
    %c0_77 = arith.constant 0 : index
    %311 = vector.load %arg18[%310, %c0_77] : memref<64x1024xf32, #tpu.memory_space<vmem>>, vector<8x512xf32>
    %312 = vector.extract_strided_slice %304 {offsets = [0, 0], sizes = [8, 512], strides = [1, 1]} : vector<8x1024xf32> to vector<8x512xf32>
    %313 = arith.addf %311, %312 : vector<8x512xf32>
    %314 = arith.index_cast %309 : i32 to index
    %c512_78 = arith.constant 512 : index
    %315 = vector.load %arg18[%314, %c512_78] : memref<64x1024xf32, #tpu.memory_space<vmem>>, vector<8x512xf32>
    %316 = vector.extract_strided_slice %304 {offsets = [0, 512], sizes = [8, 512], strides = [1, 1]} : vector<8x1024xf32> to vector<8x512xf32>
    %317 = arith.addf %315, %316 : vector<8x512xf32>
    %318 = vector.extract_strided_slice %313 {offsets = [0, 0], sizes = [8, 128], strides = [1, 1]} : vector<8x512xf32> to vector<8x128xf32>
    %319 = vector.extract_strided_slice %317 {offsets = [0, 0], sizes = [8, 128], strides = [1, 1]} : vector<8x512xf32> to vector<8x128xf32>
    %320 = tpu.concatenate %318, %319 in 1 : vector<8x128xf32>, vector<8x128xf32> -> vector<8x256xf32>
    %321 = arith.negf %320 : vector<8x256xf32>
    %322 = math.exp %321 : vector<8x256xf32>
    %cst_79 = arith.constant 1.000000e+00 : f32
    %323 = vector.broadcast %cst_79 : f32 to vector<8x256xf32>
    %324 = arith.addf %323, %322 : vector<8x256xf32>
    %325 = arith.divf %323, %324 : vector<8x256xf32>
    %326 = vector.extract_strided_slice %313 {offsets = [0, 128], sizes = [8, 128], strides = [1, 1]} : vector<8x512xf32> to vector<8x128xf32>
    %327 = vector.extract_strided_slice %317 {offsets = [0, 128], sizes = [8, 128], strides = [1, 1]} : vector<8x512xf32> to vector<8x128xf32>
    %328 = tpu.concatenate %326, %327 in 1 : vector<8x128xf32>, vector<8x128xf32> -> vector<8x256xf32>
    %329 = arith.negf %328 : vector<8x256xf32>
    %330 = math.exp %329 : vector<8x256xf32>
    %cst_80 = arith.constant 1.000000e+00 : f32
    %331 = vector.broadcast %cst_80 : f32 to vector<8x256xf32>
    %332 = arith.addf %331, %330 : vector<8x256xf32>
    %333 = arith.divf %331, %332 : vector<8x256xf32>
    %334 = vector.extract_strided_slice %313 {offsets = [0, 256], sizes = [8, 128], strides = [1, 1]} : vector<8x512xf32> to vector<8x128xf32>
    %335 = vector.extract_strided_slice %317 {offsets = [0, 256], sizes = [8, 128], strides = [1, 1]} : vector<8x512xf32> to vector<8x128xf32>
    %336 = tpu.concatenate %334, %335 in 1 : vector<8x128xf32>, vector<8x128xf32> -> vector<8x256xf32>
    %337 = math.tanh %336 : vector<8x256xf32>
    %338 = vector.extract_strided_slice %313 {offsets = [0, 384], sizes = [8, 128], strides = [1, 1]} : vector<8x512xf32> to vector<8x128xf32>
    %339 = vector.extract_strided_slice %317 {offsets = [0, 384], sizes = [8, 128], strides = [1, 1]} : vector<8x512xf32> to vector<8x128xf32>
    %340 = tpu.concatenate %338, %339 in 1 : vector<8x128xf32>, vector<8x128xf32> -> vector<8x256xf32>
    %341 = arith.negf %340 : vector<8x256xf32>
    %342 = math.exp %341 : vector<8x256xf32>
    %cst_81 = arith.constant 1.000000e+00 : f32
    %343 = vector.broadcast %cst_81 : f32 to vector<8x256xf32>
    %344 = arith.addf %343, %342 : vector<8x256xf32>
    %345 = arith.divf %343, %344 : vector<8x256xf32>
    %346 = arith.mulf %333, %299 : vector<8x256xf32>
    %347 = arith.mulf %325, %337 : vector<8x256xf32>
    %348 = arith.addf %346, %347 : vector<8x256xf32>
    %349 = math.tanh %348 : vector<8x256xf32>
    %350 = arith.mulf %345, %349 : vector<8x256xf32>
    %c7_i32_82 = arith.constant 7 : i32
    %351 = arith.truncf %350 : vector<8x256xf32> to vector<8x256xbf16>
    %c0_83 = arith.constant 0 : index
    %c0_84 = arith.constant 0 : index
    %352 = vector.load %arg3[%c0_83, %c0_84] : memref<256x1024xbf16, #tpu.memory_space<vmem>>, vector<256x1024xbf16>
    %cst_85 = arith.constant dense<0.000000e+00> : vector<8x1024xf32>
    %353 = tpu.matmul %351, %352, %cst_85 {dimension_numbers = #tpu.dot_dimension_numbers<[1], [0], [0], [1], [0, 0, 1, 1], [], []>} : vector<8x256xbf16>, vector<256x1024xbf16>, vector<8x1024xf32> -> vector<8x1024xf32>
    %c8_i32_86 = arith.constant 8 : i32
    %354 = arith.muli %c7_i32_82, %c8_i32_86 : i32
    %355 = tpu.assume_multiple %354, 8 : i32
    %c7_i32_87 = arith.constant 7 : i32
    %356 = arith.subi %c7_i32_87, %c7_i32_82 : i32
    %c8_i32_88 = arith.constant 8 : i32
    %357 = arith.muli %356, %c8_i32_88 : i32
    %358 = tpu.assume_multiple %357, 8 : i32
    %359 = arith.index_cast %355 : i32 to index
    %c0_89 = arith.constant 0 : index
    %360 = vector.load %arg18[%359, %c0_89] : memref<64x1024xf32, #tpu.memory_space<vmem>>, vector<8x512xf32>
    %361 = vector.extract_strided_slice %353 {offsets = [0, 0], sizes = [8, 512], strides = [1, 1]} : vector<8x1024xf32> to vector<8x512xf32>
    %362 = arith.addf %360, %361 : vector<8x512xf32>
    %363 = arith.index_cast %358 : i32 to index
    %c512_90 = arith.constant 512 : index
    %364 = vector.load %arg18[%363, %c512_90] : memref<64x1024xf32, #tpu.memory_space<vmem>>, vector<8x512xf32>
    %365 = vector.extract_strided_slice %353 {offsets = [0, 512], sizes = [8, 512], strides = [1, 1]} : vector<8x1024xf32> to vector<8x512xf32>
    %366 = arith.addf %364, %365 : vector<8x512xf32>
    %367 = vector.extract_strided_slice %362 {offsets = [0, 0], sizes = [8, 128], strides = [1, 1]} : vector<8x512xf32> to vector<8x128xf32>
    %368 = vector.extract_strided_slice %366 {offsets = [0, 0], sizes = [8, 128], strides = [1, 1]} : vector<8x512xf32> to vector<8x128xf32>
    %369 = tpu.concatenate %367, %368 in 1 : vector<8x128xf32>, vector<8x128xf32> -> vector<8x256xf32>
    %370 = arith.negf %369 : vector<8x256xf32>
    %371 = math.exp %370 : vector<8x256xf32>
    %cst_91 = arith.constant 1.000000e+00 : f32
    %372 = vector.broadcast %cst_91 : f32 to vector<8x256xf32>
    %373 = arith.addf %372, %371 : vector<8x256xf32>
    %374 = arith.divf %372, %373 : vector<8x256xf32>
    %375 = vector.extract_strided_slice %362 {offsets = [0, 128], sizes = [8, 128], strides = [1, 1]} : vector<8x512xf32> to vector<8x128xf32>
    %376 = vector.extract_strided_slice %366 {offsets = [0, 128], sizes = [8, 128], strides = [1, 1]} : vector<8x512xf32> to vector<8x128xf32>
    %377 = tpu.concatenate %375, %376 in 1 : vector<8x128xf32>, vector<8x128xf32> -> vector<8x256xf32>
    %378 = arith.negf %377 : vector<8x256xf32>
    %379 = math.exp %378 : vector<8x256xf32>
    %cst_92 = arith.constant 1.000000e+00 : f32
    %380 = vector.broadcast %cst_92 : f32 to vector<8x256xf32>
    %381 = arith.addf %380, %379 : vector<8x256xf32>
    %382 = arith.divf %380, %381 : vector<8x256xf32>
    %383 = vector.extract_strided_slice %362 {offsets = [0, 256], sizes = [8, 128], strides = [1, 1]} : vector<8x512xf32> to vector<8x128xf32>
    %384 = vector.extract_strided_slice %366 {offsets = [0, 256], sizes = [8, 128], strides = [1, 1]} : vector<8x512xf32> to vector<8x128xf32>
    %385 = tpu.concatenate %383, %384 in 1 : vector<8x128xf32>, vector<8x128xf32> -> vector<8x256xf32>
    %386 = math.tanh %385 : vector<8x256xf32>
    %387 = vector.extract_strided_slice %362 {offsets = [0, 384], sizes = [8, 128], strides = [1, 1]} : vector<8x512xf32> to vector<8x128xf32>
    %388 = vector.extract_strided_slice %366 {offsets = [0, 384], sizes = [8, 128], strides = [1, 1]} : vector<8x512xf32> to vector<8x128xf32>
    %389 = tpu.concatenate %387, %388 in 1 : vector<8x128xf32>, vector<8x128xf32> -> vector<8x256xf32>
    %390 = arith.negf %389 : vector<8x256xf32>
    %391 = math.exp %390 : vector<8x256xf32>
    %cst_93 = arith.constant 1.000000e+00 : f32
    %392 = vector.broadcast %cst_93 : f32 to vector<8x256xf32>
    %393 = arith.addf %392, %391 : vector<8x256xf32>
    %394 = arith.divf %392, %393 : vector<8x256xf32>
    %395 = arith.mulf %382, %348 : vector<8x256xf32>
    %396 = arith.mulf %374, %386 : vector<8x256xf32>
    %397 = arith.addf %395, %396 : vector<8x256xf32>
    %398 = math.tanh %397 : vector<8x256xf32>
    %399 = arith.mulf %394, %398 : vector<8x256xf32>
    %c8_i32_94 = arith.constant 8 : i32
    %c0_95 = arith.constant 0 : index
    %c0_96 = arith.constant 0 : index
    %400 = vector.load %arg5[%c0_95, %c0_96] : memref<256x32xf32, #tpu.memory_space<vmem>>, vector<256x32xf32>
    %cst_97 = arith.constant dense<0.000000e+00> : vector<8x32xf32>
    %401 = tpu.matmul %399, %400, %cst_97 {dimension_numbers = #tpu.dot_dimension_numbers<[1], [0], [0], [1], [0, 0, 1, 1], [], []>} : vector<8x256xf32>, vector<256x32xf32>, vector<8x32xf32> -> vector<8x32xf32>
    %c0_98 = arith.constant 0 : index
    %c0_99 = arith.constant 0 : index
    %402 = vector.load %arg6[%c0_98, %c0_99] : memref<1x32xf32, #tpu.memory_space<vmem>>, vector<1x32xf32>
    %403 = vector.broadcast %402 : vector<1x32xf32> to vector<8x32xf32>
    %404 = arith.addf %401, %403 : vector<8x32xf32>
    %405 = vector.extract_strided_slice %404 {offsets = [0, 0], sizes = [8, 16], strides = [1, 1]} : vector<8x32xf32> to vector<8x16xf32>
    %406 = vector.extract_strided_slice %404 {offsets = [0, 16], sizes = [8, 16], strides = [1, 1]} : vector<8x32xf32> to vector<8x16xf32>
    %c0_100 = arith.constant 0 : index
    %c0_101 = arith.constant 0 : index
    %407 = vector.load %arg1[%c0_100, %c0_101] : memref<8x16xf32, #tpu.memory_space<vmem>>, vector<8x16xf32>
    %cst_102 = arith.constant 5.000000e-01 : f32
    %408 = vector.broadcast %cst_102 : f32 to vector<8x16xf32>
    %409 = arith.mulf %408, %406 : vector<8x16xf32>
    %410 = math.exp %409 : vector<8x16xf32>
    %411 = arith.mulf %407, %410 : vector<8x16xf32>
    %412 = arith.addf %405, %411 : vector<8x16xf32>
    %c0_103 = arith.constant 0 : index
    %c0_104 = arith.constant 0 : index
    %413 = vector.load %arg14[%c0_103, %c0_104] : memref<8x16xf32, #tpu.memory_space<vmem>>, vector<8x16xf32>
    tpu.vector_store %arg14[%c0_103, %c0_104], %405 {strides = array<i32>} : memref<8x16xf32, #tpu.memory_space<vmem>>, vector<8x16xf32>,
    %c0_105 = arith.constant 0 : index
    %c0_106 = arith.constant 0 : index
    %414 = vector.load %arg15[%c0_105, %c0_106] : memref<8x16xf32, #tpu.memory_space<vmem>>, vector<8x16xf32>
    tpu.vector_store %arg15[%c0_105, %c0_106], %406 {strides = array<i32>} : memref<8x16xf32, #tpu.memory_space<vmem>>, vector<8x16xf32>,
    %c0_107 = arith.constant 0 : index
    %c0_108 = arith.constant 0 : index
    %415 = vector.load %arg16[%c0_107, %c0_108] : memref<8x16xf32, #tpu.memory_space<vmem>>, vector<8x16xf32>
    tpu.vector_store %arg16[%c0_107, %c0_108], %412 {strides = array<i32>} : memref<8x16xf32, #tpu.memory_space<vmem>>, vector<8x16xf32>,
    %c0_109 = arith.constant 0 : index
    %c0_110 = arith.constant 0 : index
    %416 = vector.load %arg7[%c0_109, %c0_110] : memref<16x32xf32, #tpu.memory_space<vmem>>, vector<16x32xf32>
    %cst_111 = arith.constant dense<0.000000e+00> : vector<8x32xf32>
    %417 = tpu.matmul %412, %416, %cst_111 {dimension_numbers = #tpu.dot_dimension_numbers<[1], [0], [0], [1], [0, 0, 1, 1], [], []>} : vector<8x16xf32>, vector<16x32xf32>, vector<8x32xf32> -> vector<8x32xf32>
    %c0_112 = arith.constant 0 : index
    %c0_113 = arith.constant 0 : index
    %418 = vector.load %arg8[%c0_112, %c0_113] : memref<1x32xf32, #tpu.memory_space<vmem>>, vector<1x32xf32>
    %419 = vector.broadcast %418 : vector<1x32xf32> to vector<8x32xf32>
    %420 = arith.addf %417, %419 : vector<8x32xf32>
    %421 = arith.truncf %420 : vector<8x32xf32> to vector<8x32xbf16>
    %c0_114 = arith.constant 0 : index
    %c0_115 = arith.constant 0 : index
    %422 = vector.load %arg9[%c0_114, %c0_115] : memref<32x512xbf16, #tpu.memory_space<vmem>>, vector<32x512xbf16>
    %cst_116 = arith.constant dense<0.000000e+00> : vector<8x512xf32>
    %423 = tpu.matmul %421, %422, %cst_116 {dimension_numbers = #tpu.dot_dimension_numbers<[1], [0], [0], [1], [0, 0, 1, 1], [], []>} : vector<8x32xbf16>, vector<32x512xbf16>, vector<8x512xf32> -> vector<8x512xf32>
    %c0_117 = arith.constant 0 : index
    %c0_118 = arith.constant 0 : index
    %424 = vector.load %arg0[%c0_117, %c0_118] : memref<64x32xbf16, #tpu.memory_space<vmem>>, vector<64x32xbf16>
    %c0_119 = arith.constant 0 : index
    %c0_120 = arith.constant 0 : index
    %425 = vector.load %arg9[%c0_119, %c0_120] : memref<32x512xbf16, #tpu.memory_space<vmem>>, vector<32x512xbf16>
    %cst_121 = arith.constant dense<0.000000e+00> : vector<64x512xf32>
    %426 = tpu.matmul %424, %425, %cst_121 {dimension_numbers = #tpu.dot_dimension_numbers<[1], [0], [0], [1], [0, 0, 1, 1], [], []>} : vector<64x32xbf16>, vector<32x512xbf16>, vector<64x512xf32> -> vector<64x512xf32>
    %c0_122 = arith.constant 0 : index
    %c0_123 = arith.constant 0 : index
    %427 = vector.load %arg11[%c0_122, %c0_123] : memref<1x512xf32, #tpu.memory_space<vmem>>, vector<1x512xf32>
    %428 = vector.broadcast %427 : vector<1x512xf32> to vector<64x512xf32>
    %429 = arith.addf %426, %428 : vector<64x512xf32>
    %c0_124 = arith.constant 0 : index
    %c0_125 = arith.constant 0 : index
    %430 = vector.load %arg19[%c0_124, %c0_125] : memref<64x512xf32, #tpu.memory_space<vmem>>, vector<64x512xf32>
    tpu.vector_store %arg19[%c0_124, %c0_125], %429 {strides = array<i32>} : memref<64x512xf32, #tpu.memory_space<vmem>>, vector<64x512xf32>,
    %cst_126 = arith.constant 0.000000e+00 : f32
    %431 = vector.broadcast %cst_126 : f32 to vector<8x128xf32>
    %c0_i32_127 = arith.constant 0 : i32
    %c8_i32_128 = arith.constant 8 : i32
    %432 = arith.muli %c0_i32_127, %c8_i32_128 : i32
    %433 = tpu.assume_multiple %432, 8 : i32
    %434 = arith.index_cast %433 : i32 to index
    %c0_129 = arith.constant 0 : index
    %435 = vector.load %arg19[%434, %c0_129] : memref<64x512xf32, #tpu.memory_space<vmem>>, vector<8x512xf32>
    %436 = arith.addf %435, %423 : vector<8x512xf32>
    %437 = arith.truncf %431 : vector<8x128xf32> to vector<8x128xbf16>
    %c0_130 = arith.constant 0 : index
    %c0_131 = arith.constant 0 : index
    %438 = vector.load %arg10[%c0_130, %c0_131] : memref<128x512xbf16, #tpu.memory_space<vmem>>, vector<128x512xbf16>
    %cst_132 = arith.constant dense<0.000000e+00> : vector<8x512xf32>
    %439 = tpu.matmul %437, %438, %cst_132 {dimension_numbers = #tpu.dot_dimension_numbers<[1], [0], [0], [1], [0, 0, 1, 1], [], []>} : vector<8x128xbf16>, vector<128x512xbf16>, vector<8x512xf32> -> vector<8x512xf32>
    %440 = arith.addf %436, %439 : vector<8x512xf32>
    %441 = vector.extract_strided_slice %440 {offsets = [0, 0], sizes = [8, 128], strides = [1, 1]} : vector<8x512xf32> to vector<8x128xf32>
    %442 = arith.negf %441 : vector<8x128xf32>
    %443 = math.exp %442 : vector<8x128xf32>
    %cst_133 = arith.constant 1.000000e+00 : f32
    %444 = vector.broadcast %cst_133 : f32 to vector<8x128xf32>
    %445 = arith.addf %444, %443 : vector<8x128xf32>
    %446 = arith.divf %444, %445 : vector<8x128xf32>
    %447 = vector.extract_strided_slice %440 {offsets = [0, 128], sizes = [8, 128], strides = [1, 1]} : vector<8x512xf32> to vector<8x128xf32>
    %448 = arith.negf %447 : vector<8x128xf32>
    %449 = math.exp %448 : vector<8x128xf32>
    %cst_134 = arith.constant 1.000000e+00 : f32
    %450 = vector.broadcast %cst_134 : f32 to vector<8x128xf32>
    %451 = arith.addf %450, %449 : vector<8x128xf32>
    %452 = arith.divf %450, %451 : vector<8x128xf32>
    %453 = vector.extract_strided_slice %440 {offsets = [0, 256], sizes = [8, 128], strides = [1, 1]} : vector<8x512xf32> to vector<8x128xf32>
    %454 = math.tanh %453 : vector<8x128xf32>
    %455 = vector.extract_strided_slice %440 {offsets = [0, 384], sizes = [8, 128], strides = [1, 1]} : vector<8x512xf32> to vector<8x128xf32>
    %456 = arith.negf %455 : vector<8x128xf32>
    %457 = math.exp %456 : vector<8x128xf32>
    %cst_135 = arith.constant 1.000000e+00 : f32
    %458 = vector.broadcast %cst_135 : f32 to vector<8x128xf32>
    %459 = arith.addf %458, %457 : vector<8x128xf32>
    %460 = arith.divf %458, %459 : vector<8x128xf32>
    %461 = arith.mulf %452, %431 : vector<8x128xf32>
    %462 = arith.mulf %446, %454 : vector<8x128xf32>
    %463 = arith.addf %461, %462 : vector<8x128xf32>
    %464 = math.tanh %463 : vector<8x128xf32>
    %465 = arith.mulf %460, %464 : vector<8x128xf32>
    %466 = arith.index_cast %433 : i32 to index
    %c0_136 = arith.constant 0 : index
    %467 = vector.load %arg20[%466, %c0_136] : memref<64x128xf32, #tpu.memory_space<vmem>>, vector<8x128xf32>
    tpu.vector_store %arg20[%466, %c0_136], %465 {strides = array<i32>} : memref<64x128xf32, #tpu.memory_space<vmem>>, vector<8x128xf32>,
    %c1_i32_137 = arith.constant 1 : i32
    %c8_i32_138 = arith.constant 8 : i32
    %468 = arith.muli %c1_i32_137, %c8_i32_138 : i32
    %469 = tpu.assume_multiple %468, 8 : i32
    %470 = arith.index_cast %469 : i32 to index
    %c0_139 = arith.constant 0 : index
    %471 = vector.load %arg19[%470, %c0_139] : memref<64x512xf32, #tpu.memory_space<vmem>>, vector<8x512xf32>
    %472 = arith.addf %471, %423 : vector<8x512xf32>
    %473 = arith.truncf %465 : vector<8x128xf32> to vector<8x128xbf16>
    %c0_140 = arith.constant 0 : index
    %c0_141 = arith.constant 0 : index
    %474 = vector.load %arg10[%c0_140, %c0_141] : memref<128x512xbf16, #tpu.memory_space<vmem>>, vector<128x512xbf16>
    %cst_142 = arith.constant dense<0.000000e+00> : vector<8x512xf32>
    %475 = tpu.matmul %473, %474, %cst_142 {dimension_numbers = #tpu.dot_dimension_numbers<[1], [0], [0], [1], [0, 0, 1, 1], [], []>} : vector<8x128xbf16>, vector<128x512xbf16>, vector<8x512xf32> -> vector<8x512xf32>
    %476 = arith.addf %472, %475 : vector<8x512xf32>
    %477 = vector.extract_strided_slice %476 {offsets = [0, 0], sizes = [8, 128], strides = [1, 1]} : vector<8x512xf32> to vector<8x128xf32>
    %478 = arith.negf %477 : vector<8x128xf32>
    %479 = math.exp %478 : vector<8x128xf32>
    %cst_143 = arith.constant 1.000000e+00 : f32
    %480 = vector.broadcast %cst_143 : f32 to vector<8x128xf32>
    %481 = arith.addf %480, %479 : vector<8x128xf32>
    %482 = arith.divf %480, %481 : vector<8x128xf32>
    %483 = vector.extract_strided_slice %476 {offsets = [0, 128], sizes = [8, 128], strides = [1, 1]} : vector<8x512xf32> to vector<8x128xf32>
    %484 = arith.negf %483 : vector<8x128xf32>
    %485 = math.exp %484 : vector<8x128xf32>
    %cst_144 = arith.constant 1.000000e+00 : f32
    %486 = vector.broadcast %cst_144 : f32 to vector<8x128xf32>
    %487 = arith.addf %486, %485 : vector<8x128xf32>
    %488 = arith.divf %486, %487 : vector<8x128xf32>
    %489 = vector.extract_strided_slice %476 {offsets = [0, 256], sizes = [8, 128], strides = [1, 1]} : vector<8x512xf32> to vector<8x128xf32>
    %490 = math.tanh %489 : vector<8x128xf32>
    %491 = vector.extract_strided_slice %476 {offsets = [0, 384], sizes = [8, 128], strides = [1, 1]} : vector<8x512xf32> to vector<8x128xf32>
    %492 = arith.negf %491 : vector<8x128xf32>
    %493 = math.exp %492 : vector<8x128xf32>
    %cst_145 = arith.constant 1.000000e+00 : f32
    %494 = vector.broadcast %cst_145 : f32 to vector<8x128xf32>
    %495 = arith.addf %494, %493 : vector<8x128xf32>
    %496 = arith.divf %494, %495 : vector<8x128xf32>
    %497 = arith.mulf %488, %463 : vector<8x128xf32>
    %498 = arith.mulf %482, %490 : vector<8x128xf32>
    %499 = arith.addf %497, %498 : vector<8x128xf32>
    %500 = math.tanh %499 : vector<8x128xf32>
    %501 = arith.mulf %496, %500 : vector<8x128xf32>
    %502 = arith.index_cast %469 : i32 to index
    %c0_146 = arith.constant 0 : index
    %503 = vector.load %arg20[%502, %c0_146] : memref<64x128xf32, #tpu.memory_space<vmem>>, vector<8x128xf32>
    tpu.vector_store %arg20[%502, %c0_146], %501 {strides = array<i32>} : memref<64x128xf32, #tpu.memory_space<vmem>>, vector<8x128xf32>,
    %c2_i32_147 = arith.constant 2 : i32
    %c8_i32_148 = arith.constant 8 : i32
    %504 = arith.muli %c2_i32_147, %c8_i32_148 : i32
    %505 = tpu.assume_multiple %504, 8 : i32
    %506 = arith.index_cast %505 : i32 to index
    %c0_149 = arith.constant 0 : index
    %507 = vector.load %arg19[%506, %c0_149] : memref<64x512xf32, #tpu.memory_space<vmem>>, vector<8x512xf32>
    %508 = arith.addf %507, %423 : vector<8x512xf32>
    %509 = arith.truncf %501 : vector<8x128xf32> to vector<8x128xbf16>
    %c0_150 = arith.constant 0 : index
    %c0_151 = arith.constant 0 : index
    %510 = vector.load %arg10[%c0_150, %c0_151] : memref<128x512xbf16, #tpu.memory_space<vmem>>, vector<128x512xbf16>
    %cst_152 = arith.constant dense<0.000000e+00> : vector<8x512xf32>
    %511 = tpu.matmul %509, %510, %cst_152 {dimension_numbers = #tpu.dot_dimension_numbers<[1], [0], [0], [1], [0, 0, 1, 1], [], []>} : vector<8x128xbf16>, vector<128x512xbf16>, vector<8x512xf32> -> vector<8x512xf32>
    %512 = arith.addf %508, %511 : vector<8x512xf32>
    %513 = vector.extract_strided_slice %512 {offsets = [0, 0], sizes = [8, 128], strides = [1, 1]} : vector<8x512xf32> to vector<8x128xf32>
    %514 = arith.negf %513 : vector<8x128xf32>
    %515 = math.exp %514 : vector<8x128xf32>
    %cst_153 = arith.constant 1.000000e+00 : f32
    %516 = vector.broadcast %cst_153 : f32 to vector<8x128xf32>
    %517 = arith.addf %516, %515 : vector<8x128xf32>
    %518 = arith.divf %516, %517 : vector<8x128xf32>
    %519 = vector.extract_strided_slice %512 {offsets = [0, 128], sizes = [8, 128], strides = [1, 1]} : vector<8x512xf32> to vector<8x128xf32>
    %520 = arith.negf %519 : vector<8x128xf32>
    %521 = math.exp %520 : vector<8x128xf32>
    %cst_154 = arith.constant 1.000000e+00 : f32
    %522 = vector.broadcast %cst_154 : f32 to vector<8x128xf32>
    %523 = arith.addf %522, %521 : vector<8x128xf32>
    %524 = arith.divf %522, %523 : vector<8x128xf32>
    %525 = vector.extract_strided_slice %512 {offsets = [0, 256], sizes = [8, 128], strides = [1, 1]} : vector<8x512xf32> to vector<8x128xf32>
    %526 = math.tanh %525 : vector<8x128xf32>
    %527 = vector.extract_strided_slice %512 {offsets = [0, 384], sizes = [8, 128], strides = [1, 1]} : vector<8x512xf32> to vector<8x128xf32>
    %528 = arith.negf %527 : vector<8x128xf32>
    %529 = math.exp %528 : vector<8x128xf32>
    %cst_155 = arith.constant 1.000000e+00 : f32
    %530 = vector.broadcast %cst_155 : f32 to vector<8x128xf32>
    %531 = arith.addf %530, %529 : vector<8x128xf32>
    %532 = arith.divf %530, %531 : vector<8x128xf32>
    %533 = arith.mulf %524, %499 : vector<8x128xf32>
    %534 = arith.mulf %518, %526 : vector<8x128xf32>
    %535 = arith.addf %533, %534 : vector<8x128xf32>
    %536 = math.tanh %535 : vector<8x128xf32>
    %537 = arith.mulf %532, %536 : vector<8x128xf32>
    %538 = arith.index_cast %505 : i32 to index
    %c0_156 = arith.constant 0 : index
    %539 = vector.load %arg20[%538, %c0_156] : memref<64x128xf32, #tpu.memory_space<vmem>>, vector<8x128xf32>
    tpu.vector_store %arg20[%538, %c0_156], %537 {strides = array<i32>} : memref<64x128xf32, #tpu.memory_space<vmem>>, vector<8x128xf32>,
    %c3_i32_157 = arith.constant 3 : i32
    %c8_i32_158 = arith.constant 8 : i32
    %540 = arith.muli %c3_i32_157, %c8_i32_158 : i32
    %541 = tpu.assume_multiple %540, 8 : i32
    %542 = arith.index_cast %541 : i32 to index
    %c0_159 = arith.constant 0 : index
    %543 = vector.load %arg19[%542, %c0_159] : memref<64x512xf32, #tpu.memory_space<vmem>>, vector<8x512xf32>
    %544 = arith.addf %543, %423 : vector<8x512xf32>
    %545 = arith.truncf %537 : vector<8x128xf32> to vector<8x128xbf16>
    %c0_160 = arith.constant 0 : index
    %c0_161 = arith.constant 0 : index
    %546 = vector.load %arg10[%c0_160, %c0_161] : memref<128x512xbf16, #tpu.memory_space<vmem>>, vector<128x512xbf16>
    %cst_162 = arith.constant dense<0.000000e+00> : vector<8x512xf32>
    %547 = tpu.matmul %545, %546, %cst_162 {dimension_numbers = #tpu.dot_dimension_numbers<[1], [0], [0], [1], [0, 0, 1, 1], [], []>} : vector<8x128xbf16>, vector<128x512xbf16>, vector<8x512xf32> -> vector<8x512xf32>
    %548 = arith.addf %544, %547 : vector<8x512xf32>
    %549 = vector.extract_strided_slice %548 {offsets = [0, 0], sizes = [8, 128], strides = [1, 1]} : vector<8x512xf32> to vector<8x128xf32>
    %550 = arith.negf %549 : vector<8x128xf32>
    %551 = math.exp %550 : vector<8x128xf32>
    %cst_163 = arith.constant 1.000000e+00 : f32
    %552 = vector.broadcast %cst_163 : f32 to vector<8x128xf32>
    %553 = arith.addf %552, %551 : vector<8x128xf32>
    %554 = arith.divf %552, %553 : vector<8x128xf32>
    %555 = vector.extract_strided_slice %548 {offsets = [0, 128], sizes = [8, 128], strides = [1, 1]} : vector<8x512xf32> to vector<8x128xf32>
    %556 = arith.negf %555 : vector<8x128xf32>
    %557 = math.exp %556 : vector<8x128xf32>
    %cst_164 = arith.constant 1.000000e+00 : f32
    %558 = vector.broadcast %cst_164 : f32 to vector<8x128xf32>
    %559 = arith.addf %558, %557 : vector<8x128xf32>
    %560 = arith.divf %558, %559 : vector<8x128xf32>
    %561 = vector.extract_strided_slice %548 {offsets = [0, 256], sizes = [8, 128], strides = [1, 1]} : vector<8x512xf32> to vector<8x128xf32>
    %562 = math.tanh %561 : vector<8x128xf32>
    %563 = vector.extract_strided_slice %548 {offsets = [0, 384], sizes = [8, 128], strides = [1, 1]} : vector<8x512xf32> to vector<8x128xf32>
    %564 = arith.negf %563 : vector<8x128xf32>
    %565 = math.exp %564 : vector<8x128xf32>
    %cst_165 = arith.constant 1.000000e+00 : f32
    %566 = vector.broadcast %cst_165 : f32 to vector<8x128xf32>
    %567 = arith.addf %566, %565 : vector<8x128xf32>
    %568 = arith.divf %566, %567 : vector<8x128xf32>
    %569 = arith.mulf %560, %535 : vector<8x128xf32>
    %570 = arith.mulf %554, %562 : vector<8x128xf32>
    %571 = arith.addf %569, %570 : vector<8x128xf32>
    %572 = math.tanh %571 : vector<8x128xf32>
    %573 = arith.mulf %568, %572 : vector<8x128xf32>
    %574 = arith.index_cast %541 : i32 to index
    %c0_166 = arith.constant 0 : index
    %575 = vector.load %arg20[%574, %c0_166] : memref<64x128xf32, #tpu.memory_space<vmem>>, vector<8x128xf32>
    tpu.vector_store %arg20[%574, %c0_166], %573 {strides = array<i32>} : memref<64x128xf32, #tpu.memory_space<vmem>>, vector<8x128xf32>,
    %c4_i32_167 = arith.constant 4 : i32
    %c8_i32_168 = arith.constant 8 : i32
    %576 = arith.muli %c4_i32_167, %c8_i32_168 : i32
    %577 = tpu.assume_multiple %576, 8 : i32
    %578 = arith.index_cast %577 : i32 to index
    %c0_169 = arith.constant 0 : index
    %579 = vector.load %arg19[%578, %c0_169] : memref<64x512xf32, #tpu.memory_space<vmem>>, vector<8x512xf32>
    %580 = arith.addf %579, %423 : vector<8x512xf32>
    %581 = arith.truncf %573 : vector<8x128xf32> to vector<8x128xbf16>
    %c0_170 = arith.constant 0 : index
    %c0_171 = arith.constant 0 : index
    %582 = vector.load %arg10[%c0_170, %c0_171] : memref<128x512xbf16, #tpu.memory_space<vmem>>, vector<128x512xbf16>
    %cst_172 = arith.constant dense<0.000000e+00> : vector<8x512xf32>
    %583 = tpu.matmul %581, %582, %cst_172 {dimension_numbers = #tpu.dot_dimension_numbers<[1], [0], [0], [1], [0, 0, 1, 1], [], []>} : vector<8x128xbf16>, vector<128x512xbf16>, vector<8x512xf32> -> vector<8x512xf32>
    %584 = arith.addf %580, %583 : vector<8x512xf32>
    %585 = vector.extract_strided_slice %584 {offsets = [0, 0], sizes = [8, 128], strides = [1, 1]} : vector<8x512xf32> to vector<8x128xf32>
    %586 = arith.negf %585 : vector<8x128xf32>
    %587 = math.exp %586 : vector<8x128xf32>
    %cst_173 = arith.constant 1.000000e+00 : f32
    %588 = vector.broadcast %cst_173 : f32 to vector<8x128xf32>
    %589 = arith.addf %588, %587 : vector<8x128xf32>
    %590 = arith.divf %588, %589 : vector<8x128xf32>
    %591 = vector.extract_strided_slice %584 {offsets = [0, 128], sizes = [8, 128], strides = [1, 1]} : vector<8x512xf32> to vector<8x128xf32>
    %592 = arith.negf %591 : vector<8x128xf32>
    %593 = math.exp %592 : vector<8x128xf32>
    %cst_174 = arith.constant 1.000000e+00 : f32
    %594 = vector.broadcast %cst_174 : f32 to vector<8x128xf32>
    %595 = arith.addf %594, %593 : vector<8x128xf32>
    %596 = arith.divf %594, %595 : vector<8x128xf32>
    %597 = vector.extract_strided_slice %584 {offsets = [0, 256], sizes = [8, 128], strides = [1, 1]} : vector<8x512xf32> to vector<8x128xf32>
    %598 = math.tanh %597 : vector<8x128xf32>
    %599 = vector.extract_strided_slice %584 {offsets = [0, 384], sizes = [8, 128], strides = [1, 1]} : vector<8x512xf32> to vector<8x128xf32>
    %600 = arith.negf %599 : vector<8x128xf32>
    %601 = math.exp %600 : vector<8x128xf32>
    %cst_175 = arith.constant 1.000000e+00 : f32
    %602 = vector.broadcast %cst_175 : f32 to vector<8x128xf32>
    %603 = arith.addf %602, %601 : vector<8x128xf32>
    %604 = arith.divf %602, %603 : vector<8x128xf32>
    %605 = arith.mulf %596, %571 : vector<8x128xf32>
    %606 = arith.mulf %590, %598 : vector<8x128xf32>
    %607 = arith.addf %605, %606 : vector<8x128xf32>
    %608 = math.tanh %607 : vector<8x128xf32>
    %609 = arith.mulf %604, %608 : vector<8x128xf32>
    %610 = arith.index_cast %577 : i32 to index
    %c0_176 = arith.constant 0 : index
    %611 = vector.load %arg20[%610, %c0_176] : memref<64x128xf32, #tpu.memory_space<vmem>>, vector<8x128xf32>
    tpu.vector_store %arg20[%610, %c0_176], %609 {strides = array<i32>} : memref<64x128xf32, #tpu.memory_space<vmem>>, vector<8x128xf32>,
    %c5_i32_177 = arith.constant 5 : i32
    %c8_i32_178 = arith.constant 8 : i32
    %612 = arith.muli %c5_i32_177, %c8_i32_178 : i32
    %613 = tpu.assume_multiple %612, 8 : i32
    %614 = arith.index_cast %613 : i32 to index
    %c0_179 = arith.constant 0 : index
    %615 = vector.load %arg19[%614, %c0_179] : memref<64x512xf32, #tpu.memory_space<vmem>>, vector<8x512xf32>
    %616 = arith.addf %615, %423 : vector<8x512xf32>
    %617 = arith.truncf %609 : vector<8x128xf32> to vector<8x128xbf16>
    %c0_180 = arith.constant 0 : index
    %c0_181 = arith.constant 0 : index
    %618 = vector.load %arg10[%c0_180, %c0_181] : memref<128x512xbf16, #tpu.memory_space<vmem>>, vector<128x512xbf16>
    %cst_182 = arith.constant dense<0.000000e+00> : vector<8x512xf32>
    %619 = tpu.matmul %617, %618, %cst_182 {dimension_numbers = #tpu.dot_dimension_numbers<[1], [0], [0], [1], [0, 0, 1, 1], [], []>} : vector<8x128xbf16>, vector<128x512xbf16>, vector<8x512xf32> -> vector<8x512xf32>
    %620 = arith.addf %616, %619 : vector<8x512xf32>
    %621 = vector.extract_strided_slice %620 {offsets = [0, 0], sizes = [8, 128], strides = [1, 1]} : vector<8x512xf32> to vector<8x128xf32>
    %622 = arith.negf %621 : vector<8x128xf32>
    %623 = math.exp %622 : vector<8x128xf32>
    %cst_183 = arith.constant 1.000000e+00 : f32
    %624 = vector.broadcast %cst_183 : f32 to vector<8x128xf32>
    %625 = arith.addf %624, %623 : vector<8x128xf32>
    %626 = arith.divf %624, %625 : vector<8x128xf32>
    %627 = vector.extract_strided_slice %620 {offsets = [0, 128], sizes = [8, 128], strides = [1, 1]} : vector<8x512xf32> to vector<8x128xf32>
    %628 = arith.negf %627 : vector<8x128xf32>
    %629 = math.exp %628 : vector<8x128xf32>
    %cst_184 = arith.constant 1.000000e+00 : f32
    %630 = vector.broadcast %cst_184 : f32 to vector<8x128xf32>
    %631 = arith.addf %630, %629 : vector<8x128xf32>
    %632 = arith.divf %630, %631 : vector<8x128xf32>
    %633 = vector.extract_strided_slice %620 {offsets = [0, 256], sizes = [8, 128], strides = [1, 1]} : vector<8x512xf32> to vector<8x128xf32>
    %634 = math.tanh %633 : vector<8x128xf32>
    %635 = vector.extract_strided_slice %620 {offsets = [0, 384], sizes = [8, 128], strides = [1, 1]} : vector<8x512xf32> to vector<8x128xf32>
    %636 = arith.negf %635 : vector<8x128xf32>
    %637 = math.exp %636 : vector<8x128xf32>
    %cst_185 = arith.constant 1.000000e+00 : f32
    %638 = vector.broadcast %cst_185 : f32 to vector<8x128xf32>
    %639 = arith.addf %638, %637 : vector<8x128xf32>
    %640 = arith.divf %638, %639 : vector<8x128xf32>
    %641 = arith.mulf %632, %607 : vector<8x128xf32>
    %642 = arith.mulf %626, %634 : vector<8x128xf32>
    %643 = arith.addf %641, %642 : vector<8x128xf32>
    %644 = math.tanh %643 : vector<8x128xf32>
    %645 = arith.mulf %640, %644 : vector<8x128xf32>
    %646 = arith.index_cast %613 : i32 to index
    %c0_186 = arith.constant 0 : index
    %647 = vector.load %arg20[%646, %c0_186] : memref<64x128xf32, #tpu.memory_space<vmem>>, vector<8x128xf32>
    tpu.vector_store %arg20[%646, %c0_186], %645 {strides = array<i32>} : memref<64x128xf32, #tpu.memory_space<vmem>>, vector<8x128xf32>,
    %c6_i32_187 = arith.constant 6 : i32
    %c8_i32_188 = arith.constant 8 : i32
    %648 = arith.muli %c6_i32_187, %c8_i32_188 : i32
    %649 = tpu.assume_multiple %648, 8 : i32
    %650 = arith.index_cast %649 : i32 to index
    %c0_189 = arith.constant 0 : index
    %651 = vector.load %arg19[%650, %c0_189] : memref<64x512xf32, #tpu.memory_space<vmem>>, vector<8x512xf32>
    %652 = arith.addf %651, %423 : vector<8x512xf32>
    %653 = arith.truncf %645 : vector<8x128xf32> to vector<8x128xbf16>
    %c0_190 = arith.constant 0 : index
    %c0_191 = arith.constant 0 : index
    %654 = vector.load %arg10[%c0_190, %c0_191] : memref<128x512xbf16, #tpu.memory_space<vmem>>, vector<128x512xbf16>
    %cst_192 = arith.constant dense<0.000000e+00> : vector<8x512xf32>
    %655 = tpu.matmul %653, %654, %cst_192 {dimension_numbers = #tpu.dot_dimension_numbers<[1], [0], [0], [1], [0, 0, 1, 1], [], []>} : vector<8x128xbf16>, vector<128x512xbf16>, vector<8x512xf32> -> vector<8x512xf32>
    %656 = arith.addf %652, %655 : vector<8x512xf32>
    %657 = vector.extract_strided_slice %656 {offsets = [0, 0], sizes = [8, 128], strides = [1, 1]} : vector<8x512xf32> to vector<8x128xf32>
    %658 = arith.negf %657 : vector<8x128xf32>
    %659 = math.exp %658 : vector<8x128xf32>
    %cst_193 = arith.constant 1.000000e+00 : f32
    %660 = vector.broadcast %cst_193 : f32 to vector<8x128xf32>
    %661 = arith.addf %660, %659 : vector<8x128xf32>
    %662 = arith.divf %660, %661 : vector<8x128xf32>
    %663 = vector.extract_strided_slice %656 {offsets = [0, 128], sizes = [8, 128], strides = [1, 1]} : vector<8x512xf32> to vector<8x128xf32>
    %664 = arith.negf %663 : vector<8x128xf32>
    %665 = math.exp %664 : vector<8x128xf32>
    %cst_194 = arith.constant 1.000000e+00 : f32
    %666 = vector.broadcast %cst_194 : f32 to vector<8x128xf32>
    %667 = arith.addf %666, %665 : vector<8x128xf32>
    %668 = arith.divf %666, %667 : vector<8x128xf32>
    %669 = vector.extract_strided_slice %656 {offsets = [0, 256], sizes = [8, 128], strides = [1, 1]} : vector<8x512xf32> to vector<8x128xf32>
    %670 = math.tanh %669 : vector<8x128xf32>
    %671 = vector.extract_strided_slice %656 {offsets = [0, 384], sizes = [8, 128], strides = [1, 1]} : vector<8x512xf32> to vector<8x128xf32>
    %672 = arith.negf %671 : vector<8x128xf32>
    %673 = math.exp %672 : vector<8x128xf32>
    %cst_195 = arith.constant 1.000000e+00 : f32
    %674 = vector.broadcast %cst_195 : f32 to vector<8x128xf32>
    %675 = arith.addf %674, %673 : vector<8x128xf32>
    %676 = arith.divf %674, %675 : vector<8x128xf32>
    %677 = arith.mulf %668, %643 : vector<8x128xf32>
    %678 = arith.mulf %662, %670 : vector<8x128xf32>
    %679 = arith.addf %677, %678 : vector<8x128xf32>
    %680 = math.tanh %679 : vector<8x128xf32>
    %681 = arith.mulf %676, %680 : vector<8x128xf32>
    %682 = arith.index_cast %649 : i32 to index
    %c0_196 = arith.constant 0 : index
    %683 = vector.load %arg20[%682, %c0_196] : memref<64x128xf32, #tpu.memory_space<vmem>>, vector<8x128xf32>
    tpu.vector_store %arg20[%682, %c0_196], %681 {strides = array<i32>} : memref<64x128xf32, #tpu.memory_space<vmem>>, vector<8x128xf32>,
    %c7_i32_197 = arith.constant 7 : i32
    %c8_i32_198 = arith.constant 8 : i32
    %684 = arith.muli %c7_i32_197, %c8_i32_198 : i32
    %685 = tpu.assume_multiple %684, 8 : i32
    %686 = arith.index_cast %685 : i32 to index
    %c0_199 = arith.constant 0 : index
    %687 = vector.load %arg19[%686, %c0_199] : memref<64x512xf32, #tpu.memory_space<vmem>>, vector<8x512xf32>
    %688 = arith.addf %687, %423 : vector<8x512xf32>
    %689 = arith.truncf %681 : vector<8x128xf32> to vector<8x128xbf16>
    %c0_200 = arith.constant 0 : index
    %c0_201 = arith.constant 0 : index
    %690 = vector.load %arg10[%c0_200, %c0_201] : memref<128x512xbf16, #tpu.memory_space<vmem>>, vector<128x512xbf16>
    %cst_202 = arith.constant dense<0.000000e+00> : vector<8x512xf32>
    %691 = tpu.matmul %689, %690, %cst_202 {dimension_numbers = #tpu.dot_dimension_numbers<[1], [0], [0], [1], [0, 0, 1, 1], [], []>} : vector<8x128xbf16>, vector<128x512xbf16>, vector<8x512xf32> -> vector<8x512xf32>
    %692 = arith.addf %688, %691 : vector<8x512xf32>
    %693 = vector.extract_strided_slice %692 {offsets = [0, 0], sizes = [8, 128], strides = [1, 1]} : vector<8x512xf32> to vector<8x128xf32>
    %694 = arith.negf %693 : vector<8x128xf32>
    %695 = math.exp %694 : vector<8x128xf32>
    %cst_203 = arith.constant 1.000000e+00 : f32
    %696 = vector.broadcast %cst_203 : f32 to vector<8x128xf32>
    %697 = arith.addf %696, %695 : vector<8x128xf32>
    %698 = arith.divf %696, %697 : vector<8x128xf32>
    %699 = vector.extract_strided_slice %692 {offsets = [0, 128], sizes = [8, 128], strides = [1, 1]} : vector<8x512xf32> to vector<8x128xf32>
    %700 = arith.negf %699 : vector<8x128xf32>
    %701 = math.exp %700 : vector<8x128xf32>
    %cst_204 = arith.constant 1.000000e+00 : f32
    %702 = vector.broadcast %cst_204 : f32 to vector<8x128xf32>
    %703 = arith.addf %702, %701 : vector<8x128xf32>
    %704 = arith.divf %702, %703 : vector<8x128xf32>
    %705 = vector.extract_strided_slice %692 {offsets = [0, 256], sizes = [8, 128], strides = [1, 1]} : vector<8x512xf32> to vector<8x128xf32>
    %706 = math.tanh %705 : vector<8x128xf32>
    %707 = vector.extract_strided_slice %692 {offsets = [0, 384], sizes = [8, 128], strides = [1, 1]} : vector<8x512xf32> to vector<8x128xf32>
    %708 = arith.negf %707 : vector<8x128xf32>
    %709 = math.exp %708 : vector<8x128xf32>
    %cst_205 = arith.constant 1.000000e+00 : f32
    %710 = vector.broadcast %cst_205 : f32 to vector<8x128xf32>
    %711 = arith.addf %710, %709 : vector<8x128xf32>
    %712 = arith.divf %710, %711 : vector<8x128xf32>
    %713 = arith.mulf %704, %679 : vector<8x128xf32>
    %714 = arith.mulf %698, %706 : vector<8x128xf32>
    %715 = arith.addf %713, %714 : vector<8x128xf32>
    %716 = math.tanh %715 : vector<8x128xf32>
    %717 = arith.mulf %712, %716 : vector<8x128xf32>
    %718 = arith.index_cast %685 : i32 to index
    %c0_206 = arith.constant 0 : index
    %719 = vector.load %arg20[%718, %c0_206] : memref<64x128xf32, #tpu.memory_space<vmem>>, vector<8x128xf32>
    tpu.vector_store %arg20[%718, %c0_206], %717 {strides = array<i32>} : memref<64x128xf32, #tpu.memory_space<vmem>>, vector<8x128xf32>,
    %c8_i32_207 = arith.constant 8 : i32
    %c0_208 = arith.constant 0 : index
    %c0_209 = arith.constant 0 : index
    %720 = vector.load %arg20[%c0_208, %c0_209] : memref<64x128xf32, #tpu.memory_space<vmem>>, vector<64x128xf32>
    %721 = arith.truncf %720 : vector<64x128xf32> to vector<64x128xbf16>
    %c0_210 = arith.constant 0 : index
    %c0_211 = arith.constant 0 : index
    %722 = vector.load %arg12[%c0_210, %c0_211] : memref<128x128xbf16, #tpu.memory_space<vmem>>, vector<128x128xbf16>
    %cst_212 = arith.constant dense<0.000000e+00> : vector<64x128xf32>
    %723 = tpu.matmul %721, %722, %cst_212 {dimension_numbers = #tpu.dot_dimension_numbers<[1], [0], [0], [1], [0, 0, 1, 1], [], []>} : vector<64x128xbf16>, vector<128x128xbf16>, vector<64x128xf32> -> vector<64x128xf32>
    %c0_213 = arith.constant 0 : index
    %c0_214 = arith.constant 0 : index
    %724 = vector.load %arg13[%c0_213, %c0_214] : memref<1x128xf32, #tpu.memory_space<vmem>>, vector<1x128xf32>
    %725 = vector.broadcast %724 : vector<1x128xf32> to vector<64x128xf32>
    %726 = arith.addf %723, %725 : vector<64x128xf32>
    %c0_215 = arith.constant 0 : index
    %c0_216 = arith.constant 0 : index
    %727 = vector.load %arg17[%c0_215, %c0_216] : memref<64x128xf32, #tpu.memory_space<vmem>>, vector<64x128xf32>
    tpu.vector_store %arg17[%c0_215, %c0_216], %726 {strides = array<i32>} : memref<64x128xf32, #tpu.memory_space<vmem>>, vector<64x128xf32>,
    return
  }
}

</mosaic_0001>

<llo_original>
// kernel: dae_forward.1
$region0: #{dae_forward.1}
  #allocation0 [shape = 'u32[]', space=smem, size = 0x4, offset = 0x4, fixed_abs, tag = 'smem constant byte address 0x4 - core index']
  #allocation1 [shape = 'u32[144,128]{1,0:T(1,128)}', space=vmem, size = 0x12000, scoped, tag = 'internal scratch']
  #allocation2 [shape = 'f32[64,1024]{1,0:T(8,128)}', space=vmem, size = 0x40000, scoped, tag = 'scratch operand']
  #allocation3 [shape = 'f32[64,512]{1,0:T(8,128)}', space=vmem, size = 0x20000, scoped, tag = 'scratch operand']
  #allocation4 [shape = 'f32[64,128]{1,0:T(8,128)}', space=vmem, size = 0x8000, scoped, tag = 'scratch operand']
  %s0 = inlined_call_operand.vmem [shape: bf16[64,32], index: 0, kind: input, shape index: {}]
  %s1 = inlined_call_operand.vmem [shape: f32[8,16], index: 1, kind: input, shape index: {}]
  %s2 = inlined_call_operand.vmem [shape: bf16[32,1024], index: 2, kind: input, shape index: {}]
  %s3 = inlined_call_operand.hbm [shape: bf16[256,1024], index: 3, kind: input, shape index: {}]
  %s4 = inlined_call_operand.hbm [shape: f32[1,1024], index: 4, kind: input, shape index: {}]
  %s5 = inlined_call_operand.vmem [shape: f32[256,32], index: 5, kind: input, shape index: {}]
  %s6 = inlined_call_operand.vmem [shape: f32[1,32], index: 6, kind: input, shape index: {}]
  %s7 = inlined_call_operand.vmem [shape: f32[16,32], index: 7, kind: input, shape index: {}]
  %s8 = inlined_call_operand.vmem [shape: f32[1,32], index: 8, kind: input, shape index: {}]
  %s9 = inlined_call_operand.vmem [shape: bf16[32,512], index: 9, kind: input, shape index: {}]
  %s10 = inlined_call_operand.vmem [shape: bf16[128,512], index: 10, kind: input, shape index: {}]
  %s11 = inlined_call_operand.vmem [shape: f32[1,512], index: 11, kind: input, shape index: {}]
  %s12 = inlined_call_operand.vmem [shape: bf16[128,128], index: 12, kind: input, shape index: {}]
  %s13 = inlined_call_operand.vmem [shape: f32[1,128], index: 13, kind: input, shape index: {}]
  %s14 = inlined_call_operand.vmem [shape: f32[8,16], index: 14, kind: output, shape index: {0}]
  %s15 = inlined_call_operand.vmem [shape: f32[8,16], index: 15, kind: output, shape index: {1}]
  %s16 = inlined_call_operand.vmem [shape: f32[8,16], index: 16, kind: output, shape index: {2}]
  %s17 = inlined_call_operand.vmem [shape: f32[64,128], index: 17, kind: output, shape index: {3}]
  %18 = xla_tuple %s14, %s15, %s16, %s17
  %s19 = sld [smem:[#allocation0]]
  $region98: #{dae_forward.1} parent=0
    _
  %s21 = ssub.s32 1, %s19
  %s22 = scalar_select 0, %s21, %s19
  $region1: #{dae_forward.1} parent=0
    #allocation5 [shape = 'u8[524288]{0}', space=vmem, size = 0x80000, scoped, tag = 'input window, operand 3, single buffered']
    #allocation6 [shape = 's32[1]{0}', space=sflag, size = 0x4, scoped, tag = 'scoped memory for dae_forward.1']
    #allocation7 [shape = 'u8[4096]{0}', space=vmem, size = 0x1000, scoped, tag = 'input window, operand 4, single buffered']
    #allocation8 [shape = 's32[1]{0}', space=sflag, size = 0x4, scoped, tag = 'scoped memory for dae_forward.1']
    %23 = vsyncpa [#allocation6], 0
    %24 = vsyncpa [#allocation8], 0
    // Predicated region
    $region2: #{dae_forward.1} parent=1 // pred_check
      _
    $region3: #{dae_forward.1} parent=1 // pred_check_branch
      %26 = sbr.rel (0) target = $region5
    $region4: #{dae_forward.1} parent=1 // pred_region
      _
    $region5: #{dae_forward.1} parent=1 // pred_fallthru
      _
    // Predicated region
    $region6: #{dae_forward.1} parent=1 // pred_check
      _
    $region7: #{dae_forward.1} parent=1 // pred_check_branch
      %28 = sbr.rel (0) target = $region9
    $region8: #{dae_forward.1} parent=1 // pred_region
      _
    $region9: #{dae_forward.1} parent=1 // pred_fallthru
      _
    // Predicated region
    $region10: #{dae_forward.1} parent=1 // pred_check
      _
    $region11: #{dae_forward.1} parent=1 // pred_check_branch
      %30 = sbr.rel (0) target = $region13
    $region12: #{dae_forward.1} parent=1 // pred_region
      _
    $region13: #{dae_forward.1} parent=1 // pred_fallthru
      _
    // Predicated region
    $region14: #{dae_forward.1} parent=1 // pred_check
      _
    $region15: #{dae_forward.1} parent=1 // pred_check_branch
      %32 = sbr.rel (0) target = $region17
    $region16: #{dae_forward.1} parent=1 // pred_region
      %s34 = ssub.s32 16384, 16384
      %35 = vsyncadd [#allocation6], %s34
      %s36 = sshll.u32 [#allocation5], 4
      %s37 = int_to_ptr.vmem [resolvable:$true] %s36
      %42 = dma.hbm_to_vmem [thread:$0]  %s3, 16384, %s37, [#allocation6], 512, 512, 32
    $region17: #{dae_forward.1} parent=1 // pred_fallthru
      _
    // Predicated region
    $region18: #{dae_forward.1} parent=1 // pred_check
      _
    $region19: #{dae_forward.1} parent=1 // pred_check_branch
      %44 = sbr.rel (0) target = $region21
    $region20: #{dae_forward.1} parent=1 // pred_region
      %s46 = ssub.s32 128, 128
      %47 = vsyncadd [#allocation8], %s46
      %s49 = sshll.u32 [#allocation7], 4
      %s50 = int_to_ptr.vmem [resolvable:$true] %s49
      %52 = dma.hbm_to_vmem [thread:$0]  %s4, 128, %s50, [#allocation8]
    $region21: #{dae_forward.1} parent=1 // pred_fallthru
      _
    // Predicated region
    $region22: #{dae_forward.1} parent=1 // pred_check
      _
    $region23: #{dae_forward.1} parent=1 // pred_check_branch
      %54 = sbr.rel (0) target = $region25
    $region24: #{dae_forward.1} parent=1 // pred_region
      _
    $region25: #{dae_forward.1} parent=1 // pred_fallthru
      _
    // Predicated region
    $region26: #{dae_forward.1} parent=1 // pred_check
      _
    $region27: #{dae_forward.1} parent=1 // pred_check_branch
      %56 = sbr.rel (0) target = $region29
    $region28: #{dae_forward.1} parent=1 // pred_region
      _
    $region29: #{dae_forward.1} parent=1 // pred_fallthru
      _
    // Predicated region
    $region30: #{dae_forward.1} parent=1 // pred_check
      _
    $region31: #{dae_forward.1} parent=1 // pred_check_branch
      %58 = sbr.rel (0) target = $region33
    $region32: #{dae_forward.1} parent=1 // pred_region
      _
    $region33: #{dae_forward.1} parent=1 // pred_fallthru
      _
    // Predicated region
    $region34: #{dae_forward.1} parent=1 // pred_check
      _
    $region35: #{dae_forward.1} parent=1 // pred_check_branch
      %60 = sbr.rel (0) target = $region37
    $region36: #{dae_forward.1} parent=1 // pred_region
      _
    $region37: #{dae_forward.1} parent=1 // pred_fallthru
      _
    // Predicated region
    $region38: #{dae_forward.1} parent=1 // pred_check
      _
    $region39: #{dae_forward.1} parent=1 // pred_check_branch
      %62 = sbr.rel (0) target = $region41
    $region40: #{dae_forward.1} parent=1 // pred_region
      _
    $region41: #{dae_forward.1} parent=1 // pred_fallthru
      _
    // Predicated region
    $region42: #{dae_forward.1} parent=1 // pred_check
      _
    $region43: #{dae_forward.1} parent=1 // pred_check_branch
      %64 = sbr.rel (0) target = $region45
    $region44: #{dae_forward.1} parent=1 // pred_region
      _
    $region45: #{dae_forward.1} parent=1 // pred_fallthru
      _
    // Predicated region
    $region46: #{dae_forward.1} parent=1 // pred_check
      _
    $region47: #{dae_forward.1} parent=1 // pred_check_branch
      %66 = sbr.rel (0) target = $region49
    $region48: #{dae_forward.1} parent=1 // pred_region
      _
    $region49: #{dae_forward.1} parent=1 // pred_fallthru
      _
    // Predicated region
    $region50: #{dae_forward.1} parent=1 // pred_check
      _
    $region51: #{dae_forward.1} parent=1 // pred_check_branch
      %68 = sbr.rel (0) target = $region53
    $region52: #{dae_forward.1} parent=1 // pred_region
      _
    $region53: #{dae_forward.1} parent=1 // pred_fallthru
      _
    // Predicated region
    $region54: #{dae_forward.1} parent=1 // pred_check
      _
    $region55: #{dae_forward.1} parent=1 // pred_check_branch
      %70 = sbr.rel (0) target = $region57
    $region56: #{dae_forward.1} parent=1 // pred_region
      _
    $region57: #{dae_forward.1} parent=1 // pred_fallthru
      _
    // Predicated region
    $region58: #{dae_forward.1} parent=1 // pred_check
      _
    $region59: #{dae_forward.1} parent=1 // pred_check_branch
      %72 = sbr.rel (0) target = $region61
    $region60: #{dae_forward.1} parent=1 // pred_region
      %73 = dma.done [#allocation6], 16384
    $region61: #{dae_forward.1} parent=1 // pred_fallthru
      _
    // Predicated region
    $region62: #{dae_forward.1} parent=1 // pred_check
      _
    $region63: #{dae_forward.1} parent=1 // pred_check_branch
      %75 = sbr.rel (0) target = $region65
    $region64: #{dae_forward.1} parent=1 // pred_region
      %76 = dma.done [#allocation8], 128
    $region65: #{dae_forward.1} parent=1 // pred_fallthru
      _
    %v78 = vld [vmem:[%s0] sm:$0xf]
    %v79 = vld [vmem:[%s0 + $0x4] sm:$0xf]
    %v80 = vld [vmem:[%s0 + $0x8] sm:$0xf]
    %v81 = vld [vmem:[%s0 + $0xc] sm:$0xf]
    %v82 = vld [vmem:[%s0 + $0x10] sm:$0xf]
    %v83 = vld [vmem:[%s0 + $0x14] sm:$0xf]
    %v84 = vld [vmem:[%s0 + $0x18] sm:$0xf]
    %v85 = vld [vmem:[%s0 + $0x1c] sm:$0xf]
    %v86 = vld [vmem:[%s2] sm:$0xff]
    %v87 = vld [vmem:[%s2 + $0x8] sm:$0xff]
    %v88 = vld [vmem:[%s2 + $0x10] sm:$0xff]
    %v89 = vld [vmem:[%s2 + $0x18] sm:$0xff]
    %v90 = vld [vmem:[%s2 + $0x20] sm:$0xff]
    %v91 = vld [vmem:[%s2 + $0x28] sm:$0xff]
    %v92 = vld [vmem:[%s2 + $0x30] sm:$0xff]
    %v93 = vld [vmem:[%s2 + $0x38] sm:$0xff]
    %v94 = vld [vmem:[%s2 + $0x40] sm:$0xff]
    %v95 = vld [vmem:[%s2 + $0x48] sm:$0xff]
    %v96 = vld [vmem:[%s2 + $0x50] sm:$0xff]
    %v97 = vld [vmem:[%s2 + $0x58] sm:$0xff]
    %v98 = vld [vmem:[%s2 + $0x60] sm:$0xff]
    %v99 = vld [vmem:[%s2 + $0x68] sm:$0xff]
    %v100 = vld [vmem:[%s2 + $0x70] sm:$0xff]
    %v101 = vld [vmem:[%s2 + $0x78] sm:$0xff]
    %v102 = vld [vmem:[#allocation7] sm:$0xff]
    %v104 = vlaneseq
    %v105 = vshrl.u32 %v104, 7
    %v106 = vsub.s32 0, %v105
    %v107 = vrot.slane %v102, %v106
    %v108 = vlaneseq
    %v109 = vshrl.u32 %v108, 7
    %v110 = vsub.s32 1, %v109
    %v111 = vrot.slane %v102, %v110
    %v112 = vlaneseq
    %v113 = vshrl.u32 %v112, 7
    %v114 = vsub.s32 2, %v113
    %v115 = vrot.slane %v102, %v114
    %v116 = vlaneseq
    %v117 = vshrl.u32 %v116, 7
    %v118 = vsub.s32 3, %v117
    %v119 = vrot.slane %v102, %v118
    %v120 = vlaneseq
    %v121 = vshrl.u32 %v120, 7
    %v122 = vsub.s32 4, %v121
    %v123 = vrot.slane %v102, %v122
    %v124 = vlaneseq
    %v125 = vshrl.u32 %v124, 7
    %v126 = vsub.s32 5, %v125
    %v127 = vrot.slane %v102, %v126
    %v128 = vlaneseq
    %v129 = vshrl.u32 %v128, 7
    %v130 = vsub.s32 6, %v129
    %v131 = vrot.slane %v102, %v130
    %v132 = vlaneseq
    %v133 = vshrl.u32 %v132, 7
    %v134 = vsub.s32 7, %v133
    %v135 = vrot.slane %v102, %v134
    %v152 = vunpack.c.l.b16 %v78
    %v153 = vunpack.c.l.b16 %v79
    %v154 = vunpack.c.l.b16 %v80
    %v155 = vunpack.c.l.b16 %v81
    %v156 = vunpack.c.l.b16 %v82
    %v157 = vunpack.c.l.b16 %v83
    %v158 = vunpack.c.l.b16 %v84
    %v159 = vunpack.c.l.b16 %v85
    %v160 = vpack.c.b16 %v153, %v152
    %v161 = vpack.c.b16 %v155, %v154
    %v162 = vpack.c.b16 %v157, %v156
    %v163 = vpack.c.b16 %v159, %v158
    %v180 = vunpack.c.l.b16 %v86
    %v181 = vunpack.c.h.b16 %v86
    %v182 = vunpack.c.l.b16 %v87
    %v183 = vunpack.c.h.b16 %v87
    %v184 = vunpack.c.l.b16 %v88
    %v185 = vunpack.c.h.b16 %v88
    %v186 = vunpack.c.l.b16 %v89
    %v187 = vunpack.c.h.b16 %v89
    %v188 = vunpack.c.l.b16 %v90
    %v189 = vunpack.c.h.b16 %v90
    %v190 = vunpack.c.l.b16 %v91
    %v191 = vunpack.c.h.b16 %v91
    %v192 = vunpack.c.l.b16 %v92
    %v193 = vunpack.c.h.b16 %v92
    %v194 = vunpack.c.l.b16 %v93
    %v195 = vunpack.c.h.b16 %v93
    %v196 = vunpack.c.l.b16 %v94
    %v197 = vunpack.c.h.b16 %v94
    %v198 = vunpack.c.l.b16 %v95
    %v199 = vunpack.c.h.b16 %v95
    %v200 = vunpack.c.l.b16 %v96
    %v201 = vunpack.c.h.b16 %v96
    %v202 = vunpack.c.l.b16 %v97
    %v203 = vunpack.c.h.b16 %v97
    %v204 = vunpack.c.l.b16 %v98
    %v205 = vunpack.c.h.b16 %v98
    %v206 = vunpack.c.l.b16 %v99
    %v207 = vunpack.c.h.b16 %v99
    %v208 = vunpack.c.l.b16 %v100
    %v209 = vunpack.c.h.b16 %v100
    %v210 = vunpack.c.l.b16 %v101
    %v211 = vunpack.c.h.b16 %v101
    %v212 = vpack.c.b16 %v188, %v180
    %v213 = vpack.c.b16 %v189, %v181
    %v214 = vpack.c.b16 %v190, %v182
    %v215 = vpack.c.b16 %v191, %v183
    %v216 = vpack.c.b16 %v192, %v184
    %v217 = vpack.c.b16 %v193, %v185
    %v218 = vpack.c.b16 %v194, %v186
    %v219 = vpack.c.b16 %v195, %v187
    %v220 = vpack.c.b16 %v204, %v196
    %v221 = vpack.c.b16 %v205, %v197
    %v222 = vpack.c.b16 %v206, %v198
    %v223 = vpack.c.b16 %v207, %v199
    %v224 = vpack.c.b16 %v208, %v200
    %v225 = vpack.c.b16 %v209, %v201
    %v226 = vpack.c.b16 %v210, %v202
    %v227 = vpack.c.b16 %v211, %v203
    %vm244 = vcmask 261120
    %v246 = vsel %vm244, %v160, 0
    %v249 = vsel %vm244, %v161, 0
    %v252 = vsel %vm244, %v162, 0
    %v255 = vsel %vm244, %v163, 0
    %257 = vmatprep.subr.bf16.mxu0 %v213
    %258 = vmatpush1.bf16.msra.mxu0 %v212
    %259 = vmatprep.subr.bf16.mxu0 %v221
    %260 = vmatpush1.bf16.msra.mxu0 %v220
    %261 = vmatprep.subr.bf16.mxu0 0
    %262 = vmatpush1.bf16.msra.mxu0 0
    %263 = vmatprep.subr.bf16.mxu0 0
    %264 = vmatpush1.bf16.msra.mxu0 0
    %265 = vmatprep.subr.bf16.mxu0 0
    %266 = vmatpush1.bf16.msra.mxu0 0
    %267 = vmatprep.subr.bf16.mxu0 0
    %268 = vmatpush1.bf16.msra.mxu0 0
    %269 = vmatprep.subr.bf16.mxu0 0
    %270 = vmatpush1.bf16.msra.mxu0 0
    %271 = vmatprep.subr.bf16.mxu0 0
    %272 = vmatpush1.bf16.msra.mxu0 0
    %273 = vmatprep.subr.bf16.mxu0 0
    %274 = vmatpush1.bf16.msra.mxu0 0
    %275 = vmatprep.subr.bf16.mxu0 0
    %276 = vmatpush1.bf16.msra.mxu0 0
    %277 = vmatprep.subr.bf16.mxu0 0
    %278 = vmatpush1.bf16.msra.mxu0 0
    %279 = vmatprep.subr.bf16.mxu0 0
    %280 = vmatpush1.bf16.msra.mxu0 0
    %281 = vmatprep.subr.bf16.mxu0 0
    %282 = vmatpush1.bf16.msra.mxu0 0
    %283 = vmatprep.subr.bf16.mxu0 0
    %284 = vmatpush1.bf16.msra.mxu0 0
    %285 = vmatprep.subr.bf16.mxu0 0
    %286 = vmatpush1.bf16.msra.mxu0 0
    %287 = vmatprep.subr.bf16.mxu0 0
    %288 = vmatpush1.bf16.msra.mxu0 0
    %289 = vmatprep.mubr.bf16.mxu0 0
    %290 = vmatmul.mubr.bf16.gmra.mrb[0].mxu0 %v246
    %v291 = vpop.f32.mrb[0].mxu0
    %v292 = vadd.f32 %v107, %v291
    %v293 = vpop.f32.mrb[0].mxu0
    %v294 = vadd.f32 %v111, %v293
    %v295 = vpop.f32.mrb[0].mxu0
    %v296 = vadd.f32 %v107, %v295
    %v297 = vpop.f32.mrb[0].mxu0
    %v298 = vadd.f32 %v111, %v297
    %299 = vmatprep.mubr.bf16.mxu0 0
    %300 = vmatmul.mubr.bf16.gmra.mrb[0].mxu0 %v249
    %v301 = vpop.f32.mrb[0].mxu0
    %v302 = vadd.f32 %v107, %v301
    %v303 = vpop.f32.mrb[0].mxu0
    %v304 = vadd.f32 %v111, %v303
    %v305 = vpop.f32.mrb[0].mxu0
    %v306 = vadd.f32 %v107, %v305
    %v307 = vpop.f32.mrb[0].mxu0
    %v308 = vadd.f32 %v111, %v307
    %309 = vmatprep.mubr.bf16.mxu0 0
    %310 = vmatmul.mubr.bf16.gmra.mrb[0].mxu0 %v252
    %v311 = vpop.f32.mrb[0].mxu0
    %v312 = vadd.f32 %v107, %v311
    %v313 = vpop.f32.mrb[0].mxu0
    %v314 = vadd.f32 %v111, %v313
    %v315 = vpop.f32.mrb[0].mxu0
    %v316 = vadd.f32 %v107, %v315
    %v317 = vpop.f32.mrb[0].mxu0
    %v318 = vadd.f32 %v111, %v317
    %319 = vmatprep.mubr.bf16.mxu0 0
    %320 = vmatmul.mubr.bf16.gmra.mrb[0].mxu0 %v255
    %v321 = vpop.f32.mrb[0].mxu0
    %v322 = vadd.f32 %v107, %v321
    %v323 = vpop.f32.mrb[0].mxu0
    %v324 = vadd.f32 %v111, %v323
    %v325 = vpop.f32.mrb[0].mxu0
    %v326 = vadd.f32 %v107, %v325
    %v327 = vpop.f32.mrb[0].mxu0
    %v328 = vadd.f32 %v111, %v327
    %329 = vdwg.mxu0
    %330 = vmatprep.subr.bf16.mxu0 %v215
    %331 = vmatpush1.bf16.msra.mxu0 %v214
    %332 = vmatprep.subr.bf16.mxu0 %v223
    %333 = vmatpush1.bf16.msra.mxu0 %v222
    %334 = vmatprep.subr.bf16.mxu0 0
    %335 = vmatpush1.bf16.msra.mxu0 0
    %336 = vmatprep.subr.bf16.mxu0 0
    %337 = vmatpush1.bf16.msra.mxu0 0
    %338 = vmatprep.subr.bf16.mxu0 0
    %339 = vmatpush1.bf16.msra.mxu0 0
    %340 = vmatprep.subr.bf16.mxu0 0
    %341 = vmatpush1.bf16.msra.mxu0 0
    %342 = vmatprep.subr.bf16.mxu0 0
    %343 = vmatpush1.bf16.msra.mxu0 0
    %344 = vmatprep.subr.bf16.mxu0 0
    %345 = vmatpush1.bf16.msra.mxu0 0
    %346 = vmatprep.subr.bf16.mxu0 0
    %347 = vmatpush1.bf16.msra.mxu0 0
    %348 = vmatprep.subr.bf16.mxu0 0
    %349 = vmatpush1.bf16.msra.mxu0 0
    %350 = vmatprep.subr.bf16.mxu0 0
    %351 = vmatpush1.bf16.msra.mxu0 0
    %352 = vmatprep.subr.bf16.mxu0 0
    %353 = vmatpush1.bf16.msra.mxu0 0
    %354 = vmatprep.subr.bf16.mxu0 0
    %355 = vmatpush1.bf16.msra.mxu0 0
    %356 = vmatprep.subr.bf16.mxu0 0
    %357 = vmatpush1.bf16.msra.mxu0 0
    %358 = vmatprep.subr.bf16.mxu0 0
    %359 = vmatpush1.bf16.msra.mxu0 0
    %360 = vmatprep.subr.bf16.mxu0 0
    %361 = vmatpush1.bf16.msra.mxu0 0
    %362 = vmatprep.mubr.bf16.mxu0 0
    %363 = vmatmul.mubr.bf16.gmra.mrb[0].mxu0 %v246
    %v364 = vpop.f32.mrb[0].mxu0
    %v365 = vadd.f32 %v115, %v364
    %v366 = vpop.f32.mrb[0].mxu0
    %v367 = vadd.f32 %v119, %v366
    %v368 = vpop.f32.mrb[0].mxu0
    %v369 = vadd.f32 %v115, %v368
    %v370 = vpop.f32.mrb[0].mxu0
    %v371 = vadd.f32 %v119, %v370
    %372 = vmatprep.mubr.bf16.mxu0 0
    %373 = vmatmul.mubr.bf16.gmra.mrb[0].mxu0 %v249
    %v374 = vpop.f32.mrb[0].mxu0
    %v375 = vadd.f32 %v115, %v374
    %v376 = vpop.f32.mrb[0].mxu0
    %v377 = vadd.f32 %v119, %v376
    %v378 = vpop.f32.mrb[0].mxu0
    %v379 = vadd.f32 %v115, %v378
    %v380 = vpop.f32.mrb[0].mxu0
    %v381 = vadd.f32 %v119, %v380
    %382 = vmatprep.mubr.bf16.mxu0 0
    %383 = vmatmul.mubr.bf16.gmra.mrb[0].mxu0 %v252
    %v384 = vpop.f32.mrb[0].mxu0
    %v385 = vadd.f32 %v115, %v384
    %v386 = vpop.f32.mrb[0].mxu0
    %v387 = vadd.f32 %v119, %v386
    %v388 = vpop.f32.mrb[0].mxu0
    %v389 = vadd.f32 %v115, %v388
    %v390 = vpop.f32.mrb[0].mxu0
    %v391 = vadd.f32 %v119, %v390
    %392 = vmatprep.mubr.bf16.mxu0 0
    %393 = vmatmul.mubr.bf16.gmra.mrb[0].mxu0 %v255
    %v394 = vpop.f32.mrb[0].mxu0
    %v395 = vadd.f32 %v115, %v394
    %v396 = vpop.f32.mrb[0].mxu0
    %v397 = vadd.f32 %v119, %v396
    %v398 = vpop.f32.mrb[0].mxu0
    %v399 = vadd.f32 %v115, %v398
    %v400 = vpop.f32.mrb[0].mxu0
    %v401 = vadd.f32 %v119, %v400
    %402 = vdwg.mxu0
    %403 = vmatprep.subr.bf16.mxu0 %v217
    %404 = vmatpush1.bf16.msra.mxu0 %v216
    %405 = vmatprep.subr.bf16.mxu0 %v225
    %406 = vmatpush1.bf16.msra.mxu0 %v224
    %407 = vmatprep.subr.bf16.mxu0 0
    %408 = vmatpush1.bf16.msra.mxu0 0
    %409 = vmatprep.subr.bf16.mxu0 0
    %410 = vmatpush1.bf16.msra.mxu0 0
    %411 = vmatprep.subr.bf16.mxu0 0
    %412 = vmatpush1.bf16.msra.mxu0 0
    %413 = vmatprep.subr.bf16.mxu0 0
    %414 = vmatpush1.bf16.msra.mxu0 0
    %415 = vmatprep.subr.bf16.mxu0 0
    %416 = vmatpush1.bf16.msra.mxu0 0
    %417 = vmatprep.subr.bf16.mxu0 0
    %418 = vmatpush1.bf16.msra.mxu0 0
    %419 = vmatprep.subr.bf16.mxu0 0
    %420 = vmatpush1.bf16.msra.mxu0 0
    %421 = vmatprep.subr.bf16.mxu0 0
    %422 = vmatpush1.bf16.msra.mxu0 0
    %423 = vmatprep.subr.bf16.mxu0 0
    %424 = vmatpush1.bf16.msra.mxu0 0
    %425 = vmatprep.subr.bf16.mxu0 0
    %426 = vmatpush1.bf16.msra.mxu0 0
    %427 = vmatprep.subr.bf16.mxu0 0
    %428 = vmatpush1.bf16.msra.mxu0 0
    %429 = vmatprep.subr.bf16.mxu0 0
    %430 = vmatpush1.bf16.msra.mxu0 0
    %431 = vmatprep.subr.bf16.mxu0 0
    %432 = vmatpush1.bf16.msra.mxu0 0
    %433 = vmatprep.subr.bf16.mxu0 0
    %434 = vmatpush1.bf16.msra.mxu0 0
    %435 = vmatprep.mubr.bf16.mxu0 0
    %436 = vmatmul.mubr.bf16.gmra.mrb[0].mxu0 %v246
    %v437 = vpop.f32.mrb[0].mxu0
    %v438 = vadd.f32 %v123, %v437
    %v439 = vpop.f32.mrb[0].mxu0
    %v440 = vadd.f32 %v127, %v439
    %v441 = vpop.f32.mrb[0].mxu0
    %v442 = vadd.f32 %v123, %v441
    %v443 = vpop.f32.mrb[0].mxu0
    %v444 = vadd.f32 %v127, %v443
    %445 = vmatprep.mubr.bf16.mxu0 0
    %446 = vmatmul.mubr.bf16.gmra.mrb[0].mxu0 %v249
    %v447 = vpop.f32.mrb[0].mxu0
    %v448 = vadd.f32 %v123, %v447
    %v449 = vpop.f32.mrb[0].mxu0
    %v450 = vadd.f32 %v127, %v449
    %v451 = vpop.f32.mrb[0].mxu0
    %v452 = vadd.f32 %v123, %v451
    %v453 = vpop.f32.mrb[0].mxu0
    %v454 = vadd.f32 %v127, %v453
    %455 = vmatprep.mubr.bf16.mxu0 0
    %456 = vmatmul.mubr.bf16.gmra.mrb[0].mxu0 %v252
    %v457 = vpop.f32.mrb[0].mxu0
    %v458 = vadd.f32 %v123, %v457
    %v459 = vpop.f32.mrb[0].mxu0
    %v460 = vadd.f32 %v127, %v459
    %v461 = vpop.f32.mrb[0].mxu0
    %v462 = vadd.f32 %v123, %v461
    %v463 = vpop.f32.mrb[0].mxu0
    %v464 = vadd.f32 %v127, %v463
    %465 = vmatprep.mubr.bf16.mxu0 0
    %466 = vmatmul.mubr.bf16.gmra.mrb[0].mxu0 %v255
    %v467 = vpop.f32.mrb[0].mxu0
    %v468 = vadd.f32 %v123, %v467
    %v469 = vpop.f32.mrb[0].mxu0
    %v470 = vadd.f32 %v127, %v469
    %v471 = vpop.f32.mrb[0].mxu0
    %v472 = vadd.f32 %v123, %v471
    %v473 = vpop.f32.mrb[0].mxu0
    %v474 = vadd.f32 %v127, %v473
    %475 = vdwg.mxu0
    %476 = vmatprep.subr.bf16.mxu0 %v219
    %477 = vmatpush1.bf16.msra.mxu0 %v218
    %478 = vmatprep.subr.bf16.mxu0 %v227
    %479 = vmatpush1.bf16.msra.mxu0 %v226
    %480 = vmatprep.subr.bf16.mxu0 0
    %481 = vmatpush1.bf16.msra.mxu0 0
    %482 = vmatprep.subr.bf16.mxu0 0
    %483 = vmatpush1.bf16.msra.mxu0 0
    %484 = vmatprep.subr.bf16.mxu0 0
    %485 = vmatpush1.bf16.msra.mxu0 0
    %486 = vmatprep.subr.bf16.mxu0 0
    %487 = vmatpush1.bf16.msra.mxu0 0
    %488 = vmatprep.subr.bf16.mxu0 0
    %489 = vmatpush1.bf16.msra.mxu0 0
    %490 = vmatprep.subr.bf16.mxu0 0
    %491 = vmatpush1.bf16.msra.mxu0 0
    %492 = vmatprep.subr.bf16.mxu0 0
    %493 = vmatpush1.bf16.msra.mxu0 0
    %494 = vmatprep.subr.bf16.mxu0 0
    %495 = vmatpush1.bf16.msra.mxu0 0
    %496 = vmatprep.subr.bf16.mxu0 0
    %497 = vmatpush1.bf16.msra.mxu0 0
    %498 = vmatprep.subr.bf16.mxu0 0
    %499 = vmatpush1.bf16.msra.mxu0 0
    %500 = vmatprep.subr.bf16.mxu0 0
    %501 = vmatpush1.bf16.msra.mxu0 0
    %502 = vmatprep.subr.bf16.mxu0 0
    %503 = vmatpush1.bf16.msra.mxu0 0
    %504 = vmatprep.subr.bf16.mxu0 0
    %505 = vmatpush1.bf16.msra.mxu0 0
    %506 = vmatprep.subr.bf16.mxu0 0
    %507 = vmatpush1.bf16.msra.mxu0 0
    %508 = vmatprep.mubr.bf16.mxu0 0
    %509 = vmatmul.mubr.bf16.gmra.mrb[0].mxu0 %v246
    %v510 = vpop.f32.mrb[0].mxu0
    %v511 = vadd.f32 %v131, %v510
    %v512 = vpop.f32.mrb[0].mxu0
    %v513 = vadd.f32 %v135, %v512
    %v514 = vpop.f32.mrb[0].mxu0
    %v515 = vadd.f32 %v131, %v514
    %v516 = vpop.f32.mrb[0].mxu0
    %v517 = vadd.f32 %v135, %v516
    %518 = vmatprep.mubr.bf16.mxu0 0
    %519 = vmatmul.mubr.bf16.gmra.mrb[0].mxu0 %v249
    %v520 = vpop.f32.mrb[0].mxu0
    %v521 = vadd.f32 %v131, %v520
    %v522 = vpop.f32.mrb[0].mxu0
    %v523 = vadd.f32 %v135, %v522
    %v524 = vpop.f32.mrb[0].mxu0
    %v525 = vadd.f32 %v131, %v524
    %v526 = vpop.f32.mrb[0].mxu0
    %v527 = vadd.f32 %v135, %v526
    %528 = vmatprep.mubr.bf16.mxu0 0
    %529 = vmatmul.mubr.bf16.gmra.mrb[0].mxu0 %v252
    %v530 = vpop.f32.mrb[0].mxu0
    %v531 = vadd.f32 %v131, %v530
    %v532 = vpop.f32.mrb[0].mxu0
    %v533 = vadd.f32 %v135, %v532
    %v534 = vpop.f32.mrb[0].mxu0
    %v535 = vadd.f32 %v131, %v534
    %v536 = vpop.f32.mrb[0].mxu0
    %v537 = vadd.f32 %v135, %v536
    %538 = vmatprep.mubr.bf16.mxu0 0
    %539 = vmatmul.mubr.bf16.gmra.mrb[0].mxu0 %v255
    %v540 = vpop.f32.mrb[0].mxu0
    %v541 = vadd.f32 %v131, %v540
    %v542 = vpop.f32.mrb[0].mxu0
    %v543 = vadd.f32 %v135, %v542
    %v544 = vpop.f32.mrb[0].mxu0
    %v545 = vadd.f32 %v131, %v544
    %v546 = vpop.f32.mrb[0].mxu0
    %v547 = vadd.f32 %v135, %v546
    %548 = vdwg.mxu0
    %549 = vst [vmem:[#allocation2] sm:$0xff] %v292
    %550 = vst [vmem:[#allocation2 + $0x8] sm:$0xff] %v294
    %551 = vst [vmem:[#allocation2 + $0x10] sm:$0xff] %v365
    %552 = vst [vmem:[#allocation2 + $0x18] sm:$0xff] %v367
    %553 = vst [vmem:[#allocation2 + $0x20] sm:$0xff] %v438
    %554 = vst [vmem:[#allocation2 + $0x28] sm:$0xff] %v440
    %555 = vst [vmem:[#allocation2 + $0x30] sm:$0xff] %v511
    %556 = vst [vmem:[#allocation2 + $0x38] sm:$0xff] %v513
    %557 = vst [vmem:[#allocation2 + $0x40] sm:$0xff] %v296
    %558 = vst [vmem:[#allocation2 + $0x48] sm:$0xff] %v298
    %559 = vst [vmem:[#allocation2 + $0x50] sm:$0xff] %v369
    %560 = vst [vmem:[#allocation2 + $0x58] sm:$0xff] %v371
    %561 = vst [vmem:[#allocation2 + $0x60] sm:$0xff] %v442
    %562 = vst [vmem:[#allocation2 + $0x68] sm:$0xff] %v444
    %563 = vst [vmem:[#allocation2 + $0x70] sm:$0xff] %v515
    %564 = vst [vmem:[#allocation2 + $0x78] sm:$0xff] %v517
    %565 = vst [vmem:[#allocation2 + $0x80] sm:$0xff] %v302
    %566 = vst [vmem:[#allocation2 + $0x88] sm:$0xff] %v304
    %567 = vst [vmem:[#allocation2 + $0x90] sm:$0xff] %v375
    %568 = vst [vmem:[#allocation2 + $0x98] sm:$0xff] %v377
    %569 = vst [vmem:[#allocation2 + $0xa0] sm:$0xff] %v448
    %570 = vst [vmem:[#allocation2 + $0xa8] sm:$0xff] %v450
    %571 = vst [vmem:[#allocation2 + $0xb0] sm:$0xff] %v521
    %572 = vst [vmem:[#allocation2 + $0xb8] sm:$0xff] %v523
    %573 = vst [vmem:[#allocation2 + $0xc0] sm:$0xff] %v306
    %574 = vst [vmem:[#allocation2 + $0xc8] sm:$0xff] %v308
    %575 = vst [vmem:[#allocation2 + $0xd0] sm:$0xff] %v379
    %576 = vst [vmem:[#allocation2 + $0xd8] sm:$0xff] %v381
    %577 = vst [vmem:[#allocation2 + $0xe0] sm:$0xff] %v452
    %578 = vst [vmem:[#allocation2 + $0xe8] sm:$0xff] %v454
    %579 = vst [vmem:[#allocation2 + $0xf0] sm:$0xff] %v525
    %580 = vst [vmem:[#allocation2 + $0xf8] sm:$0xff] %v527
    %581 = vst [vmem:[#allocation2 + $0x100] sm:$0xff] %v312
    %582 = vst [vmem:[#allocation2 + $0x108] sm:$0xff] %v314
    %583 = vst [vmem:[#allocation2 + $0x110] sm:$0xff] %v385
    %584 = vst [vmem:[#allocation2 + $0x118] sm:$0xff] %v387
    %585 = vst [vmem:[#allocation2 + $0x120] sm:$0xff] %v458
    %586 = vst [vmem:[#allocation2 + $0x128] sm:$0xff] %v460
    %587 = vst [vmem:[#allocation2 + $0x130] sm:$0xff] %v531
    %588 = vst [vmem:[#allocation2 + $0x138] sm:$0xff] %v533
    %589 = vst [vmem:[#allocation2 + $0x140] sm:$0xff] %v316
    %590 = vst [vmem:[#allocation2 + $0x148] sm:$0xff] %v318
    %591 = vst [vmem:[#allocation2 + $0x150] sm:$0xff] %v389
    %592 = vst [vmem:[#allocation2 + $0x158] sm:$0xff] %v391
    %593 = vst [vmem:[#allocation2 + $0x160] sm:$0xff] %v462
    %594 = vst [vmem:[#allocation2 + $0x168] sm:$0xff] %v464
    %595 = vst [vmem:[#allocation2 + $0x170] sm:$0xff] %v535
    %596 = vst [vmem:[#allocation2 + $0x178] sm:$0xff] %v537
    %597 = vst [vmem:[#allocation2 + $0x180] sm:$0xff] %v322
    %598 = vst [vmem:[#allocation2 + $0x188] sm:$0xff] %v324
    %599 = vst [vmem:[#allocation2 + $0x190] sm:$0xff] %v395
    %600 = vst [vmem:[#allocation2 + $0x198] sm:$0xff] %v397
    %601 = vst [vmem:[#allocation2 + $0x1a0] sm:$0xff] %v468
    %602 = vst [vmem:[#allocation2 + $0x1a8] sm:$0xff] %v470
    %603 = vst [vmem:[#allocation2 + $0x1b0] sm:$0xff] %v541
    %604 = vst [vmem:[#allocation2 + $0x1b8] sm:$0xff] %v543
    %605 = vst [vmem:[#allocation2 + $0x1c0] sm:$0xff] %v326
    %606 = vst [vmem:[#allocation2 + $0x1c8] sm:$0xff] %v328
    %607 = vst [vmem:[#allocation2 + $0x1d0] sm:$0xff] %v399
    %608 = vst [vmem:[#allocation2 + $0x1d8] sm:$0xff] %v401
    %609 = vst [vmem:[#allocation2 + $0x1e0] sm:$0xff] %v472
    %610 = vst [vmem:[#allocation2 + $0x1e8] sm:$0xff] %v474
    %611 = vst [vmem:[#allocation2 + $0x1f0] sm:$0xff] %v545
    %612 = vst [vmem:[#allocation2 + $0x1f8] sm:$0xff] %v547
    %v613 = vld [vmem:[#allocation5] sm:$0xff]
    %v614 = vld [vmem:[#allocation5 + $0x8] sm:$0xff]
    %v615 = vld [vmem:[#allocation5 + $0x10] sm:$0xff]
    %v616 = vld [vmem:[#allocation5 + $0x18] sm:$0xff]
    %v617 = vld [vmem:[#allocation5 + $0x20] sm:$0xff]
    %v618 = vld [vmem:[#allocation5 + $0x28] sm:$0xff]
    %v619 = vld [vmem:[#allocation5 + $0x30] sm:$0xff]
    %v620 = vld [vmem:[#allocation5 + $0x38] sm:$0xff]
    %v621 = vld [vmem:[#allocation5 + $0x40] sm:$0xff]
    %v622 = vld [vmem:[#allocation5 + $0x48] sm:$0xff]
    %v623 = vld [vmem:[#allocation5 + $0x50] sm:$0xff]
    %v624 = vld [vmem:[#allocation5 + $0x58] sm:$0xff]
    %v625 = vld [vmem:[#allocation5 + $0x60] sm:$0xff]
    %v626 = vld [vmem:[#allocation5 + $0x68] sm:$0xff]
    %v627 = vld [vmem:[#allocation5 + $0x70] sm:$0xff]
    %v628 = vld [vmem:[#allocation5 + $0x78] sm:$0xff]
    %v629 = vld [vmem:[#allocation5 + $0x80] sm:$0xff]
    %v630 = vld [vmem:[#allocation5 + $0x88] sm:$0xff]
    %v631 = vld [vmem:[#allocation5 + $0x90] sm:$0xff]
    %v632 = vld [vmem:[#allocation5 + $0x98] sm:$0xff]
    %v633 = vld [vmem:[#allocation5 + $0xa0] sm:$0xff]
    %v634 = vld [vmem:[#allocation5 + $0xa8] sm:$0xff]
    %v635 = vld [vmem:[#allocation5 + $0xb0] sm:$0xff]
    %v636 = vld [vmem:[#allocation5 + $0xb8] sm:$0xff]
    %v637 = vld [vmem:[#allocation5 + $0xc0] sm:$0xff]
    %v638 = vld [vmem:[#allocation5 + $0xc8] sm:$0xff]
    %v639 = vld [vmem:[#allocation5 + $0xd0] sm:$0xff]
    %v640 = vld [vmem:[#allocation5 + $0xd8] sm:$0xff]
    %v641 = vld [vmem:[#allocation5 + $0xe0] sm:$0xff]
    %v642 = vld [vmem:[#allocation5 + $0xe8] sm:$0xff]
    %v643 = vld [vmem:[#allocation5 + $0xf0] sm:$0xff]
    %v644 = vld [vmem:[#allocation5 + $0xf8] sm:$0xff]
    %v645 = vld [vmem:[#allocation5 + $0x100] sm:$0xff]
    %v646 = vld [vmem:[#allocation5 + $0x108] sm:$0xff]
    %v647 = vld [vmem:[#allocation5 + $0x110] sm:$0xff]
    %v648 = vld [vmem:[#allocation5 + $0x118] sm:$0xff]
    %v649 = vld [vmem:[#allocation5 + $0x120] sm:$0xff]
    %v650 = vld [vmem:[#allocation5 + $0x128] sm:$0xff]
    %v651 = vld [vmem:[#allocation5 + $0x130] sm:$0xff]
    %v652 = vld [vmem:[#allocation5 + $0x138] sm:$0xff]
    %v653 = vld [vmem:[#allocation5 + $0x140] sm:$0xff]
    %v654 = vld [vmem:[#allocation5 + $0x148] sm:$0xff]
    %v655 = vld [vmem:[#allocation5 + $0x150] sm:$0xff]
    %v656 = vld [vmem:[#allocation5 + $0x158] sm:$0xff]
    %v657 = vld [vmem:[#allocation5 + $0x160] sm:$0xff]
    %v658 = vld [vmem:[#allocation5 + $0x168] sm:$0xff]
    %v659 = vld [vmem:[#allocation5 + $0x170] sm:$0xff]
    %v660 = vld [vmem:[#allocation5 + $0x178] sm:$0xff]
    %v661 = vld [vmem:[#allocation5 + $0x180] sm:$0xff]
    %v662 = vld [vmem:[#allocation5 + $0x188] sm:$0xff]
    %v663 = vld [vmem:[#allocation5 + $0x190] sm:$0xff]
    %v664 = vld [vmem:[#allocation5 + $0x198] sm:$0xff]
    %v665 = vld [vmem:[#allocation5 + $0x1a0] sm:$0xff]
    %v666 = vld [vmem:[#allocation5 + $0x1a8] sm:$0xff]
    %v667 = vld [vmem:[#allocation5 + $0x1b0] sm:$0xff]
    %v668 = vld [vmem:[#allocation5 + $0x1b8] sm:$0xff]
    %v669 = vld [vmem:[#allocation5 + $0x1c0] sm:$0xff]
    %v670 = vld [vmem:[#allocation5 + $0x1c8] sm:$0xff]
    %v671 = vld [vmem:[#allocation5 + $0x1d0] sm:$0xff]
    %v672 = vld [vmem:[#allocation5 + $0x1d8] sm:$0xff]
    %v673 = vld [vmem:[#allocation5 + $0x1e0] sm:$0xff]
    %v674 = vld [vmem:[#allocation5 + $0x1e8] sm:$0xff]
    %v675 = vld [vmem:[#allocation5 + $0x1f0] sm:$0xff]
    %v676 = vld [vmem:[#allocation5 + $0x1f8] sm:$0xff]
    %v677 = vld [vmem:[#allocation5 + $0x200] sm:$0xff]
    %v678 = vld [vmem:[#allocation5 + $0x208] sm:$0xff]
    %v679 = vld [vmem:[#allocation5 + $0x210] sm:$0xff]
    %v680 = vld [vmem:[#allocation5 + $0x218] sm:$0xff]
    %v681 = vld [vmem:[#allocation5 + $0x220] sm:$0xff]
    %v682 = vld [vmem:[#allocation5 + $0x228] sm:$0xff]
    %v683 = vld [vmem:[#allocation5 + $0x230] sm:$0xff]
    %v684 = vld [vmem:[#allocation5 + $0x238] sm:$0xff]
    %v685 = vld [vmem:[#allocation5 + $0x240] sm:$0xff]
    %v686 = vld [vmem:[#allocation5 + $0x248] sm:$0xff]
    %v687 = vld [vmem:[#allocation5 + $0x250] sm:$0xff]
    %v688 = vld [vmem:[#allocation5 + $0x258] sm:$0xff]
    %v689 = vld [vmem:[#allocation5 + $0x260] sm:$0xff]
    %v690 = vld [vmem:[#allocation5 + $0x268] sm:$0xff]
    %v691 = vld [vmem:[#allocation5 + $0x270] sm:$0xff]
    %v692 = vld [vmem:[#allocation5 + $0x278] sm:$0xff]
    %v693 = vld [vmem:[#allocation5 + $0x280] sm:$0xff]
    %v694 = vld [vmem:[#allocation5 + $0x288] sm:$0xff]
    %v695 = vld [vmem:[#allocation5 + $0x290] sm:$0xff]
    %v696 = vld [vmem:[#allocation5 + $0x298] sm:$0xff]
    %v697 = vld [vmem:[#allocation5 + $0x2a0] sm:$0xff]
    %v698 = vld [vmem:[#allocation5 + $0x2a8] sm:$0xff]
    %v699 = vld [vmem:[#allocation5 + $0x2b0] sm:$0xff]
    %v700 = vld [vmem:[#allocation5 + $0x2b8] sm:$0xff]
    %v701 = vld [vmem:[#allocation5 + $0x2c0] sm:$0xff]
    %v702 = vld [vmem:[#allocation5 + $0x2c8] sm:$0xff]
    %v703 = vld [vmem:[#allocation5 + $0x2d0] sm:$0xff]
    %v704 = vld [vmem:[#allocation5 + $0x2d8] sm:$0xff]
    %v705 = vld [vmem:[#allocation5 + $0x2e0] sm:$0xff]
    %v706 = vld [vmem:[#allocation5 + $0x2e8] sm:$0xff]
    %v707 = vld [vmem:[#allocation5 + $0x2f0] sm:$0xff]
    %v708 = vld [vmem:[#allocation5 + $0x2f8] sm:$0xff]
    %v709 = vld [vmem:[#allocation5 + $0x300] sm:$0xff]
    %v710 = vld [vmem:[#allocation5 + $0x308] sm:$0xff]
    %v711 = vld [vmem:[#allocation5 + $0x310] sm:$0xff]
    %v712 = vld [vmem:[#allocation5 + $0x318] sm:$0xff]
    %v713 = vld [vmem:[#allocation5 + $0x320] sm:$0xff]
    %v714 = vld [vmem:[#allocation5 + $0x328] sm:$0xff]
    %v715 = vld [vmem:[#allocation5 + $0x330] sm:$0xff]
    %v716 = vld [vmem:[#allocation5 + $0x338] sm:$0xff]
    %v717 = vld [vmem:[#allocation5 + $0x340] sm:$0xff]
    %v718 = vld [vmem:[#allocation5 + $0x348] sm:$0xff]
    %v719 = vld [vmem:[#allocation5 + $0x350] sm:$0xff]
    %v720 = vld [vmem:[#allocation5 + $0x358] sm:$0xff]
    %v721 = vld [vmem:[#allocation5 + $0x360] sm:$0xff]
    %v722 = vld [vmem:[#allocation5 + $0x368] sm:$0xff]
    %v723 = vld [vmem:[#allocation5 + $0x370] sm:$0xff]
    %v724 = vld [vmem:[#allocation5 + $0x378] sm:$0xff]
    %v725 = vld [vmem:[#allocation5 + $0x380] sm:$0xff]
    %v726 = vld [vmem:[#allocation5 + $0x388] sm:$0xff]
    %v727 = vld [vmem:[#allocation5 + $0x390] sm:$0xff]
    %v728 = vld [vmem:[#allocation5 + $0x398] sm:$0xff]
    %v729 = vld [vmem:[#allocation5 + $0x3a0] sm:$0xff]
    %v730 = vld [vmem:[#allocation5 + $0x3a8] sm:$0xff]
    %v731 = vld [vmem:[#allocation5 + $0x3b0] sm:$0xff]
    %v732 = vld [vmem:[#allocation5 + $0x3b8] sm:$0xff]
    %v733 = vld [vmem:[#allocation5 + $0x3c0] sm:$0xff]
    %v734 = vld [vmem:[#allocation5 + $0x3c8] sm:$0xff]
    %v735 = vld [vmem:[#allocation5 + $0x3d0] sm:$0xff]
    %v736 = vld [vmem:[#allocation5 + $0x3d8] sm:$0xff]
    %v737 = vld [vmem:[#allocation5 + $0x3e0] sm:$0xff]
    %v738 = vld [vmem:[#allocation5 + $0x3e8] sm:$0xff]
    %v739 = vld [vmem:[#allocation5 + $0x3f0] sm:$0xff]
    %v740 = vld [vmem:[#allocation5 + $0x3f8] sm:$0xff]
    %v869 = vunpack.c.l.b16 %v613
    %v870 = vunpack.c.h.b16 %v613
    %v871 = vunpack.c.l.b16 %v614
    %v872 = vunpack.c.h.b16 %v614
    %v873 = vunpack.c.l.b16 %v615
    %v874 = vunpack.c.h.b16 %v615
    %v875 = vunpack.c.l.b16 %v616
    %v876 = vunpack.c.h.b16 %v616
    %v877 = vunpack.c.l.b16 %v617
    %v878 = vunpack.c.h.b16 %v617
    %v879 = vunpack.c.l.b16 %v618
    %v880 = vunpack.c.h.b16 %v618
    %v881 = vunpack.c.l.b16 %v619
    %v882 = vunpack.c.h.b16 %v619
    %v883 = vunpack.c.l.b16 %v620
    %v884 = vunpack.c.h.b16 %v620
    %v885 = vunpack.c.l.b16 %v621
    %v886 = vunpack.c.h.b16 %v621
    %v887 = vunpack.c.l.b16 %v622
    %v888 = vunpack.c.h.b16 %v622
    %v889 = vunpack.c.l.b16 %v623
    %v890 = vunpack.c.h.b16 %v623
    %v891 = vunpack.c.l.b16 %v624
    %v892 = vunpack.c.h.b16 %v624
    %v893 = vunpack.c.l.b16 %v625
    %v894 = vunpack.c.h.b16 %v625
    %v895 = vunpack.c.l.b16 %v626
    %v896 = vunpack.c.h.b16 %v626
    %v897 = vunpack.c.l.b16 %v627
    %v898 = vunpack.c.h.b16 %v627
    %v899 = vunpack.c.l.b16 %v628
    %v900 = vunpack.c.h.b16 %v628
    %v901 = vunpack.c.l.b16 %v629
    %v902 = vunpack.c.h.b16 %v629
    %v903 = vunpack.c.l.b16 %v630
    %v904 = vunpack.c.h.b16 %v630
    %v905 = vunpack.c.l.b16 %v631
    %v906 = vunpack.c.h.b16 %v631
    %v907 = vunpack.c.l.b16 %v632
    %v908 = vunpack.c.h.b16 %v632
    %v909 = vunpack.c.l.b16 %v633
    %v910 = vunpack.c.h.b16 %v633
    %v911 = vunpack.c.l.b16 %v634
    %v912 = vunpack.c.h.b16 %v634
    %v913 = vunpack.c.l.b16 %v635
    %v914 = vunpack.c.h.b16 %v635
    %v915 = vunpack.c.l.b16 %v636
    %v916 = vunpack.c.h.b16 %v636
    %v917 = vunpack.c.l.b16 %v637
    %v918 = vunpack.c.h.b16 %v637
    %v919 = vunpack.c.l.b16 %v638
    %v920 = vunpack.c.h.b16 %v638
    %v921 = vunpack.c.l.b16 %v639
    %v922 = vunpack.c.h.b16 %v639
    %v923 = vunpack.c.l.b16 %v640
    %v924 = vunpack.c.h.b16 %v640
    %v925 = vunpack.c.l.b16 %v641
    %v926 = vunpack.c.h.b16 %v641
    %v927 = vunpack.c.l.b16 %v642
    %v928 = vunpack.c.h.b16 %v642
    %v929 = vunpack.c.l.b16 %v643
    %v930 = vunpack.c.h.b16 %v643
    %v931 = vunpack.c.l.b16 %v644
    %v932 = vunpack.c.h.b16 %v644
    %v933 = vunpack.c.l.b16 %v645
    %v934 = vunpack.c.h.b16 %v645
    %v935 = vunpack.c.l.b16 %v646
    %v936 = vunpack.c.h.b16 %v646
    %v937 = vunpack.c.l.b16 %v647
    %v938 = vunpack.c.h.b16 %v647
    %v939 = vunpack.c.l.b16 %v648
    %v940 = vunpack.c.h.b16 %v648
    %v941 = vunpack.c.l.b16 %v649
    %v942 = vunpack.c.h.b16 %v649
    %v943 = vunpack.c.l.b16 %v650
    %v944 = vunpack.c.h.b16 %v650
    %v945 = vunpack.c.l.b16 %v651
    %v946 = vunpack.c.h.b16 %v651
    %v947 = vunpack.c.l.b16 %v652
    %v948 = vunpack.c.h.b16 %v652
    %v949 = vunpack.c.l.b16 %v653
    %v950 = vunpack.c.h.b16 %v653
    %v951 = vunpack.c.l.b16 %v654
    %v952 = vunpack.c.h.b16 %v654
    %v953 = vunpack.c.l.b16 %v655
    %v954 = vunpack.c.h.b16 %v655
    %v955 = vunpack.c.l.b16 %v656
    %v956 = vunpack.c.h.b16 %v656
    %v957 = vunpack.c.l.b16 %v657
    %v958 = vunpack.c.h.b16 %v657
    %v959 = vunpack.c.l.b16 %v658
    %v960 = vunpack.c.h.b16 %v658
    %v961 = vunpack.c.l.b16 %v659
    %v962 = vunpack.c.h.b16 %v659
    %v963 = vunpack.c.l.b16 %v660
    %v964 = vunpack.c.h.b16 %v660
    %v965 = vunpack.c.l.b16 %v661
    %v966 = vunpack.c.h.b16 %v661
    %v967 = vunpack.c.l.b16 %v662
    %v968 = vunpack.c.h.b16 %v662
    %v969 = vunpack.c.l.b16 %v663
    %v970 = vunpack.c.h.b16 %v663
    %v971 = vunpack.c.l.b16 %v664
    %v972 = vunpack.c.h.b16 %v664
    %v973 = vunpack.c.l.b16 %v665
    %v974 = vunpack.c.h.b16 %v665
    %v975 = vunpack.c.l.b16 %v666
    %v976 = vunpack.c.h.b16 %v666
    %v977 = vunpack.c.l.b16 %v667
    %v978 = vunpack.c.h.b16 %v667
    %v979 = vunpack.c.l.b16 %v668
    %v980 = vunpack.c.h.b16 %v668
    %v981 = vunpack.c.l.b16 %v669
    %v982 = vunpack.c.h.b16 %v669
    %v983 = vunpack.c.l.b16 %v670
    %v984 = vunpack.c.h.b16 %v670
    %v985 = vunpack.c.l.b16 %v671
    %v986 = vunpack.c.h.b16 %v671
    %v987 = vunpack.c.l.b16 %v672
    %v988 = vunpack.c.h.b16 %v672
    %v989 = vunpack.c.l.b16 %v673
    %v990 = vunpack.c.h.b16 %v673
    %v991 = vunpack.c.l.b16 %v674
    %v992 = vunpack.c.h.b16 %v674
    %v993 = vunpack.c.l.b16 %v675
    %v994 = vunpack.c.h.b16 %v675
    %v995 = vunpack.c.l.b16 %v676
    %v996 = vunpack.c.h.b16 %v676
    %v997 = vunpack.c.l.b16 %v677
    %v998 = vunpack.c.h.b16 %v677
    %v999 = vunpack.c.l.b16 %v678
    %v1000 = vunpack.c.h.b16 %v678
    %v1001 = vunpack.c.l.b16 %v679
    %v1002 = vunpack.c.h.b16 %v679
    %v1003 = vunpack.c.l.b16 %v680
    %v1004 = vunpack.c.h.b16 %v680
    %v1005 = vunpack.c.l.b16 %v681
    %v1006 = vunpack.c.h.b16 %v681
    %v1007 = vunpack.c.l.b16 %v682
    %v1008 = vunpack.c.h.b16 %v682
    %v1009 = vunpack.c.l.b16 %v683
    %v1010 = vunpack.c.h.b16 %v683
    %v1011 = vunpack.c.l.b16 %v684
    %v1012 = vunpack.c.h.b16 %v684
    %v1013 = vunpack.c.l.b16 %v685
    %v1014 = vunpack.c.h.b16 %v685
    %v1015 = vunpack.c.l.b16 %v686
    %v1016 = vunpack.c.h.b16 %v686
    %v1017 = vunpack.c.l.b16 %v687
    %v1018 = vunpack.c.h.b16 %v687
    %v1019 = vunpack.c.l.b16 %v688
    %v1020 = vunpack.c.h.b16 %v688
    %v1021 = vunpack.c.l.b16 %v689
    %v1022 = vunpack.c.h.b16 %v689
    %v1023 = vunpack.c.l.b16 %v690
    %v1024 = vunpack.c.h.b16 %v690
    %v1025 = vunpack.c.l.b16 %v691
    %v1026 = vunpack.c.h.b16 %v691
    %v1027 = vunpack.c.l.b16 %v692
    %v1028 = vunpack.c.h.b16 %v692
    %v1029 = vunpack.c.l.b16 %v693
    %v1030 = vunpack.c.h.b16 %v693
    %v1031 = vunpack.c.l.b16 %v694
    %v1032 = vunpack.c.h.b16 %v694
    %v1033 = vunpack.c.l.b16 %v695
    %v1034 = vunpack.c.h.b16 %v695
    %v1035 = vunpack.c.l.b16 %v696
    %v1036 = vunpack.c.h.b16 %v696
    %v1037 = vunpack.c.l.b16 %v697
    %v1038 = vunpack.c.h.b16 %v697
    %v1039 = vunpack.c.l.b16 %v698
    %v1040 = vunpack.c.h.b16 %v698
    %v1041 = vunpack.c.l.b16 %v699
    %v1042 = vunpack.c.h.b16 %v699
    %v1043 = vunpack.c.l.b16 %v700
    %v1044 = vunpack.c.h.b16 %v700
    %v1045 = vunpack.c.l.b16 %v701
    %v1046 = vunpack.c.h.b16 %v701
    %v1047 = vunpack.c.l.b16 %v702
    %v1048 = vunpack.c.h.b16 %v702
    %v1049 = vunpack.c.l.b16 %v703
    %v1050 = vunpack.c.h.b16 %v703
    %v1051 = vunpack.c.l.b16 %v704
    %v1052 = vunpack.c.h.b16 %v704
    %v1053 = vunpack.c.l.b16 %v705
    %v1054 = vunpack.c.h.b16 %v705
    %v1055 = vunpack.c.l.b16 %v706
    %v1056 = vunpack.c.h.b16 %v706
    %v1057 = vunpack.c.l.b16 %v707
    %v1058 = vunpack.c.h.b16 %v707
    %v1059 = vunpack.c.l.b16 %v708
    %v1060 = vunpack.c.h.b16 %v708
    %v1061 = vunpack.c.l.b16 %v709
    %v1062 = vunpack.c.h.b16 %v709
    %v1063 = vunpack.c.l.b16 %v710
    %v1064 = vunpack.c.h.b16 %v710
    %v1065 = vunpack.c.l.b16 %v711
    %v1066 = vunpack.c.h.b16 %v711
    %v1067 = vunpack.c.l.b16 %v712
    %v1068 = vunpack.c.h.b16 %v712
    %v1069 = vunpack.c.l.b16 %v713
    %v1070 = vunpack.c.h.b16 %v713
    %v1071 = vunpack.c.l.b16 %v714
    %v1072 = vunpack.c.h.b16 %v714
    %v1073 = vunpack.c.l.b16 %v715
    %v1074 = vunpack.c.h.b16 %v715
    %v1075 = vunpack.c.l.b16 %v716
    %v1076 = vunpack.c.h.b16 %v716
    %v1077 = vunpack.c.l.b16 %v717
    %v1078 = vunpack.c.h.b16 %v717
    %v1079 = vunpack.c.l.b16 %v718
    %v1080 = vunpack.c.h.b16 %v718
    %v1081 = vunpack.c.l.b16 %v719
    %v1082 = vunpack.c.h.b16 %v719
    %v1083 = vunpack.c.l.b16 %v720
    %v1084 = vunpack.c.h.b16 %v720
    %v1085 = vunpack.c.l.b16 %v721
    %v1086 = vunpack.c.h.b16 %v721
    %v1087 = vunpack.c.l.b16 %v722
    %v1088 = vunpack.c.h.b16 %v722
    %v1089 = vunpack.c.l.b16 %v723
    %v1090 = vunpack.c.h.b16 %v723
    %v1091 = vunpack.c.l.b16 %v724
    %v1092 = vunpack.c.h.b16 %v724
    %v1093 = vunpack.c.l.b16 %v725
    %v1094 = vunpack.c.h.b16 %v725
    %v1095 = vunpack.c.l.b16 %v726
    %v1096 = vunpack.c.h.b16 %v726
    %v1097 = vunpack.c.l.b16 %v727
    %v1098 = vunpack.c.h.b16 %v727
    %v1099 = vunpack.c.l.b16 %v728
    %v1100 = vunpack.c.h.b16 %v728
    %v1101 = vunpack.c.l.b16 %v729
    %v1102 = vunpack.c.h.b16 %v729
    %v1103 = vunpack.c.l.b16 %v730
    %v1104 = vunpack.c.h.b16 %v730
    %v1105 = vunpack.c.l.b16 %v731
    %v1106 = vunpack.c.h.b16 %v731
    %v1107 = vunpack.c.l.b16 %v732
    %v1108 = vunpack.c.h.b16 %v732
    %v1109 = vunpack.c.l.b16 %v733
    %v1110 = vunpack.c.h.b16 %v733
    %v1111 = vunpack.c.l.b16 %v734
    %v1112 = vunpack.c.h.b16 %v734
    %v1113 = vunpack.c.l.b16 %v735
    %v1114 = vunpack.c.h.b16 %v735
    %v1115 = vunpack.c.l.b16 %v736
    %v1116 = vunpack.c.h.b16 %v736
    %v1117 = vunpack.c.l.b16 %v737
    %v1118 = vunpack.c.h.b16 %v737
    %v1119 = vunpack.c.l.b16 %v738
    %v1120 = vunpack.c.h.b16 %v738
    %v1121 = vunpack.c.l.b16 %v739
    %v1122 = vunpack.c.h.b16 %v739
    %v1123 = vunpack.c.l.b16 %v740
    %v1124 = vunpack.c.h.b16 %v740
    %v1125 = vpack.c.b16 %v877, %v869
    %v1126 = vpack.c.b16 %v878, %v870
    %v1127 = vpack.c.b16 %v879, %v871
    %v1128 = vpack.c.b16 %v880, %v872
    %v1129 = vpack.c.b16 %v881, %v873
    %v1130 = vpack.c.b16 %v882, %v874
    %v1131 = vpack.c.b16 %v883, %v875
    %v1132 = vpack.c.b16 %v884, %v876
    %v1133 = vpack.c.b16 %v893, %v885
    %v1134 = vpack.c.b16 %v894, %v886
    %v1135 = vpack.c.b16 %v895, %v887
    %v1136 = vpack.c.b16 %v896, %v888
    %v1137 = vpack.c.b16 %v897, %v889
    %v1138 = vpack.c.b16 %v898, %v890
    %v1139 = vpack.c.b16 %v899, %v891
    %v1140 = vpack.c.b16 %v900, %v892
    %v1141 = vpack.c.b16 %v909, %v901
    %v1142 = vpack.c.b16 %v910, %v902
    %v1143 = vpack.c.b16 %v911, %v903
    %v1144 = vpack.c.b16 %v912, %v904
    %v1145 = vpack.c.b16 %v913, %v905
    %v1146 = vpack.c.b16 %v914, %v906
    %v1147 = vpack.c.b16 %v915, %v907
    %v1148 = vpack.c.b16 %v916, %v908
    %v1149 = vpack.c.b16 %v925, %v917
    %v1150 = vpack.c.b16 %v926, %v918
    %v1151 = vpack.c.b16 %v927, %v919
    %v1152 = vpack.c.b16 %v928, %v920
    %v1153 = vpack.c.b16 %v929, %v921
    %v1154 = vpack.c.b16 %v930, %v922
    %v1155 = vpack.c.b16 %v931, %v923
    %v1156 = vpack.c.b16 %v932, %v924
    %v1157 = vpack.c.b16 %v941, %v933
    %v1158 = vpack.c.b16 %v942, %v934
    %v1159 = vpack.c.b16 %v943, %v935
    %v1160 = vpack.c.b16 %v944, %v936
    %v1161 = vpack.c.b16 %v945, %v937
    %v1162 = vpack.c.b16 %v946, %v938
    %v1163 = vpack.c.b16 %v947, %v939
    %v1164 = vpack.c.b16 %v948, %v940
    %v1165 = vpack.c.b16 %v957, %v949
    %v1166 = vpack.c.b16 %v958, %v950
    %v1167 = vpack.c.b16 %v959, %v951
    %v1168 = vpack.c.b16 %v960, %v952
    %v1169 = vpack.c.b16 %v961, %v953
    %v1170 = vpack.c.b16 %v962, %v954
    %v1171 = vpack.c.b16 %v963, %v955
    %v1172 = vpack.c.b16 %v964, %v956
    %v1173 = vpack.c.b16 %v973, %v965
    %v1174 = vpack.c.b16 %v974, %v966
    %v1175 = vpack.c.b16 %v975, %v967
    %v1176 = vpack.c.b16 %v976, %v968
    %v1177 = vpack.c.b16 %v977, %v969
    %v1178 = vpack.c.b16 %v978, %v970
    %v1179 = vpack.c.b16 %v979, %v971
    %v1180 = vpack.c.b16 %v980, %v972
    %v1181 = vpack.c.b16 %v989, %v981
    %v1182 = vpack.c.b16 %v990, %v982
    %v1183 = vpack.c.b16 %v991, %v983
    %v1184 = vpack.c.b16 %v992, %v984
    %v1185 = vpack.c.b16 %v993, %v985
    %v1186 = vpack.c.b16 %v994, %v986
    %v1187 = vpack.c.b16 %v995, %v987
    %v1188 = vpack.c.b16 %v996, %v988
    %v1189 = vpack.c.b16 %v1005, %v997
    %v1190 = vpack.c.b16 %v1006, %v998
    %v1191 = vpack.c.b16 %v1007, %v999
    %v1192 = vpack.c.b16 %v1008, %v1000
    %v1193 = vpack.c.b16 %v1009, %v1001
    %v1194 = vpack.c.b16 %v1010, %v1002
    %v1195 = vpack.c.b16 %v1011, %v1003
    %v1196 = vpack.c.b16 %v1012, %v1004
    %v1197 = vpack.c.b16 %v1021, %v1013
    %v1198 = vpack.c.b16 %v1022, %v1014
    %v1199 = vpack.c.b16 %v1023, %v1015
    %v1200 = vpack.c.b16 %v1024, %v1016
    %v1201 = vpack.c.b16 %v1025, %v1017
    %v1202 = vpack.c.b16 %v1026, %v1018
    %v1203 = vpack.c.b16 %v1027, %v1019
    %v1204 = vpack.c.b16 %v1028, %v1020
    %v1205 = vpack.c.b16 %v1037, %v1029
    %v1206 = vpack.c.b16 %v1038, %v1030
    %v1207 = vpack.c.b16 %v1039, %v1031
    %v1208 = vpack.c.b16 %v1040, %v1032
    %v1209 = vpack.c.b16 %v1041, %v1033
    %v1210 = vpack.c.b16 %v1042, %v1034
    %v1211 = vpack.c.b16 %v1043, %v1035
    %v1212 = vpack.c.b16 %v1044, %v1036
    %v1213 = vpack.c.b16 %v1053, %v1045
    %v1214 = vpack.c.b16 %v1054, %v1046
    %v1215 = vpack.c.b16 %v1055, %v1047
    %v1216 = vpack.c.b16 %v1056, %v1048
    %v1217 = vpack.c.b16 %v1057, %v1049
    %v1218 = vpack.c.b16 %v1058, %v1050
    %v1219 = vpack.c.b16 %v1059, %v1051
    %v1220 = vpack.c.b16 %v1060, %v1052
    %v1221 = vpack.c.b16 %v1069, %v1061
    %v1222 = vpack.c.b16 %v1070, %v1062
    %v1223 = vpack.c.b16 %v1071, %v1063
    %v1224 = vpack.c.b16 %v1072, %v1064
    %v1225 = vpack.c.b16 %v1073, %v1065
    %v1226 = vpack.c.b16 %v1074, %v1066
    %v1227 = vpack.c.b16 %v1075, %v1067
    %v1228 = vpack.c.b16 %v1076, %v1068
    %v1229 = vpack.c.b16 %v1085, %v1077
    %v1230 = vpack.c.b16 %v1086, %v1078
    %v1231 = vpack.c.b16 %v1087, %v1079
    %v1232 = vpack.c.b16 %v1088, %v1080
    %v1233 = vpack.c.b16 %v1089, %v1081
    %v1234 = vpack.c.b16 %v1090, %v1082
    %v1235 = vpack.c.b16 %v1091, %v1083
    %v1236 = vpack.c.b16 %v1092, %v1084
    %v1237 = vpack.c.b16 %v1101, %v1093
    %v1238 = vpack.c.b16 %v1102, %v1094
    %v1239 = vpack.c.b16 %v1103, %v1095
    %v1240 = vpack.c.b16 %v1104, %v1096
    %v1241 = vpack.c.b16 %v1105, %v1097
    %v1242 = vpack.c.b16 %v1106, %v1098
    %v1243 = vpack.c.b16 %v1107, %v1099
    %v1244 = vpack.c.b16 %v1108, %v1100
    %v1245 = vpack.c.b16 %v1117, %v1109
    %v1246 = vpack.c.b16 %v1118, %v1110
    %v1247 = vpack.c.b16 %v1119, %v1111
    %v1248 = vpack.c.b16 %v1120, %v1112
    %v1249 = vpack.c.b16 %v1121, %v1113
    %v1250 = vpack.c.b16 %v1122, %v1114
    %v1251 = vpack.c.b16 %v1123, %v1115
    %v1252 = vpack.c.b16 %v1124, %v1116
    %1381 = vmatprep.subr.bf16.mxu0 %v1126
    %1382 = vmatpush1.bf16.msra.mxu0 %v1125
    %1383 = vmatprep.subr.bf16.mxu0 %v1134
    %1384 = vmatpush1.bf16.msra.mxu0 %v1133
    %1385 = vmatprep.subr.bf16.mxu0 %v1142
    %1386 = vmatpush1.bf16.msra.mxu0 %v1141
    %1387 = vmatprep.subr.bf16.mxu0 %v1150
    %1388 = vmatpush1.bf16.msra.mxu0 %v1149
    %1389 = vmatprep.subr.bf16.mxu0 %v1158
    %1390 = vmatpush1.bf16.msra.mxu0 %v1157
    %1391 = vmatprep.subr.bf16.mxu0 %v1166
    %1392 = vmatpush1.bf16.msra.mxu0 %v1165
    %1393 = vmatprep.subr.bf16.mxu0 %v1174
    %1394 = vmatpush1.bf16.msra.mxu0 %v1173
    %1395 = vmatprep.subr.bf16.mxu0 %v1182
    %1396 = vmatpush1.bf16.msra.mxu0 %v1181
    %1397 = vmatprep.subr.bf16.mxu0 %v1190
    %1398 = vmatpush1.bf16.msra.mxu0 %v1189
    %1399 = vmatprep.subr.bf16.mxu0 %v1198
    %1400 = vmatpush1.bf16.msra.mxu0 %v1197
    %1401 = vmatprep.subr.bf16.mxu0 %v1206
    %1402 = vmatpush1.bf16.msra.mxu0 %v1205
    %1403 = vmatprep.subr.bf16.mxu0 %v1214
    %1404 = vmatpush1.bf16.msra.mxu0 %v1213
    %1405 = vmatprep.subr.bf16.mxu0 %v1222
    %1406 = vmatpush1.bf16.msra.mxu0 %v1221
    %1407 = vmatprep.subr.bf16.mxu0 %v1230
    %1408 = vmatpush1.bf16.msra.mxu0 %v1229
    %1409 = vmatprep.subr.bf16.mxu0 %v1238
    %1410 = vmatpush1.bf16.msra.mxu0 %v1237
    %1411 = vmatprep.subr.bf16.mxu0 %v1246
    %1412 = vmatpush1.bf16.msra.mxu0 %v1245
    %1413 = vmatprep.mubr.bf16.mxu0 0
    %1414 = vmatmul.mubr.bf16.gmra.mrb[0].mxu0 0
    %v1415 = vpop.f32.mrb[0].mxu0
    %v1416 = vadd.f32 0.0, %v1415
    %v1417 = vpop.f32.mrb[0].mxu0
    %v1418 = vadd.f32 0.0, %v1417
    %v1419 = vpop.f32.mrb[0].mxu0
    %v1420 = vpop.f32.mrb[0].mxu0
    %1421 = vdwg.mxu0
    %1422 = vmatprep.subr.bf16.mxu0 %v1128
    %1423 = vmatpush1.bf16.msra.mxu0 %v1127
    %1424 = vmatprep.subr.bf16.mxu0 %v1136
    %1425 = vmatpush1.bf16.msra.mxu0 %v1135
    %1426 = vmatprep.subr.bf16.mxu0 %v1144
    %1427 = vmatpush1.bf16.msra.mxu0 %v1143
    %1428 = vmatprep.subr.bf16.mxu0 %v1152
    %1429 = vmatpush1.bf16.msra.mxu0 %v1151
    %1430 = vmatprep.subr.bf16.mxu0 %v1160
    %1431 = vmatpush1.bf16.msra.mxu0 %v1159
    %1432 = vmatprep.subr.bf16.mxu0 %v1168
    %1433 = vmatpush1.bf16.msra.mxu0 %v1167
    %1434 = vmatprep.subr.bf16.mxu0 %v1176
    %1435 = vmatpush1.bf16.msra.mxu0 %v1175
    %1436 = vmatprep.subr.bf16.mxu0 %v1184
    %1437 = vmatpush1.bf16.msra.mxu0 %v1183
    %1438 = vmatprep.subr.bf16.mxu0 %v1192
    %1439 = vmatpush1.bf16.msra.mxu0 %v1191
    %1440 = vmatprep.subr.bf16.mxu0 %v1200
    %1441 = vmatpush1.bf16.msra.mxu0 %v1199
    %1442 = vmatprep.subr.bf16.mxu0 %v1208
    %1443 = vmatpush1.bf16.msra.mxu0 %v1207
    %1444 = vmatprep.subr.bf16.mxu0 %v1216
    %1445 = vmatpush1.bf16.msra.mxu0 %v1215
    %1446 = vmatprep.subr.bf16.mxu0 %v1224
    %1447 = vmatpush1.bf16.msra.mxu0 %v1223
    %1448 = vmatprep.subr.bf16.mxu0 %v1232
    %1449 = vmatpush1.bf16.msra.mxu0 %v1231
    %1450 = vmatprep.subr.bf16.mxu0 %v1240
    %1451 = vmatpush1.bf16.msra.mxu0 %v1239
    %1452 = vmatprep.subr.bf16.mxu0 %v1248
    %1453 = vmatpush1.bf16.msra.mxu0 %v1247
    %1454 = vmatprep.mubr.bf16.mxu0 0
    %1455 = vmatmul.mubr.bf16.gmra.mrb[0].mxu0 0
    %v1456 = vpop.f32.mrb[0].mxu0
    %v1457 = vadd.f32 0.0, %v1456
    %v1458 = vpop.f32.mrb[0].mxu0
    %v1459 = vadd.f32 0.0, %v1458
    %v1460 = vpop.f32.mrb[0].mxu0
    %v1461 = vpop.f32.mrb[0].mxu0
    %1462 = vdwg.mxu0
    %1463 = vmatprep.subr.bf16.mxu0 %v1130
    %1464 = vmatpush1.bf16.msra.mxu0 %v1129
    %1465 = vmatprep.subr.bf16.mxu0 %v1138
    %1466 = vmatpush1.bf16.msra.mxu0 %v1137
    %1467 = vmatprep.subr.bf16.mxu0 %v1146
    %1468 = vmatpush1.bf16.msra.mxu0 %v1145
    %1469 = vmatprep.subr.bf16.mxu0 %v1154
    %1470 = vmatpush1.bf16.msra.mxu0 %v1153
    %1471 = vmatprep.subr.bf16.mxu0 %v1162
    %1472 = vmatpush1.bf16.msra.mxu0 %v1161
    %1473 = vmatprep.subr.bf16.mxu0 %v1170
    %1474 = vmatpush1.bf16.msra.mxu0 %v1169
    %1475 = vmatprep.subr.bf16.mxu0 %v1178
    %1476 = vmatpush1.bf16.msra.mxu0 %v1177
    %1477 = vmatprep.subr.bf16.mxu0 %v1186
    %1478 = vmatpush1.bf16.msra.mxu0 %v1185
    %1479 = vmatprep.subr.bf16.mxu0 %v1194
    %1480 = vmatpush1.bf16.msra.mxu0 %v1193
    %1481 = vmatprep.subr.bf16.mxu0 %v1202
    %1482 = vmatpush1.bf16.msra.mxu0 %v1201
    %1483 = vmatprep.subr.bf16.mxu0 %v1210
    %1484 = vmatpush1.bf16.msra.mxu0 %v1209
    %1485 = vmatprep.subr.bf16.mxu0 %v1218
    %1486 = vmatpush1.bf16.msra.mxu0 %v1217
    %1487 = vmatprep.subr.bf16.mxu0 %v1226
    %1488 = vmatpush1.bf16.msra.mxu0 %v1225
    %1489 = vmatprep.subr.bf16.mxu0 %v1234
    %1490 = vmatpush1.bf16.msra.mxu0 %v1233
    %1491 = vmatprep.subr.bf16.mxu0 %v1242
    %1492 = vmatpush1.bf16.msra.mxu0 %v1241
    %1493 = vmatprep.subr.bf16.mxu0 %v1250
    %1494 = vmatpush1.bf16.msra.mxu0 %v1249
    %1495 = vmatprep.mubr.bf16.mxu0 0
    %1496 = vmatmul.mubr.bf16.gmra.mrb[0].mxu0 0
    %v1497 = vpop.f32.mrb[0].mxu0
    %v1498 = vadd.f32 0.0, %v1497
    %v1499 = vpop.f32.mrb[0].mxu0
    %v1500 = vadd.f32 0.0, %v1499
    %v1501 = vpop.f32.mrb[0].mxu0
    %v1502 = vpop.f32.mrb[0].mxu0
    %1503 = vdwg.mxu0
    %1504 = vmatprep.subr.bf16.mxu0 %v1132
    %1505 = vmatpush1.bf16.msra.mxu0 %v1131
    %1506 = vmatprep.subr.bf16.mxu0 %v1140
    %1507 = vmatpush1.bf16.msra.mxu0 %v1139
    %1508 = vmatprep.subr.bf16.mxu0 %v1148
    %1509 = vmatpush1.bf16.msra.mxu0 %v1147
    %1510 = vmatprep.subr.bf16.mxu0 %v1156
    %1511 = vmatpush1.bf16.msra.mxu0 %v1155
    %1512 = vmatprep.subr.bf16.mxu0 %v1164
    %1513 = vmatpush1.bf16.msra.mxu0 %v1163
    %1514 = vmatprep.subr.bf16.mxu0 %v1172
    %1515 = vmatpush1.bf16.msra.mxu0 %v1171
    %1516 = vmatprep.subr.bf16.mxu0 %v1180
    %1517 = vmatpush1.bf16.msra.mxu0 %v1179
    %1518 = vmatprep.subr.bf16.mxu0 %v1188
    %1519 = vmatpush1.bf16.msra.mxu0 %v1187
    %1520 = vmatprep.subr.bf16.mxu0 %v1196
    %1521 = vmatpush1.bf16.msra.mxu0 %v1195
    %1522 = vmatprep.subr.bf16.mxu0 %v1204
    %1523 = vmatpush1.bf16.msra.mxu0 %v1203
    %1524 = vmatprep.subr.bf16.mxu0 %v1212
    %1525 = vmatpush1.bf16.msra.mxu0 %v1211
    %1526 = vmatprep.subr.bf16.mxu0 %v1220
    %1527 = vmatpush1.bf16.msra.mxu0 %v1219
    %1528 = vmatprep.subr.bf16.mxu0 %v1228
    %1529 = vmatpush1.bf16.msra.mxu0 %v1227
    %1530 = vmatprep.subr.bf16.mxu0 %v1236
    %1531 = vmatpush1.bf16.msra.mxu0 %v1235
    %1532 = vmatprep.subr.bf16.mxu0 %v1244
    %1533 = vmatpush1.bf16.msra.mxu0 %v1243
    %1534 = vmatprep.subr.bf16.mxu0 %v1252
    %1535 = vmatpush1.bf16.msra.mxu0 %v1251
    %1536 = vmatprep.mubr.bf16.mxu0 0
    %1537 = vmatmul.mubr.bf16.gmra.mrb[0].mxu0 0
    %v1538 = vpop.f32.mrb[0].mxu0
    %v1539 = vadd.f32 0.0, %v1538
    %v1540 = vpop.f32.mrb[0].mxu0
    %v1541 = vadd.f32 0.0, %v1540
    %v1542 = vpop.f32.mrb[0].mxu0
    %v1543 = vpop.f32.mrb[0].mxu0
    %1544 = vdwg.mxu0
    %s1545 = smul.u32 0, 8
    %s1546 = smul.addr %s1545, 8
    %s1547 = scalar_lea.vmem [#allocation2], %s1546
    %v1548 = vld [vmem:[%s1547] sm:$0xff]
    %v1549 = vld [vmem:[%s1547 + $0x8] sm:$0xff]
    %v1550 = vld [vmem:[%s1547 + $0x10] sm:$0xff]
    %v1551 = vld [vmem:[%s1547 + $0x18] sm:$0xff]
    %v1552 = vadd.f32 %v1548, %v1416
    %v1553 = vadd.f32 %v1549, %v1418
    %v1554 = vadd.f32 %v1550, %v1457
    %v1555 = vadd.f32 %v1551, %v1459
    %s1556 = smul.u32 7, 8
    %s1557 = smul.addr %s1556, 8
    %s1558 = scalar_lea.vmem [#allocation2], %s1557
    %v1559 = vld [vmem:[%s1558 + $0x20] sm:$0xff]
    %v1560 = vld [vmem:[%s1558 + $0x28] sm:$0xff]
    %v1561 = vld [vmem:[%s1558 + $0x30] sm:$0xff]
    %v1562 = vld [vmem:[%s1558 + $0x38] sm:$0xff]
    %v1563 = vadd.f32 %v1559, %v1498
    %v1564 = vadd.f32 %v1560, %v1500
    %v1565 = vadd.f32 %v1561, %v1539
    %v1566 = vadd.f32 %v1562, %v1541
    %v1567 = vxor.u32 %v1552, 2147483648
    %v1568 = vxor.u32 %v1563, 2147483648
    %v1569 = vmul.f32 %v1567, 1.442695
    %v1570 = vpow.pop %v1569
    %v1571 = vmul.f32 %v1568, 1.442695
    %v1572 = vpow.pop %v1571
    %v1573 = vadd.f32 %v1570, 1.0
    %v1574 = vadd.f32 %v1572, 1.0
    %v1575 = vrcp.pop %v1573
    %v1576 = vmul.f32 1.0, %v1575
    %v1577 = vrcp.pop %v1574
    %v1578 = vmul.f32 1.0, %v1577
    %v1579 = vxor.u32 %v1553, 2147483648
    %v1580 = vxor.u32 %v1564, 2147483648
    %v1581 = vmul.f32 %v1579, 1.442695
    %v1582 = vpow.pop %v1581
    %v1583 = vmul.f32 %v1580, 1.442695
    %v1584 = vpow.pop %v1583
    %v1585 = vadd.f32 %v1582, 1.0
    %v1586 = vadd.f32 %v1584, 1.0
    %v1587 = vrcp.pop %v1585
    %v1588 = vmul.f32 1.0, %v1587
    %v1589 = vrcp.pop %v1586
    %v1590 = vmul.f32 1.0, %v1589
    %v1591 = vtanh.pop %v1554
    %v1592 = vtanh.pop %v1565
    %v1593 = vxor.u32 %v1555, 2147483648
    %v1594 = vxor.u32 %v1566, 2147483648
    %v1595 = vmul.f32 %v1593, 1.442695
    %v1596 = vpow.pop %v1595
    %v1597 = vmul.f32 %v1594, 1.442695
    %v1598 = vpow.pop %v1597
    %v1599 = vadd.f32 %v1596, 1.0
    %v1600 = vadd.f32 %v1598, 1.0
    %v1601 = vrcp.pop %v1599
    %v1602 = vmul.f32 1.0, %v1601
    %v1603 = vrcp.pop %v1600
    %v1604 = vmul.f32 1.0, %v1603
    %v1605 = vmul.f32 %v1588, 0.0
    %v1606 = vmul.f32 %v1590, 0.0
    %v1607 = vmul.f32 %v1576, %v1591
    %v1608 = vmul.f32 %v1578, %v1592
    %v1609 = vadd.f32 %v1605, %v1607
    %v1610 = vadd.f32 %v1606, %v1608
    %v1611 = vtanh.pop %v1609
    %v1612 = vtanh.pop %v1610
    %v1613 = vmul.f32 %v1602, %v1611
    %v1614 = vmul.f32 %v1604, %v1612
    %v1615 = vpack.c.bf16 %v1613, %v1613
    %v1616 = vpack.c.bf16 %v1614, %v1614
    %1617 = vmatprep.subr.bf16.mxu0 %v1126
    %1618 = vmatpush1.bf16.msra.mxu0 %v1125
    %1619 = vmatprep.subr.bf16.mxu0 %v1134
    %1620 = vmatpush1.bf16.msra.mxu0 %v1133
    %1621 = vmatprep.subr.bf16.mxu0 %v1142
    %1622 = vmatpush1.bf16.msra.mxu0 %v1141
    %1623 = vmatprep.subr.bf16.mxu0 %v1150
    %1624 = vmatpush1.bf16.msra.mxu0 %v1149
    %1625 = vmatprep.subr.bf16.mxu0 %v1158
    %1626 = vmatpush1.bf16.msra.mxu0 %v1157
    %1627 = vmatprep.subr.bf16.mxu0 %v1166
    %1628 = vmatpush1.bf16.msra.mxu0 %v1165
    %1629 = vmatprep.subr.bf16.mxu0 %v1174
    %1630 = vmatpush1.bf16.msra.mxu0 %v1173
    %1631 = vmatprep.subr.bf16.mxu0 %v1182
    %1632 = vmatpush1.bf16.msra.mxu0 %v1181
    %1633 = vmatprep.subr.bf16.mxu0 %v1190
    %1634 = vmatpush1.bf16.msra.mxu0 %v1189
    %1635 = vmatprep.subr.bf16.mxu0 %v1198
    %1636 = vmatpush1.bf16.msra.mxu0 %v1197
    %1637 = vmatprep.subr.bf16.mxu0 %v1206
    %1638 = vmatpush1.bf16.msra.mxu0 %v1205
    %1639 = vmatprep.subr.bf16.mxu0 %v1214
    %1640 = vmatpush1.bf16.msra.mxu0 %v1213
    %1641 = vmatprep.subr.bf16.mxu0 %v1222
    %1642 = vmatpush1.bf16.msra.mxu0 %v1221
    %1643 = vmatprep.subr.bf16.mxu0 %v1230
    %1644 = vmatpush1.bf16.msra.mxu0 %v1229
    %1645 = vmatprep.subr.bf16.mxu0 %v1238
    %1646 = vmatpush1.bf16.msra.mxu0 %v1237
    %1647 = vmatprep.subr.bf16.mxu0 %v1246
    %1648 = vmatpush1.bf16.msra.mxu0 %v1245
    %1649 = vmatprep.mubr.bf16.mxu0 %v1616
    %1650 = vmatmul.mubr.bf16.gmra.mrb[0].mxu0 %v1615
    %v1651 = vpop.f32.mrb[0].mxu0
    %v1652 = vadd.f32 0.0, %v1651
    %v1653 = vpop.f32.mrb[0].mxu0
    %v1654 = vadd.f32 0.0, %v1653
    %v1655 = vpop.f32.mrb[0].mxu0
    %v1656 = vpop.f32.mrb[0].mxu0
    %1657 = vdwg.mxu0
    %1658 = vmatprep.subr.bf16.mxu0 %v1128
    %1659 = vmatpush1.bf16.msra.mxu0 %v1127
    %1660 = vmatprep.subr.bf16.mxu0 %v1136
    %1661 = vmatpush1.bf16.msra.mxu0 %v1135
    %1662 = vmatprep.subr.bf16.mxu0 %v1144
    %1663 = vmatpush1.bf16.msra.mxu0 %v1143
    %1664 = vmatprep.subr.bf16.mxu0 %v1152
    %1665 = vmatpush1.bf16.msra.mxu0 %v1151
    %1666 = vmatprep.subr.bf16.mxu0 %v1160
    %1667 = vmatpush1.bf16.msra.mxu0 %v1159
    %1668 = vmatprep.subr.bf16.mxu0 %v1168
    %1669 = vmatpush1.bf16.msra.mxu0 %v1167
    %1670 = vmatprep.subr.bf16.mxu0 %v1176
    %1671 = vmatpush1.bf16.msra.mxu0 %v1175
    %1672 = vmatprep.subr.bf16.mxu0 %v1184
    %1673 = vmatpush1.bf16.msra.mxu0 %v1183
    %1674 = vmatprep.subr.bf16.mxu0 %v1192
    %1675 = vmatpush1.bf16.msra.mxu0 %v1191
    %1676 = vmatprep.subr.bf16.mxu0 %v1200
    %1677 = vmatpush1.bf16.msra.mxu0 %v1199
    %1678 = vmatprep.subr.bf16.mxu0 %v1208
    %1679 = vmatpush1.bf16.msra.mxu0 %v1207
    %1680 = vmatprep.subr.bf16.mxu0 %v1216
    %1681 = vmatpush1.bf16.msra.mxu0 %v1215
    %1682 = vmatprep.subr.bf16.mxu0 %v1224
    %1683 = vmatpush1.bf16.msra.mxu0 %v1223
    %1684 = vmatprep.subr.bf16.mxu0 %v1232
    %1685 = vmatpush1.bf16.msra.mxu0 %v1231
    %1686 = vmatprep.subr.bf16.mxu0 %v1240
    %1687 = vmatpush1.bf16.msra.mxu0 %v1239
    %1688 = vmatprep.subr.bf16.mxu0 %v1248
    %1689 = vmatpush1.bf16.msra.mxu0 %v1247
    %1690 = vmatprep.mubr.bf16.mxu0 %v1616
    %1691 = vmatmul.mubr.bf16.gmra.mrb[0].mxu0 %v1615
    %v1692 = vpop.f32.mrb[0].mxu0
    %v1693 = vadd.f32 0.0, %v1692
    %v1694 = vpop.f32.mrb[0].mxu0
    %v1695 = vadd.f32 0.0, %v1694
    %v1696 = vpop.f32.mrb[0].mxu0
    %v1697 = vpop.f32.mrb[0].mxu0
    %1698 = vdwg.mxu0
    %1699 = vmatprep.subr.bf16.mxu0 %v1130
    %1700 = vmatpush1.bf16.msra.mxu0 %v1129
    %1701 = vmatprep.subr.bf16.mxu0 %v1138
    %1702 = vmatpush1.bf16.msra.mxu0 %v1137
    %1703 = vmatprep.subr.bf16.mxu0 %v1146
    %1704 = vmatpush1.bf16.msra.mxu0 %v1145
    %1705 = vmatprep.subr.bf16.mxu0 %v1154
    %1706 = vmatpush1.bf16.msra.mxu0 %v1153
    %1707 = vmatprep.subr.bf16.mxu0 %v1162
    %1708 = vmatpush1.bf16.msra.mxu0 %v1161
    %1709 = vmatprep.subr.bf16.mxu0 %v1170
    %1710 = vmatpush1.bf16.msra.mxu0 %v1169
    %1711 = vmatprep.subr.bf16.mxu0 %v1178
    %1712 = vmatpush1.bf16.msra.mxu0 %v1177
    %1713 = vmatprep.subr.bf16.mxu0 %v1186
    %1714 = vmatpush1.bf16.msra.mxu0 %v1185
    %1715 = vmatprep.subr.bf16.mxu0 %v1194
    %1716 = vmatpush1.bf16.msra.mxu0 %v1193
    %1717 = vmatprep.subr.bf16.mxu0 %v1202
    %1718 = vmatpush1.bf16.msra.mxu0 %v1201
    %1719 = vmatprep.subr.bf16.mxu0 %v1210
    %1720 = vmatpush1.bf16.msra.mxu0 %v1209
    %1721 = vmatprep.subr.bf16.mxu0 %v1218
    %1722 = vmatpush1.bf16.msra.mxu0 %v1217
    %1723 = vmatprep.subr.bf16.mxu0 %v1226
    %1724 = vmatpush1.bf16.msra.mxu0 %v1225
    %1725 = vmatprep.subr.bf16.mxu0 %v1234
    %1726 = vmatpush1.bf16.msra.mxu0 %v1233
    %1727 = vmatprep.subr.bf16.mxu0 %v1242
    %1728 = vmatpush1.bf16.msra.mxu0 %v1241
    %1729 = vmatprep.subr.bf16.mxu0 %v1250
    %1730 = vmatpush1.bf16.msra.mxu0 %v1249
    %1731 = vmatprep.mubr.bf16.mxu0 %v1616
    %1732 = vmatmul.mubr.bf16.gmra.mrb[0].mxu0 %v1615
    %v1733 = vpop.f32.mrb[0].mxu0
    %v1734 = vadd.f32 0.0, %v1733
    %v1735 = vpop.f32.mrb[0].mxu0
    %v1736 = vadd.f32 0.0, %v1735
    %v1737 = vpop.f32.mrb[0].mxu0
    %v1738 = vpop.f32.mrb[0].mxu0
    %1739 = vdwg.mxu0
    %1740 = vmatprep.subr.bf16.mxu0 %v1132
    %1741 = vmatpush1.bf16.msra.mxu0 %v1131
    %1742 = vmatprep.subr.bf16.mxu0 %v1140
    %1743 = vmatpush1.bf16.msra.mxu0 %v1139
    %1744 = vmatprep.subr.bf16.mxu0 %v1148
    %1745 = vmatpush1.bf16.msra.mxu0 %v1147
    %1746 = vmatprep.subr.bf16.mxu0 %v1156
    %1747 = vmatpush1.bf16.msra.mxu0 %v1155
    %1748 = vmatprep.subr.bf16.mxu0 %v1164
    %1749 = vmatpush1.bf16.msra.mxu0 %v1163
    %1750 = vmatprep.subr.bf16.mxu0 %v1172
    %1751 = vmatpush1.bf16.msra.mxu0 %v1171
    %1752 = vmatprep.subr.bf16.mxu0 %v1180
    %1753 = vmatpush1.bf16.msra.mxu0 %v1179
    %1754 = vmatprep.subr.bf16.mxu0 %v1188
    %1755 = vmatpush1.bf16.msra.mxu0 %v1187
    %1756 = vmatprep.subr.bf16.mxu0 %v1196
    %1757 = vmatpush1.bf16.msra.mxu0 %v1195
    %1758 = vmatprep.subr.bf16.mxu0 %v1204
    %1759 = vmatpush1.bf16.msra.mxu0 %v1203
    %1760 = vmatprep.subr.bf16.mxu0 %v1212
    %1761 = vmatpush1.bf16.msra.mxu0 %v1211
    %1762 = vmatprep.subr.bf16.mxu0 %v1220
    %1763 = vmatpush1.bf16.msra.mxu0 %v1219
    %1764 = vmatprep.subr.bf16.mxu0 %v1228
    %1765 = vmatpush1.bf16.msra.mxu0 %v1227
    %1766 = vmatprep.subr.bf16.mxu0 %v1236
    %1767 = vmatpush1.bf16.msra.mxu0 %v1235
    %1768 = vmatprep.subr.bf16.mxu0 %v1244
    %1769 = vmatpush1.bf16.msra.mxu0 %v1243
    %1770 = vmatprep.subr.bf16.mxu0 %v1252
    %1771 = vmatpush1.bf16.msra.mxu0 %v1251
    %1772 = vmatprep.mubr.bf16.mxu0 %v1616
    %1773 = vmatmul.mubr.bf16.gmra.mrb[0].mxu0 %v1615
    %v1774 = vpop.f32.mrb[0].mxu0
    %v1775 = vadd.f32 0.0, %v1774
    %v1776 = vpop.f32.mrb[0].mxu0
    %v1777 = vadd.f32 0.0, %v1776
    %v1778 = vpop.f32.mrb[0].mxu0
    %v1779 = vpop.f32.mrb[0].mxu0
    %1780 = vdwg.mxu0
    %s1781 = smul.u32 1, 8
    %s1782 = smul.addr %s1781, 8
    %s1783 = scalar_lea.vmem [#allocation2], %s1782
    %v1784 = vld [vmem:[%s1783] sm:$0xff]
    %v1785 = vld [vmem:[%s1783 + $0x8] sm:$0xff]
    %v1786 = vld [vmem:[%s1783 + $0x10] sm:$0xff]
    %v1787 = vld [vmem:[%s1783 + $0x18] sm:$0xff]
    %v1788 = vadd.f32 %v1784, %v1652
    %v1789 = vadd.f32 %v1785, %v1654
    %v1790 = vadd.f32 %v1786, %v1693
    %v1791 = vadd.f32 %v1787, %v1695
    %s1792 = smul.u32 6, 8
    %s1793 = smul.addr %s1792, 8
    %s1794 = scalar_lea.vmem [#allocation2], %s1793
    %v1795 = vld [vmem:[%s1794 + $0x20] sm:$0xff]
    %v1796 = vld [vmem:[%s1794 + $0x28] sm:$0xff]
    %v1797 = vld [vmem:[%s1794 + $0x30] sm:$0xff]
    %v1798 = vld [vmem:[%s1794 + $0x38] sm:$0xff]
    %v1799 = vadd.f32 %v1795, %v1734
    %v1800 = vadd.f32 %v1796, %v1736
    %v1801 = vadd.f32 %v1797, %v1775
    %v1802 = vadd.f32 %v1798, %v1777
    %v1803 = vxor.u32 %v1788, 2147483648
    %v1804 = vxor.u32 %v1799, 2147483648
    %v1805 = vmul.f32 %v1803, 1.442695
    %v1806 = vpow.pop %v1805
    %v1807 = vmul.f32 %v1804, 1.442695
    %v1808 = vpow.pop %v1807
    %v1809 = vadd.f32 %v1806, 1.0
    %v1810 = vadd.f32 %v1808, 1.0
    %v1811 = vrcp.pop %v1809
    %v1812 = vmul.f32 1.0, %v1811
    %v1813 = vrcp.pop %v1810
    %v1814 = vmul.f32 1.0, %v1813
    %v1815 = vxor.u32 %v1789, 2147483648
    %v1816 = vxor.u32 %v1800, 2147483648
    %v1817 = vmul.f32 %v1815, 1.442695
    %v1818 = vpow.pop %v1817
    %v1819 = vmul.f32 %v1816, 1.442695
    %v1820 = vpow.pop %v1819
    %v1821 = vadd.f32 %v1818, 1.0
    %v1822 = vadd.f32 %v1820, 1.0
    %v1823 = vrcp.pop %v1821
    %v1824 = vmul.f32 1.0, %v1823
    %v1825 = vrcp.pop %v1822
    %v1826 = vmul.f32 1.0, %v1825
    %v1827 = vtanh.pop %v1790
    %v1828 = vtanh.pop %v1801
    %v1829 = vxor.u32 %v1791, 2147483648
    %v1830 = vxor.u32 %v1802, 2147483648
    %v1831 = vmul.f32 %v1829, 1.442695
    %v1832 = vpow.pop %v1831
    %v1833 = vmul.f32 %v1830, 1.442695
    %v1834 = vpow.pop %v1833
    %v1835 = vadd.f32 %v1832, 1.0
    %v1836 = vadd.f32 %v1834, 1.0
    %v1837 = vrcp.pop %v1835
    %v1838 = vmul.f32 1.0, %v1837
    %v1839 = vrcp.pop %v1836
    %v1840 = vmul.f32 1.0, %v1839
    %v1841 = vmul.f32 %v1824, %v1609
    %v1842 = vmul.f32 %v1826, %v1610
    %v1843 = vmul.f32 %v1812, %v1827
    %v1844 = vmul.f32 %v1814, %v1828
    %v1845 = vadd.f32 %v1841, %v1843
    %v1846 = vadd.f32 %v1842, %v1844
    %v1847 = vtanh.pop %v1845
    %v1848 = vtanh.pop %v1846
    %v1849 = vmul.f32 %v1838, %v1847
    %v1850 = vmul.f32 %v1840, %v1848
    %v1851 = vpack.c.bf16 %v1849, %v1849
    %v1852 = vpack.c.bf16 %v1850, %v1850
    %1853 = vmatprep.subr.bf16.mxu0 %v1126
    %1854 = vmatpush1.bf16.msra.mxu0 %v1125
    %1855 = vmatprep.subr.bf16.mxu0 %v1134
    %1856 = vmatpush1.bf16.msra.mxu0 %v1133
    %1857 = vmatprep.subr.bf16.mxu0 %v1142
    %1858 = vmatpush1.bf16.msra.mxu0 %v1141
    %1859 = vmatprep.subr.bf16.mxu0 %v1150
    %1860 = vmatpush1.bf16.msra.mxu0 %v1149
    %1861 = vmatprep.subr.bf16.mxu0 %v1158
    %1862 = vmatpush1.bf16.msra.mxu0 %v1157
    %1863 = vmatprep.subr.bf16.mxu0 %v1166
    %1864 = vmatpush1.bf16.msra.mxu0 %v1165
    %1865 = vmatprep.subr.bf16.mxu0 %v1174
    %1866 = vmatpush1.bf16.msra.mxu0 %v1173
    %1867 = vmatprep.subr.bf16.mxu0 %v1182
    %1868 = vmatpush1.bf16.msra.mxu0 %v1181
    %1869 = vmatprep.subr.bf16.mxu0 %v1190
    %1870 = vmatpush1.bf16.msra.mxu0 %v1189
    %1871 = vmatprep.subr.bf16.mxu0 %v1198
    %1872 = vmatpush1.bf16.msra.mxu0 %v1197
    %1873 = vmatprep.subr.bf16.mxu0 %v1206
    %1874 = vmatpush1.bf16.msra.mxu0 %v1205
    %1875 = vmatprep.subr.bf16.mxu0 %v1214
    %1876 = vmatpush1.bf16.msra.mxu0 %v1213
    %1877 = vmatprep.subr.bf16.mxu0 %v1222
    %1878 = vmatpush1.bf16.msra.mxu0 %v1221
    %1879 = vmatprep.subr.bf16.mxu0 %v1230
    %1880 = vmatpush1.bf16.msra.mxu0 %v1229
    %1881 = vmatprep.subr.bf16.mxu0 %v1238
    %1882 = vmatpush1.bf16.msra.mxu0 %v1237
    %1883 = vmatprep.subr.bf16.mxu0 %v1246
    %1884 = vmatpush1.bf16.msra.mxu0 %v1245
    %1885 = vmatprep.mubr.bf16.mxu0 %v1852
    %1886 = vmatmul.mubr.bf16.gmra.mrb[0].mxu0 %v1851
    %v1887 = vpop.f32.mrb[0].mxu0
    %v1888 = vadd.f32 0.0, %v1887
    %v1889 = vpop.f32.mrb[0].mxu0
    %v1890 = vadd.f32 0.0, %v1889
    %v1891 = vpop.f32.mrb[0].mxu0
    %v1892 = vpop.f32.mrb[0].mxu0
    %1893 = vdwg.mxu0
    %1894 = vmatprep.subr.bf16.mxu0 %v1128
    %1895 = vmatpush1.bf16.msra.mxu0 %v1127
    %1896 = vmatprep.subr.bf16.mxu0 %v1136
    %1897 = vmatpush1.bf16.msra.mxu0 %v1135
    %1898 = vmatprep.subr.bf16.mxu0 %v1144
    %1899 = vmatpush1.bf16.msra.mxu0 %v1143
    %1900 = vmatprep.subr.bf16.mxu0 %v1152
    %1901 = vmatpush1.bf16.msra.mxu0 %v1151
    %1902 = vmatprep.subr.bf16.mxu0 %v1160
    %1903 = vmatpush1.bf16.msra.mxu0 %v1159
    %1904 = vmatprep.subr.bf16.mxu0 %v1168
    %1905 = vmatpush1.bf16.msra.mxu0 %v1167
    %1906 = vmatprep.subr.bf16.mxu0 %v1176
    %1907 = vmatpush1.bf16.msra.mxu0 %v1175
    %1908 = vmatprep.subr.bf16.mxu0 %v1184
    %1909 = vmatpush1.bf16.msra.mxu0 %v1183
    %1910 = vmatprep.subr.bf16.mxu0 %v1192
    %1911 = vmatpush1.bf16.msra.mxu0 %v1191
    %1912 = vmatprep.subr.bf16.mxu0 %v1200
    %1913 = vmatpush1.bf16.msra.mxu0 %v1199
    %1914 = vmatprep.subr.bf16.mxu0 %v1208
    %1915 = vmatpush1.bf16.msra.mxu0 %v1207
    %1916 = vmatprep.subr.bf16.mxu0 %v1216
    %1917 = vmatpush1.bf16.msra.mxu0 %v1215
    %1918 = vmatprep.subr.bf16.mxu0 %v1224
    %1919 = vmatpush1.bf16.msra.mxu0 %v1223
    %1920 = vmatprep.subr.bf16.mxu0 %v1232
    %1921 = vmatpush1.bf16.msra.mxu0 %v1231
    %1922 = vmatprep.subr.bf16.mxu0 %v1240
    %1923 = vmatpush1.bf16.msra.mxu0 %v1239
    %1924 = vmatprep.subr.bf16.mxu0 %v1248
    %1925 = vmatpush1.bf16.msra.mxu0 %v1247
    %1926 = vmatprep.mubr.bf16.mxu0 %v1852
    %1927 = vmatmul.mubr.bf16.gmra.mrb[0].mxu0 %v1851
    %v1928 = vpop.f32.mrb[0].mxu0
    %v1929 = vadd.f32 0.0, %v1928
    %v1930 = vpop.f32.mrb[0].mxu0
    %v1931 = vadd.f32 0.0, %v1930
    %v1932 = vpop.f32.mrb[0].mxu0
    %v1933 = vpop.f32.mrb[0].mxu0
    %1934 = vdwg.mxu0
    %1935 = vmatprep.subr.bf16.mxu0 %v1130
    %1936 = vmatpush1.bf16.msra.mxu0 %v1129
    %1937 = vmatprep.subr.bf16.mxu0 %v1138
    %1938 = vmatpush1.bf16.msra.mxu0 %v1137
    %1939 = vmatprep.subr.bf16.mxu0 %v1146
    %1940 = vmatpush1.bf16.msra.mxu0 %v1145
    %1941 = vmatprep.subr.bf16.mxu0 %v1154
    %1942 = vmatpush1.bf16.msra.mxu0 %v1153
    %1943 = vmatprep.subr.bf16.mxu0 %v1162
    %1944 = vmatpush1.bf16.msra.mxu0 %v1161
    %1945 = vmatprep.subr.bf16.mxu0 %v1170
    %1946 = vmatpush1.bf16.msra.mxu0 %v1169
    %1947 = vmatprep.subr.bf16.mxu0 %v1178
    %1948 = vmatpush1.bf16.msra.mxu0 %v1177
    %1949 = vmatprep.subr.bf16.mxu0 %v1186
    %1950 = vmatpush1.bf16.msra.mxu0 %v1185
    %1951 = vmatprep.subr.bf16.mxu0 %v1194
    %1952 = vmatpush1.bf16.msra.mxu0 %v1193
    %1953 = vmatprep.subr.bf16.mxu0 %v1202
    %1954 = vmatpush1.bf16.msra.mxu0 %v1201
    %1955 = vmatprep.subr.bf16.mxu0 %v1210
    %1956 = vmatpush1.bf16.msra.mxu0 %v1209
    %1957 = vmatprep.subr.bf16.mxu0 %v1218
    %1958 = vmatpush1.bf16.msra.mxu0 %v1217
    %1959 = vmatprep.subr.bf16.mxu0 %v1226
    %1960 = vmatpush1.bf16.msra.mxu0 %v1225
    %1961 = vmatprep.subr.bf16.mxu0 %v1234
    %1962 = vmatpush1.bf16.msra.mxu0 %v1233
    %1963 = vmatprep.subr.bf16.mxu0 %v1242
    %1964 = vmatpush1.bf16.msra.mxu0 %v1241
    %1965 = vmatprep.subr.bf16.mxu0 %v1250
    %1966 = vmatpush1.bf16.msra.mxu0 %v1249
    %1967 = vmatprep.mubr.bf16.mxu0 %v1852
    %1968 = vmatmul.mubr.bf16.gmra.mrb[0].mxu0 %v1851
    %v1969 = vpop.f32.mrb[0].mxu0
    %v1970 = vadd.f32 0.0, %v1969
    %v1971 = vpop.f32.mrb[0].mxu0
    %v1972 = vadd.f32 0.0, %v1971
    %v1973 = vpop.f32.mrb[0].mxu0
    %v1974 = vpop.f32.mrb[0].mxu0
    %1975 = vdwg.mxu0
    %1976 = vmatprep.subr.bf16.mxu0 %v1132
    %1977 = vmatpush1.bf16.msra.mxu0 %v1131
    %1978 = vmatprep.subr.bf16.mxu0 %v1140
    %1979 = vmatpush1.bf16.msra.mxu0 %v1139
    %1980 = vmatprep.subr.bf16.mxu0 %v1148
    %1981 = vmatpush1.bf16.msra.mxu0 %v1147
    %1982 = vmatprep.subr.bf16.mxu0 %v1156
    %1983 = vmatpush1.bf16.msra.mxu0 %v1155
    %1984 = vmatprep.subr.bf16.mxu0 %v1164
    %1985 = vmatpush1.bf16.msra.mxu0 %v1163
    %1986 = vmatprep.subr.bf16.mxu0 %v1172
    %1987 = vmatpush1.bf16.msra.mxu0 %v1171
    %1988 = vmatprep.subr.bf16.mxu0 %v1180
    %1989 = vmatpush1.bf16.msra.mxu0 %v1179
    %1990 = vmatprep.subr.bf16.mxu0 %v1188
    %1991 = vmatpush1.bf16.msra.mxu0 %v1187
    %1992 = vmatprep.subr.bf16.mxu0 %v1196
    %1993 = vmatpush1.bf16.msra.mxu0 %v1195
    %1994 = vmatprep.subr.bf16.mxu0 %v1204
    %1995 = vmatpush1.bf16.msra.mxu0 %v1203
    %1996 = vmatprep.subr.bf16.mxu0 %v1212
    %1997 = vmatpush1.bf16.msra.mxu0 %v1211
    %1998 = vmatprep.subr.bf16.mxu0 %v1220
    %1999 = vmatpush1.bf16.msra.mxu0 %v1219
    %2000 = vmatprep.subr.bf16.mxu0 %v1228
    %2001 = vmatpush1.bf16.msra.mxu0 %v1227
    %2002 = vmatprep.subr.bf16.mxu0 %v1236
    %2003 = vmatpush1.bf16.msra.mxu0 %v1235
    %2004 = vmatprep.subr.bf16.mxu0 %v1244
    %2005 = vmatpush1.bf16.msra.mxu0 %v1243
    %2006 = vmatprep.subr.bf16.mxu0 %v1252
    %2007 = vmatpush1.bf16.msra.mxu0 %v1251
    %2008 = vmatprep.mubr.bf16.mxu0 %v1852
    %2009 = vmatmul.mubr.bf16.gmra.mrb[0].mxu0 %v1851
    %v2010 = vpop.f32.mrb[0].mxu0
    %v2011 = vadd.f32 0.0, %v2010
    %v2012 = vpop.f32.mrb[0].mxu0
    %v2013 = vadd.f32 0.0, %v2012
    %v2014 = vpop.f32.mrb[0].mxu0
    %v2015 = vpop.f32.mrb[0].mxu0
    %2016 = vdwg.mxu0
    %s2017 = smul.u32 2, 8
    %s2018 = smul.addr %s2017, 8
    %s2019 = scalar_lea.vmem [#allocation2], %s2018
    %v2020 = vld [vmem:[%s2019] sm:$0xff]
    %v2021 = vld [vmem:[%s2019 + $0x8] sm:$0xff]
    %v2022 = vld [vmem:[%s2019 + $0x10] sm:$0xff]
    %v2023 = vld [vmem:[%s2019 + $0x18] sm:$0xff]
    %v2024 = vadd.f32 %v2020, %v1888
    %v2025 = vadd.f32 %v2021, %v1890
    %v2026 = vadd.f32 %v2022, %v1929
    %v2027 = vadd.f32 %v2023, %v1931
    %s2028 = smul.u32 5, 8
    %s2029 = smul.addr %s2028, 8
    %s2030 = scalar_lea.vmem [#allocation2], %s2029
    %v2031 = vld [vmem:[%s2030 + $0x20] sm:$0xff]
    %v2032 = vld [vmem:[%s2030 + $0x28] sm:$0xff]
    %v2033 = vld [vmem:[%s2030 + $0x30] sm:$0xff]
    %v2034 = vld [vmem:[%s2030 + $0x38] sm:$0xff]
    %v2035 = vadd.f32 %v2031, %v1970
    %v2036 = vadd.f32 %v2032, %v1972
    %v2037 = vadd.f32 %v2033, %v2011
    %v2038 = vadd.f32 %v2034, %v2013
    %v2039 = vxor.u32 %v2024, 2147483648
    %v2040 = vxor.u32 %v2035, 2147483648
    %v2041 = vmul.f32 %v2039, 1.442695
    %v2042 = vpow.pop %v2041
    %v2043 = vmul.f32 %v2040, 1.442695
    %v2044 = vpow.pop %v2043
    %v2045 = vadd.f32 %v2042, 1.0
    %v2046 = vadd.f32 %v2044, 1.0
    %v2047 = vrcp.pop %v2045
    %v2048 = vmul.f32 1.0, %v2047
    %v2049 = vrcp.pop %v2046
    %v2050 = vmul.f32 1.0, %v2049
    %v2051 = vxor.u32 %v2025, 2147483648
    %v2052 = vxor.u32 %v2036, 2147483648
    %v2053 = vmul.f32 %v2051, 1.442695
    %v2054 = vpow.pop %v2053
    %v2055 = vmul.f32 %v2052, 1.442695
    %v2056 = vpow.pop %v2055
    %v2057 = vadd.f32 %v2054, 1.0
    %v2058 = vadd.f32 %v2056, 1.0
    %v2059 = vrcp.pop %v2057
    %v2060 = vmul.f32 1.0, %v2059
    %v2061 = vrcp.pop %v2058
    %v2062 = vmul.f32 1.0, %v2061
    %v2063 = vtanh.pop %v2026
    %v2064 = vtanh.pop %v2037
    %v2065 = vxor.u32 %v2027, 2147483648
    %v2066 = vxor.u32 %v2038, 2147483648
    %v2067 = vmul.f32 %v2065, 1.442695
    %v2068 = vpow.pop %v2067
    %v2069 = vmul.f32 %v2066, 1.442695
    %v2070 = vpow.pop %v2069
    %v2071 = vadd.f32 %v2068, 1.0
    %v2072 = vadd.f32 %v2070, 1.0
    %v2073 = vrcp.pop %v2071
    %v2074 = vmul.f32 1.0, %v2073
    %v2075 = vrcp.pop %v2072
    %v2076 = vmul.f32 1.0, %v2075
    %v2077 = vmul.f32 %v2060, %v1845
    %v2078 = vmul.f32 %v2062, %v1846
    %v2079 = vmul.f32 %v2048, %v2063
    %v2080 = vmul.f32 %v2050, %v2064
    %v2081 = vadd.f32 %v2077, %v2079
    %v2082 = vadd.f32 %v2078, %v2080
    %v2083 = vtanh.pop %v2081
    %v2084 = vtanh.pop %v2082
    %v2085 = vmul.f32 %v2074, %v2083
    %v2086 = vmul.f32 %v2076, %v2084
    %v2087 = vpack.c.bf16 %v2085, %v2085
    %v2088 = vpack.c.bf16 %v2086, %v2086
    %2089 = vmatprep.subr.bf16.mxu0 %v1126
    %2090 = vmatpush1.bf16.msra.mxu0 %v1125
    %2091 = vmatprep.subr.bf16.mxu0 %v1134
    %2092 = vmatpush1.bf16.msra.mxu0 %v1133
    %2093 = vmatprep.subr.bf16.mxu0 %v1142
    %2094 = vmatpush1.bf16.msra.mxu0 %v1141
    %2095 = vmatprep.subr.bf16.mxu0 %v1150
    %2096 = vmatpush1.bf16.msra.mxu0 %v1149
    %2097 = vmatprep.subr.bf16.mxu0 %v1158
    %2098 = vmatpush1.bf16.msra.mxu0 %v1157
    %2099 = vmatprep.subr.bf16.mxu0 %v1166
    %2100 = vmatpush1.bf16.msra.mxu0 %v1165
    %2101 = vmatprep.subr.bf16.mxu0 %v1174
    %2102 = vmatpush1.bf16.msra.mxu0 %v1173
    %2103 = vmatprep.subr.bf16.mxu0 %v1182
    %2104 = vmatpush1.bf16.msra.mxu0 %v1181
    %2105 = vmatprep.subr.bf16.mxu0 %v1190
    %2106 = vmatpush1.bf16.msra.mxu0 %v1189
    %2107 = vmatprep.subr.bf16.mxu0 %v1198
    %2108 = vmatpush1.bf16.msra.mxu0 %v1197
    %2109 = vmatprep.subr.bf16.mxu0 %v1206
    %2110 = vmatpush1.bf16.msra.mxu0 %v1205
    %2111 = vmatprep.subr.bf16.mxu0 %v1214
    %2112 = vmatpush1.bf16.msra.mxu0 %v1213
    %2113 = vmatprep.subr.bf16.mxu0 %v1222
    %2114 = vmatpush1.bf16.msra.mxu0 %v1221
    %2115 = vmatprep.subr.bf16.mxu0 %v1230
    %2116 = vmatpush1.bf16.msra.mxu0 %v1229
    %2117 = vmatprep.subr.bf16.mxu0 %v1238
    %2118 = vmatpush1.bf16.msra.mxu0 %v1237
    %2119 = vmatprep.subr.bf16.mxu0 %v1246
    %2120 = vmatpush1.bf16.msra.mxu0 %v1245
    %2121 = vmatprep.mubr.bf16.mxu0 %v2088
    %2122 = vmatmul.mubr.bf16.gmra.mrb[0].mxu0 %v2087
    %v2123 = vpop.f32.mrb[0].mxu0
    %v2124 = vadd.f32 0.0, %v2123
    %v2125 = vpop.f32.mrb[0].mxu0
    %v2126 = vadd.f32 0.0, %v2125
    %v2127 = vpop.f32.mrb[0].mxu0
    %v2128 = vpop.f32.mrb[0].mxu0
    %2129 = vdwg.mxu0
    %2130 = vmatprep.subr.bf16.mxu0 %v1128
    %2131 = vmatpush1.bf16.msra.mxu0 %v1127
    %2132 = vmatprep.subr.bf16.mxu0 %v1136
    %2133 = vmatpush1.bf16.msra.mxu0 %v1135
    %2134 = vmatprep.subr.bf16.mxu0 %v1144
    %2135 = vmatpush1.bf16.msra.mxu0 %v1143
    %2136 = vmatprep.subr.bf16.mxu0 %v1152
    %2137 = vmatpush1.bf16.msra.mxu0 %v1151
    %2138 = vmatprep.subr.bf16.mxu0 %v1160
    %2139 = vmatpush1.bf16.msra.mxu0 %v1159
    %2140 = vmatprep.subr.bf16.mxu0 %v1168
    %2141 = vmatpush1.bf16.msra.mxu0 %v1167
    %2142 = vmatprep.subr.bf16.mxu0 %v1176
    %2143 = vmatpush1.bf16.msra.mxu0 %v1175
    %2144 = vmatprep.subr.bf16.mxu0 %v1184
    %2145 = vmatpush1.bf16.msra.mxu0 %v1183
    %2146 = vmatprep.subr.bf16.mxu0 %v1192
    %2147 = vmatpush1.bf16.msra.mxu0 %v1191
    %2148 = vmatprep.subr.bf16.mxu0 %v1200
    %2149 = vmatpush1.bf16.msra.mxu0 %v1199
    %2150 = vmatprep.subr.bf16.mxu0 %v1208
    %2151 = vmatpush1.bf16.msra.mxu0 %v1207
    %2152 = vmatprep.subr.bf16.mxu0 %v1216
    %2153 = vmatpush1.bf16.msra.mxu0 %v1215
    %2154 = vmatprep.subr.bf16.mxu0 %v1224
    %2155 = vmatpush1.bf16.msra.mxu0 %v1223
    %2156 = vmatprep.subr.bf16.mxu0 %v1232
    %2157 = vmatpush1.bf16.msra.mxu0 %v1231
    %2158 = vmatprep.subr.bf16.mxu0 %v1240
    %2159 = vmatpush1.bf16.msra.mxu0 %v1239
    %2160 = vmatprep.subr.bf16.mxu0 %v1248
    %2161 = vmatpush1.bf16.msra.mxu0 %v1247
    %2162 = vmatprep.mubr.bf16.mxu0 %v2088
    %2163 = vmatmul.mubr.bf16.gmra.mrb[0].mxu0 %v2087
    %v2164 = vpop.f32.mrb[0].mxu0
    %v2165 = vadd.f32 0.0, %v2164
    %v2166 = vpop.f32.mrb[0].mxu0
    %v2167 = vadd.f32 0.0, %v2166
    %v2168 = vpop.f32.mrb[0].mxu0
    %v2169 = vpop.f32.mrb[0].mxu0
    %2170 = vdwg.mxu0
    %2171 = vmatprep.subr.bf16.mxu0 %v1130
    %2172 = vmatpush1.bf16.msra.mxu0 %v1129
    %2173 = vmatprep.subr.bf16.mxu0 %v1138
    %2174 = vmatpush1.bf16.msra.mxu0 %v1137
    %2175 = vmatprep.subr.bf16.mxu0 %v1146
    %2176 = vmatpush1.bf16.msra.mxu0 %v1145
    %2177 = vmatprep.subr.bf16.mxu0 %v1154
    %2178 = vmatpush1.bf16.msra.mxu0 %v1153
    %2179 = vmatprep.subr.bf16.mxu0 %v1162
    %2180 = vmatpush1.bf16.msra.mxu0 %v1161
    %2181 = vmatprep.subr.bf16.mxu0 %v1170
    %2182 = vmatpush1.bf16.msra.mxu0 %v1169
    %2183 = vmatprep.subr.bf16.mxu0 %v1178
    %2184 = vmatpush1.bf16.msra.mxu0 %v1177
    %2185 = vmatprep.subr.bf16.mxu0 %v1186
    %2186 = vmatpush1.bf16.msra.mxu0 %v1185
    %2187 = vmatprep.subr.bf16.mxu0 %v1194
    %2188 = vmatpush1.bf16.msra.mxu0 %v1193
    %2189 = vmatprep.subr.bf16.mxu0 %v1202
    %2190 = vmatpush1.bf16.msra.mxu0 %v1201
    %2191 = vmatprep.subr.bf16.mxu0 %v1210
    %2192 = vmatpush1.bf16.msra.mxu0 %v1209
    %2193 = vmatprep.subr.bf16.mxu0 %v1218
    %2194 = vmatpush1.bf16.msra.mxu0 %v1217
    %2195 = vmatprep.subr.bf16.mxu0 %v1226
    %2196 = vmatpush1.bf16.msra.mxu0 %v1225
    %2197 = vmatprep.subr.bf16.mxu0 %v1234
    %2198 = vmatpush1.bf16.msra.mxu0 %v1233
    %2199 = vmatprep.subr.bf16.mxu0 %v1242
    %2200 = vmatpush1.bf16.msra.mxu0 %v1241
    %2201 = vmatprep.subr.bf16.mxu0 %v1250
    %2202 = vmatpush1.bf16.msra.mxu0 %v1249
    %2203 = vmatprep.mubr.bf16.mxu0 %v2088
    %2204 = vmatmul.mubr.bf16.gmra.mrb[0].mxu0 %v2087
    %v2205 = vpop.f32.mrb[0].mxu0
    %v2206 = vadd.f32 0.0, %v2205
    %v2207 = vpop.f32.mrb[0].mxu0
    %v2208 = vadd.f32 0.0, %v2207
    %v2209 = vpop.f32.mrb[0].mxu0
    %v2210 = vpop.f32.mrb[0].mxu0
    %2211 = vdwg.mxu0
    %2212 = vmatprep.subr.bf16.mxu0 %v1132
    %2213 = vmatpush1.bf16.msra.mxu0 %v1131
    %2214 = vmatprep.subr.bf16.mxu0 %v1140
    %2215 = vmatpush1.bf16.msra.mxu0 %v1139
    %2216 = vmatprep.subr.bf16.mxu0 %v1148
    %2217 = vmatpush1.bf16.msra.mxu0 %v1147
    %2218 = vmatprep.subr.bf16.mxu0 %v1156
    %2219 = vmatpush1.bf16.msra.mxu0 %v1155
    %2220 = vmatprep.subr.bf16.mxu0 %v1164
    %2221 = vmatpush1.bf16.msra.mxu0 %v1163
    %2222 = vmatprep.subr.bf16.mxu0 %v1172
    %2223 = vmatpush1.bf16.msra.mxu0 %v1171
    %2224 = vmatprep.subr.bf16.mxu0 %v1180
    %2225 = vmatpush1.bf16.msra.mxu0 %v1179
    %2226 = vmatprep.subr.bf16.mxu0 %v1188
    %2227 = vmatpush1.bf16.msra.mxu0 %v1187
    %2228 = vmatprep.subr.bf16.mxu0 %v1196
    %2229 = vmatpush1.bf16.msra.mxu0 %v1195
    %2230 = vmatprep.subr.bf16.mxu0 %v1204
    %2231 = vmatpush1.bf16.msra.mxu0 %v1203
    %2232 = vmatprep.subr.bf16.mxu0 %v1212
    %2233 = vmatpush1.bf16.msra.mxu0 %v1211
    %2234 = vmatprep.subr.bf16.mxu0 %v1220
    %2235 = vmatpush1.bf16.msra.mxu0 %v1219
    %2236 = vmatprep.subr.bf16.mxu0 %v1228
    %2237 = vmatpush1.bf16.msra.mxu0 %v1227
    %2238 = vmatprep.subr.bf16.mxu0 %v1236
    %2239 = vmatpush1.bf16.msra.mxu0 %v1235
    %2240 = vmatprep.subr.bf16.mxu0 %v1244
    %2241 = vmatpush1.bf16.msra.mxu0 %v1243
    %2242 = vmatprep.subr.bf16.mxu0 %v1252
    %2243 = vmatpush1.bf16.msra.mxu0 %v1251
    %2244 = vmatprep.mubr.bf16.mxu0 %v2088
    %2245 = vmatmul.mubr.bf16.gmra.mrb[0].mxu0 %v2087
    %v2246 = vpop.f32.mrb[0].mxu0
    %v2247 = vadd.f32 0.0, %v2246
    %v2248 = vpop.f32.mrb[0].mxu0
    %v2249 = vadd.f32 0.0, %v2248
    %v2250 = vpop.f32.mrb[0].mxu0
    %v2251 = vpop.f32.mrb[0].mxu0
    %2252 = vdwg.mxu0
    %s2253 = smul.u32 3, 8
    %s2254 = smul.addr %s2253, 8
    %s2255 = scalar_lea.vmem [#allocation2], %s2254
    %v2256 = vld [vmem:[%s2255] sm:$0xff]
    %v2257 = vld [vmem:[%s2255 + $0x8] sm:$0xff]
    %v2258 = vld [vmem:[%s2255 + $0x10] sm:$0xff]
    %v2259 = vld [vmem:[%s2255 + $0x18] sm:$0xff]
    %v2260 = vadd.f32 %v2256, %v2124
    %v2261 = vadd.f32 %v2257, %v2126
    %v2262 = vadd.f32 %v2258, %v2165
    %v2263 = vadd.f32 %v2259, %v2167
    %s2264 = smul.u32 4, 8
    %s2265 = smul.addr %s2264, 8
    %s2266 = scalar_lea.vmem [#allocation2], %s2265
    %v2267 = vld [vmem:[%s2266 + $0x20] sm:$0xff]
    %v2268 = vld [vmem:[%s2266 + $0x28] sm:$0xff]
    %v2269 = vld [vmem:[%s2266 + $0x30] sm:$0xff]
    %v2270 = vld [vmem:[%s2266 + $0x38] sm:$0xff]
    %v2271 = vadd.f32 %v2267, %v2206
    %v2272 = vadd.f32 %v2268, %v2208
    %v2273 = vadd.f32 %v2269, %v2247
    %v2274 = vadd.f32 %v2270, %v2249
    %v2275 = vxor.u32 %v2260, 2147483648
    %v2276 = vxor.u32 %v2271, 2147483648
    %v2277 = vmul.f32 %v2275, 1.442695
    %v2278 = vpow.pop %v2277
    %v2279 = vmul.f32 %v2276, 1.442695
    %v2280 = vpow.pop %v2279
    %v2281 = vadd.f32 %v2278, 1.0
    %v2282 = vadd.f32 %v2280, 1.0
    %v2283 = vrcp.pop %v2281
    %v2284 = vmul.f32 1.0, %v2283
    %v2285 = vrcp.pop %v2282
    %v2286 = vmul.f32 1.0, %v2285
    %v2287 = vxor.u32 %v2261, 2147483648
    %v2288 = vxor.u32 %v2272, 2147483648
    %v2289 = vmul.f32 %v2287, 1.442695
    %v2290 = vpow.pop %v2289
    %v2291 = vmul.f32 %v2288, 1.442695
    %v2292 = vpow.pop %v2291
    %v2293 = vadd.f32 %v2290, 1.0
    %v2294 = vadd.f32 %v2292, 1.0
    %v2295 = vrcp.pop %v2293
    %v2296 = vmul.f32 1.0, %v2295
    %v2297 = vrcp.pop %v2294
    %v2298 = vmul.f32 1.0, %v2297
    %v2299 = vtanh.pop %v2262
    %v2300 = vtanh.pop %v2273
    %v2301 = vxor.u32 %v2263, 2147483648
    %v2302 = vxor.u32 %v2274, 2147483648
    %v2303 = vmul.f32 %v2301, 1.442695
    %v2304 = vpow.pop %v2303
    %v2305 = vmul.f32 %v2302, 1.442695
    %v2306 = vpow.pop %v2305
    %v2307 = vadd.f32 %v2304, 1.0
    %v2308 = vadd.f32 %v2306, 1.0
    %v2309 = vrcp.pop %v2307
    %v2310 = vmul.f32 1.0, %v2309
    %v2311 = vrcp.pop %v2308
    %v2312 = vmul.f32 1.0, %v2311
    %v2313 = vmul.f32 %v2296, %v2081
    %v2314 = vmul.f32 %v2298, %v2082
    %v2315 = vmul.f32 %v2284, %v2299
    %v2316 = vmul.f32 %v2286, %v2300
    %v2317 = vadd.f32 %v2313, %v2315
    %v2318 = vadd.f32 %v2314, %v2316
    %v2319 = vtanh.pop %v2317
    %v2320 = vtanh.pop %v2318
    %v2321 = vmul.f32 %v2310, %v2319
    %v2322 = vmul.f32 %v2312, %v2320
    %v2323 = vpack.c.bf16 %v2321, %v2321
    %v2324 = vpack.c.bf16 %v2322, %v2322
    %2325 = vmatprep.subr.bf16.mxu0 %v1126
    %2326 = vmatpush1.bf16.msra.mxu0 %v1125
    %2327 = vmatprep.subr.bf16.mxu0 %v1134
    %2328 = vmatpush1.bf16.msra.mxu0 %v1133
    %2329 = vmatprep.subr.bf16.mxu0 %v1142
    %2330 = vmatpush1.bf16.msra.mxu0 %v1141
    %2331 = vmatprep.subr.bf16.mxu0 %v1150
    %2332 = vmatpush1.bf16.msra.mxu0 %v1149
    %2333 = vmatprep.subr.bf16.mxu0 %v1158
    %2334 = vmatpush1.bf16.msra.mxu0 %v1157
    %2335 = vmatprep.subr.bf16.mxu0 %v1166
    %2336 = vmatpush1.bf16.msra.mxu0 %v1165
    %2337 = vmatprep.subr.bf16.mxu0 %v1174
    %2338 = vmatpush1.bf16.msra.mxu0 %v1173
    %2339 = vmatprep.subr.bf16.mxu0 %v1182
    %2340 = vmatpush1.bf16.msra.mxu0 %v1181
    %2341 = vmatprep.subr.bf16.mxu0 %v1190
    %2342 = vmatpush1.bf16.msra.mxu0 %v1189
    %2343 = vmatprep.subr.bf16.mxu0 %v1198
    %2344 = vmatpush1.bf16.msra.mxu0 %v1197
    %2345 = vmatprep.subr.bf16.mxu0 %v1206
    %2346 = vmatpush1.bf16.msra.mxu0 %v1205
    %2347 = vmatprep.subr.bf16.mxu0 %v1214
    %2348 = vmatpush1.bf16.msra.mxu0 %v1213
    %2349 = vmatprep.subr.bf16.mxu0 %v1222
    %2350 = vmatpush1.bf16.msra.mxu0 %v1221
    %2351 = vmatprep.subr.bf16.mxu0 %v1230
    %2352 = vmatpush1.bf16.msra.mxu0 %v1229
    %2353 = vmatprep.subr.bf16.mxu0 %v1238
    %2354 = vmatpush1.bf16.msra.mxu0 %v1237
    %2355 = vmatprep.subr.bf16.mxu0 %v1246
    %2356 = vmatpush1.bf16.msra.mxu0 %v1245
    %2357 = vmatprep.mubr.bf16.mxu0 %v2324
    %2358 = vmatmul.mubr.bf16.gmra.mrb[0].mxu0 %v2323
    %v2359 = vpop.f32.mrb[0].mxu0
    %v2360 = vadd.f32 0.0, %v2359
    %v2361 = vpop.f32.mrb[0].mxu0
    %v2362 = vadd.f32 0.0, %v2361
    %v2363 = vpop.f32.mrb[0].mxu0
    %v2364 = vpop.f32.mrb[0].mxu0
    %2365 = vdwg.mxu0
    %2366 = vmatprep.subr.bf16.mxu0 %v1128
    %2367 = vmatpush1.bf16.msra.mxu0 %v1127
    %2368 = vmatprep.subr.bf16.mxu0 %v1136
    %2369 = vmatpush1.bf16.msra.mxu0 %v1135
    %2370 = vmatprep.subr.bf16.mxu0 %v1144
    %2371 = vmatpush1.bf16.msra.mxu0 %v1143
    %2372 = vmatprep.subr.bf16.mxu0 %v1152
    %2373 = vmatpush1.bf16.msra.mxu0 %v1151
    %2374 = vmatprep.subr.bf16.mxu0 %v1160
    %2375 = vmatpush1.bf16.msra.mxu0 %v1159
    %2376 = vmatprep.subr.bf16.mxu0 %v1168
    %2377 = vmatpush1.bf16.msra.mxu0 %v1167
    %2378 = vmatprep.subr.bf16.mxu0 %v1176
    %2379 = vmatpush1.bf16.msra.mxu0 %v1175
    %2380 = vmatprep.subr.bf16.mxu0 %v1184
    %2381 = vmatpush1.bf16.msra.mxu0 %v1183
    %2382 = vmatprep.subr.bf16.mxu0 %v1192
    %2383 = vmatpush1.bf16.msra.mxu0 %v1191
    %2384 = vmatprep.subr.bf16.mxu0 %v1200
    %2385 = vmatpush1.bf16.msra.mxu0 %v1199
    %2386 = vmatprep.subr.bf16.mxu0 %v1208
    %2387 = vmatpush1.bf16.msra.mxu0 %v1207
    %2388 = vmatprep.subr.bf16.mxu0 %v1216
    %2389 = vmatpush1.bf16.msra.mxu0 %v1215
    %2390 = vmatprep.subr.bf16.mxu0 %v1224
    %2391 = vmatpush1.bf16.msra.mxu0 %v1223
    %2392 = vmatprep.subr.bf16.mxu0 %v1232
    %2393 = vmatpush1.bf16.msra.mxu0 %v1231
    %2394 = vmatprep.subr.bf16.mxu0 %v1240
    %2395 = vmatpush1.bf16.msra.mxu0 %v1239
    %2396 = vmatprep.subr.bf16.mxu0 %v1248
    %2397 = vmatpush1.bf16.msra.mxu0 %v1247
    %2398 = vmatprep.mubr.bf16.mxu0 %v2324
    %2399 = vmatmul.mubr.bf16.gmra.mrb[0].mxu0 %v2323
    %v2400 = vpop.f32.mrb[0].mxu0
    %v2401 = vadd.f32 0.0, %v2400
    %v2402 = vpop.f32.mrb[0].mxu0
    %v2403 = vadd.f32 0.0, %v2402
    %v2404 = vpop.f32.mrb[0].mxu0
    %v2405 = vpop.f32.mrb[0].mxu0
    %2406 = vdwg.mxu0
    %2407 = vmatprep.subr.bf16.mxu0 %v1130
    %2408 = vmatpush1.bf16.msra.mxu0 %v1129
    %2409 = vmatprep.subr.bf16.mxu0 %v1138
    %2410 = vmatpush1.bf16.msra.mxu0 %v1137
    %2411 = vmatprep.subr.bf16.mxu0 %v1146
    %2412 = vmatpush1.bf16.msra.mxu0 %v1145
    %2413 = vmatprep.subr.bf16.mxu0 %v1154
    %2414 = vmatpush1.bf16.msra.mxu0 %v1153
    %2415 = vmatprep.subr.bf16.mxu0 %v1162
    %2416 = vmatpush1.bf16.msra.mxu0 %v1161
    %2417 = vmatprep.subr.bf16.mxu0 %v1170
    %2418 = vmatpush1.bf16.msra.mxu0 %v1169
    %2419 = vmatprep.subr.bf16.mxu0 %v1178
    %2420 = vmatpush1.bf16.msra.mxu0 %v1177
    %2421 = vmatprep.subr.bf16.mxu0 %v1186
    %2422 = vmatpush1.bf16.msra.mxu0 %v1185
    %2423 = vmatprep.subr.bf16.mxu0 %v1194
    %2424 = vmatpush1.bf16.msra.mxu0 %v1193
    %2425 = vmatprep.subr.bf16.mxu0 %v1202
    %2426 = vmatpush1.bf16.msra.mxu0 %v1201
    %2427 = vmatprep.subr.bf16.mxu0 %v1210
    %2428 = vmatpush1.bf16.msra.mxu0 %v1209
    %2429 = vmatprep.subr.bf16.mxu0 %v1218
    %2430 = vmatpush1.bf16.msra.mxu0 %v1217
    %2431 = vmatprep.subr.bf16.mxu0 %v1226
    %2432 = vmatpush1.bf16.msra.mxu0 %v1225
    %2433 = vmatprep.subr.bf16.mxu0 %v1234
    %2434 = vmatpush1.bf16.msra.mxu0 %v1233
    %2435 = vmatprep.subr.bf16.mxu0 %v1242
    %2436 = vmatpush1.bf16.msra.mxu0 %v1241
    %2437 = vmatprep.subr.bf16.mxu0 %v1250
    %2438 = vmatpush1.bf16.msra.mxu0 %v1249
    %2439 = vmatprep.mubr.bf16.mxu0 %v2324
    %2440 = vmatmul.mubr.bf16.gmra.mrb[0].mxu0 %v2323
    %v2441 = vpop.f32.mrb[0].mxu0
    %v2442 = vadd.f32 0.0, %v2441
    %v2443 = vpop.f32.mrb[0].mxu0
    %v2444 = vadd.f32 0.0, %v2443
    %v2445 = vpop.f32.mrb[0].mxu0
    %v2446 = vpop.f32.mrb[0].mxu0
    %2447 = vdwg.mxu0
    %2448 = vmatprep.subr.bf16.mxu0 %v1132
    %2449 = vmatpush1.bf16.msra.mxu0 %v1131
    %2450 = vmatprep.subr.bf16.mxu0 %v1140
    %2451 = vmatpush1.bf16.msra.mxu0 %v1139
    %2452 = vmatprep.subr.bf16.mxu0 %v1148
    %2453 = vmatpush1.bf16.msra.mxu0 %v1147
    %2454 = vmatprep.subr.bf16.mxu0 %v1156
    %2455 = vmatpush1.bf16.msra.mxu0 %v1155
    %2456 = vmatprep.subr.bf16.mxu0 %v1164
    %2457 = vmatpush1.bf16.msra.mxu0 %v1163
    %2458 = vmatprep.subr.bf16.mxu0 %v1172
    %2459 = vmatpush1.bf16.msra.mxu0 %v1171
    %2460 = vmatprep.subr.bf16.mxu0 %v1180
    %2461 = vmatpush1.bf16.msra.mxu0 %v1179
    %2462 = vmatprep.subr.bf16.mxu0 %v1188
    %2463 = vmatpush1.bf16.msra.mxu0 %v1187
    %2464 = vmatprep.subr.bf16.mxu0 %v1196
    %2465 = vmatpush1.bf16.msra.mxu0 %v1195
    %2466 = vmatprep.subr.bf16.mxu0 %v1204
    %2467 = vmatpush1.bf16.msra.mxu0 %v1203
    %2468 = vmatprep.subr.bf16.mxu0 %v1212
    %2469 = vmatpush1.bf16.msra.mxu0 %v1211
    %2470 = vmatprep.subr.bf16.mxu0 %v1220
    %2471 = vmatpush1.bf16.msra.mxu0 %v1219
    %2472 = vmatprep.subr.bf16.mxu0 %v1228
    %2473 = vmatpush1.bf16.msra.mxu0 %v1227
    %2474 = vmatprep.subr.bf16.mxu0 %v1236
    %2475 = vmatpush1.bf16.msra.mxu0 %v1235
    %2476 = vmatprep.subr.bf16.mxu0 %v1244
    %2477 = vmatpush1.bf16.msra.mxu0 %v1243
    %2478 = vmatprep.subr.bf16.mxu0 %v1252
    %2479 = vmatpush1.bf16.msra.mxu0 %v1251
    %2480 = vmatprep.mubr.bf16.mxu0 %v2324
    %2481 = vmatmul.mubr.bf16.gmra.mrb[0].mxu0 %v2323
    %v2482 = vpop.f32.mrb[0].mxu0
    %v2483 = vadd.f32 0.0, %v2482
    %v2484 = vpop.f32.mrb[0].mxu0
    %v2485 = vadd.f32 0.0, %v2484
    %v2486 = vpop.f32.mrb[0].mxu0
    %v2487 = vpop.f32.mrb[0].mxu0
    %2488 = vdwg.mxu0
    %v2489 = vld [vmem:[%s2266] sm:$0xff]
    %v2490 = vld [vmem:[%s2266 + $0x8] sm:$0xff]
    %v2491 = vld [vmem:[%s2266 + $0x10] sm:$0xff]
    %v2492 = vld [vmem:[%s2266 + $0x18] sm:$0xff]
    %v2493 = vadd.f32 %v2489, %v2360
    %v2494 = vadd.f32 %v2490, %v2362
    %v2495 = vadd.f32 %v2491, %v2401
    %v2496 = vadd.f32 %v2492, %v2403
    %v2497 = vld [vmem:[%s2255 + $0x20] sm:$0xff]
    %v2498 = vld [vmem:[%s2255 + $0x28] sm:$0xff]
    %v2499 = vld [vmem:[%s2255 + $0x30] sm:$0xff]
    %v2500 = vld [vmem:[%s2255 + $0x38] sm:$0xff]
    %v2501 = vadd.f32 %v2497, %v2442
    %v2502 = vadd.f32 %v2498, %v2444
    %v2503 = vadd.f32 %v2499, %v2483
    %v2504 = vadd.f32 %v2500, %v2485
    %v2505 = vxor.u32 %v2493, 2147483648
    %v2506 = vxor.u32 %v2501, 2147483648
    %v2507 = vmul.f32 %v2505, 1.442695
    %v2508 = vpow.pop %v2507
    %v2509 = vmul.f32 %v2506, 1.442695
    %v2510 = vpow.pop %v2509
    %v2511 = vadd.f32 %v2508, 1.0
    %v2512 = vadd.f32 %v2510, 1.0
    %v2513 = vrcp.pop %v2511
    %v2514 = vmul.f32 1.0, %v2513
    %v2515 = vrcp.pop %v2512
    %v2516 = vmul.f32 1.0, %v2515
    %v2517 = vxor.u32 %v2494, 2147483648
    %v2518 = vxor.u32 %v2502, 2147483648
    %v2519 = vmul.f32 %v2517, 1.442695
    %v2520 = vpow.pop %v2519
    %v2521 = vmul.f32 %v2518, 1.442695
    %v2522 = vpow.pop %v2521
    %v2523 = vadd.f32 %v2520, 1.0
    %v2524 = vadd.f32 %v2522, 1.0
    %v2525 = vrcp.pop %v2523
    %v2526 = vmul.f32 1.0, %v2525
    %v2527 = vrcp.pop %v2524
    %v2528 = vmul.f32 1.0, %v2527
    %v2529 = vtanh.pop %v2495
    %v2530 = vtanh.pop %v2503
    %v2531 = vxor.u32 %v2496, 2147483648
    %v2532 = vxor.u32 %v2504, 2147483648
    %v2533 = vmul.f32 %v2531, 1.442695
    %v2534 = vpow.pop %v2533
    %v2535 = vmul.f32 %v2532, 1.442695
    %v2536 = vpow.pop %v2535
    %v2537 = vadd.f32 %v2534, 1.0
    %v2538 = vadd.f32 %v2536, 1.0
    %v2539 = vrcp.pop %v2537
    %v2540 = vmul.f32 1.0, %v2539
    %v2541 = vrcp.pop %v2538
    %v2542 = vmul.f32 1.0, %v2541
    %v2543 = vmul.f32 %v2526, %v2317
    %v2544 = vmul.f32 %v2528, %v2318
    %v2545 = vmul.f32 %v2514, %v2529
    %v2546 = vmul.f32 %v2516, %v2530
    %v2547 = vadd.f32 %v2543, %v2545
    %v2548 = vadd.f32 %v2544, %v2546
    %v2549 = vtanh.pop %v2547
    %v2550 = vtanh.pop %v2548
    %v2551 = vmul.f32 %v2540, %v2549
    %v2552 = vmul.f32 %v2542, %v2550
    %v2553 = vpack.c.bf16 %v2551, %v2551
    %v2554 = vpack.c.bf16 %v2552, %v2552
    %2555 = vmatprep.subr.bf16.mxu0 %v1126
    %2556 = vmatpush1.bf16.msra.mxu0 %v1125
    %2557 = vmatprep.subr.bf16.mxu0 %v1134
    %2558 = vmatpush1.bf16.msra.mxu0 %v1133
    %2559 = vmatprep.subr.bf16.mxu0 %v1142
    %2560 = vmatpush1.bf16.msra.mxu0 %v1141
    %2561 = vmatprep.subr.bf16.mxu0 %v1150
    %2562 = vmatpush1.bf16.msra.mxu0 %v1149
    %2563 = vmatprep.subr.bf16.mxu0 %v1158
    %2564 = vmatpush1.bf16.msra.mxu0 %v1157
    %2565 = vmatprep.subr.bf16.mxu0 %v1166
    %2566 = vmatpush1.bf16.msra.mxu0 %v1165
    %2567 = vmatprep.subr.bf16.mxu0 %v1174
    %2568 = vmatpush1.bf16.msra.mxu0 %v1173
    %2569 = vmatprep.subr.bf16.mxu0 %v1182
    %2570 = vmatpush1.bf16.msra.mxu0 %v1181
    %2571 = vmatprep.subr.bf16.mxu0 %v1190
    %2572 = vmatpush1.bf16.msra.mxu0 %v1189
    %2573 = vmatprep.subr.bf16.mxu0 %v1198
    %2574 = vmatpush1.bf16.msra.mxu0 %v1197
    %2575 = vmatprep.subr.bf16.mxu0 %v1206
    %2576 = vmatpush1.bf16.msra.mxu0 %v1205
    %2577 = vmatprep.subr.bf16.mxu0 %v1214
    %2578 = vmatpush1.bf16.msra.mxu0 %v1213
    %2579 = vmatprep.subr.bf16.mxu0 %v1222
    %2580 = vmatpush1.bf16.msra.mxu0 %v1221
    %2581 = vmatprep.subr.bf16.mxu0 %v1230
    %2582 = vmatpush1.bf16.msra.mxu0 %v1229
    %2583 = vmatprep.subr.bf16.mxu0 %v1238
    %2584 = vmatpush1.bf16.msra.mxu0 %v1237
    %2585 = vmatprep.subr.bf16.mxu0 %v1246
    %2586 = vmatpush1.bf16.msra.mxu0 %v1245
    %2587 = vmatprep.mubr.bf16.mxu0 %v2554
    %2588 = vmatmul.mubr.bf16.gmra.mrb[0].mxu0 %v2553
    %v2589 = vpop.f32.mrb[0].mxu0
    %v2590 = vadd.f32 0.0, %v2589
    %v2591 = vpop.f32.mrb[0].mxu0
    %v2592 = vadd.f32 0.0, %v2591
    %v2593 = vpop.f32.mrb[0].mxu0
    %v2594 = vpop.f32.mrb[0].mxu0
    %2595 = vdwg.mxu0
    %2596 = vmatprep.subr.bf16.mxu0 %v1128
    %2597 = vmatpush1.bf16.msra.mxu0 %v1127
    %2598 = vmatprep.subr.bf16.mxu0 %v1136
    %2599 = vmatpush1.bf16.msra.mxu0 %v1135
    %2600 = vmatprep.subr.bf16.mxu0 %v1144
    %2601 = vmatpush1.bf16.msra.mxu0 %v1143
    %2602 = vmatprep.subr.bf16.mxu0 %v1152
    %2603 = vmatpush1.bf16.msra.mxu0 %v1151
    %2604 = vmatprep.subr.bf16.mxu0 %v1160
    %2605 = vmatpush1.bf16.msra.mxu0 %v1159
    %2606 = vmatprep.subr.bf16.mxu0 %v1168
    %2607 = vmatpush1.bf16.msra.mxu0 %v1167
    %2608 = vmatprep.subr.bf16.mxu0 %v1176
    %2609 = vmatpush1.bf16.msra.mxu0 %v1175
    %2610 = vmatprep.subr.bf16.mxu0 %v1184
    %2611 = vmatpush1.bf16.msra.mxu0 %v1183
    %2612 = vmatprep.subr.bf16.mxu0 %v1192
    %2613 = vmatpush1.bf16.msra.mxu0 %v1191
    %2614 = vmatprep.subr.bf16.mxu0 %v1200
    %2615 = vmatpush1.bf16.msra.mxu0 %v1199
    %2616 = vmatprep.subr.bf16.mxu0 %v1208
    %2617 = vmatpush1.bf16.msra.mxu0 %v1207
    %2618 = vmatprep.subr.bf16.mxu0 %v1216
    %2619 = vmatpush1.bf16.msra.mxu0 %v1215
    %2620 = vmatprep.subr.bf16.mxu0 %v1224
    %2621 = vmatpush1.bf16.msra.mxu0 %v1223
    %2622 = vmatprep.subr.bf16.mxu0 %v1232
    %2623 = vmatpush1.bf16.msra.mxu0 %v1231
    %2624 = vmatprep.subr.bf16.mxu0 %v1240
    %2625 = vmatpush1.bf16.msra.mxu0 %v1239
    %2626 = vmatprep.subr.bf16.mxu0 %v1248
    %2627 = vmatpush1.bf16.msra.mxu0 %v1247
    %2628 = vmatprep.mubr.bf16.mxu0 %v2554
    %2629 = vmatmul.mubr.bf16.gmra.mrb[0].mxu0 %v2553
    %v2630 = vpop.f32.mrb[0].mxu0
    %v2631 = vadd.f32 0.0, %v2630
    %v2632 = vpop.f32.mrb[0].mxu0
    %v2633 = vadd.f32 0.0, %v2632
    %v2634 = vpop.f32.mrb[0].mxu0
    %v2635 = vpop.f32.mrb[0].mxu0
    %2636 = vdwg.mxu0
    %2637 = vmatprep.subr.bf16.mxu0 %v1130
    %2638 = vmatpush1.bf16.msra.mxu0 %v1129
    %2639 = vmatprep.subr.bf16.mxu0 %v1138
    %2640 = vmatpush1.bf16.msra.mxu0 %v1137
    %2641 = vmatprep.subr.bf16.mxu0 %v1146
    %2642 = vmatpush1.bf16.msra.mxu0 %v1145
    %2643 = vmatprep.subr.bf16.mxu0 %v1154
    %2644 = vmatpush1.bf16.msra.mxu0 %v1153
    %2645 = vmatprep.subr.bf16.mxu0 %v1162
    %2646 = vmatpush1.bf16.msra.mxu0 %v1161
    %2647 = vmatprep.subr.bf16.mxu0 %v1170
    %2648 = vmatpush1.bf16.msra.mxu0 %v1169
    %2649 = vmatprep.subr.bf16.mxu0 %v1178
    %2650 = vmatpush1.bf16.msra.mxu0 %v1177
    %2651 = vmatprep.subr.bf16.mxu0 %v1186
    %2652 = vmatpush1.bf16.msra.mxu0 %v1185
    %2653 = vmatprep.subr.bf16.mxu0 %v1194
    %2654 = vmatpush1.bf16.msra.mxu0 %v1193
    %2655 = vmatprep.subr.bf16.mxu0 %v1202
    %2656 = vmatpush1.bf16.msra.mxu0 %v1201
    %2657 = vmatprep.subr.bf16.mxu0 %v1210
    %2658 = vmatpush1.bf16.msra.mxu0 %v1209
    %2659 = vmatprep.subr.bf16.mxu0 %v1218
    %2660 = vmatpush1.bf16.msra.mxu0 %v1217
    %2661 = vmatprep.subr.bf16.mxu0 %v1226
    %2662 = vmatpush1.bf16.msra.mxu0 %v1225
    %2663 = vmatprep.subr.bf16.mxu0 %v1234
    %2664 = vmatpush1.bf16.msra.mxu0 %v1233
    %2665 = vmatprep.subr.bf16.mxu0 %v1242
    %2666 = vmatpush1.bf16.msra.mxu0 %v1241
    %2667 = vmatprep.subr.bf16.mxu0 %v1250
    %2668 = vmatpush1.bf16.msra.mxu0 %v1249
    %2669 = vmatprep.mubr.bf16.mxu0 %v2554
    %2670 = vmatmul.mubr.bf16.gmra.mrb[0].mxu0 %v2553
    %v2671 = vpop.f32.mrb[0].mxu0
    %v2672 = vadd.f32 0.0, %v2671
    %v2673 = vpop.f32.mrb[0].mxu0
    %v2674 = vadd.f32 0.0, %v2673
    %v2675 = vpop.f32.mrb[0].mxu0
    %v2676 = vpop.f32.mrb[0].mxu0
    %2677 = vdwg.mxu0
    %2678 = vmatprep.subr.bf16.mxu0 %v1132
    %2679 = vmatpush1.bf16.msra.mxu0 %v1131
    %2680 = vmatprep.subr.bf16.mxu0 %v1140
    %2681 = vmatpush1.bf16.msra.mxu0 %v1139
    %2682 = vmatprep.subr.bf16.mxu0 %v1148
    %2683 = vmatpush1.bf16.msra.mxu0 %v1147
    %2684 = vmatprep.subr.bf16.mxu0 %v1156
    %2685 = vmatpush1.bf16.msra.mxu0 %v1155
    %2686 = vmatprep.subr.bf16.mxu0 %v1164
    %2687 = vmatpush1.bf16.msra.mxu0 %v1163
    %2688 = vmatprep.subr.bf16.mxu0 %v1172
    %2689 = vmatpush1.bf16.msra.mxu0 %v1171
    %2690 = vmatprep.subr.bf16.mxu0 %v1180
    %2691 = vmatpush1.bf16.msra.mxu0 %v1179
    %2692 = vmatprep.subr.bf16.mxu0 %v1188
    %2693 = vmatpush1.bf16.msra.mxu0 %v1187
    %2694 = vmatprep.subr.bf16.mxu0 %v1196
    %2695 = vmatpush1.bf16.msra.mxu0 %v1195
    %2696 = vmatprep.subr.bf16.mxu0 %v1204
    %2697 = vmatpush1.bf16.msra.mxu0 %v1203
    %2698 = vmatprep.subr.bf16.mxu0 %v1212
    %2699 = vmatpush1.bf16.msra.mxu0 %v1211
    %2700 = vmatprep.subr.bf16.mxu0 %v1220
    %2701 = vmatpush1.bf16.msra.mxu0 %v1219
    %2702 = vmatprep.subr.bf16.mxu0 %v1228
    %2703 = vmatpush1.bf16.msra.mxu0 %v1227
    %2704 = vmatprep.subr.bf16.mxu0 %v1236
    %2705 = vmatpush1.bf16.msra.mxu0 %v1235
    %2706 = vmatprep.subr.bf16.mxu0 %v1244
    %2707 = vmatpush1.bf16.msra.mxu0 %v1243
    %2708 = vmatprep.subr.bf16.mxu0 %v1252
    %2709 = vmatpush1.bf16.msra.mxu0 %v1251
    %2710 = vmatprep.mubr.bf16.mxu0 %v2554
    %2711 = vmatmul.mubr.bf16.gmra.mrb[0].mxu0 %v2553
    %v2712 = vpop.f32.mrb[0].mxu0
    %v2713 = vadd.f32 0.0, %v2712
    %v2714 = vpop.f32.mrb[0].mxu0
    %v2715 = vadd.f32 0.0, %v2714
    %v2716 = vpop.f32.mrb[0].mxu0
    %v2717 = vpop.f32.mrb[0].mxu0
    %2718 = vdwg.mxu0
    %v2719 = vld [vmem:[%s2030] sm:$0xff]
    %v2720 = vld [vmem:[%s2030 + $0x8] sm:$0xff]
    %v2721 = vld [vmem:[%s2030 + $0x10] sm:$0xff]
    %v2722 = vld [vmem:[%s2030 + $0x18] sm:$0xff]
    %v2723 = vadd.f32 %v2719, %v2590
    %v2724 = vadd.f32 %v2720, %v2592
    %v2725 = vadd.f32 %v2721, %v2631
    %v2726 = vadd.f32 %v2722, %v2633
    %v2727 = vld [vmem:[%s2019 + $0x20] sm:$0xff]
    %v2728 = vld [vmem:[%s2019 + $0x28] sm:$0xff]
    %v2729 = vld [vmem:[%s2019 + $0x30] sm:$0xff]
    %v2730 = vld [vmem:[%s2019 + $0x38] sm:$0xff]
    %v2731 = vadd.f32 %v2727, %v2672
    %v2732 = vadd.f32 %v2728, %v2674
    %v2733 = vadd.f32 %v2729, %v2713
    %v2734 = vadd.f32 %v2730, %v2715
    %v2735 = vxor.u32 %v2723, 2147483648
    %v2736 = vxor.u32 %v2731, 2147483648
    %v2737 = vmul.f32 %v2735, 1.442695
    %v2738 = vpow.pop %v2737
    %v2739 = vmul.f32 %v2736, 1.442695
    %v2740 = vpow.pop %v2739
    %v2741 = vadd.f32 %v2738, 1.0
    %v2742 = vadd.f32 %v2740, 1.0
    %v2743 = vrcp.pop %v2741
    %v2744 = vmul.f32 1.0, %v2743
    %v2745 = vrcp.pop %v2742
    %v2746 = vmul.f32 1.0, %v2745
    %v2747 = vxor.u32 %v2724, 2147483648
    %v2748 = vxor.u32 %v2732, 2147483648
    %v2749 = vmul.f32 %v2747, 1.442695
    %v2750 = vpow.pop %v2749
    %v2751 = vmul.f32 %v2748, 1.442695
    %v2752 = vpow.pop %v2751
    %v2753 = vadd.f32 %v2750, 1.0
    %v2754 = vadd.f32 %v2752, 1.0
    %v2755 = vrcp.pop %v2753
    %v2756 = vmul.f32 1.0, %v2755
    %v2757 = vrcp.pop %v2754
    %v2758 = vmul.f32 1.0, %v2757
    %v2759 = vtanh.pop %v2725
    %v2760 = vtanh.pop %v2733
    %v2761 = vxor.u32 %v2726, 2147483648
    %v2762 = vxor.u32 %v2734, 2147483648
    %v2763 = vmul.f32 %v2761, 1.442695
    %v2764 = vpow.pop %v2763
    %v2765 = vmul.f32 %v2762, 1.442695
    %v2766 = vpow.pop %v2765
    %v2767 = vadd.f32 %v2764, 1.0
    %v2768 = vadd.f32 %v2766, 1.0
    %v2769 = vrcp.pop %v2767
    %v2770 = vmul.f32 1.0, %v2769
    %v2771 = vrcp.pop %v2768
    %v2772 = vmul.f32 1.0, %v2771
    %v2773 = vmul.f32 %v2756, %v2547
    %v2774 = vmul.f32 %v2758, %v2548
    %v2775 = vmul.f32 %v2744, %v2759
    %v2776 = vmul.f32 %v2746, %v2760
    %v2777 = vadd.f32 %v2773, %v2775
    %v2778 = vadd.f32 %v2774, %v2776
    %v2779 = vtanh.pop %v2777
    %v2780 = vtanh.pop %v2778
    %v2781 = vmul.f32 %v2770, %v2779
    %v2782 = vmul.f32 %v2772, %v2780
    %v2783 = vpack.c.bf16 %v2781, %v2781
    %v2784 = vpack.c.bf16 %v2782, %v2782
    %2785 = vmatprep.subr.bf16.mxu0 %v1126
    %2786 = vmatpush1.bf16.msra.mxu0 %v1125
    %2787 = vmatprep.subr.bf16.mxu0 %v1134
    %2788 = vmatpush1.bf16.msra.mxu0 %v1133
    %2789 = vmatprep.subr.bf16.mxu0 %v1142
    %2790 = vmatpush1.bf16.msra.mxu0 %v1141
    %2791 = vmatprep.subr.bf16.mxu0 %v1150
    %2792 = vmatpush1.bf16.msra.mxu0 %v1149
    %2793 = vmatprep.subr.bf16.mxu0 %v1158
    %2794 = vmatpush1.bf16.msra.mxu0 %v1157
    %2795 = vmatprep.subr.bf16.mxu0 %v1166
    %2796 = vmatpush1.bf16.msra.mxu0 %v1165
    %2797 = vmatprep.subr.bf16.mxu0 %v1174
    %2798 = vmatpush1.bf16.msra.mxu0 %v1173
    %2799 = vmatprep.subr.bf16.mxu0 %v1182
    %2800 = vmatpush1.bf16.msra.mxu0 %v1181
    %2801 = vmatprep.subr.bf16.mxu0 %v1190
    %2802 = vmatpush1.bf16.msra.mxu0 %v1189
    %2803 = vmatprep.subr.bf16.mxu0 %v1198
    %2804 = vmatpush1.bf16.msra.mxu0 %v1197
    %2805 = vmatprep.subr.bf16.mxu0 %v1206
    %2806 = vmatpush1.bf16.msra.mxu0 %v1205
    %2807 = vmatprep.subr.bf16.mxu0 %v1214
    %2808 = vmatpush1.bf16.msra.mxu0 %v1213
    %2809 = vmatprep.subr.bf16.mxu0 %v1222
    %2810 = vmatpush1.bf16.msra.mxu0 %v1221
    %2811 = vmatprep.subr.bf16.mxu0 %v1230
    %2812 = vmatpush1.bf16.msra.mxu0 %v1229
    %2813 = vmatprep.subr.bf16.mxu0 %v1238
    %2814 = vmatpush1.bf16.msra.mxu0 %v1237
    %2815 = vmatprep.subr.bf16.mxu0 %v1246
    %2816 = vmatpush1.bf16.msra.mxu0 %v1245
    %2817 = vmatprep.mubr.bf16.mxu0 %v2784
    %2818 = vmatmul.mubr.bf16.gmra.mrb[0].mxu0 %v2783
    %v2819 = vpop.f32.mrb[0].mxu0
    %v2820 = vadd.f32 0.0, %v2819
    %v2821 = vpop.f32.mrb[0].mxu0
    %v2822 = vadd.f32 0.0, %v2821
    %v2823 = vpop.f32.mrb[0].mxu0
    %v2824 = vpop.f32.mrb[0].mxu0
    %2825 = vdwg.mxu0
    %2826 = vmatprep.subr.bf16.mxu0 %v1128
    %2827 = vmatpush1.bf16.msra.mxu0 %v1127
    %2828 = vmatprep.subr.bf16.mxu0 %v1136
    %2829 = vmatpush1.bf16.msra.mxu0 %v1135
    %2830 = vmatprep.subr.bf16.mxu0 %v1144
    %2831 = vmatpush1.bf16.msra.mxu0 %v1143
    %2832 = vmatprep.subr.bf16.mxu0 %v1152
    %2833 = vmatpush1.bf16.msra.mxu0 %v1151
    %2834 = vmatprep.subr.bf16.mxu0 %v1160
    %2835 = vmatpush1.bf16.msra.mxu0 %v1159
    %2836 = vmatprep.subr.bf16.mxu0 %v1168
    %2837 = vmatpush1.bf16.msra.mxu0 %v1167
    %2838 = vmatprep.subr.bf16.mxu0 %v1176
    %2839 = vmatpush1.bf16.msra.mxu0 %v1175
    %2840 = vmatprep.subr.bf16.mxu0 %v1184
    %2841 = vmatpush1.bf16.msra.mxu0 %v1183
    %2842 = vmatprep.subr.bf16.mxu0 %v1192
    %2843 = vmatpush1.bf16.msra.mxu0 %v1191
    %2844 = vmatprep.subr.bf16.mxu0 %v1200
    %2845 = vmatpush1.bf16.msra.mxu0 %v1199
    %2846 = vmatprep.subr.bf16.mxu0 %v1208
    %2847 = vmatpush1.bf16.msra.mxu0 %v1207
    %2848 = vmatprep.subr.bf16.mxu0 %v1216
    %2849 = vmatpush1.bf16.msra.mxu0 %v1215
    %2850 = vmatprep.subr.bf16.mxu0 %v1224
    %2851 = vmatpush1.bf16.msra.mxu0 %v1223
    %2852 = vmatprep.subr.bf16.mxu0 %v1232
    %2853 = vmatpush1.bf16.msra.mxu0 %v1231
    %2854 = vmatprep.subr.bf16.mxu0 %v1240
    %2855 = vmatpush1.bf16.msra.mxu0 %v1239
    %2856 = vmatprep.subr.bf16.mxu0 %v1248
    %2857 = vmatpush1.bf16.msra.mxu0 %v1247
    %2858 = vmatprep.mubr.bf16.mxu0 %v2784
    %2859 = vmatmul.mubr.bf16.gmra.mrb[0].mxu0 %v2783
    %v2860 = vpop.f32.mrb[0].mxu0
    %v2861 = vadd.f32 0.0, %v2860
    %v2862 = vpop.f32.mrb[0].mxu0
    %v2863 = vadd.f32 0.0, %v2862
    %v2864 = vpop.f32.mrb[0].mxu0
    %v2865 = vpop.f32.mrb[0].mxu0
    %2866 = vdwg.mxu0
    %2867 = vmatprep.subr.bf16.mxu0 %v1130
    %2868 = vmatpush1.bf16.msra.mxu0 %v1129
    %2869 = vmatprep.subr.bf16.mxu0 %v1138
    %2870 = vmatpush1.bf16.msra.mxu0 %v1137
    %2871 = vmatprep.subr.bf16.mxu0 %v1146
    %2872 = vmatpush1.bf16.msra.mxu0 %v1145
    %2873 = vmatprep.subr.bf16.mxu0 %v1154
    %2874 = vmatpush1.bf16.msra.mxu0 %v1153
    %2875 = vmatprep.subr.bf16.mxu0 %v1162
    %2876 = vmatpush1.bf16.msra.mxu0 %v1161
    %2877 = vmatprep.subr.bf16.mxu0 %v1170
    %2878 = vmatpush1.bf16.msra.mxu0 %v1169
    %2879 = vmatprep.subr.bf16.mxu0 %v1178
    %2880 = vmatpush1.bf16.msra.mxu0 %v1177
    %2881 = vmatprep.subr.bf16.mxu0 %v1186
    %2882 = vmatpush1.bf16.msra.mxu0 %v1185
    %2883 = vmatprep.subr.bf16.mxu0 %v1194
    %2884 = vmatpush1.bf16.msra.mxu0 %v1193
    %2885 = vmatprep.subr.bf16.mxu0 %v1202
    %2886 = vmatpush1.bf16.msra.mxu0 %v1201
    %2887 = vmatprep.subr.bf16.mxu0 %v1210
    %2888 = vmatpush1.bf16.msra.mxu0 %v1209
    %2889 = vmatprep.subr.bf16.mxu0 %v1218
    %2890 = vmatpush1.bf16.msra.mxu0 %v1217
    %2891 = vmatprep.subr.bf16.mxu0 %v1226
    %2892 = vmatpush1.bf16.msra.mxu0 %v1225
    %2893 = vmatprep.subr.bf16.mxu0 %v1234
    %2894 = vmatpush1.bf16.msra.mxu0 %v1233
    %2895 = vmatprep.subr.bf16.mxu0 %v1242
    %2896 = vmatpush1.bf16.msra.mxu0 %v1241
    %2897 = vmatprep.subr.bf16.mxu0 %v1250
    %2898 = vmatpush1.bf16.msra.mxu0 %v1249
    %2899 = vmatprep.mubr.bf16.mxu0 %v2784
    %2900 = vmatmul.mubr.bf16.gmra.mrb[0].mxu0 %v2783
    %v2901 = vpop.f32.mrb[0].mxu0
    %v2902 = vadd.f32 0.0, %v2901
    %v2903 = vpop.f32.mrb[0].mxu0
    %v2904 = vadd.f32 0.0, %v2903
    %v2905 = vpop.f32.mrb[0].mxu0
    %v2906 = vpop.f32.mrb[0].mxu0
    %2907 = vdwg.mxu0
    %2908 = vmatprep.subr.bf16.mxu0 %v1132
    %2909 = vmatpush1.bf16.msra.mxu0 %v1131
    %2910 = vmatprep.subr.bf16.mxu0 %v1140
    %2911 = vmatpush1.bf16.msra.mxu0 %v1139
    %2912 = vmatprep.subr.bf16.mxu0 %v1148
    %2913 = vmatpush1.bf16.msra.mxu0 %v1147
    %2914 = vmatprep.subr.bf16.mxu0 %v1156
    %2915 = vmatpush1.bf16.msra.mxu0 %v1155
    %2916 = vmatprep.subr.bf16.mxu0 %v1164
    %2917 = vmatpush1.bf16.msra.mxu0 %v1163
    %2918 = vmatprep.subr.bf16.mxu0 %v1172
    %2919 = vmatpush1.bf16.msra.mxu0 %v1171
    %2920 = vmatprep.subr.bf16.mxu0 %v1180
    %2921 = vmatpush1.bf16.msra.mxu0 %v1179
    %2922 = vmatprep.subr.bf16.mxu0 %v1188
    %2923 = vmatpush1.bf16.msra.mxu0 %v1187
    %2924 = vmatprep.subr.bf16.mxu0 %v1196
    %2925 = vmatpush1.bf16.msra.mxu0 %v1195
    %2926 = vmatprep.subr.bf16.mxu0 %v1204
    %2927 = vmatpush1.bf16.msra.mxu0 %v1203
    %2928 = vmatprep.subr.bf16.mxu0 %v1212
    %2929 = vmatpush1.bf16.msra.mxu0 %v1211
    %2930 = vmatprep.subr.bf16.mxu0 %v1220
    %2931 = vmatpush1.bf16.msra.mxu0 %v1219
    %2932 = vmatprep.subr.bf16.mxu0 %v1228
    %2933 = vmatpush1.bf16.msra.mxu0 %v1227
    %2934 = vmatprep.subr.bf16.mxu0 %v1236
    %2935 = vmatpush1.bf16.msra.mxu0 %v1235
    %2936 = vmatprep.subr.bf16.mxu0 %v1244
    %2937 = vmatpush1.bf16.msra.mxu0 %v1243
    %2938 = vmatprep.subr.bf16.mxu0 %v1252
    %2939 = vmatpush1.bf16.msra.mxu0 %v1251
    %2940 = vmatprep.mubr.bf16.mxu0 %v2784
    %2941 = vmatmul.mubr.bf16.gmra.mrb[0].mxu0 %v2783
    %v2942 = vpop.f32.mrb[0].mxu0
    %v2943 = vadd.f32 0.0, %v2942
    %v2944 = vpop.f32.mrb[0].mxu0
    %v2945 = vadd.f32 0.0, %v2944
    %v2946 = vpop.f32.mrb[0].mxu0
    %v2947 = vpop.f32.mrb[0].mxu0
    %2948 = vdwg.mxu0
    %v2949 = vld [vmem:[%s1794] sm:$0xff]
    %v2950 = vld [vmem:[%s1794 + $0x8] sm:$0xff]
    %v2951 = vld [vmem:[%s1794 + $0x10] sm:$0xff]
    %v2952 = vld [vmem:[%s1794 + $0x18] sm:$0xff]
    %v2953 = vadd.f32 %v2949, %v2820
    %v2954 = vadd.f32 %v2950, %v2822
    %v2955 = vadd.f32 %v2951, %v2861
    %v2956 = vadd.f32 %v2952, %v2863
    %v2957 = vld [vmem:[%s1783 + $0x20] sm:$0xff]
    %v2958 = vld [vmem:[%s1783 + $0x28] sm:$0xff]
    %v2959 = vld [vmem:[%s1783 + $0x30] sm:$0xff]
    %v2960 = vld [vmem:[%s1783 + $0x38] sm:$0xff]
    %v2961 = vadd.f32 %v2957, %v2902
    %v2962 = vadd.f32 %v2958, %v2904
    %v2963 = vadd.f32 %v2959, %v2943
    %v2964 = vadd.f32 %v2960, %v2945
    %v2965 = vxor.u32 %v2953, 2147483648
    %v2966 = vxor.u32 %v2961, 2147483648
    %v2967 = vmul.f32 %v2965, 1.442695
    %v2968 = vpow.pop %v2967
    %v2969 = vmul.f32 %v2966, 1.442695
    %v2970 = vpow.pop %v2969
    %v2971 = vadd.f32 %v2968, 1.0
    %v2972 = vadd.f32 %v2970, 1.0
    %v2973 = vrcp.pop %v2971
    %v2974 = vmul.f32 1.0, %v2973
    %v2975 = vrcp.pop %v2972
    %v2976 = vmul.f32 1.0, %v2975
    %v2977 = vxor.u32 %v2954, 2147483648
    %v2978 = vxor.u32 %v2962, 2147483648
    %v2979 = vmul.f32 %v2977, 1.442695
    %v2980 = vpow.pop %v2979
    %v2981 = vmul.f32 %v2978, 1.442695
    %v2982 = vpow.pop %v2981
    %v2983 = vadd.f32 %v2980, 1.0
    %v2984 = vadd.f32 %v2982, 1.0
    %v2985 = vrcp.pop %v2983
    %v2986 = vmul.f32 1.0, %v2985
    %v2987 = vrcp.pop %v2984
    %v2988 = vmul.f32 1.0, %v2987
    %v2989 = vtanh.pop %v2955
    %v2990 = vtanh.pop %v2963
    %v2991 = vxor.u32 %v2956, 2147483648
    %v2992 = vxor.u32 %v2964, 2147483648
    %v2993 = vmul.f32 %v2991, 1.442695
    %v2994 = vpow.pop %v2993
    %v2995 = vmul.f32 %v2992, 1.442695
    %v2996 = vpow.pop %v2995
    %v2997 = vadd.f32 %v2994, 1.0
    %v2998 = vadd.f32 %v2996, 1.0
    %v2999 = vrcp.pop %v2997
    %v3000 = vmul.f32 1.0, %v2999
    %v3001 = vrcp.pop %v2998
    %v3002 = vmul.f32 1.0, %v3001
    %v3003 = vmul.f32 %v2986, %v2777
    %v3004 = vmul.f32 %v2988, %v2778
    %v3005 = vmul.f32 %v2974, %v2989
    %v3006 = vmul.f32 %v2976, %v2990
    %v3007 = vadd.f32 %v3003, %v3005
    %v3008 = vadd.f32 %v3004, %v3006
    %v3009 = vtanh.pop %v3007
    %v3010 = vtanh.pop %v3008
    %v3011 = vmul.f32 %v3000, %v3009
    %v3012 = vmul.f32 %v3002, %v3010
    %v3013 = vpack.c.bf16 %v3011, %v3011
    %v3014 = vpack.c.bf16 %v3012, %v3012
    %3015 = vmatprep.subr.bf16.mxu0 %v1126
    %3016 = vmatpush1.bf16.msra.mxu0 %v1125
    %3017 = vmatprep.subr.bf16.mxu0 %v1134
    %3018 = vmatpush1.bf16.msra.mxu0 %v1133
    %3019 = vmatprep.subr.bf16.mxu0 %v1142
    %3020 = vmatpush1.bf16.msra.mxu0 %v1141
    %3021 = vmatprep.subr.bf16.mxu0 %v1150
    %3022 = vmatpush1.bf16.msra.mxu0 %v1149
    %3023 = vmatprep.subr.bf16.mxu0 %v1158
    %3024 = vmatpush1.bf16.msra.mxu0 %v1157
    %3025 = vmatprep.subr.bf16.mxu0 %v1166
    %3026 = vmatpush1.bf16.msra.mxu0 %v1165
    %3027 = vmatprep.subr.bf16.mxu0 %v1174
    %3028 = vmatpush1.bf16.msra.mxu0 %v1173
    %3029 = vmatprep.subr.bf16.mxu0 %v1182
    %3030 = vmatpush1.bf16.msra.mxu0 %v1181
    %3031 = vmatprep.subr.bf16.mxu0 %v1190
    %3032 = vmatpush1.bf16.msra.mxu0 %v1189
    %3033 = vmatprep.subr.bf16.mxu0 %v1198
    %3034 = vmatpush1.bf16.msra.mxu0 %v1197
    %3035 = vmatprep.subr.bf16.mxu0 %v1206
    %3036 = vmatpush1.bf16.msra.mxu0 %v1205
    %3037 = vmatprep.subr.bf16.mxu0 %v1214
    %3038 = vmatpush1.bf16.msra.mxu0 %v1213
    %3039 = vmatprep.subr.bf16.mxu0 %v1222
    %3040 = vmatpush1.bf16.msra.mxu0 %v1221
    %3041 = vmatprep.subr.bf16.mxu0 %v1230
    %3042 = vmatpush1.bf16.msra.mxu0 %v1229
    %3043 = vmatprep.subr.bf16.mxu0 %v1238
    %3044 = vmatpush1.bf16.msra.mxu0 %v1237
    %3045 = vmatprep.subr.bf16.mxu0 %v1246
    %3046 = vmatpush1.bf16.msra.mxu0 %v1245
    %3047 = vmatprep.mubr.bf16.mxu0 %v3014
    %3048 = vmatmul.mubr.bf16.gmra.mrb[0].mxu0 %v3013
    %v3049 = vpop.f32.mrb[0].mxu0
    %v3050 = vadd.f32 0.0, %v3049
    %v3051 = vpop.f32.mrb[0].mxu0
    %v3052 = vadd.f32 0.0, %v3051
    %v3053 = vpop.f32.mrb[0].mxu0
    %v3054 = vpop.f32.mrb[0].mxu0
    %3055 = vdwg.mxu0
    %3056 = vmatprep.subr.bf16.mxu0 %v1128
    %3057 = vmatpush1.bf16.msra.mxu0 %v1127
    %3058 = vmatprep.subr.bf16.mxu0 %v1136
    %3059 = vmatpush1.bf16.msra.mxu0 %v1135
    %3060 = vmatprep.subr.bf16.mxu0 %v1144
    %3061 = vmatpush1.bf16.msra.mxu0 %v1143
    %3062 = vmatprep.subr.bf16.mxu0 %v1152
    %3063 = vmatpush1.bf16.msra.mxu0 %v1151
    %3064 = vmatprep.subr.bf16.mxu0 %v1160
    %3065 = vmatpush1.bf16.msra.mxu0 %v1159
    %3066 = vmatprep.subr.bf16.mxu0 %v1168
    %3067 = vmatpush1.bf16.msra.mxu0 %v1167
    %3068 = vmatprep.subr.bf16.mxu0 %v1176
    %3069 = vmatpush1.bf16.msra.mxu0 %v1175
    %3070 = vmatprep.subr.bf16.mxu0 %v1184
    %3071 = vmatpush1.bf16.msra.mxu0 %v1183
    %3072 = vmatprep.subr.bf16.mxu0 %v1192
    %3073 = vmatpush1.bf16.msra.mxu0 %v1191
    %3074 = vmatprep.subr.bf16.mxu0 %v1200
    %3075 = vmatpush1.bf16.msra.mxu0 %v1199
    %3076 = vmatprep.subr.bf16.mxu0 %v1208
    %3077 = vmatpush1.bf16.msra.mxu0 %v1207
    %3078 = vmatprep.subr.bf16.mxu0 %v1216
    %3079 = vmatpush1.bf16.msra.mxu0 %v1215
    %3080 = vmatprep.subr.bf16.mxu0 %v1224
    %3081 = vmatpush1.bf16.msra.mxu0 %v1223
    %3082 = vmatprep.subr.bf16.mxu0 %v1232
    %3083 = vmatpush1.bf16.msra.mxu0 %v1231
    %3084 = vmatprep.subr.bf16.mxu0 %v1240
    %3085 = vmatpush1.bf16.msra.mxu0 %v1239
    %3086 = vmatprep.subr.bf16.mxu0 %v1248
    %3087 = vmatpush1.bf16.msra.mxu0 %v1247
    %3088 = vmatprep.mubr.bf16.mxu0 %v3014
    %3089 = vmatmul.mubr.bf16.gmra.mrb[0].mxu0 %v3013
    %v3090 = vpop.f32.mrb[0].mxu0
    %v3091 = vadd.f32 0.0, %v3090
    %v3092 = vpop.f32.mrb[0].mxu0
    %v3093 = vadd.f32 0.0, %v3092
    %v3094 = vpop.f32.mrb[0].mxu0
    %v3095 = vpop.f32.mrb[0].mxu0
    %3096 = vdwg.mxu0
    %3097 = vmatprep.subr.bf16.mxu0 %v1130
    %3098 = vmatpush1.bf16.msra.mxu0 %v1129
    %3099 = vmatprep.subr.bf16.mxu0 %v1138
    %3100 = vmatpush1.bf16.msra.mxu0 %v1137
    %3101 = vmatprep.subr.bf16.mxu0 %v1146
    %3102 = vmatpush1.bf16.msra.mxu0 %v1145
    %3103 = vmatprep.subr.bf16.mxu0 %v1154
    %3104 = vmatpush1.bf16.msra.mxu0 %v1153
    %3105 = vmatprep.subr.bf16.mxu0 %v1162
    %3106 = vmatpush1.bf16.msra.mxu0 %v1161
    %3107 = vmatprep.subr.bf16.mxu0 %v1170
    %3108 = vmatpush1.bf16.msra.mxu0 %v1169
    %3109 = vmatprep.subr.bf16.mxu0 %v1178
    %3110 = vmatpush1.bf16.msra.mxu0 %v1177
    %3111 = vmatprep.subr.bf16.mxu0 %v1186
    %3112 = vmatpush1.bf16.msra.mxu0 %v1185
    %3113 = vmatprep.subr.bf16.mxu0 %v1194
    %3114 = vmatpush1.bf16.msra.mxu0 %v1193
    %3115 = vmatprep.subr.bf16.mxu0 %v1202
    %3116 = vmatpush1.bf16.msra.mxu0 %v1201
    %3117 = vmatprep.subr.bf16.mxu0 %v1210
    %3118 = vmatpush1.bf16.msra.mxu0 %v1209
    %3119 = vmatprep.subr.bf16.mxu0 %v1218
    %3120 = vmatpush1.bf16.msra.mxu0 %v1217
    %3121 = vmatprep.subr.bf16.mxu0 %v1226
    %3122 = vmatpush1.bf16.msra.mxu0 %v1225
    %3123 = vmatprep.subr.bf16.mxu0 %v1234
    %3124 = vmatpush1.bf16.msra.mxu0 %v1233
    %3125 = vmatprep.subr.bf16.mxu0 %v1242
    %3126 = vmatpush1.bf16.msra.mxu0 %v1241
    %3127 = vmatprep.subr.bf16.mxu0 %v1250
    %3128 = vmatpush1.bf16.msra.mxu0 %v1249
    %3129 = vmatprep.mubr.bf16.mxu0 %v3014
    %3130 = vmatmul.mubr.bf16.gmra.mrb[0].mxu0 %v3013
    %v3131 = vpop.f32.mrb[0].mxu0
    %v3132 = vadd.f32 0.0, %v3131
    %v3133 = vpop.f32.mrb[0].mxu0
    %v3134 = vadd.f32 0.0, %v3133
    %v3135 = vpop.f32.mrb[0].mxu0
    %v3136 = vpop.f32.mrb[0].mxu0
    %3137 = vdwg.mxu0
    %3138 = vmatprep.subr.bf16.mxu0 %v1132
    %3139 = vmatpush1.bf16.msra.mxu0 %v1131
    %3140 = vmatprep.subr.bf16.mxu0 %v1140
    %3141 = vmatpush1.bf16.msra.mxu0 %v1139
    %3142 = vmatprep.subr.bf16.mxu0 %v1148
    %3143 = vmatpush1.bf16.msra.mxu0 %v1147
    %3144 = vmatprep.subr.bf16.mxu0 %v1156
    %3145 = vmatpush1.bf16.msra.mxu0 %v1155
    %3146 = vmatprep.subr.bf16.mxu0 %v1164
    %3147 = vmatpush1.bf16.msra.mxu0 %v1163
    %3148 = vmatprep.subr.bf16.mxu0 %v1172
    %3149 = vmatpush1.bf16.msra.mxu0 %v1171
    %3150 = vmatprep.subr.bf16.mxu0 %v1180
    %3151 = vmatpush1.bf16.msra.mxu0 %v1179
    %3152 = vmatprep.subr.bf16.mxu0 %v1188
    %3153 = vmatpush1.bf16.msra.mxu0 %v1187
    %3154 = vmatprep.subr.bf16.mxu0 %v1196
    %3155 = vmatpush1.bf16.msra.mxu0 %v1195
    %3156 = vmatprep.subr.bf16.mxu0 %v1204
    %3157 = vmatpush1.bf16.msra.mxu0 %v1203
    %3158 = vmatprep.subr.bf16.mxu0 %v1212
    %3159 = vmatpush1.bf16.msra.mxu0 %v1211
    %3160 = vmatprep.subr.bf16.mxu0 %v1220
    %3161 = vmatpush1.bf16.msra.mxu0 %v1219
    %3162 = vmatprep.subr.bf16.mxu0 %v1228
    %3163 = vmatpush1.bf16.msra.mxu0 %v1227
    %3164 = vmatprep.subr.bf16.mxu0 %v1236
    %3165 = vmatpush1.bf16.msra.mxu0 %v1235
    %3166 = vmatprep.subr.bf16.mxu0 %v1244
    %3167 = vmatpush1.bf16.msra.mxu0 %v1243
    %3168 = vmatprep.subr.bf16.mxu0 %v1252
    %3169 = vmatpush1.bf16.msra.mxu0 %v1251
    %3170 = vmatprep.mubr.bf16.mxu0 %v3014
    %3171 = vmatmul.mubr.bf16.gmra.mrb[0].mxu0 %v3013
    %v3172 = vpop.f32.mrb[0].mxu0
    %v3173 = vadd.f32 0.0, %v3172
    %v3174 = vpop.f32.mrb[0].mxu0
    %v3175 = vadd.f32 0.0, %v3174
    %v3176 = vpop.f32.mrb[0].mxu0
    %v3177 = vpop.f32.mrb[0].mxu0
    %3178 = vdwg.mxu0
    %v3179 = vld [vmem:[%s1558] sm:$0xff]
    %v3180 = vld [vmem:[%s1558 + $0x8] sm:$0xff]
    %v3181 = vld [vmem:[%s1558 + $0x10] sm:$0xff]
    %v3182 = vld [vmem:[%s1558 + $0x18] sm:$0xff]
    %v3183 = vadd.f32 %v3179, %v3050
    %v3184 = vadd.f32 %v3180, %v3052
    %v3185 = vadd.f32 %v3181, %v3091
    %v3186 = vadd.f32 %v3182, %v3093
    %v3187 = vld [vmem:[%s1547 + $0x20] sm:$0xff]
    %v3188 = vld [vmem:[%s1547 + $0x28] sm:$0xff]
    %v3189 = vld [vmem:[%s1547 + $0x30] sm:$0xff]
    %v3190 = vld [vmem:[%s1547 + $0x38] sm:$0xff]
    %v3191 = vadd.f32 %v3187, %v3132
    %v3192 = vadd.f32 %v3188, %v3134
    %v3193 = vadd.f32 %v3189, %v3173
    %v3194 = vadd.f32 %v3190, %v3175
    %v3195 = vxor.u32 %v3183, 2147483648
    %v3196 = vxor.u32 %v3191, 2147483648
    %v3197 = vmul.f32 %v3195, 1.442695
    %v3198 = vpow.pop %v3197
    %v3199 = vmul.f32 %v3196, 1.442695
    %v3200 = vpow.pop %v3199
    %v3201 = vadd.f32 %v3198, 1.0
    %v3202 = vadd.f32 %v3200, 1.0
    %v3203 = vrcp.pop %v3201
    %v3204 = vmul.f32 1.0, %v3203
    %v3205 = vrcp.pop %v3202
    %v3206 = vmul.f32 1.0, %v3205
    %v3207 = vxor.u32 %v3184, 2147483648
    %v3208 = vxor.u32 %v3192, 2147483648
    %v3209 = vmul.f32 %v3207, 1.442695
    %v3210 = vpow.pop %v3209
    %v3211 = vmul.f32 %v3208, 1.442695
    %v3212 = vpow.pop %v3211
    %v3213 = vadd.f32 %v3210, 1.0
    %v3214 = vadd.f32 %v3212, 1.0
    %v3215 = vrcp.pop %v3213
    %v3216 = vmul.f32 1.0, %v3215
    %v3217 = vrcp.pop %v3214
    %v3218 = vmul.f32 1.0, %v3217
    %v3219 = vtanh.pop %v3185
    %v3220 = vtanh.pop %v3193
    %v3221 = vxor.u32 %v3186, 2147483648
    %v3222 = vxor.u32 %v3194, 2147483648
    %v3223 = vmul.f32 %v3221, 1.442695
    %v3224 = vpow.pop %v3223
    %v3225 = vmul.f32 %v3222, 1.442695
    %v3226 = vpow.pop %v3225
    %v3227 = vadd.f32 %v3224, 1.0
    %v3228 = vadd.f32 %v3226, 1.0
    %v3229 = vrcp.pop %v3227
    %v3230 = vmul.f32 1.0, %v3229
    %v3231 = vrcp.pop %v3228
    %v3232 = vmul.f32 1.0, %v3231
    %v3233 = vmul.f32 %v3216, %v3007
    %v3234 = vmul.f32 %v3218, %v3008
    %v3235 = vmul.f32 %v3204, %v3219
    %v3236 = vmul.f32 %v3206, %v3220
    %v3237 = vadd.f32 %v3233, %v3235
    %v3238 = vadd.f32 %v3234, %v3236
    %v3239 = vtanh.pop %v3237
    %v3240 = vtanh.pop %v3238
    %v3241 = vmul.f32 %v3230, %v3239
    %v3242 = vmul.f32 %v3232, %v3240
    %v3243 = vld [vmem:[%s5] sm:$0xff]
    %v3244 = vld [vmem:[%s5 + $0x8] sm:$0xff]
    %v3245 = vld [vmem:[%s5 + $0x10] sm:$0xff]
    %v3246 = vld [vmem:[%s5 + $0x18] sm:$0xff]
    %v3247 = vld [vmem:[%s5 + $0x20] sm:$0xff]
    %v3248 = vld [vmem:[%s5 + $0x28] sm:$0xff]
    %v3249 = vld [vmem:[%s5 + $0x30] sm:$0xff]
    %v3250 = vld [vmem:[%s5 + $0x38] sm:$0xff]
    %v3251 = vld [vmem:[%s5 + $0x40] sm:$0xff]
    %v3252 = vld [vmem:[%s5 + $0x48] sm:$0xff]
    %v3253 = vld [vmem:[%s5 + $0x50] sm:$0xff]
    %v3254 = vld [vmem:[%s5 + $0x58] sm:$0xff]
    %v3255 = vld [vmem:[%s5 + $0x60] sm:$0xff]
    %v3256 = vld [vmem:[%s5 + $0x68] sm:$0xff]
    %v3257 = vld [vmem:[%s5 + $0x70] sm:$0xff]
    %v3258 = vld [vmem:[%s5 + $0x78] sm:$0xff]
    %v3259 = vld [vmem:[%s5 + $0x80] sm:$0xff]
    %v3260 = vld [vmem:[%s5 + $0x88] sm:$0xff]
    %v3261 = vld [vmem:[%s5 + $0x90] sm:$0xff]
    %v3262 = vld [vmem:[%s5 + $0x98] sm:$0xff]
    %v3263 = vld [vmem:[%s5 + $0xa0] sm:$0xff]
    %v3264 = vld [vmem:[%s5 + $0xa8] sm:$0xff]
    %v3265 = vld [vmem:[%s5 + $0xb0] sm:$0xff]
    %v3266 = vld [vmem:[%s5 + $0xb8] sm:$0xff]
    %v3267 = vld [vmem:[%s5 + $0xc0] sm:$0xff]
    %v3268 = vld [vmem:[%s5 + $0xc8] sm:$0xff]
    %v3269 = vld [vmem:[%s5 + $0xd0] sm:$0xff]
    %v3270 = vld [vmem:[%s5 + $0xd8] sm:$0xff]
    %v3271 = vld [vmem:[%s5 + $0xe0] sm:$0xff]
    %v3272 = vld [vmem:[%s5 + $0xe8] sm:$0xff]
    %v3273 = vld [vmem:[%s5 + $0xf0] sm:$0xff]
    %v3274 = vld [vmem:[%s5 + $0xf8] sm:$0xff]
    %v3275 = vld [vmem:[%s6] sm:$0x1]
    %v3277 = vlaneseq
    %v3278 = vshrl.u32 %v3277, 7
    %v3279 = vsub.s32 0, %v3278
    %v3280 = vrot.slane %v3275, %v3279
    %3282 = vmatprep.subr.mxu0 0.0
    %3283 = vmatpush1.msra.mxu0 %v3243
    %3284 = vmatprep.subr.mxu0 0.0
    %3285 = vmatpush1.msra.mxu0 %v3244
    %3286 = vmatprep.subr.mxu0 0.0
    %3287 = vmatpush1.msra.mxu0 %v3245
    %3288 = vmatprep.subr.mxu0 0.0
    %3289 = vmatpush1.msra.mxu0 %v3246
    %3290 = vmatprep.subr.mxu0 0.0
    %3291 = vmatpush1.msra.mxu0 %v3247
    %3292 = vmatprep.subr.mxu0 0.0
    %3293 = vmatpush1.msra.mxu0 %v3248
    %3294 = vmatprep.subr.mxu0 0.0
    %3295 = vmatpush1.msra.mxu0 %v3249
    %3296 = vmatprep.subr.mxu0 0.0
    %3297 = vmatpush1.msra.mxu0 %v3250
    %3298 = vmatprep.subr.mxu0 0.0
    %3299 = vmatpush1.msra.mxu0 %v3251
    %3300 = vmatprep.subr.mxu0 0.0
    %3301 = vmatpush1.msra.mxu0 %v3252
    %3302 = vmatprep.subr.mxu0 0.0
    %3303 = vmatpush1.msra.mxu0 %v3253
    %3304 = vmatprep.subr.mxu0 0.0
    %3305 = vmatpush1.msra.mxu0 %v3254
    %3306 = vmatprep.subr.mxu0 0.0
    %3307 = vmatpush1.msra.mxu0 %v3255
    %3308 = vmatprep.subr.mxu0 0.0
    %3309 = vmatpush1.msra.mxu0 %v3256
    %3310 = vmatprep.subr.mxu0 0.0
    %3311 = vmatpush1.msra.mxu0 %v3257
    %3312 = vmatprep.subr.mxu0 0.0
    %3313 = vmatpush1.msra.mxu0 %v3258
    %3314 = vmatprep.subr.mxu0 0.0
    %3315 = vmatpush1.msra.mxu0 %v3259
    %3316 = vmatprep.subr.mxu0 0.0
    %3317 = vmatpush1.msra.mxu0 %v3260
    %3318 = vmatprep.subr.mxu0 0.0
    %3319 = vmatpush1.msra.mxu0 %v3261
    %3320 = vmatprep.subr.mxu0 0.0
    %3321 = vmatpush1.msra.mxu0 %v3262
    %3322 = vmatprep.subr.mxu0 0.0
    %3323 = vmatpush1.msra.mxu0 %v3263
    %3324 = vmatprep.subr.mxu0 0.0
    %3325 = vmatpush1.msra.mxu0 %v3264
    %3326 = vmatprep.subr.mxu0 0.0
    %3327 = vmatpush1.msra.mxu0 %v3265
    %3328 = vmatprep.subr.mxu0 0.0
    %3329 = vmatpush1.msra.mxu0 %v3266
    %3330 = vmatprep.subr.mxu0 0.0
    %3331 = vmatpush1.msra.mxu0 %v3267
    %3332 = vmatprep.subr.mxu0 0.0
    %3333 = vmatpush1.msra.mxu0 %v3268
    %3334 = vmatprep.subr.mxu0 0.0
    %3335 = vmatpush1.msra.mxu0 %v3269
    %3336 = vmatprep.subr.mxu0 0.0
    %3337 = vmatpush1.msra.mxu0 %v3270
    %3338 = vmatprep.subr.mxu0 0.0
    %3339 = vmatpush1.msra.mxu0 %v3271
    %3340 = vmatprep.subr.mxu0 0.0
    %3341 = vmatpush1.msra.mxu0 %v3272
    %3342 = vmatprep.subr.mxu0 0.0
    %3343 = vmatpush1.msra.mxu0 %v3273
    %3344 = vmatprep.subr.mxu0 0.0
    %3345 = vmatpush1.msra.mxu0 %v3274
    %3346 = vmatprep.mubr.f32.mxu0 %v3242
    %3347 = vmatmul.mubr.f32.gmra.mrb[0].mxu0 %v3241
    %v3348 = vpop.f32.mrb[0].mxu0
    %v3349 = vadd.f32 %v3280, %v3348
    %v3350 = vpop.f32.mrb[0].mxu0
    %3351 = vdwg.mxu0
    %v3352 = vld [vmem:[%s1] sm:$0xff]
    %v3353 = vmul.f32 %v3349, 0.5
    %v3354 = vmul.f32 %v3353, 1.442695
    %v3355 = vpow.pop %v3354
    %3357 = vrot.lane.b32.xlu0 %v3355, 112
    %v3358 = vpop.permute.xlu0 %3357
    %v3360 = vmul.f32 %v3352, %v3358
    %v3361 = vadd.f32 %v3349, %v3360
    %vm3362 = vcmask 130048
    %3363 = vst.msk [vmem:[%s14] sm:$0xff] %vm3362, %v3349
    %3365 = vrot.lane.b32.xlu0 %v3349, 112
    %v3366 = vpop.permute.xlu0 %3365
    %3368 = vst.msk [vmem:[%s15] sm:$0xff] %vm3362, %v3366
    %3369 = vst.msk [vmem:[%s16] sm:$0xff] %vm3362, %v3361
    %v3370 = vld [vmem:[%s7] sm:$0xff]
    %v3371 = vld [vmem:[%s7 + $0x8] sm:$0xff]
    %v3372 = vld [vmem:[%s8] sm:$0x1]
    %v3374 = vlaneseq
    %v3375 = vshrl.u32 %v3374, 7
    %v3376 = vsub.s32 0, %v3375
    %v3377 = vrot.slane %v3372, %v3376
    %v3380 = vsel %vm3362, %v3361, 0
    %3382 = vmatprep.subr.mxu0 0.0
    %3383 = vmatpush1.msra.mxu0 %v3370
    %3384 = vmatprep.subr.mxu0 0.0
    %3385 = vmatpush1.msra.mxu0 %v3371
    %3386 = vmatprep.subr.mxu0 0.0
    %3387 = vmatpush1.msra.mxu0 0.0
    %3388 = vmatprep.subr.mxu0 0.0
    %3389 = vmatpush1.msra.mxu0 0.0
    %3390 = vmatprep.subr.mxu0 0.0
    %3391 = vmatpush1.msra.mxu0 0.0
    %3392 = vmatprep.subr.mxu0 0.0
    %3393 = vmatpush1.msra.mxu0 0.0
    %3394 = vmatprep.subr.mxu0 0.0
    %3395 = vmatpush1.msra.mxu0 0.0
    %3396 = vmatprep.subr.mxu0 0.0
    %3397 = vmatpush1.msra.mxu0 0.0
    %3398 = vmatprep.subr.mxu0 0.0
    %3399 = vmatpush1.msra.mxu0 0.0
    %3400 = vmatprep.subr.mxu0 0.0
    %3401 = vmatpush1.msra.mxu0 0.0
    %3402 = vmatprep.subr.mxu0 0.0
    %3403 = vmatpush1.msra.mxu0 0.0
    %3404 = vmatprep.subr.mxu0 0.0
    %3405 = vmatpush1.msra.mxu0 0.0
    %3406 = vmatprep.subr.mxu0 0.0
    %3407 = vmatpush1.msra.mxu0 0.0
    %3408 = vmatprep.subr.mxu0 0.0
    %3409 = vmatpush1.msra.mxu0 0.0
    %3410 = vmatprep.subr.mxu0 0.0
    %3411 = vmatpush1.msra.mxu0 0.0
    %3412 = vmatprep.subr.mxu0 0.0
    %3413 = vmatpush1.msra.mxu0 0.0
    %3414 = vmatprep.subr.mxu0 0.0
    %3415 = vmatpush1.msra.mxu0 0.0
    %3416 = vmatprep.subr.mxu0 0.0
    %3417 = vmatpush1.msra.mxu0 0.0
    %3418 = vmatprep.subr.mxu0 0.0
    %3419 = vmatpush1.msra.mxu0 0.0
    %3420 = vmatprep.subr.mxu0 0.0
    %3421 = vmatpush1.msra.mxu0 0.0
    %3422 = vmatprep.subr.mxu0 0.0
    %3423 = vmatpush1.msra.mxu0 0.0
    %3424 = vmatprep.subr.mxu0 0.0
    %3425 = vmatpush1.msra.mxu0 0.0
    %3426 = vmatprep.subr.mxu0 0.0
    %3427 = vmatpush1.msra.mxu0 0.0
    %3428 = vmatprep.subr.mxu0 0.0
    %3429 = vmatpush1.msra.mxu0 0.0
    %3430 = vmatprep.subr.mxu0 0.0
    %3431 = vmatpush1.msra.mxu0 0.0
    %3432 = vmatprep.subr.mxu0 0.0
    %3433 = vmatpush1.msra.mxu0 0.0
    %3434 = vmatprep.subr.mxu0 0.0
    %3435 = vmatpush1.msra.mxu0 0.0
    %3436 = vmatprep.subr.mxu0 0.0
    %3437 = vmatpush1.msra.mxu0 0.0
    %3438 = vmatprep.subr.mxu0 0.0
    %3439 = vmatpush1.msra.mxu0 0.0
    %3440 = vmatprep.subr.mxu0 0.0
    %3441 = vmatpush1.msra.mxu0 0.0
    %3442 = vmatprep.subr.mxu0 0.0
    %3443 = vmatpush1.msra.mxu0 0.0
    %3444 = vmatprep.subr.mxu0 0.0
    %3445 = vmatpush1.msra.mxu0 0.0
    %3446 = vmatprep.mubr.f32.mxu0 0.0
    %3447 = vmatmul.mubr.f32.gmra.mrb[0].mxu0 %v3380
    %v3448 = vpop.f32.mrb[0].mxu0
    %v3449 = vadd.f32 %v3377, %v3448
    %v3450 = vpop.f32.mrb[0].mxu0
    %3451 = vdwg.mxu0
    %v3452 = vpack.c.bf16 %v3449, %v3449
    %v3453 = vld [vmem:[%s9] sm:$0xff]
    %v3454 = vld [vmem:[%s9 + $0x8] sm:$0xff]
    %v3455 = vld [vmem:[%s9 + $0x10] sm:$0xff]
    %v3456 = vld [vmem:[%s9 + $0x18] sm:$0xff]
    %v3457 = vld [vmem:[%s9 + $0x20] sm:$0xff]
    %v3458 = vld [vmem:[%s9 + $0x28] sm:$0xff]
    %v3459 = vld [vmem:[%s9 + $0x30] sm:$0xff]
    %v3460 = vld [vmem:[%s9 + $0x38] sm:$0xff]
    %v3469 = vunpack.c.l.b16 %v3453
    %v3470 = vunpack.c.h.b16 %v3453
    %v3471 = vunpack.c.l.b16 %v3454
    %v3472 = vunpack.c.h.b16 %v3454
    %v3473 = vunpack.c.l.b16 %v3455
    %v3474 = vunpack.c.h.b16 %v3455
    %v3475 = vunpack.c.l.b16 %v3456
    %v3476 = vunpack.c.h.b16 %v3456
    %v3477 = vunpack.c.l.b16 %v3457
    %v3478 = vunpack.c.h.b16 %v3457
    %v3479 = vunpack.c.l.b16 %v3458
    %v3480 = vunpack.c.h.b16 %v3458
    %v3481 = vunpack.c.l.b16 %v3459
    %v3482 = vunpack.c.h.b16 %v3459
    %v3483 = vunpack.c.l.b16 %v3460
    %v3484 = vunpack.c.h.b16 %v3460
    %v3485 = vpack.c.b16 %v3473, %v3469
    %v3486 = vpack.c.b16 %v3474, %v3470
    %v3487 = vpack.c.b16 %v3475, %v3471
    %v3488 = vpack.c.b16 %v3476, %v3472
    %v3489 = vpack.c.b16 %v3481, %v3477
    %v3490 = vpack.c.b16 %v3482, %v3478
    %v3491 = vpack.c.b16 %v3483, %v3479
    %v3492 = vpack.c.b16 %v3484, %v3480
    %v3502 = vsel %vm244, %v3452, 0
    %3504 = vmatprep.subr.bf16.mxu0 %v3486
    %3505 = vmatpush1.bf16.msra.mxu0 %v3485
    %3506 = vmatprep.subr.bf16.mxu0 %v3490
    %3507 = vmatpush1.bf16.msra.mxu0 %v3489
    %3508 = vmatprep.subr.bf16.mxu0 0
    %3509 = vmatpush1.bf16.msra.mxu0 0
    %3510 = vmatprep.subr.bf16.mxu0 0
    %3511 = vmatpush1.bf16.msra.mxu0 0
    %3512 = vmatprep.subr.bf16.mxu0 0
    %3513 = vmatpush1.bf16.msra.mxu0 0
    %3514 = vmatprep.subr.bf16.mxu0 0
    %3515 = vmatpush1.bf16.msra.mxu0 0
    %3516 = vmatprep.subr.bf16.mxu0 0
    %3517 = vmatpush1.bf16.msra.mxu0 0
    %3518 = vmatprep.subr.bf16.mxu0 0
    %3519 = vmatpush1.bf16.msra.mxu0 0
    %3520 = vmatprep.subr.bf16.mxu0 0
    %3521 = vmatpush1.bf16.msra.mxu0 0
    %3522 = vmatprep.subr.bf16.mxu0 0
    %3523 = vmatpush1.bf16.msra.mxu0 0
    %3524 = vmatprep.subr.bf16.mxu0 0
    %3525 = vmatpush1.bf16.msra.mxu0 0
    %3526 = vmatprep.subr.bf16.mxu0 0
    %3527 = vmatpush1.bf16.msra.mxu0 0
    %3528 = vmatprep.subr.bf16.mxu0 0
    %3529 = vmatpush1.bf16.msra.mxu0 0
    %3530 = vmatprep.subr.bf16.mxu0 0
    %3531 = vmatpush1.bf16.msra.mxu0 0
    %3532 = vmatprep.subr.bf16.mxu0 0
    %3533 = vmatpush1.bf16.msra.mxu0 0
    %3534 = vmatprep.subr.bf16.mxu0 0
    %3535 = vmatpush1.bf16.msra.mxu0 0
    %3536 = vmatprep.mubr.bf16.mxu0 0
    %3537 = vmatmul.mubr.bf16.gmra.mrb[0].mxu0 %v3502
    %v3538 = vpop.f32.mrb[0].mxu0
    %v3539 = vadd.f32 0.0, %v3538
    %v3540 = vpop.f32.mrb[0].mxu0
    %v3541 = vadd.f32 0.0, %v3540
    %v3542 = vpop.f32.mrb[0].mxu0
    %v3543 = vpop.f32.mrb[0].mxu0
    %3544 = vdwg.mxu0
    %3545 = vmatprep.subr.bf16.mxu0 %v3488
    %3546 = vmatpush1.bf16.msra.mxu0 %v3487
    %3547 = vmatprep.subr.bf16.mxu0 %v3492
    %3548 = vmatpush1.bf16.msra.mxu0 %v3491
    %3549 = vmatprep.subr.bf16.mxu0 0
    %3550 = vmatpush1.bf16.msra.mxu0 0
    %3551 = vmatprep.subr.bf16.mxu0 0
    %3552 = vmatpush1.bf16.msra.mxu0 0
    %3553 = vmatprep.subr.bf16.mxu0 0
    %3554 = vmatpush1.bf16.msra.mxu0 0
    %3555 = vmatprep.subr.bf16.mxu0 0
    %3556 = vmatpush1.bf16.msra.mxu0 0
    %3557 = vmatprep.subr.bf16.mxu0 0
    %3558 = vmatpush1.bf16.msra.mxu0 0
    %3559 = vmatprep.subr.bf16.mxu0 0
    %3560 = vmatpush1.bf16.msra.mxu0 0
    %3561 = vmatprep.subr.bf16.mxu0 0
    %3562 = vmatpush1.bf16.msra.mxu0 0
    %3563 = vmatprep.subr.bf16.mxu0 0
    %3564 = vmatpush1.bf16.msra.mxu0 0
    %3565 = vmatprep.subr.bf16.mxu0 0
    %3566 = vmatpush1.bf16.msra.mxu0 0
    %3567 = vmatprep.subr.bf16.mxu0 0
    %3568 = vmatpush1.bf16.msra.mxu0 0
    %3569 = vmatprep.subr.bf16.mxu0 0
    %3570 = vmatpush1.bf16.msra.mxu0 0
    %3571 = vmatprep.subr.bf16.mxu0 0
    %3572 = vmatpush1.bf16.msra.mxu0 0
    %3573 = vmatprep.subr.bf16.mxu0 0
    %3574 = vmatpush1.bf16.msra.mxu0 0
    %3575 = vmatprep.subr.bf16.mxu0 0
    %3576 = vmatpush1.bf16.msra.mxu0 0
    %3577 = vmatprep.mubr.bf16.mxu0 0
    %3578 = vmatmul.mubr.bf16.gmra.mrb[0].mxu0 %v3502
    %v3579 = vpop.f32.mrb[0].mxu0
    %v3580 = vadd.f32 0.0, %v3579
    %v3581 = vpop.f32.mrb[0].mxu0
    %v3582 = vadd.f32 0.0, %v3581
    %v3583 = vpop.f32.mrb[0].mxu0
    %v3584 = vpop.f32.mrb[0].mxu0
    %3585 = vdwg.mxu0
    %v3586 = vld [vmem:[%s0] sm:$0xf]
    %v3587 = vld [vmem:[%s0 + $0x4] sm:$0xf]
    %v3588 = vld [vmem:[%s0 + $0x8] sm:$0xf]
    %v3589 = vld [vmem:[%s0 + $0xc] sm:$0xf]
    %v3590 = vld [vmem:[%s0 + $0x10] sm:$0xf]
    %v3591 = vld [vmem:[%s0 + $0x14] sm:$0xf]
    %v3592 = vld [vmem:[%s0 + $0x18] sm:$0xf]
    %v3593 = vld [vmem:[%s0 + $0x1c] sm:$0xf]
    %v3594 = vld [vmem:[%s11] sm:$0xf]
    %v3596 = vlaneseq
    %v3597 = vshrl.u32 %v3596, 7
    %v3598 = vsub.s32 0, %v3597
    %v3599 = vrot.slane %v3594, %v3598
    %v3600 = vlaneseq
    %v3601 = vshrl.u32 %v3600, 7
    %v3602 = vsub.s32 1, %v3601
    %v3603 = vrot.slane %v3594, %v3602
    %v3604 = vlaneseq
    %v3605 = vshrl.u32 %v3604, 7
    %v3606 = vsub.s32 2, %v3605
    %v3607 = vrot.slane %v3594, %v3606
    %v3608 = vlaneseq
    %v3609 = vshrl.u32 %v3608, 7
    %v3610 = vsub.s32 3, %v3609
    %v3611 = vrot.slane %v3594, %v3610
    %v3624 = vunpack.c.l.b16 %v3586
    %v3625 = vunpack.c.l.b16 %v3587
    %v3626 = vunpack.c.l.b16 %v3588
    %v3627 = vunpack.c.l.b16 %v3589
    %v3628 = vunpack.c.l.b16 %v3590
    %v3629 = vunpack.c.l.b16 %v3591
    %v3630 = vunpack.c.l.b16 %v3592
    %v3631 = vunpack.c.l.b16 %v3593
    %v3632 = vpack.c.b16 %v3625, %v3624
    %v3633 = vpack.c.b16 %v3627, %v3626
    %v3634 = vpack.c.b16 %v3629, %v3628
    %v3635 = vpack.c.b16 %v3631, %v3630
    %v3637 = vsel %vm244, %v3632, 0
    %v3640 = vsel %vm244, %v3633, 0
    %v3643 = vsel %vm244, %v3634, 0
    %v3646 = vsel %vm244, %v3635, 0
    %3648 = vmatprep.subr.bf16.mxu0 %v3486
    %3649 = vmatpush1.bf16.msra.mxu0 %v3485
    %3650 = vmatprep.subr.bf16.mxu0 %v3490
    %3651 = vmatpush1.bf16.msra.mxu0 %v3489
    %3652 = vmatprep.subr.bf16.mxu0 0
    %3653 = vmatpush1.bf16.msra.mxu0 0
    %3654 = vmatprep.subr.bf16.mxu0 0
    %3655 = vmatpush1.bf16.msra.mxu0 0
    %3656 = vmatprep.subr.bf16.mxu0 0
    %3657 = vmatpush1.bf16.msra.mxu0 0
    %3658 = vmatprep.subr.bf16.mxu0 0
    %3659 = vmatpush1.bf16.msra.mxu0 0
    %3660 = vmatprep.subr.bf16.mxu0 0
    %3661 = vmatpush1.bf16.msra.mxu0 0
    %3662 = vmatprep.subr.bf16.mxu0 0
    %3663 = vmatpush1.bf16.msra.mxu0 0
    %3664 = vmatprep.subr.bf16.mxu0 0
    %3665 = vmatpush1.bf16.msra.mxu0 0
    %3666 = vmatprep.subr.bf16.mxu0 0
    %3667 = vmatpush1.bf16.msra.mxu0 0
    %3668 = vmatprep.subr.bf16.mxu0 0
    %3669 = vmatpush1.bf16.msra.mxu0 0
    %3670 = vmatprep.subr.bf16.mxu0 0
    %3671 = vmatpush1.bf16.msra.mxu0 0
    %3672 = vmatprep.subr.bf16.mxu0 0
    %3673 = vmatpush1.bf16.msra.mxu0 0
    %3674 = vmatprep.subr.bf16.mxu0 0
    %3675 = vmatpush1.bf16.msra.mxu0 0
    %3676 = vmatprep.subr.bf16.mxu0 0
    %3677 = vmatpush1.bf16.msra.mxu0 0
    %3678 = vmatprep.subr.bf16.mxu0 0
    %3679 = vmatpush1.bf16.msra.mxu0 0
    %3680 = vmatprep.mubr.bf16.mxu0 0
    %3681 = vmatmul.mubr.bf16.gmra.mrb[0].mxu0 %v3637
    %v3682 = vpop.f32.mrb[0].mxu0
    %v3683 = vadd.f32 %v3599, %v3682
    %v3684 = vpop.f32.mrb[0].mxu0
    %v3685 = vadd.f32 %v3603, %v3684
    %v3686 = vpop.f32.mrb[0].mxu0
    %v3687 = vadd.f32 %v3599, %v3686
    %v3688 = vpop.f32.mrb[0].mxu0
    %v3689 = vadd.f32 %v3603, %v3688
    %3690 = vmatprep.mubr.bf16.mxu0 0
    %3691 = vmatmul.mubr.bf16.gmra.mrb[0].mxu0 %v3640
    %v3692 = vpop.f32.mrb[0].mxu0
    %v3693 = vadd.f32 %v3599, %v3692
    %v3694 = vpop.f32.mrb[0].mxu0
    %v3695 = vadd.f32 %v3603, %v3694
    %v3696 = vpop.f32.mrb[0].mxu0
    %v3697 = vadd.f32 %v3599, %v3696
    %v3698 = vpop.f32.mrb[0].mxu0
    %v3699 = vadd.f32 %v3603, %v3698
    %3700 = vmatprep.mubr.bf16.mxu0 0
    %3701 = vmatmul.mubr.bf16.gmra.mrb[0].mxu0 %v3643
    %v3702 = vpop.f32.mrb[0].mxu0
    %v3703 = vadd.f32 %v3599, %v3702
    %v3704 = vpop.f32.mrb[0].mxu0
    %v3705 = vadd.f32 %v3603, %v3704
    %v3706 = vpop.f32.mrb[0].mxu0
    %v3707 = vadd.f32 %v3599, %v3706
    %v3708 = vpop.f32.mrb[0].mxu0
    %v3709 = vadd.f32 %v3603, %v3708
    %3710 = vmatprep.mubr.bf16.mxu0 0
    %3711 = vmatmul.mubr.bf16.gmra.mrb[0].mxu0 %v3646
    %v3712 = vpop.f32.mrb[0].mxu0
    %v3713 = vadd.f32 %v3599, %v3712
    %v3714 = vpop.f32.mrb[0].mxu0
    %v3715 = vadd.f32 %v3603, %v3714
    %v3716 = vpop.f32.mrb[0].mxu0
    %v3717 = vadd.f32 %v3599, %v3716
    %v3718 = vpop.f32.mrb[0].mxu0
    %v3719 = vadd.f32 %v3603, %v3718
    %3720 = vdwg.mxu0
    %3721 = vmatprep.subr.bf16.mxu0 %v3488
    %3722 = vmatpush1.bf16.msra.mxu0 %v3487
    %3723 = vmatprep.subr.bf16.mxu0 %v3492
    %3724 = vmatpush1.bf16.msra.mxu0 %v3491
    %3725 = vmatprep.subr.bf16.mxu0 0
    %3726 = vmatpush1.bf16.msra.mxu0 0
    %3727 = vmatprep.subr.bf16.mxu0 0
    %3728 = vmatpush1.bf16.msra.mxu0 0
    %3729 = vmatprep.subr.bf16.mxu0 0
    %3730 = vmatpush1.bf16.msra.mxu0 0
    %3731 = vmatprep.subr.bf16.mxu0 0
    %3732 = vmatpush1.bf16.msra.mxu0 0
    %3733 = vmatprep.subr.bf16.mxu0 0
    %3734 = vmatpush1.bf16.msra.mxu0 0
    %3735 = vmatprep.subr.bf16.mxu0 0
    %3736 = vmatpush1.bf16.msra.mxu0 0
    %3737 = vmatprep.subr.bf16.mxu0 0
    %3738 = vmatpush1.bf16.msra.mxu0 0
    %3739 = vmatprep.subr.bf16.mxu0 0
    %3740 = vmatpush1.bf16.msra.mxu0 0
    %3741 = vmatprep.subr.bf16.mxu0 0
    %3742 = vmatpush1.bf16.msra.mxu0 0
    %3743 = vmatprep.subr.bf16.mxu0 0
    %3744 = vmatpush1.bf16.msra.mxu0 0
    %3745 = vmatprep.subr.bf16.mxu0 0
    %3746 = vmatpush1.bf16.msra.mxu0 0
    %3747 = vmatprep.subr.bf16.mxu0 0
    %3748 = vmatpush1.bf16.msra.mxu0 0
    %3749 = vmatprep.subr.bf16.mxu0 0
    %3750 = vmatpush1.bf16.msra.mxu0 0
    %3751 = vmatprep.subr.bf16.mxu0 0
    %3752 = vmatpush1.bf16.msra.mxu0 0
    %3753 = vmatprep.mubr.bf16.mxu0 0
    %3754 = vmatmul.mubr.bf16.gmra.mrb[0].mxu0 %v3637
    %v3755 = vpop.f32.mrb[0].mxu0
    %v3756 = vadd.f32 %v3607, %v3755
    %v3757 = vpop.f32.mrb[0].mxu0
    %v3758 = vadd.f32 %v3611, %v3757
    %v3759 = vpop.f32.mrb[0].mxu0
    %v3760 = vadd.f32 %v3607, %v3759
    %v3761 = vpop.f32.mrb[0].mxu0
    %v3762 = vadd.f32 %v3611, %v3761
    %3763 = vmatprep.mubr.bf16.mxu0 0
    %3764 = vmatmul.mubr.bf16.gmra.mrb[0].mxu0 %v3640
    %v3765 = vpop.f32.mrb[0].mxu0
    %v3766 = vadd.f32 %v3607, %v3765
    %v3767 = vpop.f32.mrb[0].mxu0
    %v3768 = vadd.f32 %v3611, %v3767
    %v3769 = vpop.f32.mrb[0].mxu0
    %v3770 = vadd.f32 %v3607, %v3769
    %v3771 = vpop.f32.mrb[0].mxu0
    %v3772 = vadd.f32 %v3611, %v3771
    %3773 = vmatprep.mubr.bf16.mxu0 0
    %3774 = vmatmul.mubr.bf16.gmra.mrb[0].mxu0 %v3643
    %v3775 = vpop.f32.mrb[0].mxu0
    %v3776 = vadd.f32 %v3607, %v3775
    %v3777 = vpop.f32.mrb[0].mxu0
    %v3778 = vadd.f32 %v3611, %v3777
    %v3779 = vpop.f32.mrb[0].mxu0
    %v3780 = vadd.f32 %v3607, %v3779
    %v3781 = vpop.f32.mrb[0].mxu0
    %v3782 = vadd.f32 %v3611, %v3781
    %3783 = vmatprep.mubr.bf16.mxu0 0
    %3784 = vmatmul.mubr.bf16.gmra.mrb[0].mxu0 %v3646
    %v3785 = vpop.f32.mrb[0].mxu0
    %v3786 = vadd.f32 %v3607, %v3785
    %v3787 = vpop.f32.mrb[0].mxu0
    %v3788 = vadd.f32 %v3611, %v3787
    %v3789 = vpop.f32.mrb[0].mxu0
    %v3790 = vadd.f32 %v3607, %v3789
    %v3791 = vpop.f32.mrb[0].mxu0
    %v3792 = vadd.f32 %v3611, %v3791
    %3793 = vdwg.mxu0
    %3794 = vst [vmem:[#allocation3] sm:$0xff] %v3683
    %3795 = vst [vmem:[#allocation3 + $0x8] sm:$0xff] %v3685
    %3796 = vst [vmem:[#allocation3 + $0x10] sm:$0xff] %v3756
    %3797 = vst [vmem:[#allocation3 + $0x18] sm:$0xff] %v3758
    %3798 = vst [vmem:[#allocation3 + $0x20] sm:$0xff] %v3687
    %3799 = vst [vmem:[#allocation3 + $0x28] sm:$0xff] %v3689
    %3800 = vst [vmem:[#allocation3 + $0x30] sm:$0xff] %v3760
    %3801 = vst [vmem:[#allocation3 + $0x38] sm:$0xff] %v3762
    %3802 = vst [vmem:[#allocation3 + $0x40] sm:$0xff] %v3693
    %3803 = vst [vmem:[#allocation3 + $0x48] sm:$0xff] %v3695
    %3804 = vst [vmem:[#allocation3 + $0x50] sm:$0xff] %v3766
    %3805 = vst [vmem:[#allocation3 + $0x58] sm:$0xff] %v3768
    %3806 = vst [vmem:[#allocation3 + $0x60] sm:$0xff] %v3697
    %3807 = vst [vmem:[#allocation3 + $0x68] sm:$0xff] %v3699
    %3808 = vst [vmem:[#allocation3 + $0x70] sm:$0xff] %v3770
    %3809 = vst [vmem:[#allocation3 + $0x78] sm:$0xff] %v3772
    %3810 = vst [vmem:[#allocation3 + $0x80] sm:$0xff] %v3703
    %3811 = vst [vmem:[#allocation3 + $0x88] sm:$0xff] %v3705
    %3812 = vst [vmem:[#allocation3 + $0x90] sm:$0xff] %v3776
    %3813 = vst [vmem:[#allocation3 + $0x98] sm:$0xff] %v3778
    %3814 = vst [vmem:[#allocation3 + $0xa0] sm:$0xff] %v3707
    %3815 = vst [vmem:[#allocation3 + $0xa8] sm:$0xff] %v3709
    %3816 = vst [vmem:[#allocation3 + $0xb0] sm:$0xff] %v3780
    %3817 = vst [vmem:[#allocation3 + $0xb8] sm:$0xff] %v3782
    %3818 = vst [vmem:[#allocation3 + $0xc0] sm:$0xff] %v3713
    %3819 = vst [vmem:[#allocation3 + $0xc8] sm:$0xff] %v3715
    %3820 = vst [vmem:[#allocation3 + $0xd0] sm:$0xff] %v3786
    %3821 = vst [vmem:[#allocation3 + $0xd8] sm:$0xff] %v3788
    %3822 = vst [vmem:[#allocation3 + $0xe0] sm:$0xff] %v3717
    %3823 = vst [vmem:[#allocation3 + $0xe8] sm:$0xff] %v3719
    %3824 = vst [vmem:[#allocation3 + $0xf0] sm:$0xff] %v3790
    %3825 = vst [vmem:[#allocation3 + $0xf8] sm:$0xff] %v3792
    %s3826 = smul.u32 0, 4
    %s3827 = smul.addr %s3826, 8
    %s3828 = scalar_lea.vmem [#allocation3], %s3827
    %v3829 = vld [vmem:[%s3828] sm:$0xff]
    %v3830 = vld [vmem:[%s3828 + $0x8] sm:$0xff]
    %v3831 = vld [vmem:[%s3828 + $0x10] sm:$0xff]
    %v3832 = vld [vmem:[%s3828 + $0x18] sm:$0xff]
    %v3833 = vadd.f32 %v3829, %v3539
    %v3834 = vadd.f32 %v3830, %v3541
    %v3835 = vadd.f32 %v3831, %v3580
    %v3836 = vadd.f32 %v3832, %v3582
    %v3837 = vld [vmem:[%s10] sm:$0xff]
    %v3838 = vld [vmem:[%s10 + $0x8] sm:$0xff]
    %v3839 = vld [vmem:[%s10 + $0x10] sm:$0xff]
    %v3840 = vld [vmem:[%s10 + $0x18] sm:$0xff]
    %v3841 = vld [vmem:[%s10 + $0x20] sm:$0xff]
    %v3842 = vld [vmem:[%s10 + $0x28] sm:$0xff]
    %v3843 = vld [vmem:[%s10 + $0x30] sm:$0xff]
    %v3844 = vld [vmem:[%s10 + $0x38] sm:$0xff]
    %v3845 = vld [vmem:[%s10 + $0x40] sm:$0xff]
    %v3846 = vld [vmem:[%s10 + $0x48] sm:$0xff]
    %v3847 = vld [vmem:[%s10 + $0x50] sm:$0xff]
    %v3848 = vld [vmem:[%s10 + $0x58] sm:$0xff]
    %v3849 = vld [vmem:[%s10 + $0x60] sm:$0xff]
    %v3850 = vld [vmem:[%s10 + $0x68] sm:$0xff]
    %v3851 = vld [vmem:[%s10 + $0x70] sm:$0xff]
    %v3852 = vld [vmem:[%s10 + $0x78] sm:$0xff]
    %v3853 = vld [vmem:[%s10 + $0x80] sm:$0xff]
    %v3854 = vld [vmem:[%s10 + $0x88] sm:$0xff]
    %v3855 = vld [vmem:[%s10 + $0x90] sm:$0xff]
    %v3856 = vld [vmem:[%s10 + $0x98] sm:$0xff]
    %v3857 = vld [vmem:[%s10 + $0xa0] sm:$0xff]
    %v3858 = vld [vmem:[%s10 + $0xa8] sm:$0xff]
    %v3859 = vld [vmem:[%s10 + $0xb0] sm:$0xff]
    %v3860 = vld [vmem:[%s10 + $0xb8] sm:$0xff]
    %v3861 = vld [vmem:[%s10 + $0xc0] sm:$0xff]
    %v3862 = vld [vmem:[%s10 + $0xc8] sm:$0xff]
    %v3863 = vld [vmem:[%s10 + $0xd0] sm:$0xff]
    %v3864 = vld [vmem:[%s10 + $0xd8] sm:$0xff]
    %v3865 = vld [vmem:[%s10 + $0xe0] sm:$0xff]
    %v3866 = vld [vmem:[%s10 + $0xe8] sm:$0xff]
    %v3867 = vld [vmem:[%s10 + $0xf0] sm:$0xff]
    %v3868 = vld [vmem:[%s10 + $0xf8] sm:$0xff]
    %v3901 = vunpack.c.l.b16 %v3837
    %v3902 = vunpack.c.h.b16 %v3837
    %v3903 = vunpack.c.l.b16 %v3838
    %v3904 = vunpack.c.h.b16 %v3838
    %v3905 = vunpack.c.l.b16 %v3839
    %v3906 = vunpack.c.h.b16 %v3839
    %v3907 = vunpack.c.l.b16 %v3840
    %v3908 = vunpack.c.h.b16 %v3840
    %v3909 = vunpack.c.l.b16 %v3841
    %v3910 = vunpack.c.h.b16 %v3841
    %v3911 = vunpack.c.l.b16 %v3842
    %v3912 = vunpack.c.h.b16 %v3842
    %v3913 = vunpack.c.l.b16 %v3843
    %v3914 = vunpack.c.h.b16 %v3843
    %v3915 = vunpack.c.l.b16 %v3844
    %v3916 = vunpack.c.h.b16 %v3844
    %v3917 = vunpack.c.l.b16 %v3845
    %v3918 = vunpack.c.h.b16 %v3845
    %v3919 = vunpack.c.l.b16 %v3846
    %v3920 = vunpack.c.h.b16 %v3846
    %v3921 = vunpack.c.l.b16 %v3847
    %v3922 = vunpack.c.h.b16 %v3847
    %v3923 = vunpack.c.l.b16 %v3848
    %v3924 = vunpack.c.h.b16 %v3848
    %v3925 = vunpack.c.l.b16 %v3849
    %v3926 = vunpack.c.h.b16 %v3849
    %v3927 = vunpack.c.l.b16 %v3850
    %v3928 = vunpack.c.h.b16 %v3850
    %v3929 = vunpack.c.l.b16 %v3851
    %v3930 = vunpack.c.h.b16 %v3851
    %v3931 = vunpack.c.l.b16 %v3852
    %v3932 = vunpack.c.h.b16 %v3852
    %v3933 = vunpack.c.l.b16 %v3853
    %v3934 = vunpack.c.h.b16 %v3853
    %v3935 = vunpack.c.l.b16 %v3854
    %v3936 = vunpack.c.h.b16 %v3854
    %v3937 = vunpack.c.l.b16 %v3855
    %v3938 = vunpack.c.h.b16 %v3855
    %v3939 = vunpack.c.l.b16 %v3856
    %v3940 = vunpack.c.h.b16 %v3856
    %v3941 = vunpack.c.l.b16 %v3857
    %v3942 = vunpack.c.h.b16 %v3857
    %v3943 = vunpack.c.l.b16 %v3858
    %v3944 = vunpack.c.h.b16 %v3858
    %v3945 = vunpack.c.l.b16 %v3859
    %v3946 = vunpack.c.h.b16 %v3859
    %v3947 = vunpack.c.l.b16 %v3860
    %v3948 = vunpack.c.h.b16 %v3860
    %v3949 = vunpack.c.l.b16 %v3861
    %v3950 = vunpack.c.h.b16 %v3861
    %v3951 = vunpack.c.l.b16 %v3862
    %v3952 = vunpack.c.h.b16 %v3862
    %v3953 = vunpack.c.l.b16 %v3863
    %v3954 = vunpack.c.h.b16 %v3863
    %v3955 = vunpack.c.l.b16 %v3864
    %v3956 = vunpack.c.h.b16 %v3864
    %v3957 = vunpack.c.l.b16 %v3865
    %v3958 = vunpack.c.h.b16 %v3865
    %v3959 = vunpack.c.l.b16 %v3866
    %v3960 = vunpack.c.h.b16 %v3866
    %v3961 = vunpack.c.l.b16 %v3867
    %v3962 = vunpack.c.h.b16 %v3867
    %v3963 = vunpack.c.l.b16 %v3868
    %v3964 = vunpack.c.h.b16 %v3868
    %v3965 = vpack.c.b16 %v3905, %v3901
    %v3966 = vpack.c.b16 %v3906, %v3902
    %v3967 = vpack.c.b16 %v3907, %v3903
    %v3968 = vpack.c.b16 %v3908, %v3904
    %v3969 = vpack.c.b16 %v3913, %v3909
    %v3970 = vpack.c.b16 %v3914, %v3910
    %v3971 = vpack.c.b16 %v3915, %v3911
    %v3972 = vpack.c.b16 %v3916, %v3912
    %v3973 = vpack.c.b16 %v3921, %v3917
    %v3974 = vpack.c.b16 %v3922, %v3918
    %v3975 = vpack.c.b16 %v3923, %v3919
    %v3976 = vpack.c.b16 %v3924, %v3920
    %v3977 = vpack.c.b16 %v3929, %v3925
    %v3978 = vpack.c.b16 %v3930, %v3926
    %v3979 = vpack.c.b16 %v3931, %v3927
    %v3980 = vpack.c.b16 %v3932, %v3928
    %v3981 = vpack.c.b16 %v3937, %v3933
    %v3982 = vpack.c.b16 %v3938, %v3934
    %v3983 = vpack.c.b16 %v3939, %v3935
    %v3984 = vpack.c.b16 %v3940, %v3936
    %v3985 = vpack.c.b16 %v3945, %v3941
    %v3986 = vpack.c.b16 %v3946, %v3942
    %v3987 = vpack.c.b16 %v3947, %v3943
    %v3988 = vpack.c.b16 %v3948, %v3944
    %v3989 = vpack.c.b16 %v3953, %v3949
    %v3990 = vpack.c.b16 %v3954, %v3950
    %v3991 = vpack.c.b16 %v3955, %v3951
    %v3992 = vpack.c.b16 %v3956, %v3952
    %v3993 = vpack.c.b16 %v3961, %v3957
    %v3994 = vpack.c.b16 %v3962, %v3958
    %v3995 = vpack.c.b16 %v3963, %v3959
    %v3996 = vpack.c.b16 %v3964, %v3960
    %4029 = vmatprep.subr.bf16.mxu0 %v3966
    %4030 = vmatpush1.bf16.msra.mxu0 %v3965
    %4031 = vmatprep.subr.bf16.mxu0 %v3970
    %4032 = vmatpush1.bf16.msra.mxu0 %v3969
    %4033 = vmatprep.subr.bf16.mxu0 %v3974
    %4034 = vmatpush1.bf16.msra.mxu0 %v3973
    %4035 = vmatprep.subr.bf16.mxu0 %v3978
    %4036 = vmatpush1.bf16.msra.mxu0 %v3977
    %4037 = vmatprep.subr.bf16.mxu0 %v3982
    %4038 = vmatpush1.bf16.msra.mxu0 %v3981
    %4039 = vmatprep.subr.bf16.mxu0 %v3986
    %4040 = vmatpush1.bf16.msra.mxu0 %v3985
    %4041 = vmatprep.subr.bf16.mxu0 %v3990
    %4042 = vmatpush1.bf16.msra.mxu0 %v3989
    %4043 = vmatprep.subr.bf16.mxu0 %v3994
    %4044 = vmatpush1.bf16.msra.mxu0 %v3993
    %4045 = vmatprep.subr.bf16.mxu0 0
    %4046 = vmatpush1.bf16.msra.mxu0 0
    %4047 = vmatprep.subr.bf16.mxu0 0
    %4048 = vmatpush1.bf16.msra.mxu0 0
    %4049 = vmatprep.subr.bf16.mxu0 0
    %4050 = vmatpush1.bf16.msra.mxu0 0
    %4051 = vmatprep.subr.bf16.mxu0 0
    %4052 = vmatpush1.bf16.msra.mxu0 0
    %4053 = vmatprep.subr.bf16.mxu0 0
    %4054 = vmatpush1.bf16.msra.mxu0 0
    %4055 = vmatprep.subr.bf16.mxu0 0
    %4056 = vmatpush1.bf16.msra.mxu0 0
    %4057 = vmatprep.subr.bf16.mxu0 0
    %4058 = vmatpush1.bf16.msra.mxu0 0
    %4059 = vmatprep.subr.bf16.mxu0 0
    %4060 = vmatpush1.bf16.msra.mxu0 0
    %4061 = vmatprep.mubr.bf16.mxu0 0
    %4062 = vmatmul.mubr.bf16.gmra.mrb[0].mxu0 0
    %v4063 = vpop.f32.mrb[0].mxu0
    %v4064 = vadd.f32 0.0, %v4063
    %v4065 = vpop.f32.mrb[0].mxu0
    %v4066 = vadd.f32 0.0, %v4065
    %v4067 = vpop.f32.mrb[0].mxu0
    %v4068 = vpop.f32.mrb[0].mxu0
    %4069 = vdwg.mxu0
    %4070 = vmatprep.subr.bf16.mxu0 %v3968
    %4071 = vmatpush1.bf16.msra.mxu0 %v3967
    %4072 = vmatprep.subr.bf16.mxu0 %v3972
    %4073 = vmatpush1.bf16.msra.mxu0 %v3971
    %4074 = vmatprep.subr.bf16.mxu0 %v3976
    %4075 = vmatpush1.bf16.msra.mxu0 %v3975
    %4076 = vmatprep.subr.bf16.mxu0 %v3980
    %4077 = vmatpush1.bf16.msra.mxu0 %v3979
    %4078 = vmatprep.subr.bf16.mxu0 %v3984
    %4079 = vmatpush1.bf16.msra.mxu0 %v3983
    %4080 = vmatprep.subr.bf16.mxu0 %v3988
    %4081 = vmatpush1.bf16.msra.mxu0 %v3987
    %4082 = vmatprep.subr.bf16.mxu0 %v3992
    %4083 = vmatpush1.bf16.msra.mxu0 %v3991
    %4084 = vmatprep.subr.bf16.mxu0 %v3996
    %4085 = vmatpush1.bf16.msra.mxu0 %v3995
    %4086 = vmatprep.subr.bf16.mxu0 0
    %4087 = vmatpush1.bf16.msra.mxu0 0
    %4088 = vmatprep.subr.bf16.mxu0 0
    %4089 = vmatpush1.bf16.msra.mxu0 0
    %4090 = vmatprep.subr.bf16.mxu0 0
    %4091 = vmatpush1.bf16.msra.mxu0 0
    %4092 = vmatprep.subr.bf16.mxu0 0
    %4093 = vmatpush1.bf16.msra.mxu0 0
    %4094 = vmatprep.subr.bf16.mxu0 0
    %4095 = vmatpush1.bf16.msra.mxu0 0
    %4096 = vmatprep.subr.bf16.mxu0 0
    %4097 = vmatpush1.bf16.msra.mxu0 0
    %4098 = vmatprep.subr.bf16.mxu0 0
    %4099 = vmatpush1.bf16.msra.mxu0 0
    %4100 = vmatprep.subr.bf16.mxu0 0
    %4101 = vmatpush1.bf16.msra.mxu0 0
    %4102 = vmatprep.mubr.bf16.mxu0 0
    %4103 = vmatmul.mubr.bf16.gmra.mrb[0].mxu0 0
    %v4104 = vpop.f32.mrb[0].mxu0
    %v4105 = vadd.f32 0.0, %v4104
    %v4106 = vpop.f32.mrb[0].mxu0
    %v4107 = vadd.f32 0.0, %v4106
    %v4108 = vpop.f32.mrb[0].mxu0
    %v4109 = vpop.f32.mrb[0].mxu0
    %4110 = vdwg.mxu0
    %v4111 = vadd.f32 %v3833, %v4064
    %v4112 = vadd.f32 %v3834, %v4066
    %v4113 = vadd.f32 %v3835, %v4105
    %v4114 = vadd.f32 %v3836, %v4107
    %v4115 = vxor.u32 %v4111, 2147483648
    %v4116 = vmul.f32 %v4115, 1.442695
    %v4117 = vpow.pop %v4116
    %v4118 = vadd.f32 %v4117, 1.0
    %v4119 = vrcp.pop %v4118
    %v4120 = vmul.f32 1.0, %v4119
    %v4121 = vxor.u32 %v4112, 2147483648
    %v4122 = vmul.f32 %v4121, 1.442695
    %v4123 = vpow.pop %v4122
    %v4124 = vadd.f32 %v4123, 1.0
    %v4125 = vrcp.pop %v4124
    %v4126 = vmul.f32 1.0, %v4125
    %v4127 = vtanh.pop %v4113
    %v4128 = vxor.u32 %v4114, 2147483648
    %v4129 = vmul.f32 %v4128, 1.442695
    %v4130 = vpow.pop %v4129
    %v4131 = vadd.f32 %v4130, 1.0
    %v4132 = vrcp.pop %v4131
    %v4133 = vmul.f32 1.0, %v4132
    %v4134 = vmul.f32 %v4126, 0.0
    %v4135 = vmul.f32 %v4120, %v4127
    %v4136 = vadd.f32 %v4134, %v4135
    %v4137 = vtanh.pop %v4136
    %v4138 = vmul.f32 %v4133, %v4137
    %4139 = vst [vmem:[#allocation4] sm:$0xff] %v4138
    %s4140 = smul.u32 1, 4
    %s4141 = smul.addr %s4140, 8
    %s4142 = scalar_lea.vmem [#allocation3], %s4141
    %v4143 = vld [vmem:[%s4142] sm:$0xff]
    %v4144 = vld [vmem:[%s4142 + $0x8] sm:$0xff]
    %v4145 = vld [vmem:[%s4142 + $0x10] sm:$0xff]
    %v4146 = vld [vmem:[%s4142 + $0x18] sm:$0xff]
    %v4147 = vadd.f32 %v4143, %v3539
    %v4148 = vadd.f32 %v4144, %v3541
    %v4149 = vadd.f32 %v4145, %v3580
    %v4150 = vadd.f32 %v4146, %v3582
    %v4151 = vpack.c.bf16 %v4138, %v4138
    %v4152 = vld [vmem:[%s10] sm:$0xff]
    %v4153 = vld [vmem:[%s10 + $0x8] sm:$0xff]
    %v4154 = vld [vmem:[%s10 + $0x10] sm:$0xff]
    %v4155 = vld [vmem:[%s10 + $0x18] sm:$0xff]
    %v4156 = vld [vmem:[%s10 + $0x20] sm:$0xff]
    %v4157 = vld [vmem:[%s10 + $0x28] sm:$0xff]
    %v4158 = vld [vmem:[%s10 + $0x30] sm:$0xff]
    %v4159 = vld [vmem:[%s10 + $0x38] sm:$0xff]
    %v4160 = vld [vmem:[%s10 + $0x40] sm:$0xff]
    %v4161 = vld [vmem:[%s10 + $0x48] sm:$0xff]
    %v4162 = vld [vmem:[%s10 + $0x50] sm:$0xff]
    %v4163 = vld [vmem:[%s10 + $0x58] sm:$0xff]
    %v4164 = vld [vmem:[%s10 + $0x60] sm:$0xff]
    %v4165 = vld [vmem:[%s10 + $0x68] sm:$0xff]
    %v4166 = vld [vmem:[%s10 + $0x70] sm:$0xff]
    %v4167 = vld [vmem:[%s10 + $0x78] sm:$0xff]
    %v4168 = vld [vmem:[%s10 + $0x80] sm:$0xff]
    %v4169 = vld [vmem:[%s10 + $0x88] sm:$0xff]
    %v4170 = vld [vmem:[%s10 + $0x90] sm:$0xff]
    %v4171 = vld [vmem:[%s10 + $0x98] sm:$0xff]
    %v4172 = vld [vmem:[%s10 + $0xa0] sm:$0xff]
    %v4173 = vld [vmem:[%s10 + $0xa8] sm:$0xff]
    %v4174 = vld [vmem:[%s10 + $0xb0] sm:$0xff]
    %v4175 = vld [vmem:[%s10 + $0xb8] sm:$0xff]
    %v4176 = vld [vmem:[%s10 + $0xc0] sm:$0xff]
    %v4177 = vld [vmem:[%s10 + $0xc8] sm:$0xff]
    %v4178 = vld [vmem:[%s10 + $0xd0] sm:$0xff]
    %v4179 = vld [vmem:[%s10 + $0xd8] sm:$0xff]
    %v4180 = vld [vmem:[%s10 + $0xe0] sm:$0xff]
    %v4181 = vld [vmem:[%s10 + $0xe8] sm:$0xff]
    %v4182 = vld [vmem:[%s10 + $0xf0] sm:$0xff]
    %v4183 = vld [vmem:[%s10 + $0xf8] sm:$0xff]
    %v4216 = vunpack.c.l.b16 %v4152
    %v4217 = vunpack.c.h.b16 %v4152
    %v4218 = vunpack.c.l.b16 %v4153
    %v4219 = vunpack.c.h.b16 %v4153
    %v4220 = vunpack.c.l.b16 %v4154
    %v4221 = vunpack.c.h.b16 %v4154
    %v4222 = vunpack.c.l.b16 %v4155
    %v4223 = vunpack.c.h.b16 %v4155
    %v4224 = vunpack.c.l.b16 %v4156
    %v4225 = vunpack.c.h.b16 %v4156
    %v4226 = vunpack.c.l.b16 %v4157
    %v4227 = vunpack.c.h.b16 %v4157
    %v4228 = vunpack.c.l.b16 %v4158
    %v4229 = vunpack.c.h.b16 %v4158
    %v4230 = vunpack.c.l.b16 %v4159
    %v4231 = vunpack.c.h.b16 %v4159
    %v4232 = vunpack.c.l.b16 %v4160
    %v4233 = vunpack.c.h.b16 %v4160
    %v4234 = vunpack.c.l.b16 %v4161
    %v4235 = vunpack.c.h.b16 %v4161
    %v4236 = vunpack.c.l.b16 %v4162
    %v4237 = vunpack.c.h.b16 %v4162
    %v4238 = vunpack.c.l.b16 %v4163
    %v4239 = vunpack.c.h.b16 %v4163
    %v4240 = vunpack.c.l.b16 %v4164
    %v4241 = vunpack.c.h.b16 %v4164
    %v4242 = vunpack.c.l.b16 %v4165
    %v4243 = vunpack.c.h.b16 %v4165
    %v4244 = vunpack.c.l.b16 %v4166
    %v4245 = vunpack.c.h.b16 %v4166
    %v4246 = vunpack.c.l.b16 %v4167
    %v4247 = vunpack.c.h.b16 %v4167
    %v4248 = vunpack.c.l.b16 %v4168
    %v4249 = vunpack.c.h.b16 %v4168
    %v4250 = vunpack.c.l.b16 %v4169
    %v4251 = vunpack.c.h.b16 %v4169
    %v4252 = vunpack.c.l.b16 %v4170
    %v4253 = vunpack.c.h.b16 %v4170
    %v4254 = vunpack.c.l.b16 %v4171
    %v4255 = vunpack.c.h.b16 %v4171
    %v4256 = vunpack.c.l.b16 %v4172
    %v4257 = vunpack.c.h.b16 %v4172
    %v4258 = vunpack.c.l.b16 %v4173
    %v4259 = vunpack.c.h.b16 %v4173
    %v4260 = vunpack.c.l.b16 %v4174
    %v4261 = vunpack.c.h.b16 %v4174
    %v4262 = vunpack.c.l.b16 %v4175
    %v4263 = vunpack.c.h.b16 %v4175
    %v4264 = vunpack.c.l.b16 %v4176
    %v4265 = vunpack.c.h.b16 %v4176
    %v4266 = vunpack.c.l.b16 %v4177
    %v4267 = vunpack.c.h.b16 %v4177
    %v4268 = vunpack.c.l.b16 %v4178
    %v4269 = vunpack.c.h.b16 %v4178
    %v4270 = vunpack.c.l.b16 %v4179
    %v4271 = vunpack.c.h.b16 %v4179
    %v4272 = vunpack.c.l.b16 %v4180
    %v4273 = vunpack.c.h.b16 %v4180
    %v4274 = vunpack.c.l.b16 %v4181
    %v4275 = vunpack.c.h.b16 %v4181
    %v4276 = vunpack.c.l.b16 %v4182
    %v4277 = vunpack.c.h.b16 %v4182
    %v4278 = vunpack.c.l.b16 %v4183
    %v4279 = vunpack.c.h.b16 %v4183
    %v4280 = vpack.c.b16 %v4220, %v4216
    %v4281 = vpack.c.b16 %v4221, %v4217
    %v4282 = vpack.c.b16 %v4222, %v4218
    %v4283 = vpack.c.b16 %v4223, %v4219
    %v4284 = vpack.c.b16 %v4228, %v4224
    %v4285 = vpack.c.b16 %v4229, %v4225
    %v4286 = vpack.c.b16 %v4230, %v4226
    %v4287 = vpack.c.b16 %v4231, %v4227
    %v4288 = vpack.c.b16 %v4236, %v4232
    %v4289 = vpack.c.b16 %v4237, %v4233
    %v4290 = vpack.c.b16 %v4238, %v4234
    %v4291 = vpack.c.b16 %v4239, %v4235
    %v4292 = vpack.c.b16 %v4244, %v4240
    %v4293 = vpack.c.b16 %v4245, %v4241
    %v4294 = vpack.c.b16 %v4246, %v4242
    %v4295 = vpack.c.b16 %v4247, %v4243
    %v4296 = vpack.c.b16 %v4252, %v4248
    %v4297 = vpack.c.b16 %v4253, %v4249
    %v4298 = vpack.c.b16 %v4254, %v4250
    %v4299 = vpack.c.b16 %v4255, %v4251
    %v4300 = vpack.c.b16 %v4260, %v4256
    %v4301 = vpack.c.b16 %v4261, %v4257
    %v4302 = vpack.c.b16 %v4262, %v4258
    %v4303 = vpack.c.b16 %v4263, %v4259
    %v4304 = vpack.c.b16 %v4268, %v4264
    %v4305 = vpack.c.b16 %v4269, %v4265
    %v4306 = vpack.c.b16 %v4270, %v4266
    %v4307 = vpack.c.b16 %v4271, %v4267
    %v4308 = vpack.c.b16 %v4276, %v4272
    %v4309 = vpack.c.b16 %v4277, %v4273
    %v4310 = vpack.c.b16 %v4278, %v4274
    %v4311 = vpack.c.b16 %v4279, %v4275
    %4344 = vmatprep.subr.bf16.mxu0 %v4281
    %4345 = vmatpush1.bf16.msra.mxu0 %v4280
    %4346 = vmatprep.subr.bf16.mxu0 %v4285
    %4347 = vmatpush1.bf16.msra.mxu0 %v4284
    %4348 = vmatprep.subr.bf16.mxu0 %v4289
    %4349 = vmatpush1.bf16.msra.mxu0 %v4288
    %4350 = vmatprep.subr.bf16.mxu0 %v4293
    %4351 = vmatpush1.bf16.msra.mxu0 %v4292
    %4352 = vmatprep.subr.bf16.mxu0 %v4297
    %4353 = vmatpush1.bf16.msra.mxu0 %v4296
    %4354 = vmatprep.subr.bf16.mxu0 %v4301
    %4355 = vmatpush1.bf16.msra.mxu0 %v4300
    %4356 = vmatprep.subr.bf16.mxu0 %v4305
    %4357 = vmatpush1.bf16.msra.mxu0 %v4304
    %4358 = vmatprep.subr.bf16.mxu0 %v4309
    %4359 = vmatpush1.bf16.msra.mxu0 %v4308
    %4360 = vmatprep.subr.bf16.mxu0 0
    %4361 = vmatpush1.bf16.msra.mxu0 0
    %4362 = vmatprep.subr.bf16.mxu0 0
    %4363 = vmatpush1.bf16.msra.mxu0 0
    %4364 = vmatprep.subr.bf16.mxu0 0
    %4365 = vmatpush1.bf16.msra.mxu0 0
    %4366 = vmatprep.subr.bf16.mxu0 0
    %4367 = vmatpush1.bf16.msra.mxu0 0
    %4368 = vmatprep.subr.bf16.mxu0 0
    %4369 = vmatpush1.bf16.msra.mxu0 0
    %4370 = vmatprep.subr.bf16.mxu0 0
    %4371 = vmatpush1.bf16.msra.mxu0 0
    %4372 = vmatprep.subr.bf16.mxu0 0
    %4373 = vmatpush1.bf16.msra.mxu0 0
    %4374 = vmatprep.subr.bf16.mxu0 0
    %4375 = vmatpush1.bf16.msra.mxu0 0
    %4376 = vmatprep.mubr.bf16.mxu0 0
    %4377 = vmatmul.mubr.bf16.gmra.mrb[0].mxu0 %v4151
    %v4378 = vpop.f32.mrb[0].mxu0
    %v4379 = vadd.f32 0.0, %v4378
    %v4380 = vpop.f32.mrb[0].mxu0
    %v4381 = vadd.f32 0.0, %v4380
    %v4382 = vpop.f32.mrb[0].mxu0
    %v4383 = vpop.f32.mrb[0].mxu0
    %4384 = vdwg.mxu0
    %4385 = vmatprep.subr.bf16.mxu0 %v4283
    %4386 = vmatpush1.bf16.msra.mxu0 %v4282
    %4387 = vmatprep.subr.bf16.mxu0 %v4287
    %4388 = vmatpush1.bf16.msra.mxu0 %v4286
    %4389 = vmatprep.subr.bf16.mxu0 %v4291
    %4390 = vmatpush1.bf16.msra.mxu0 %v4290
    %4391 = vmatprep.subr.bf16.mxu0 %v4295
    %4392 = vmatpush1.bf16.msra.mxu0 %v4294
    %4393 = vmatprep.subr.bf16.mxu0 %v4299
    %4394 = vmatpush1.bf16.msra.mxu0 %v4298
    %4395 = vmatprep.subr.bf16.mxu0 %v4303
    %4396 = vmatpush1.bf16.msra.mxu0 %v4302
    %4397 = vmatprep.subr.bf16.mxu0 %v4307
    %4398 = vmatpush1.bf16.msra.mxu0 %v4306
    %4399 = vmatprep.subr.bf16.mxu0 %v4311
    %4400 = vmatpush1.bf16.msra.mxu0 %v4310
    %4401 = vmatprep.subr.bf16.mxu0 0
    %4402 = vmatpush1.bf16.msra.mxu0 0
    %4403 = vmatprep.subr.bf16.mxu0 0
    %4404 = vmatpush1.bf16.msra.mxu0 0
    %4405 = vmatprep.subr.bf16.mxu0 0
    %4406 = vmatpush1.bf16.msra.mxu0 0
    %4407 = vmatprep.subr.bf16.mxu0 0
    %4408 = vmatpush1.bf16.msra.mxu0 0
    %4409 = vmatprep.subr.bf16.mxu0 0
    %4410 = vmatpush1.bf16.msra.mxu0 0
    %4411 = vmatprep.subr.bf16.mxu0 0
    %4412 = vmatpush1.bf16.msra.mxu0 0
    %4413 = vmatprep.subr.bf16.mxu0 0
    %4414 = vmatpush1.bf16.msra.mxu0 0
    %4415 = vmatprep.subr.bf16.mxu0 0
    %4416 = vmatpush1.bf16.msra.mxu0 0
    %4417 = vmatprep.mubr.bf16.mxu0 0
    %4418 = vmatmul.mubr.bf16.gmra.mrb[0].mxu0 %v4151
    %v4419 = vpop.f32.mrb[0].mxu0
    %v4420 = vadd.f32 0.0, %v4419
    %v4421 = vpop.f32.mrb[0].mxu0
    %v4422 = vadd.f32 0.0, %v4421
    %v4423 = vpop.f32.mrb[0].mxu0
    %v4424 = vpop.f32.mrb[0].mxu0
    %4425 = vdwg.mxu0
    %v4426 = vadd.f32 %v4147, %v4379
    %v4427 = vadd.f32 %v4148, %v4381
    %v4428 = vadd.f32 %v4149, %v4420
    %v4429 = vadd.f32 %v4150, %v4422
    %v4430 = vxor.u32 %v4426, 2147483648
    %v4431 = vmul.f32 %v4430, 1.442695
    %v4432 = vpow.pop %v4431
    %v4433 = vadd.f32 %v4432, 1.0
    %v4434 = vrcp.pop %v4433
    %v4435 = vmul.f32 1.0, %v4434
    %v4436 = vxor.u32 %v4427, 2147483648
    %v4437 = vmul.f32 %v4436, 1.442695
    %v4438 = vpow.pop %v4437
    %v4439 = vadd.f32 %v4438, 1.0
    %v4440 = vrcp.pop %v4439
    %v4441 = vmul.f32 1.0, %v4440
    %v4442 = vtanh.pop %v4428
    %v4443 = vxor.u32 %v4429, 2147483648
    %v4444 = vmul.f32 %v4443, 1.442695
    %v4445 = vpow.pop %v4444
    %v4446 = vadd.f32 %v4445, 1.0
    %v4447 = vrcp.pop %v4446
    %v4448 = vmul.f32 1.0, %v4447
    %v4449 = vmul.f32 %v4441, %v4136
    %v4450 = vmul.f32 %v4435, %v4442
    %v4451 = vadd.f32 %v4449, %v4450
    %v4452 = vtanh.pop %v4451
    %v4453 = vmul.f32 %v4448, %v4452
    %s4454 = scalar_lea.vmem [#allocation4], 8
    %4455 = vst [vmem:[%s4454] sm:$0xff] %v4453
    %s4456 = smul.u32 2, 4
    %s4457 = smul.addr %s4456, 8
    %s4458 = scalar_lea.vmem [#allocation3], %s4457
    %v4459 = vld [vmem:[%s4458] sm:$0xff]
    %v4460 = vld [vmem:[%s4458 + $0x8] sm:$0xff]
    %v4461 = vld [vmem:[%s4458 + $0x10] sm:$0xff]
    %v4462 = vld [vmem:[%s4458 + $0x18] sm:$0xff]
    %v4463 = vadd.f32 %v4459, %v3539
    %v4464 = vadd.f32 %v4460, %v3541
    %v4465 = vadd.f32 %v4461, %v3580
    %v4466 = vadd.f32 %v4462, %v3582
    %v4467 = vpack.c.bf16 %v4453, %v4453
    %v4468 = vld [vmem:[%s10] sm:$0xff]
    %v4469 = vld [vmem:[%s10 + $0x8] sm:$0xff]
    %v4470 = vld [vmem:[%s10 + $0x10] sm:$0xff]
    %v4471 = vld [vmem:[%s10 + $0x18] sm:$0xff]
    %v4472 = vld [vmem:[%s10 + $0x20] sm:$0xff]
    %v4473 = vld [vmem:[%s10 + $0x28] sm:$0xff]
    %v4474 = vld [vmem:[%s10 + $0x30] sm:$0xff]
    %v4475 = vld [vmem:[%s10 + $0x38] sm:$0xff]
    %v4476 = vld [vmem:[%s10 + $0x40] sm:$0xff]
    %v4477 = vld [vmem:[%s10 + $0x48] sm:$0xff]
    %v4478 = vld [vmem:[%s10 + $0x50] sm:$0xff]
    %v4479 = vld [vmem:[%s10 + $0x58] sm:$0xff]
    %v4480 = vld [vmem:[%s10 + $0x60] sm:$0xff]
    %v4481 = vld [vmem:[%s10 + $0x68] sm:$0xff]
    %v4482 = vld [vmem:[%s10 + $0x70] sm:$0xff]
    %v4483 = vld [vmem:[%s10 + $0x78] sm:$0xff]
    %v4484 = vld [vmem:[%s10 + $0x80] sm:$0xff]
    %v4485 = vld [vmem:[%s10 + $0x88] sm:$0xff]
    %v4486 = vld [vmem:[%s10 + $0x90] sm:$0xff]
    %v4487 = vld [vmem:[%s10 + $0x98] sm:$0xff]
    %v4488 = vld [vmem:[%s10 + $0xa0] sm:$0xff]
    %v4489 = vld [vmem:[%s10 + $0xa8] sm:$0xff]
    %v4490 = vld [vmem:[%s10 + $0xb0] sm:$0xff]
    %v4491 = vld [vmem:[%s10 + $0xb8] sm:$0xff]
    %v4492 = vld [vmem:[%s10 + $0xc0] sm:$0xff]
    %v4493 = vld [vmem:[%s10 + $0xc8] sm:$0xff]
    %v4494 = vld [vmem:[%s10 + $0xd0] sm:$0xff]
    %v4495 = vld [vmem:[%s10 + $0xd8] sm:$0xff]
    %v4496 = vld [vmem:[%s10 + $0xe0] sm:$0xff]
    %v4497 = vld [vmem:[%s10 + $0xe8] sm:$0xff]
    %v4498 = vld [vmem:[%s10 + $0xf0] sm:$0xff]
    %v4499 = vld [vmem:[%s10 + $0xf8] sm:$0xff]
    %v4532 = vunpack.c.l.b16 %v4468
    %v4533 = vunpack.c.h.b16 %v4468
    %v4534 = vunpack.c.l.b16 %v4469
    %v4535 = vunpack.c.h.b16 %v4469
    %v4536 = vunpack.c.l.b16 %v4470
    %v4537 = vunpack.c.h.b16 %v4470
    %v4538 = vunpack.c.l.b16 %v4471
    %v4539 = vunpack.c.h.b16 %v4471
    %v4540 = vunpack.c.l.b16 %v4472
    %v4541 = vunpack.c.h.b16 %v4472
    %v4542 = vunpack.c.l.b16 %v4473
    %v4543 = vunpack.c.h.b16 %v4473
    %v4544 = vunpack.c.l.b16 %v4474
    %v4545 = vunpack.c.h.b16 %v4474
    %v4546 = vunpack.c.l.b16 %v4475
    %v4547 = vunpack.c.h.b16 %v4475
    %v4548 = vunpack.c.l.b16 %v4476
    %v4549 = vunpack.c.h.b16 %v4476
    %v4550 = vunpack.c.l.b16 %v4477
    %v4551 = vunpack.c.h.b16 %v4477
    %v4552 = vunpack.c.l.b16 %v4478
    %v4553 = vunpack.c.h.b16 %v4478
    %v4554 = vunpack.c.l.b16 %v4479
    %v4555 = vunpack.c.h.b16 %v4479
    %v4556 = vunpack.c.l.b16 %v4480
    %v4557 = vunpack.c.h.b16 %v4480
    %v4558 = vunpack.c.l.b16 %v4481
    %v4559 = vunpack.c.h.b16 %v4481
    %v4560 = vunpack.c.l.b16 %v4482
    %v4561 = vunpack.c.h.b16 %v4482
    %v4562 = vunpack.c.l.b16 %v4483
    %v4563 = vunpack.c.h.b16 %v4483
    %v4564 = vunpack.c.l.b16 %v4484
    %v4565 = vunpack.c.h.b16 %v4484
    %v4566 = vunpack.c.l.b16 %v4485
    %v4567 = vunpack.c.h.b16 %v4485
    %v4568 = vunpack.c.l.b16 %v4486
    %v4569 = vunpack.c.h.b16 %v4486
    %v4570 = vunpack.c.l.b16 %v4487
    %v4571 = vunpack.c.h.b16 %v4487
    %v4572 = vunpack.c.l.b16 %v4488
    %v4573 = vunpack.c.h.b16 %v4488
    %v4574 = vunpack.c.l.b16 %v4489
    %v4575 = vunpack.c.h.b16 %v4489
    %v4576 = vunpack.c.l.b16 %v4490
    %v4577 = vunpack.c.h.b16 %v4490
    %v4578 = vunpack.c.l.b16 %v4491
    %v4579 = vunpack.c.h.b16 %v4491
    %v4580 = vunpack.c.l.b16 %v4492
    %v4581 = vunpack.c.h.b16 %v4492
    %v4582 = vunpack.c.l.b16 %v4493
    %v4583 = vunpack.c.h.b16 %v4493
    %v4584 = vunpack.c.l.b16 %v4494
    %v4585 = vunpack.c.h.b16 %v4494
    %v4586 = vunpack.c.l.b16 %v4495
    %v4587 = vunpack.c.h.b16 %v4495
    %v4588 = vunpack.c.l.b16 %v4496
    %v4589 = vunpack.c.h.b16 %v4496
    %v4590 = vunpack.c.l.b16 %v4497
    %v4591 = vunpack.c.h.b16 %v4497
    %v4592 = vunpack.c.l.b16 %v4498
    %v4593 = vunpack.c.h.b16 %v4498
    %v4594 = vunpack.c.l.b16 %v4499
    %v4595 = vunpack.c.h.b16 %v4499
    %v4596 = vpack.c.b16 %v4536, %v4532
    %v4597 = vpack.c.b16 %v4537, %v4533
    %v4598 = vpack.c.b16 %v4538, %v4534
    %v4599 = vpack.c.b16 %v4539, %v4535
    %v4600 = vpack.c.b16 %v4544, %v4540
    %v4601 = vpack.c.b16 %v4545, %v4541
    %v4602 = vpack.c.b16 %v4546, %v4542
    %v4603 = vpack.c.b16 %v4547, %v4543
    %v4604 = vpack.c.b16 %v4552, %v4548
    %v4605 = vpack.c.b16 %v4553, %v4549
    %v4606 = vpack.c.b16 %v4554, %v4550
    %v4607 = vpack.c.b16 %v4555, %v4551
    %v4608 = vpack.c.b16 %v4560, %v4556
    %v4609 = vpack.c.b16 %v4561, %v4557
    %v4610 = vpack.c.b16 %v4562, %v4558
    %v4611 = vpack.c.b16 %v4563, %v4559
    %v4612 = vpack.c.b16 %v4568, %v4564
    %v4613 = vpack.c.b16 %v4569, %v4565
    %v4614 = vpack.c.b16 %v4570, %v4566
    %v4615 = vpack.c.b16 %v4571, %v4567
    %v4616 = vpack.c.b16 %v4576, %v4572
    %v4617 = vpack.c.b16 %v4577, %v4573
    %v4618 = vpack.c.b16 %v4578, %v4574
    %v4619 = vpack.c.b16 %v4579, %v4575
    %v4620 = vpack.c.b16 %v4584, %v4580
    %v4621 = vpack.c.b16 %v4585, %v4581
    %v4622 = vpack.c.b16 %v4586, %v4582
    %v4623 = vpack.c.b16 %v4587, %v4583
    %v4624 = vpack.c.b16 %v4592, %v4588
    %v4625 = vpack.c.b16 %v4593, %v4589
    %v4626 = vpack.c.b16 %v4594, %v4590
    %v4627 = vpack.c.b16 %v4595, %v4591
    %4660 = vmatprep.subr.bf16.mxu0 %v4597
    %4661 = vmatpush1.bf16.msra.mxu0 %v4596
    %4662 = vmatprep.subr.bf16.mxu0 %v4601
    %4663 = vmatpush1.bf16.msra.mxu0 %v4600
    %4664 = vmatprep.subr.bf16.mxu0 %v4605
    %4665 = vmatpush1.bf16.msra.mxu0 %v4604
    %4666 = vmatprep.subr.bf16.mxu0 %v4609
    %4667 = vmatpush1.bf16.msra.mxu0 %v4608
    %4668 = vmatprep.subr.bf16.mxu0 %v4613
    %4669 = vmatpush1.bf16.msra.mxu0 %v4612
    %4670 = vmatprep.subr.bf16.mxu0 %v4617
    %4671 = vmatpush1.bf16.msra.mxu0 %v4616
    %4672 = vmatprep.subr.bf16.mxu0 %v4621
    %4673 = vmatpush1.bf16.msra.mxu0 %v4620
    %4674 = vmatprep.subr.bf16.mxu0 %v4625
    %4675 = vmatpush1.bf16.msra.mxu0 %v4624
    %4676 = vmatprep.subr.bf16.mxu0 0
    %4677 = vmatpush1.bf16.msra.mxu0 0
    %4678 = vmatprep.subr.bf16.mxu0 0
    %4679 = vmatpush1.bf16.msra.mxu0 0
    %4680 = vmatprep.subr.bf16.mxu0 0
    %4681 = vmatpush1.bf16.msra.mxu0 0
    %4682 = vmatprep.subr.bf16.mxu0 0
    %4683 = vmatpush1.bf16.msra.mxu0 0
    %4684 = vmatprep.subr.bf16.mxu0 0
    %4685 = vmatpush1.bf16.msra.mxu0 0
    %4686 = vmatprep.subr.bf16.mxu0 0
    %4687 = vmatpush1.bf16.msra.mxu0 0
    %4688 = vmatprep.subr.bf16.mxu0 0
    %4689 = vmatpush1.bf16.msra.mxu0 0
    %4690 = vmatprep.subr.bf16.mxu0 0
    %4691 = vmatpush1.bf16.msra.mxu0 0
    %4692 = vmatprep.mubr.bf16.mxu0 0
    %4693 = vmatmul.mubr.bf16.gmra.mrb[0].mxu0 %v4467
    %v4694 = vpop.f32.mrb[0].mxu0
    %v4695 = vadd.f32 0.0, %v4694
    %v4696 = vpop.f32.mrb[0].mxu0
    %v4697 = vadd.f32 0.0, %v4696
    %v4698 = vpop.f32.mrb[0].mxu0
    %v4699 = vpop.f32.mrb[0].mxu0
    %4700 = vdwg.mxu0
    %4701 = vmatprep.subr.bf16.mxu0 %v4599
    %4702 = vmatpush1.bf16.msra.mxu0 %v4598
    %4703 = vmatprep.subr.bf16.mxu0 %v4603
    %4704 = vmatpush1.bf16.msra.mxu0 %v4602
    %4705 = vmatprep.subr.bf16.mxu0 %v4607
    %4706 = vmatpush1.bf16.msra.mxu0 %v4606
    %4707 = vmatprep.subr.bf16.mxu0 %v4611
    %4708 = vmatpush1.bf16.msra.mxu0 %v4610
    %4709 = vmatprep.subr.bf16.mxu0 %v4615
    %4710 = vmatpush1.bf16.msra.mxu0 %v4614
    %4711 = vmatprep.subr.bf16.mxu0 %v4619
    %4712 = vmatpush1.bf16.msra.mxu0 %v4618
    %4713 = vmatprep.subr.bf16.mxu0 %v4623
    %4714 = vmatpush1.bf16.msra.mxu0 %v4622
    %4715 = vmatprep.subr.bf16.mxu0 %v4627
    %4716 = vmatpush1.bf16.msra.mxu0 %v4626
    %4717 = vmatprep.subr.bf16.mxu0 0
    %4718 = vmatpush1.bf16.msra.mxu0 0
    %4719 = vmatprep.subr.bf16.mxu0 0
    %4720 = vmatpush1.bf16.msra.mxu0 0
    %4721 = vmatprep.subr.bf16.mxu0 0
    %4722 = vmatpush1.bf16.msra.mxu0 0
    %4723 = vmatprep.subr.bf16.mxu0 0
    %4724 = vmatpush1.bf16.msra.mxu0 0
    %4725 = vmatprep.subr.bf16.mxu0 0
    %4726 = vmatpush1.bf16.msra.mxu0 0
    %4727 = vmatprep.subr.bf16.mxu0 0
    %4728 = vmatpush1.bf16.msra.mxu0 0
    %4729 = vmatprep.subr.bf16.mxu0 0
    %4730 = vmatpush1.bf16.msra.mxu0 0
    %4731 = vmatprep.subr.bf16.mxu0 0
    %4732 = vmatpush1.bf16.msra.mxu0 0
    %4733 = vmatprep.mubr.bf16.mxu0 0
    %4734 = vmatmul.mubr.bf16.gmra.mrb[0].mxu0 %v4467
    %v4735 = vpop.f32.mrb[0].mxu0
    %v4736 = vadd.f32 0.0, %v4735
    %v4737 = vpop.f32.mrb[0].mxu0
    %v4738 = vadd.f32 0.0, %v4737
    %v4739 = vpop.f32.mrb[0].mxu0
    %v4740 = vpop.f32.mrb[0].mxu0
    %4741 = vdwg.mxu0
    %v4742 = vadd.f32 %v4463, %v4695
    %v4743 = vadd.f32 %v4464, %v4697
    %v4744 = vadd.f32 %v4465, %v4736
    %v4745 = vadd.f32 %v4466, %v4738
    %v4746 = vxor.u32 %v4742, 2147483648
    %v4747 = vmul.f32 %v4746, 1.442695
    %v4748 = vpow.pop %v4747
    %v4749 = vadd.f32 %v4748, 1.0
    %v4750 = vrcp.pop %v4749
    %v4751 = vmul.f32 1.0, %v4750
    %v4752 = vxor.u32 %v4743, 2147483648
    %v4753 = vmul.f32 %v4752, 1.442695
    %v4754 = vpow.pop %v4753
    %v4755 = vadd.f32 %v4754, 1.0
    %v4756 = vrcp.pop %v4755
    %v4757 = vmul.f32 1.0, %v4756
    %v4758 = vtanh.pop %v4744
    %v4759 = vxor.u32 %v4745, 2147483648
    %v4760 = vmul.f32 %v4759, 1.442695
    %v4761 = vpow.pop %v4760
    %v4762 = vadd.f32 %v4761, 1.0
    %v4763 = vrcp.pop %v4762
    %v4764 = vmul.f32 1.0, %v4763
    %v4765 = vmul.f32 %v4757, %v4451
    %v4766 = vmul.f32 %v4751, %v4758
    %v4767 = vadd.f32 %v4765, %v4766
    %v4768 = vtanh.pop %v4767
    %v4769 = vmul.f32 %v4764, %v4768
    %s4770 = scalar_lea.vmem [#allocation4], 16
    %4771 = vst [vmem:[%s4770] sm:$0xff] %v4769
    %s4772 = smul.u32 3, 4
    %s4773 = smul.addr %s4772, 8
    %s4774 = scalar_lea.vmem [#allocation3], %s4773
    %v4775 = vld [vmem:[%s4774] sm:$0xff]
    %v4776 = vld [vmem:[%s4774 + $0x8] sm:$0xff]
    %v4777 = vld [vmem:[%s4774 + $0x10] sm:$0xff]
    %v4778 = vld [vmem:[%s4774 + $0x18] sm:$0xff]
    %v4779 = vadd.f32 %v4775, %v3539
    %v4780 = vadd.f32 %v4776, %v3541
    %v4781 = vadd.f32 %v4777, %v3580
    %v4782 = vadd.f32 %v4778, %v3582
    %v4783 = vpack.c.bf16 %v4769, %v4769
    %v4784 = vld [vmem:[%s10] sm:$0xff]
    %v4785 = vld [vmem:[%s10 + $0x8] sm:$0xff]
    %v4786 = vld [vmem:[%s10 + $0x10] sm:$0xff]
    %v4787 = vld [vmem:[%s10 + $0x18] sm:$0xff]
    %v4788 = vld [vmem:[%s10 + $0x20] sm:$0xff]
    %v4789 = vld [vmem:[%s10 + $0x28] sm:$0xff]
    %v4790 = vld [vmem:[%s10 + $0x30] sm:$0xff]
    %v4791 = vld [vmem:[%s10 + $0x38] sm:$0xff]
    %v4792 = vld [vmem:[%s10 + $0x40] sm:$0xff]
    %v4793 = vld [vmem:[%s10 + $0x48] sm:$0xff]
    %v4794 = vld [vmem:[%s10 + $0x50] sm:$0xff]
    %v4795 = vld [vmem:[%s10 + $0x58] sm:$0xff]
    %v4796 = vld [vmem:[%s10 + $0x60] sm:$0xff]
    %v4797 = vld [vmem:[%s10 + $0x68] sm:$0xff]
    %v4798 = vld [vmem:[%s10 + $0x70] sm:$0xff]
    %v4799 = vld [vmem:[%s10 + $0x78] sm:$0xff]
    %v4800 = vld [vmem:[%s10 + $0x80] sm:$0xff]
    %v4801 = vld [vmem:[%s10 + $0x88] sm:$0xff]
    %v4802 = vld [vmem:[%s10 + $0x90] sm:$0xff]
    %v4803 = vld [vmem:[%s10 + $0x98] sm:$0xff]
    %v4804 = vld [vmem:[%s10 + $0xa0] sm:$0xff]
    %v4805 = vld [vmem:[%s10 + $0xa8] sm:$0xff]
    %v4806 = vld [vmem:[%s10 + $0xb0] sm:$0xff]
    %v4807 = vld [vmem:[%s10 + $0xb8] sm:$0xff]
    %v4808 = vld [vmem:[%s10 + $0xc0] sm:$0xff]
    %v4809 = vld [vmem:[%s10 + $0xc8] sm:$0xff]
    %v4810 = vld [vmem:[%s10 + $0xd0] sm:$0xff]
    %v4811 = vld [vmem:[%s10 + $0xd8] sm:$0xff]
    %v4812 = vld [vmem:[%s10 + $0xe0] sm:$0xff]
    %v4813 = vld [vmem:[%s10 + $0xe8] sm:$0xff]
    %v4814 = vld [vmem:[%s10 + $0xf0] sm:$0xff]
    %v4815 = vld [vmem:[%s10 + $0xf8] sm:$0xff]
    %v4848 = vunpack.c.l.b16 %v4784
    %v4849 = vunpack.c.h.b16 %v4784
    %v4850 = vunpack.c.l.b16 %v4785
    %v4851 = vunpack.c.h.b16 %v4785
    %v4852 = vunpack.c.l.b16 %v4786
    %v4853 = vunpack.c.h.b16 %v4786
    %v4854 = vunpack.c.l.b16 %v4787
    %v4855 = vunpack.c.h.b16 %v4787
    %v4856 = vunpack.c.l.b16 %v4788
    %v4857 = vunpack.c.h.b16 %v4788
    %v4858 = vunpack.c.l.b16 %v4789
    %v4859 = vunpack.c.h.b16 %v4789
    %v4860 = vunpack.c.l.b16 %v4790
    %v4861 = vunpack.c.h.b16 %v4790
    %v4862 = vunpack.c.l.b16 %v4791
    %v4863 = vunpack.c.h.b16 %v4791
    %v4864 = vunpack.c.l.b16 %v4792
    %v4865 = vunpack.c.h.b16 %v4792
    %v4866 = vunpack.c.l.b16 %v4793
    %v4867 = vunpack.c.h.b16 %v4793
    %v4868 = vunpack.c.l.b16 %v4794
    %v4869 = vunpack.c.h.b16 %v4794
    %v4870 = vunpack.c.l.b16 %v4795
    %v4871 = vunpack.c.h.b16 %v4795
    %v4872 = vunpack.c.l.b16 %v4796
    %v4873 = vunpack.c.h.b16 %v4796
    %v4874 = vunpack.c.l.b16 %v4797
    %v4875 = vunpack.c.h.b16 %v4797
    %v4876 = vunpack.c.l.b16 %v4798
    %v4877 = vunpack.c.h.b16 %v4798
    %v4878 = vunpack.c.l.b16 %v4799
    %v4879 = vunpack.c.h.b16 %v4799
    %v4880 = vunpack.c.l.b16 %v4800
    %v4881 = vunpack.c.h.b16 %v4800
    %v4882 = vunpack.c.l.b16 %v4801
    %v4883 = vunpack.c.h.b16 %v4801
    %v4884 = vunpack.c.l.b16 %v4802
    %v4885 = vunpack.c.h.b16 %v4802
    %v4886 = vunpack.c.l.b16 %v4803
    %v4887 = vunpack.c.h.b16 %v4803
    %v4888 = vunpack.c.l.b16 %v4804
    %v4889 = vunpack.c.h.b16 %v4804
    %v4890 = vunpack.c.l.b16 %v4805
    %v4891 = vunpack.c.h.b16 %v4805
    %v4892 = vunpack.c.l.b16 %v4806
    %v4893 = vunpack.c.h.b16 %v4806
    %v4894 = vunpack.c.l.b16 %v4807
    %v4895 = vunpack.c.h.b16 %v4807
    %v4896 = vunpack.c.l.b16 %v4808
    %v4897 = vunpack.c.h.b16 %v4808
    %v4898 = vunpack.c.l.b16 %v4809
    %v4899 = vunpack.c.h.b16 %v4809
    %v4900 = vunpack.c.l.b16 %v4810
    %v4901 = vunpack.c.h.b16 %v4810
    %v4902 = vunpack.c.l.b16 %v4811
    %v4903 = vunpack.c.h.b16 %v4811
    %v4904 = vunpack.c.l.b16 %v4812
    %v4905 = vunpack.c.h.b16 %v4812
    %v4906 = vunpack.c.l.b16 %v4813
    %v4907 = vunpack.c.h.b16 %v4813
    %v4908 = vunpack.c.l.b16 %v4814
    %v4909 = vunpack.c.h.b16 %v4814
    %v4910 = vunpack.c.l.b16 %v4815
    %v4911 = vunpack.c.h.b16 %v4815
    %v4912 = vpack.c.b16 %v4852, %v4848
    %v4913 = vpack.c.b16 %v4853, %v4849
    %v4914 = vpack.c.b16 %v4854, %v4850
    %v4915 = vpack.c.b16 %v4855, %v4851
    %v4916 = vpack.c.b16 %v4860, %v4856
    %v4917 = vpack.c.b16 %v4861, %v4857
    %v4918 = vpack.c.b16 %v4862, %v4858
    %v4919 = vpack.c.b16 %v4863, %v4859
    %v4920 = vpack.c.b16 %v4868, %v4864
    %v4921 = vpack.c.b16 %v4869, %v4865
    %v4922 = vpack.c.b16 %v4870, %v4866
    %v4923 = vpack.c.b16 %v4871, %v4867
    %v4924 = vpack.c.b16 %v4876, %v4872
    %v4925 = vpack.c.b16 %v4877, %v4873
    %v4926 = vpack.c.b16 %v4878, %v4874
    %v4927 = vpack.c.b16 %v4879, %v4875
    %v4928 = vpack.c.b16 %v4884, %v4880
    %v4929 = vpack.c.b16 %v4885, %v4881
    %v4930 = vpack.c.b16 %v4886, %v4882
    %v4931 = vpack.c.b16 %v4887, %v4883
    %v4932 = vpack.c.b16 %v4892, %v4888
    %v4933 = vpack.c.b16 %v4893, %v4889
    %v4934 = vpack.c.b16 %v4894, %v4890
    %v4935 = vpack.c.b16 %v4895, %v4891
    %v4936 = vpack.c.b16 %v4900, %v4896
    %v4937 = vpack.c.b16 %v4901, %v4897
    %v4938 = vpack.c.b16 %v4902, %v4898
    %v4939 = vpack.c.b16 %v4903, %v4899
    %v4940 = vpack.c.b16 %v4908, %v4904
    %v4941 = vpack.c.b16 %v4909, %v4905
    %v4942 = vpack.c.b16 %v4910, %v4906
    %v4943 = vpack.c.b16 %v4911, %v4907
    %4976 = vmatprep.subr.bf16.mxu0 %v4913
    %4977 = vmatpush1.bf16.msra.mxu0 %v4912
    %4978 = vmatprep.subr.bf16.mxu0 %v4917
    %4979 = vmatpush1.bf16.msra.mxu0 %v4916
    %4980 = vmatprep.subr.bf16.mxu0 %v4921
    %4981 = vmatpush1.bf16.msra.mxu0 %v4920
    %4982 = vmatprep.subr.bf16.mxu0 %v4925
    %4983 = vmatpush1.bf16.msra.mxu0 %v4924
    %4984 = vmatprep.subr.bf16.mxu0 %v4929
    %4985 = vmatpush1.bf16.msra.mxu0 %v4928
    %4986 = vmatprep.subr.bf16.mxu0 %v4933
    %4987 = vmatpush1.bf16.msra.mxu0 %v4932
    %4988 = vmatprep.subr.bf16.mxu0 %v4937
    %4989 = vmatpush1.bf16.msra.mxu0 %v4936
    %4990 = vmatprep.subr.bf16.mxu0 %v4941
    %4991 = vmatpush1.bf16.msra.mxu0 %v4940
    %4992 = vmatprep.subr.bf16.mxu0 0
    %4993 = vmatpush1.bf16.msra.mxu0 0
    %4994 = vmatprep.subr.bf16.mxu0 0
    %4995 = vmatpush1.bf16.msra.mxu0 0
    %4996 = vmatprep.subr.bf16.mxu0 0
    %4997 = vmatpush1.bf16.msra.mxu0 0
    %4998 = vmatprep.subr.bf16.mxu0 0
    %4999 = vmatpush1.bf16.msra.mxu0 0
    %5000 = vmatprep.subr.bf16.mxu0 0
    %5001 = vmatpush1.bf16.msra.mxu0 0
    %5002 = vmatprep.subr.bf16.mxu0 0
    %5003 = vmatpush1.bf16.msra.mxu0 0
    %5004 = vmatprep.subr.bf16.mxu0 0
    %5005 = vmatpush1.bf16.msra.mxu0 0
    %5006 = vmatprep.subr.bf16.mxu0 0
    %5007 = vmatpush1.bf16.msra.mxu0 0
    %5008 = vmatprep.mubr.bf16.mxu0 0
    %5009 = vmatmul.mubr.bf16.gmra.mrb[0].mxu0 %v4783
    %v5010 = vpop.f32.mrb[0].mxu0
    %v5011 = vadd.f32 0.0, %v5010
    %v5012 = vpop.f32.mrb[0].mxu0
    %v5013 = vadd.f32 0.0, %v5012
    %v5014 = vpop.f32.mrb[0].mxu0
    %v5015 = vpop.f32.mrb[0].mxu0
    %5016 = vdwg.mxu0
    %5017 = vmatprep.subr.bf16.mxu0 %v4915
    %5018 = vmatpush1.bf16.msra.mxu0 %v4914
    %5019 = vmatprep.subr.bf16.mxu0 %v4919
    %5020 = vmatpush1.bf16.msra.mxu0 %v4918
    %5021 = vmatprep.subr.bf16.mxu0 %v4923
    %5022 = vmatpush1.bf16.msra.mxu0 %v4922
    %5023 = vmatprep.subr.bf16.mxu0 %v4927
    %5024 = vmatpush1.bf16.msra.mxu0 %v4926
    %5025 = vmatprep.subr.bf16.mxu0 %v4931
    %5026 = vmatpush1.bf16.msra.mxu0 %v4930
    %5027 = vmatprep.subr.bf16.mxu0 %v4935
    %5028 = vmatpush1.bf16.msra.mxu0 %v4934
    %5029 = vmatprep.subr.bf16.mxu0 %v4939
    %5030 = vmatpush1.bf16.msra.mxu0 %v4938
    %5031 = vmatprep.subr.bf16.mxu0 %v4943
    %5032 = vmatpush1.bf16.msra.mxu0 %v4942
    %5033 = vmatprep.subr.bf16.mxu0 0
    %5034 = vmatpush1.bf16.msra.mxu0 0
    %5035 = vmatprep.subr.bf16.mxu0 0
    %5036 = vmatpush1.bf16.msra.mxu0 0
    %5037 = vmatprep.subr.bf16.mxu0 0
    %5038 = vmatpush1.bf16.msra.mxu0 0
    %5039 = vmatprep.subr.bf16.mxu0 0
    %5040 = vmatpush1.bf16.msra.mxu0 0
    %5041 = vmatprep.subr.bf16.mxu0 0
    %5042 = vmatpush1.bf16.msra.mxu0 0
    %5043 = vmatprep.subr.bf16.mxu0 0
    %5044 = vmatpush1.bf16.msra.mxu0 0
    %5045 = vmatprep.subr.bf16.mxu0 0
    %5046 = vmatpush1.bf16.msra.mxu0 0
    %5047 = vmatprep.subr.bf16.mxu0 0
    %5048 = vmatpush1.bf16.msra.mxu0 0
    %5049 = vmatprep.mubr.bf16.mxu0 0
    %5050 = vmatmul.mubr.bf16.gmra.mrb[0].mxu0 %v4783
    %v5051 = vpop.f32.mrb[0].mxu0
    %v5052 = vadd.f32 0.0, %v5051
    %v5053 = vpop.f32.mrb[0].mxu0
    %v5054 = vadd.f32 0.0, %v5053
    %v5055 = vpop.f32.mrb[0].mxu0
    %v5056 = vpop.f32.mrb[0].mxu0
    %5057 = vdwg.mxu0
    %v5058 = vadd.f32 %v4779, %v5011
    %v5059 = vadd.f32 %v4780, %v5013
    %v5060 = vadd.f32 %v4781, %v5052
    %v5061 = vadd.f32 %v4782, %v5054
    %v5062 = vxor.u32 %v5058, 2147483648
    %v5063 = vmul.f32 %v5062, 1.442695
    %v5064 = vpow.pop %v5063
    %v5065 = vadd.f32 %v5064, 1.0
    %v5066 = vrcp.pop %v5065
    %v5067 = vmul.f32 1.0, %v5066
    %v5068 = vxor.u32 %v5059, 2147483648
    %v5069 = vmul.f32 %v5068, 1.442695
    %v5070 = vpow.pop %v5069
    %v5071 = vadd.f32 %v5070, 1.0
    %v5072 = vrcp.pop %v5071
    %v5073 = vmul.f32 1.0, %v5072
    %v5074 = vtanh.pop %v5060
    %v5075 = vxor.u32 %v5061, 2147483648
    %v5076 = vmul.f32 %v5075, 1.442695
    %v5077 = vpow.pop %v5076
    %v5078 = vadd.f32 %v5077, 1.0
    %v5079 = vrcp.pop %v5078
    %v5080 = vmul.f32 1.0, %v5079
    %v5081 = vmul.f32 %v5073, %v4767
    %v5082 = vmul.f32 %v5067, %v5074
    %v5083 = vadd.f32 %v5081, %v5082
    %v5084 = vtanh.pop %v5083
    %v5085 = vmul.f32 %v5080, %v5084
    %s5086 = scalar_lea.vmem [#allocation4], 24
    %5087 = vst [vmem:[%s5086] sm:$0xff] %v5085
    %s5088 = smul.u32 4, 4
    %s5089 = smul.addr %s5088, 8
    %s5090 = scalar_lea.vmem [#allocation3], %s5089
    %v5091 = vld [vmem:[%s5090] sm:$0xff]
    %v5092 = vld [vmem:[%s5090 + $0x8] sm:$0xff]
    %v5093 = vld [vmem:[%s5090 + $0x10] sm:$0xff]
    %v5094 = vld [vmem:[%s5090 + $0x18] sm:$0xff]
    %v5095 = vadd.f32 %v5091, %v3539
    %v5096 = vadd.f32 %v5092, %v3541
    %v5097 = vadd.f32 %v5093, %v3580
    %v5098 = vadd.f32 %v5094, %v3582
    %v5099 = vpack.c.bf16 %v5085, %v5085
    %v5100 = vld [vmem:[%s10] sm:$0xff]
    %v5101 = vld [vmem:[%s10 + $0x8] sm:$0xff]
    %v5102 = vld [vmem:[%s10 + $0x10] sm:$0xff]
    %v5103 = vld [vmem:[%s10 + $0x18] sm:$0xff]
    %v5104 = vld [vmem:[%s10 + $0x20] sm:$0xff]
    %v5105 = vld [vmem:[%s10 + $0x28] sm:$0xff]
    %v5106 = vld [vmem:[%s10 + $0x30] sm:$0xff]
    %v5107 = vld [vmem:[%s10 + $0x38] sm:$0xff]
    %v5108 = vld [vmem:[%s10 + $0x40] sm:$0xff]
    %v5109 = vld [vmem:[%s10 + $0x48] sm:$0xff]
    %v5110 = vld [vmem:[%s10 + $0x50] sm:$0xff]
    %v5111 = vld [vmem:[%s10 + $0x58] sm:$0xff]
    %v5112 = vld [vmem:[%s10 + $0x60] sm:$0xff]
    %v5113 = vld [vmem:[%s10 + $0x68] sm:$0xff]
    %v5114 = vld [vmem:[%s10 + $0x70] sm:$0xff]
    %v5115 = vld [vmem:[%s10 + $0x78] sm:$0xff]
    %v5116 = vld [vmem:[%s10 + $0x80] sm:$0xff]
    %v5117 = vld [vmem:[%s10 + $0x88] sm:$0xff]
    %v5118 = vld [vmem:[%s10 + $0x90] sm:$0xff]
    %v5119 = vld [vmem:[%s10 + $0x98] sm:$0xff]
    %v5120 = vld [vmem:[%s10 + $0xa0] sm:$0xff]
    %v5121 = vld [vmem:[%s10 + $0xa8] sm:$0xff]
    %v5122 = vld [vmem:[%s10 + $0xb0] sm:$0xff]
    %v5123 = vld [vmem:[%s10 + $0xb8] sm:$0xff]
    %v5124 = vld [vmem:[%s10 + $0xc0] sm:$0xff]
    %v5125 = vld [vmem:[%s10 + $0xc8] sm:$0xff]
    %v5126 = vld [vmem:[%s10 + $0xd0] sm:$0xff]
    %v5127 = vld [vmem:[%s10 + $0xd8] sm:$0xff]
    %v5128 = vld [vmem:[%s10 + $0xe0] sm:$0xff]
    %v5129 = vld [vmem:[%s10 + $0xe8] sm:$0xff]
    %v5130 = vld [vmem:[%s10 + $0xf0] sm:$0xff]
    %v5131 = vld [vmem:[%s10 + $0xf8] sm:$0xff]
    %v5164 = vunpack.c.l.b16 %v5100
    %v5165 = vunpack.c.h.b16 %v5100
    %v5166 = vunpack.c.l.b16 %v5101
    %v5167 = vunpack.c.h.b16 %v5101
    %v5168 = vunpack.c.l.b16 %v5102
    %v5169 = vunpack.c.h.b16 %v5102
    %v5170 = vunpack.c.l.b16 %v5103
    %v5171 = vunpack.c.h.b16 %v5103
    %v5172 = vunpack.c.l.b16 %v5104
    %v5173 = vunpack.c.h.b16 %v5104
    %v5174 = vunpack.c.l.b16 %v5105
    %v5175 = vunpack.c.h.b16 %v5105
    %v5176 = vunpack.c.l.b16 %v5106
    %v5177 = vunpack.c.h.b16 %v5106
    %v5178 = vunpack.c.l.b16 %v5107
    %v5179 = vunpack.c.h.b16 %v5107
    %v5180 = vunpack.c.l.b16 %v5108
    %v5181 = vunpack.c.h.b16 %v5108
    %v5182 = vunpack.c.l.b16 %v5109
    %v5183 = vunpack.c.h.b16 %v5109
    %v5184 = vunpack.c.l.b16 %v5110
    %v5185 = vunpack.c.h.b16 %v5110
    %v5186 = vunpack.c.l.b16 %v5111
    %v5187 = vunpack.c.h.b16 %v5111
    %v5188 = vunpack.c.l.b16 %v5112
    %v5189 = vunpack.c.h.b16 %v5112
    %v5190 = vunpack.c.l.b16 %v5113
    %v5191 = vunpack.c.h.b16 %v5113
    %v5192 = vunpack.c.l.b16 %v5114
    %v5193 = vunpack.c.h.b16 %v5114
    %v5194 = vunpack.c.l.b16 %v5115
    %v5195 = vunpack.c.h.b16 %v5115
    %v5196 = vunpack.c.l.b16 %v5116
    %v5197 = vunpack.c.h.b16 %v5116
    %v5198 = vunpack.c.l.b16 %v5117
    %v5199 = vunpack.c.h.b16 %v5117
    %v5200 = vunpack.c.l.b16 %v5118
    %v5201 = vunpack.c.h.b16 %v5118
    %v5202 = vunpack.c.l.b16 %v5119
    %v5203 = vunpack.c.h.b16 %v5119
    %v5204 = vunpack.c.l.b16 %v5120
    %v5205 = vunpack.c.h.b16 %v5120
    %v5206 = vunpack.c.l.b16 %v5121
    %v5207 = vunpack.c.h.b16 %v5121
    %v5208 = vunpack.c.l.b16 %v5122
    %v5209 = vunpack.c.h.b16 %v5122
    %v5210 = vunpack.c.l.b16 %v5123
    %v5211 = vunpack.c.h.b16 %v5123
    %v5212 = vunpack.c.l.b16 %v5124
    %v5213 = vunpack.c.h.b16 %v5124
    %v5214 = vunpack.c.l.b16 %v5125
    %v5215 = vunpack.c.h.b16 %v5125
    %v5216 = vunpack.c.l.b16 %v5126
    %v5217 = vunpack.c.h.b16 %v5126
    %v5218 = vunpack.c.l.b16 %v5127
    %v5219 = vunpack.c.h.b16 %v5127
    %v5220 = vunpack.c.l.b16 %v5128
    %v5221 = vunpack.c.h.b16 %v5128
    %v5222 = vunpack.c.l.b16 %v5129
    %v5223 = vunpack.c.h.b16 %v5129
    %v5224 = vunpack.c.l.b16 %v5130
    %v5225 = vunpack.c.h.b16 %v5130
    %v5226 = vunpack.c.l.b16 %v5131
    %v5227 = vunpack.c.h.b16 %v5131
    %v5228 = vpack.c.b16 %v5168, %v5164
    %v5229 = vpack.c.b16 %v5169, %v5165
    %v5230 = vpack.c.b16 %v5170, %v5166
    %v5231 = vpack.c.b16 %v5171, %v5167
    %v5232 = vpack.c.b16 %v5176, %v5172
    %v5233 = vpack.c.b16 %v5177, %v5173
    %v5234 = vpack.c.b16 %v5178, %v5174
    %v5235 = vpack.c.b16 %v5179, %v5175
    %v5236 = vpack.c.b16 %v5184, %v5180
    %v5237 = vpack.c.b16 %v5185, %v5181
    %v5238 = vpack.c.b16 %v5186, %v5182
    %v5239 = vpack.c.b16 %v5187, %v5183
    %v5240 = vpack.c.b16 %v5192, %v5188
    %v5241 = vpack.c.b16 %v5193, %v5189
    %v5242 = vpack.c.b16 %v5194, %v5190
    %v5243 = vpack.c.b16 %v5195, %v5191
    %v5244 = vpack.c.b16 %v5200, %v5196
    %v5245 = vpack.c.b16 %v5201, %v5197
    %v5246 = vpack.c.b16 %v5202, %v5198
    %v5247 = vpack.c.b16 %v5203, %v5199
    %v5248 = vpack.c.b16 %v5208, %v5204
    %v5249 = vpack.c.b16 %v5209, %v5205
    %v5250 = vpack.c.b16 %v5210, %v5206
    %v5251 = vpack.c.b16 %v5211, %v5207
    %v5252 = vpack.c.b16 %v5216, %v5212
    %v5253 = vpack.c.b16 %v5217, %v5213
    %v5254 = vpack.c.b16 %v5218, %v5214
    %v5255 = vpack.c.b16 %v5219, %v5215
    %v5256 = vpack.c.b16 %v5224, %v5220
    %v5257 = vpack.c.b16 %v5225, %v5221
    %v5258 = vpack.c.b16 %v5226, %v5222
    %v5259 = vpack.c.b16 %v5227, %v5223
    %5292 = vmatprep.subr.bf16.mxu0 %v5229
    %5293 = vmatpush1.bf16.msra.mxu0 %v5228
    %5294 = vmatprep.subr.bf16.mxu0 %v5233
    %5295 = vmatpush1.bf16.msra.mxu0 %v5232
    %5296 = vmatprep.subr.bf16.mxu0 %v5237
    %5297 = vmatpush1.bf16.msra.mxu0 %v5236
    %5298 = vmatprep.subr.bf16.mxu0 %v5241
    %5299 = vmatpush1.bf16.msra.mxu0 %v5240
    %5300 = vmatprep.subr.bf16.mxu0 %v5245
    %5301 = vmatpush1.bf16.msra.mxu0 %v5244
    %5302 = vmatprep.subr.bf16.mxu0 %v5249
    %5303 = vmatpush1.bf16.msra.mxu0 %v5248
    %5304 = vmatprep.subr.bf16.mxu0 %v5253
    %5305 = vmatpush1.bf16.msra.mxu0 %v5252
    %5306 = vmatprep.subr.bf16.mxu0 %v5257
    %5307 = vmatpush1.bf16.msra.mxu0 %v5256
    %5308 = vmatprep.subr.bf16.mxu0 0
    %5309 = vmatpush1.bf16.msra.mxu0 0
    %5310 = vmatprep.subr.bf16.mxu0 0
    %5311 = vmatpush1.bf16.msra.mxu0 0
    %5312 = vmatprep.subr.bf16.mxu0 0
    %5313 = vmatpush1.bf16.msra.mxu0 0
    %5314 = vmatprep.subr.bf16.mxu0 0
    %5315 = vmatpush1.bf16.msra.mxu0 0
    %5316 = vmatprep.subr.bf16.mxu0 0
    %5317 = vmatpush1.bf16.msra.mxu0 0
    %5318 = vmatprep.subr.bf16.mxu0 0
    %5319 = vmatpush1.bf16.msra.mxu0 0
    %5320 = vmatprep.subr.bf16.mxu0 0
    %5321 = vmatpush1.bf16.msra.mxu0 0
    %5322 = vmatprep.subr.bf16.mxu0 0
    %5323 = vmatpush1.bf16.msra.mxu0 0
    %5324 = vmatprep.mubr.bf16.mxu0 0
    %5325 = vmatmul.mubr.bf16.gmra.mrb[0].mxu0 %v5099
    %v5326 = vpop.f32.mrb[0].mxu0
    %v5327 = vadd.f32 0.0, %v5326
    %v5328 = vpop.f32.mrb[0].mxu0
    %v5329 = vadd.f32 0.0, %v5328
    %v5330 = vpop.f32.mrb[0].mxu0
    %v5331 = vpop.f32.mrb[0].mxu0
    %5332 = vdwg.mxu0
    %5333 = vmatprep.subr.bf16.mxu0 %v5231
    %5334 = vmatpush1.bf16.msra.mxu0 %v5230
    %5335 = vmatprep.subr.bf16.mxu0 %v5235
    %5336 = vmatpush1.bf16.msra.mxu0 %v5234
    %5337 = vmatprep.subr.bf16.mxu0 %v5239
    %5338 = vmatpush1.bf16.msra.mxu0 %v5238
    %5339 = vmatprep.subr.bf16.mxu0 %v5243
    %5340 = vmatpush1.bf16.msra.mxu0 %v5242
    %5341 = vmatprep.subr.bf16.mxu0 %v5247
    %5342 = vmatpush1.bf16.msra.mxu0 %v5246
    %5343 = vmatprep.subr.bf16.mxu0 %v5251
    %5344 = vmatpush1.bf16.msra.mxu0 %v5250
    %5345 = vmatprep.subr.bf16.mxu0 %v5255
    %5346 = vmatpush1.bf16.msra.mxu0 %v5254
    %5347 = vmatprep.subr.bf16.mxu0 %v5259
    %5348 = vmatpush1.bf16.msra.mxu0 %v5258
    %5349 = vmatprep.subr.bf16.mxu0 0
    %5350 = vmatpush1.bf16.msra.mxu0 0
    %5351 = vmatprep.subr.bf16.mxu0 0
    %5352 = vmatpush1.bf16.msra.mxu0 0
    %5353 = vmatprep.subr.bf16.mxu0 0
    %5354 = vmatpush1.bf16.msra.mxu0 0
    %5355 = vmatprep.subr.bf16.mxu0 0
    %5356 = vmatpush1.bf16.msra.mxu0 0
    %5357 = vmatprep.subr.bf16.mxu0 0
    %5358 = vmatpush1.bf16.msra.mxu0 0
    %5359 = vmatprep.subr.bf16.mxu0 0
    %5360 = vmatpush1.bf16.msra.mxu0 0
    %5361 = vmatprep.subr.bf16.mxu0 0
    %5362 = vmatpush1.bf16.msra.mxu0 0
    %5363 = vmatprep.subr.bf16.mxu0 0
    %5364 = vmatpush1.bf16.msra.mxu0 0
    %5365 = vmatprep.mubr.bf16.mxu0 0
    %5366 = vmatmul.mubr.bf16.gmra.mrb[0].mxu0 %v5099
    %v5367 = vpop.f32.mrb[0].mxu0
    %v5368 = vadd.f32 0.0, %v5367
    %v5369 = vpop.f32.mrb[0].mxu0
    %v5370 = vadd.f32 0.0, %v5369
    %v5371 = vpop.f32.mrb[0].mxu0
    %v5372 = vpop.f32.mrb[0].mxu0
    %5373 = vdwg.mxu0
    %v5374 = vadd.f32 %v5095, %v5327
    %v5375 = vadd.f32 %v5096, %v5329
    %v5376 = vadd.f32 %v5097, %v5368
    %v5377 = vadd.f32 %v5098, %v5370
    %v5378 = vxor.u32 %v5374, 2147483648
    %v5379 = vmul.f32 %v5378, 1.442695
    %v5380 = vpow.pop %v5379
    %v5381 = vadd.f32 %v5380, 1.0
    %v5382 = vrcp.pop %v5381
    %v5383 = vmul.f32 1.0, %v5382
    %v5384 = vxor.u32 %v5375, 2147483648
    %v5385 = vmul.f32 %v5384, 1.442695
    %v5386 = vpow.pop %v5385
    %v5387 = vadd.f32 %v5386, 1.0
    %v5388 = vrcp.pop %v5387
    %v5389 = vmul.f32 1.0, %v5388
    %v5390 = vtanh.pop %v5376
    %v5391 = vxor.u32 %v5377, 2147483648
    %v5392 = vmul.f32 %v5391, 1.442695
    %v5393 = vpow.pop %v5392
    %v5394 = vadd.f32 %v5393, 1.0
    %v5395 = vrcp.pop %v5394
    %v5396 = vmul.f32 1.0, %v5395
    %v5397 = vmul.f32 %v5389, %v5083
    %v5398 = vmul.f32 %v5383, %v5390
    %v5399 = vadd.f32 %v5397, %v5398
    %v5400 = vtanh.pop %v5399
    %v5401 = vmul.f32 %v5396, %v5400
    %s5402 = scalar_lea.vmem [#allocation4], 32
    %5403 = vst [vmem:[%s5402] sm:$0xff] %v5401
    %s5404 = smul.u32 5, 4
    %s5405 = smul.addr %s5404, 8
    %s5406 = scalar_lea.vmem [#allocation3], %s5405
    %v5407 = vld [vmem:[%s5406] sm:$0xff]
    %v5408 = vld [vmem:[%s5406 + $0x8] sm:$0xff]
    %v5409 = vld [vmem:[%s5406 + $0x10] sm:$0xff]
    %v5410 = vld [vmem:[%s5406 + $0x18] sm:$0xff]
    %v5411 = vadd.f32 %v5407, %v3539
    %v5412 = vadd.f32 %v5408, %v3541
    %v5413 = vadd.f32 %v5409, %v3580
    %v5414 = vadd.f32 %v5410, %v3582
    %v5415 = vpack.c.bf16 %v5401, %v5401
    %v5416 = vld [vmem:[%s10] sm:$0xff]
    %v5417 = vld [vmem:[%s10 + $0x8] sm:$0xff]
    %v5418 = vld [vmem:[%s10 + $0x10] sm:$0xff]
    %v5419 = vld [vmem:[%s10 + $0x18] sm:$0xff]
    %v5420 = vld [vmem:[%s10 + $0x20] sm:$0xff]
    %v5421 = vld [vmem:[%s10 + $0x28] sm:$0xff]
    %v5422 = vld [vmem:[%s10 + $0x30] sm:$0xff]
    %v5423 = vld [vmem:[%s10 + $0x38] sm:$0xff]
    %v5424 = vld [vmem:[%s10 + $0x40] sm:$0xff]
    %v5425 = vld [vmem:[%s10 + $0x48] sm:$0xff]
    %v5426 = vld [vmem:[%s10 + $0x50] sm:$0xff]
    %v5427 = vld [vmem:[%s10 + $0x58] sm:$0xff]
    %v5428 = vld [vmem:[%s10 + $0x60] sm:$0xff]
    %v5429 = vld [vmem:[%s10 + $0x68] sm:$0xff]
    %v5430 = vld [vmem:[%s10 + $0x70] sm:$0xff]
    %v5431 = vld [vmem:[%s10 + $0x78] sm:$0xff]
    %v5432 = vld [vmem:[%s10 + $0x80] sm:$0xff]
    %v5433 = vld [vmem:[%s10 + $0x88] sm:$0xff]
    %v5434 = vld [vmem:[%s10 + $0x90] sm:$0xff]
    %v5435 = vld [vmem:[%s10 + $0x98] sm:$0xff]
    %v5436 = vld [vmem:[%s10 + $0xa0] sm:$0xff]
    %v5437 = vld [vmem:[%s10 + $0xa8] sm:$0xff]
    %v5438 = vld [vmem:[%s10 + $0xb0] sm:$0xff]
    %v5439 = vld [vmem:[%s10 + $0xb8] sm:$0xff]
    %v5440 = vld [vmem:[%s10 + $0xc0] sm:$0xff]
    %v5441 = vld [vmem:[%s10 + $0xc8] sm:$0xff]
    %v5442 = vld [vmem:[%s10 + $0xd0] sm:$0xff]
    %v5443 = vld [vmem:[%s10 + $0xd8] sm:$0xff]
    %v5444 = vld [vmem:[%s10 + $0xe0] sm:$0xff]
    %v5445 = vld [vmem:[%s10 + $0xe8] sm:$0xff]
    %v5446 = vld [vmem:[%s10 + $0xf0] sm:$0xff]
    %v5447 = vld [vmem:[%s10 + $0xf8] sm:$0xff]
    %v5480 = vunpack.c.l.b16 %v5416
    %v5481 = vunpack.c.h.b16 %v5416
    %v5482 = vunpack.c.l.b16 %v5417
    %v5483 = vunpack.c.h.b16 %v5417
    %v5484 = vunpack.c.l.b16 %v5418
    %v5485 = vunpack.c.h.b16 %v5418
    %v5486 = vunpack.c.l.b16 %v5419
    %v5487 = vunpack.c.h.b16 %v5419
    %v5488 = vunpack.c.l.b16 %v5420
    %v5489 = vunpack.c.h.b16 %v5420
    %v5490 = vunpack.c.l.b16 %v5421
    %v5491 = vunpack.c.h.b16 %v5421
    %v5492 = vunpack.c.l.b16 %v5422
    %v5493 = vunpack.c.h.b16 %v5422
    %v5494 = vunpack.c.l.b16 %v5423
    %v5495 = vunpack.c.h.b16 %v5423
    %v5496 = vunpack.c.l.b16 %v5424
    %v5497 = vunpack.c.h.b16 %v5424
    %v5498 = vunpack.c.l.b16 %v5425
    %v5499 = vunpack.c.h.b16 %v5425
    %v5500 = vunpack.c.l.b16 %v5426
    %v5501 = vunpack.c.h.b16 %v5426
    %v5502 = vunpack.c.l.b16 %v5427
    %v5503 = vunpack.c.h.b16 %v5427
    %v5504 = vunpack.c.l.b16 %v5428
    %v5505 = vunpack.c.h.b16 %v5428
    %v5506 = vunpack.c.l.b16 %v5429
    %v5507 = vunpack.c.h.b16 %v5429
    %v5508 = vunpack.c.l.b16 %v5430
    %v5509 = vunpack.c.h.b16 %v5430
    %v5510 = vunpack.c.l.b16 %v5431
    %v5511 = vunpack.c.h.b16 %v5431
    %v5512 = vunpack.c.l.b16 %v5432
    %v5513 = vunpack.c.h.b16 %v5432
    %v5514 = vunpack.c.l.b16 %v5433
    %v5515 = vunpack.c.h.b16 %v5433
    %v5516 = vunpack.c.l.b16 %v5434
    %v5517 = vunpack.c.h.b16 %v5434
    %v5518 = vunpack.c.l.b16 %v5435
    %v5519 = vunpack.c.h.b16 %v5435
    %v5520 = vunpack.c.l.b16 %v5436
    %v5521 = vunpack.c.h.b16 %v5436
    %v5522 = vunpack.c.l.b16 %v5437
    %v5523 = vunpack.c.h.b16 %v5437
    %v5524 = vunpack.c.l.b16 %v5438
    %v5525 = vunpack.c.h.b16 %v5438
    %v5526 = vunpack.c.l.b16 %v5439
    %v5527 = vunpack.c.h.b16 %v5439
    %v5528 = vunpack.c.l.b16 %v5440
    %v5529 = vunpack.c.h.b16 %v5440
    %v5530 = vunpack.c.l.b16 %v5441
    %v5531 = vunpack.c.h.b16 %v5441
    %v5532 = vunpack.c.l.b16 %v5442
    %v5533 = vunpack.c.h.b16 %v5442
    %v5534 = vunpack.c.l.b16 %v5443
    %v5535 = vunpack.c.h.b16 %v5443
    %v5536 = vunpack.c.l.b16 %v5444
    %v5537 = vunpack.c.h.b16 %v5444
    %v5538 = vunpack.c.l.b16 %v5445
    %v5539 = vunpack.c.h.b16 %v5445
    %v5540 = vunpack.c.l.b16 %v5446
    %v5541 = vunpack.c.h.b16 %v5446
    %v5542 = vunpack.c.l.b16 %v5447
    %v5543 = vunpack.c.h.b16 %v5447
    %v5544 = vpack.c.b16 %v5484, %v5480
    %v5545 = vpack.c.b16 %v5485, %v5481
    %v5546 = vpack.c.b16 %v5486, %v5482
    %v5547 = vpack.c.b16 %v5487, %v5483
    %v5548 = vpack.c.b16 %v5492, %v5488
    %v5549 = vpack.c.b16 %v5493, %v5489
    %v5550 = vpack.c.b16 %v5494, %v5490
    %v5551 = vpack.c.b16 %v5495, %v5491
    %v5552 = vpack.c.b16 %v5500, %v5496
    %v5553 = vpack.c.b16 %v5501, %v5497
    %v5554 = vpack.c.b16 %v5502, %v5498
    %v5555 = vpack.c.b16 %v5503, %v5499
    %v5556 = vpack.c.b16 %v5508, %v5504
    %v5557 = vpack.c.b16 %v5509, %v5505
    %v5558 = vpack.c.b16 %v5510, %v5506
    %v5559 = vpack.c.b16 %v5511, %v5507
    %v5560 = vpack.c.b16 %v5516, %v5512
    %v5561 = vpack.c.b16 %v5517, %v5513
    %v5562 = vpack.c.b16 %v5518, %v5514
    %v5563 = vpack.c.b16 %v5519, %v5515
    %v5564 = vpack.c.b16 %v5524, %v5520
    %v5565 = vpack.c.b16 %v5525, %v5521
    %v5566 = vpack.c.b16 %v5526, %v5522
    %v5567 = vpack.c.b16 %v5527, %v5523
    %v5568 = vpack.c.b16 %v5532, %v5528
    %v5569 = vpack.c.b16 %v5533, %v5529
    %v5570 = vpack.c.b16 %v5534, %v5530
    %v5571 = vpack.c.b16 %v5535, %v5531
    %v5572 = vpack.c.b16 %v5540, %v5536
    %v5573 = vpack.c.b16 %v5541, %v5537
    %v5574 = vpack.c.b16 %v5542, %v5538
    %v5575 = vpack.c.b16 %v5543, %v5539
    %5608 = vmatprep.subr.bf16.mxu0 %v5545
    %5609 = vmatpush1.bf16.msra.mxu0 %v5544
    %5610 = vmatprep.subr.bf16.mxu0 %v5549
    %5611 = vmatpush1.bf16.msra.mxu0 %v5548
    %5612 = vmatprep.subr.bf16.mxu0 %v5553
    %5613 = vmatpush1.bf16.msra.mxu0 %v5552
    %5614 = vmatprep.subr.bf16.mxu0 %v5557
    %5615 = vmatpush1.bf16.msra.mxu0 %v5556
    %5616 = vmatprep.subr.bf16.mxu0 %v5561
    %5617 = vmatpush1.bf16.msra.mxu0 %v5560
    %5618 = vmatprep.subr.bf16.mxu0 %v5565
    %5619 = vmatpush1.bf16.msra.mxu0 %v5564
    %5620 = vmatprep.subr.bf16.mxu0 %v5569
    %5621 = vmatpush1.bf16.msra.mxu0 %v5568
    %5622 = vmatprep.subr.bf16.mxu0 %v5573
    %5623 = vmatpush1.bf16.msra.mxu0 %v5572
    %5624 = vmatprep.subr.bf16.mxu0 0
    %5625 = vmatpush1.bf16.msra.mxu0 0
    %5626 = vmatprep.subr.bf16.mxu0 0
    %5627 = vmatpush1.bf16.msra.mxu0 0
    %5628 = vmatprep.subr.bf16.mxu0 0
    %5629 = vmatpush1.bf16.msra.mxu0 0
    %5630 = vmatprep.subr.bf16.mxu0 0
    %5631 = vmatpush1.bf16.msra.mxu0 0
    %5632 = vmatprep.subr.bf16.mxu0 0
    %5633 = vmatpush1.bf16.msra.mxu0 0
    %5634 = vmatprep.subr.bf16.mxu0 0
    %5635 = vmatpush1.bf16.msra.mxu0 0
    %5636 = vmatprep.subr.bf16.mxu0 0
    %5637 = vmatpush1.bf16.msra.mxu0 0
    %5638 = vmatprep.subr.bf16.mxu0 0
    %5639 = vmatpush1.bf16.msra.mxu0 0
    %5640 = vmatprep.mubr.bf16.mxu0 0
    %5641 = vmatmul.mubr.bf16.gmra.mrb[0].mxu0 %v5415
    %v5642 = vpop.f32.mrb[0].mxu0
    %v5643 = vadd.f32 0.0, %v5642
    %v5644 = vpop.f32.mrb[0].mxu0
    %v5645 = vadd.f32 0.0, %v5644
    %v5646 = vpop.f32.mrb[0].mxu0
    %v5647 = vpop.f32.mrb[0].mxu0
    %5648 = vdwg.mxu0
    %5649 = vmatprep.subr.bf16.mxu0 %v5547
    %5650 = vmatpush1.bf16.msra.mxu0 %v5546
    %5651 = vmatprep.subr.bf16.mxu0 %v5551
    %5652 = vmatpush1.bf16.msra.mxu0 %v5550
    %5653 = vmatprep.subr.bf16.mxu0 %v5555
    %5654 = vmatpush1.bf16.msra.mxu0 %v5554
    %5655 = vmatprep.subr.bf16.mxu0 %v5559
    %5656 = vmatpush1.bf16.msra.mxu0 %v5558
    %5657 = vmatprep.subr.bf16.mxu0 %v5563
    %5658 = vmatpush1.bf16.msra.mxu0 %v5562
    %5659 = vmatprep.subr.bf16.mxu0 %v5567
    %5660 = vmatpush1.bf16.msra.mxu0 %v5566
    %5661 = vmatprep.subr.bf16.mxu0 %v5571
    %5662 = vmatpush1.bf16.msra.mxu0 %v5570
    %5663 = vmatprep.subr.bf16.mxu0 %v5575
    %5664 = vmatpush1.bf16.msra.mxu0 %v5574
    %5665 = vmatprep.subr.bf16.mxu0 0
    %5666 = vmatpush1.bf16.msra.mxu0 0
    %5667 = vmatprep.subr.bf16.mxu0 0
    %5668 = vmatpush1.bf16.msra.mxu0 0
    %5669 = vmatprep.subr.bf16.mxu0 0
    %5670 = vmatpush1.bf16.msra.mxu0 0
    %5671 = vmatprep.subr.bf16.mxu0 0
    %5672 = vmatpush1.bf16.msra.mxu0 0
    %5673 = vmatprep.subr.bf16.mxu0 0
    %5674 = vmatpush1.bf16.msra.mxu0 0
    %5675 = vmatprep.subr.bf16.mxu0 0
    %5676 = vmatpush1.bf16.msra.mxu0 0
    %5677 = vmatprep.subr.bf16.mxu0 0
    %5678 = vmatpush1.bf16.msra.mxu0 0
    %5679 = vmatprep.subr.bf16.mxu0 0
    %5680 = vmatpush1.bf16.msra.mxu0 0
    %5681 = vmatprep.mubr.bf16.mxu0 0
    %5682 = vmatmul.mubr.bf16.gmra.mrb[0].mxu0 %v5415
    %v5683 = vpop.f32.mrb[0].mxu0
    %v5684 = vadd.f32 0.0, %v5683
    %v5685 = vpop.f32.mrb[0].mxu0
    %v5686 = vadd.f32 0.0, %v5685
    %v5687 = vpop.f32.mrb[0].mxu0
    %v5688 = vpop.f32.mrb[0].mxu0
    %5689 = vdwg.mxu0
    %v5690 = vadd.f32 %v5411, %v5643
    %v5691 = vadd.f32 %v5412, %v5645
    %v5692 = vadd.f32 %v5413, %v5684
    %v5693 = vadd.f32 %v5414, %v5686
    %v5694 = vxor.u32 %v5690, 2147483648
    %v5695 = vmul.f32 %v5694, 1.442695
    %v5696 = vpow.pop %v5695
    %v5697 = vadd.f32 %v5696, 1.0
    %v5698 = vrcp.pop %v5697
    %v5699 = vmul.f32 1.0, %v5698
    %v5700 = vxor.u32 %v5691, 2147483648
    %v5701 = vmul.f32 %v5700, 1.442695
    %v5702 = vpow.pop %v5701
    %v5703 = vadd.f32 %v5702, 1.0
    %v5704 = vrcp.pop %v5703
    %v5705 = vmul.f32 1.0, %v5704
    %v5706 = vtanh.pop %v5692
    %v5707 = vxor.u32 %v5693, 2147483648
    %v5708 = vmul.f32 %v5707, 1.442695
    %v5709 = vpow.pop %v5708
    %v5710 = vadd.f32 %v5709, 1.0
    %v5711 = vrcp.pop %v5710
    %v5712 = vmul.f32 1.0, %v5711
    %v5713 = vmul.f32 %v5705, %v5399
    %v5714 = vmul.f32 %v5699, %v5706
    %v5715 = vadd.f32 %v5713, %v5714
    %v5716 = vtanh.pop %v5715
    %v5717 = vmul.f32 %v5712, %v5716
    %s5718 = scalar_lea.vmem [#allocation4], 40
    %5719 = vst [vmem:[%s5718] sm:$0xff] %v5717
    %s5720 = smul.u32 6, 4
    %s5721 = smul.addr %s5720, 8
    %s5722 = scalar_lea.vmem [#allocation3], %s5721
    %v5723 = vld [vmem:[%s5722] sm:$0xff]
    %v5724 = vld [vmem:[%s5722 + $0x8] sm:$0xff]
    %v5725 = vld [vmem:[%s5722 + $0x10] sm:$0xff]
    %v5726 = vld [vmem:[%s5722 + $0x18] sm:$0xff]
    %v5727 = vadd.f32 %v5723, %v3539
    %v5728 = vadd.f32 %v5724, %v3541
    %v5729 = vadd.f32 %v5725, %v3580
    %v5730 = vadd.f32 %v5726, %v3582
    %v5731 = vpack.c.bf16 %v5717, %v5717
    %v5732 = vld [vmem:[%s10] sm:$0xff]
    %v5733 = vld [vmem:[%s10 + $0x8] sm:$0xff]
    %v5734 = vld [vmem:[%s10 + $0x10] sm:$0xff]
    %v5735 = vld [vmem:[%s10 + $0x18] sm:$0xff]
    %v5736 = vld [vmem:[%s10 + $0x20] sm:$0xff]
    %v5737 = vld [vmem:[%s10 + $0x28] sm:$0xff]
    %v5738 = vld [vmem:[%s10 + $0x30] sm:$0xff]
    %v5739 = vld [vmem:[%s10 + $0x38] sm:$0xff]
    %v5740 = vld [vmem:[%s10 + $0x40] sm:$0xff]
    %v5741 = vld [vmem:[%s10 + $0x48] sm:$0xff]
    %v5742 = vld [vmem:[%s10 + $0x50] sm:$0xff]
    %v5743 = vld [vmem:[%s10 + $0x58] sm:$0xff]
    %v5744 = vld [vmem:[%s10 + $0x60] sm:$0xff]
    %v5745 = vld [vmem:[%s10 + $0x68] sm:$0xff]
    %v5746 = vld [vmem:[%s10 + $0x70] sm:$0xff]
    %v5747 = vld [vmem:[%s10 + $0x78] sm:$0xff]
    %v5748 = vld [vmem:[%s10 + $0x80] sm:$0xff]
    %v5749 = vld [vmem:[%s10 + $0x88] sm:$0xff]
    %v5750 = vld [vmem:[%s10 + $0x90] sm:$0xff]
    %v5751 = vld [vmem:[%s10 + $0x98] sm:$0xff]
    %v5752 = vld [vmem:[%s10 + $0xa0] sm:$0xff]
    %v5753 = vld [vmem:[%s10 + $0xa8] sm:$0xff]
    %v5754 = vld [vmem:[%s10 + $0xb0] sm:$0xff]
    %v5755 = vld [vmem:[%s10 + $0xb8] sm:$0xff]
    %v5756 = vld [vmem:[%s10 + $0xc0] sm:$0xff]
    %v5757 = vld [vmem:[%s10 + $0xc8] sm:$0xff]
    %v5758 = vld [vmem:[%s10 + $0xd0] sm:$0xff]
    %v5759 = vld [vmem:[%s10 + $0xd8] sm:$0xff]
    %v5760 = vld [vmem:[%s10 + $0xe0] sm:$0xff]
    %v5761 = vld [vmem:[%s10 + $0xe8] sm:$0xff]
    %v5762 = vld [vmem:[%s10 + $0xf0] sm:$0xff]
    %v5763 = vld [vmem:[%s10 + $0xf8] sm:$0xff]
    %v5796 = vunpack.c.l.b16 %v5732
    %v5797 = vunpack.c.h.b16 %v5732
    %v5798 = vunpack.c.l.b16 %v5733
    %v5799 = vunpack.c.h.b16 %v5733
    %v5800 = vunpack.c.l.b16 %v5734
    %v5801 = vunpack.c.h.b16 %v5734
    %v5802 = vunpack.c.l.b16 %v5735
    %v5803 = vunpack.c.h.b16 %v5735
    %v5804 = vunpack.c.l.b16 %v5736
    %v5805 = vunpack.c.h.b16 %v5736
    %v5806 = vunpack.c.l.b16 %v5737
    %v5807 = vunpack.c.h.b16 %v5737
    %v5808 = vunpack.c.l.b16 %v5738
    %v5809 = vunpack.c.h.b16 %v5738
    %v5810 = vunpack.c.l.b16 %v5739
    %v5811 = vunpack.c.h.b16 %v5739
    %v5812 = vunpack.c.l.b16 %v5740
    %v5813 = vunpack.c.h.b16 %v5740
    %v5814 = vunpack.c.l.b16 %v5741
    %v5815 = vunpack.c.h.b16 %v5741
    %v5816 = vunpack.c.l.b16 %v5742
    %v5817 = vunpack.c.h.b16 %v5742
    %v5818 = vunpack.c.l.b16 %v5743
    %v5819 = vunpack.c.h.b16 %v5743
    %v5820 = vunpack.c.l.b16 %v5744
    %v5821 = vunpack.c.h.b16 %v5744
    %v5822 = vunpack.c.l.b16 %v5745
    %v5823 = vunpack.c.h.b16 %v5745
    %v5824 = vunpack.c.l.b16 %v5746
    %v5825 = vunpack.c.h.b16 %v5746
    %v5826 = vunpack.c.l.b16 %v5747
    %v5827 = vunpack.c.h.b16 %v5747
    %v5828 = vunpack.c.l.b16 %v5748
    %v5829 = vunpack.c.h.b16 %v5748
    %v5830 = vunpack.c.l.b16 %v5749
    %v5831 = vunpack.c.h.b16 %v5749
    %v5832 = vunpack.c.l.b16 %v5750
    %v5833 = vunpack.c.h.b16 %v5750
    %v5834 = vunpack.c.l.b16 %v5751
    %v5835 = vunpack.c.h.b16 %v5751
    %v5836 = vunpack.c.l.b16 %v5752
    %v5837 = vunpack.c.h.b16 %v5752
    %v5838 = vunpack.c.l.b16 %v5753
    %v5839 = vunpack.c.h.b16 %v5753
    %v5840 = vunpack.c.l.b16 %v5754
    %v5841 = vunpack.c.h.b16 %v5754
    %v5842 = vunpack.c.l.b16 %v5755
    %v5843 = vunpack.c.h.b16 %v5755
    %v5844 = vunpack.c.l.b16 %v5756
    %v5845 = vunpack.c.h.b16 %v5756
    %v5846 = vunpack.c.l.b16 %v5757
    %v5847 = vunpack.c.h.b16 %v5757
    %v5848 = vunpack.c.l.b16 %v5758
    %v5849 = vunpack.c.h.b16 %v5758
    %v5850 = vunpack.c.l.b16 %v5759
    %v5851 = vunpack.c.h.b16 %v5759
    %v5852 = vunpack.c.l.b16 %v5760
    %v5853 = vunpack.c.h.b16 %v5760
    %v5854 = vunpack.c.l.b16 %v5761
    %v5855 = vunpack.c.h.b16 %v5761
    %v5856 = vunpack.c.l.b16 %v5762
    %v5857 = vunpack.c.h.b16 %v5762
    %v5858 = vunpack.c.l.b16 %v5763
    %v5859 = vunpack.c.h.b16 %v5763
    %v5860 = vpack.c.b16 %v5800, %v5796
    %v5861 = vpack.c.b16 %v5801, %v5797
    %v5862 = vpack.c.b16 %v5802, %v5798
    %v5863 = vpack.c.b16 %v5803, %v5799
    %v5864 = vpack.c.b16 %v5808, %v5804
    %v5865 = vpack.c.b16 %v5809, %v5805
    %v5866 = vpack.c.b16 %v5810, %v5806
    %v5867 = vpack.c.b16 %v5811, %v5807
    %v5868 = vpack.c.b16 %v5816, %v5812
    %v5869 = vpack.c.b16 %v5817, %v5813
    %v5870 = vpack.c.b16 %v5818, %v5814
    %v5871 = vpack.c.b16 %v5819, %v5815
    %v5872 = vpack.c.b16 %v5824, %v5820
    %v5873 = vpack.c.b16 %v5825, %v5821
    %v5874 = vpack.c.b16 %v5826, %v5822
    %v5875 = vpack.c.b16 %v5827, %v5823
    %v5876 = vpack.c.b16 %v5832, %v5828
    %v5877 = vpack.c.b16 %v5833, %v5829
    %v5878 = vpack.c.b16 %v5834, %v5830
    %v5879 = vpack.c.b16 %v5835, %v5831
    %v5880 = vpack.c.b16 %v5840, %v5836
    %v5881 = vpack.c.b16 %v5841, %v5837
    %v5882 = vpack.c.b16 %v5842, %v5838
    %v5883 = vpack.c.b16 %v5843, %v5839
    %v5884 = vpack.c.b16 %v5848, %v5844
    %v5885 = vpack.c.b16 %v5849, %v5845
    %v5886 = vpack.c.b16 %v5850, %v5846
    %v5887 = vpack.c.b16 %v5851, %v5847
    %v5888 = vpack.c.b16 %v5856, %v5852
    %v5889 = vpack.c.b16 %v5857, %v5853
    %v5890 = vpack.c.b16 %v5858, %v5854
    %v5891 = vpack.c.b16 %v5859, %v5855
    %5924 = vmatprep.subr.bf16.mxu0 %v5861
    %5925 = vmatpush1.bf16.msra.mxu0 %v5860
    %5926 = vmatprep.subr.bf16.mxu0 %v5865
    %5927 = vmatpush1.bf16.msra.mxu0 %v5864
    %5928 = vmatprep.subr.bf16.mxu0 %v5869
    %5929 = vmatpush1.bf16.msra.mxu0 %v5868
    %5930 = vmatprep.subr.bf16.mxu0 %v5873
    %5931 = vmatpush1.bf16.msra.mxu0 %v5872
    %5932 = vmatprep.subr.bf16.mxu0 %v5877
    %5933 = vmatpush1.bf16.msra.mxu0 %v5876
    %5934 = vmatprep.subr.bf16.mxu0 %v5881
    %5935 = vmatpush1.bf16.msra.mxu0 %v5880
    %5936 = vmatprep.subr.bf16.mxu0 %v5885
    %5937 = vmatpush1.bf16.msra.mxu0 %v5884
    %5938 = vmatprep.subr.bf16.mxu0 %v5889
    %5939 = vmatpush1.bf16.msra.mxu0 %v5888
    %5940 = vmatprep.subr.bf16.mxu0 0
    %5941 = vmatpush1.bf16.msra.mxu0 0
    %5942 = vmatprep.subr.bf16.mxu0 0
    %5943 = vmatpush1.bf16.msra.mxu0 0
    %5944 = vmatprep.subr.bf16.mxu0 0
    %5945 = vmatpush1.bf16.msra.mxu0 0
    %5946 = vmatprep.subr.bf16.mxu0 0
    %5947 = vmatpush1.bf16.msra.mxu0 0
    %5948 = vmatprep.subr.bf16.mxu0 0
    %5949 = vmatpush1.bf16.msra.mxu0 0
    %5950 = vmatprep.subr.bf16.mxu0 0
    %5951 = vmatpush1.bf16.msra.mxu0 0
    %5952 = vmatprep.subr.bf16.mxu0 0
    %5953 = vmatpush1.bf16.msra.mxu0 0
    %5954 = vmatprep.subr.bf16.mxu0 0
    %5955 = vmatpush1.bf16.msra.mxu0 0
    %5956 = vmatprep.mubr.bf16.mxu0 0
    %5957 = vmatmul.mubr.bf16.gmra.mrb[0].mxu0 %v5731
    %v5958 = vpop.f32.mrb[0].mxu0
    %v5959 = vadd.f32 0.0, %v5958
    %v5960 = vpop.f32.mrb[0].mxu0
    %v5961 = vadd.f32 0.0, %v5960
    %v5962 = vpop.f32.mrb[0].mxu0
    %v5963 = vpop.f32.mrb[0].mxu0
    %5964 = vdwg.mxu0
    %5965 = vmatprep.subr.bf16.mxu0 %v5863
    %5966 = vmatpush1.bf16.msra.mxu0 %v5862
    %5967 = vmatprep.subr.bf16.mxu0 %v5867
    %5968 = vmatpush1.bf16.msra.mxu0 %v5866
    %5969 = vmatprep.subr.bf16.mxu0 %v5871
    %5970 = vmatpush1.bf16.msra.mxu0 %v5870
    %5971 = vmatprep.subr.bf16.mxu0 %v5875
    %5972 = vmatpush1.bf16.msra.mxu0 %v5874
    %5973 = vmatprep.subr.bf16.mxu0 %v5879
    %5974 = vmatpush1.bf16.msra.mxu0 %v5878
    %5975 = vmatprep.subr.bf16.mxu0 %v5883
    %5976 = vmatpush1.bf16.msra.mxu0 %v5882
    %5977 = vmatprep.subr.bf16.mxu0 %v5887
    %5978 = vmatpush1.bf16.msra.mxu0 %v5886
    %5979 = vmatprep.subr.bf16.mxu0 %v5891
    %5980 = vmatpush1.bf16.msra.mxu0 %v5890
    %5981 = vmatprep.subr.bf16.mxu0 0
    %5982 = vmatpush1.bf16.msra.mxu0 0
    %5983 = vmatprep.subr.bf16.mxu0 0
    %5984 = vmatpush1.bf16.msra.mxu0 0
    %5985 = vmatprep.subr.bf16.mxu0 0
    %5986 = vmatpush1.bf16.msra.mxu0 0
    %5987 = vmatprep.subr.bf16.mxu0 0
    %5988 = vmatpush1.bf16.msra.mxu0 0
    %5989 = vmatprep.subr.bf16.mxu0 0
    %5990 = vmatpush1.bf16.msra.mxu0 0
    %5991 = vmatprep.subr.bf16.mxu0 0
    %5992 = vmatpush1.bf16.msra.mxu0 0
    %5993 = vmatprep.subr.bf16.mxu0 0
    %5994 = vmatpush1.bf16.msra.mxu0 0
    %5995 = vmatprep.subr.bf16.mxu0 0
    %5996 = vmatpush1.bf16.msra.mxu0 0
    %5997 = vmatprep.mubr.bf16.mxu0 0
    %5998 = vmatmul.mubr.bf16.gmra.mrb[0].mxu0 %v5731
    %v5999 = vpop.f32.mrb[0].mxu0
    %v6000 = vadd.f32 0.0, %v5999
    %v6001 = vpop.f32.mrb[0].mxu0
    %v6002 = vadd.f32 0.0, %v6001
    %v6003 = vpop.f32.mrb[0].mxu0
    %v6004 = vpop.f32.mrb[0].mxu0
    %6005 = vdwg.mxu0
    %v6006 = vadd.f32 %v5727, %v5959
    %v6007 = vadd.f32 %v5728, %v5961
    %v6008 = vadd.f32 %v5729, %v6000
    %v6009 = vadd.f32 %v5730, %v6002
    %v6010 = vxor.u32 %v6006, 2147483648
    %v6011 = vmul.f32 %v6010, 1.442695
    %v6012 = vpow.pop %v6011
    %v6013 = vadd.f32 %v6012, 1.0
    %v6014 = vrcp.pop %v6013
    %v6015 = vmul.f32 1.0, %v6014
    %v6016 = vxor.u32 %v6007, 2147483648
    %v6017 = vmul.f32 %v6016, 1.442695
    %v6018 = vpow.pop %v6017
    %v6019 = vadd.f32 %v6018, 1.0
    %v6020 = vrcp.pop %v6019
    %v6021 = vmul.f32 1.0, %v6020
    %v6022 = vtanh.pop %v6008
    %v6023 = vxor.u32 %v6009, 2147483648
    %v6024 = vmul.f32 %v6023, 1.442695
    %v6025 = vpow.pop %v6024
    %v6026 = vadd.f32 %v6025, 1.0
    %v6027 = vrcp.pop %v6026
    %v6028 = vmul.f32 1.0, %v6027
    %v6029 = vmul.f32 %v6021, %v5715
    %v6030 = vmul.f32 %v6015, %v6022
    %v6031 = vadd.f32 %v6029, %v6030
    %v6032 = vtanh.pop %v6031
    %v6033 = vmul.f32 %v6028, %v6032
    %s6034 = scalar_lea.vmem [#allocation4], 48
    %6035 = vst [vmem:[%s6034] sm:$0xff] %v6033
    %s6036 = smul.u32 7, 4
    %s6037 = smul.addr %s6036, 8
    %s6038 = scalar_lea.vmem [#allocation3], %s6037
    %v6039 = vld [vmem:[%s6038] sm:$0xff]
    %v6040 = vld [vmem:[%s6038 + $0x8] sm:$0xff]
    %v6041 = vld [vmem:[%s6038 + $0x10] sm:$0xff]
    %v6042 = vld [vmem:[%s6038 + $0x18] sm:$0xff]
    %v6043 = vadd.f32 %v6039, %v3539
    %v6044 = vadd.f32 %v6040, %v3541
    %v6045 = vadd.f32 %v6041, %v3580
    %v6046 = vadd.f32 %v6042, %v3582
    %v6047 = vpack.c.bf16 %v6033, %v6033
    %v6048 = vld [vmem:[%s10] sm:$0xff]
    %v6049 = vld [vmem:[%s10 + $0x8] sm:$0xff]
    %v6050 = vld [vmem:[%s10 + $0x10] sm:$0xff]
    %v6051 = vld [vmem:[%s10 + $0x18] sm:$0xff]
    %v6052 = vld [vmem:[%s10 + $0x20] sm:$0xff]
    %v6053 = vld [vmem:[%s10 + $0x28] sm:$0xff]
    %v6054 = vld [vmem:[%s10 + $0x30] sm:$0xff]
    %v6055 = vld [vmem:[%s10 + $0x38] sm:$0xff]
    %v6056 = vld [vmem:[%s10 + $0x40] sm:$0xff]
    %v6057 = vld [vmem:[%s10 + $0x48] sm:$0xff]
    %v6058 = vld [vmem:[%s10 + $0x50] sm:$0xff]
    %v6059 = vld [vmem:[%s10 + $0x58] sm:$0xff]
    %v6060 = vld [vmem:[%s10 + $0x60] sm:$0xff]
    %v6061 = vld [vmem:[%s10 + $0x68] sm:$0xff]
    %v6062 = vld [vmem:[%s10 + $0x70] sm:$0xff]
    %v6063 = vld [vmem:[%s10 + $0x78] sm:$0xff]
    %v6064 = vld [vmem:[%s10 + $0x80] sm:$0xff]
    %v6065 = vld [vmem:[%s10 + $0x88] sm:$0xff]
    %v6066 = vld [vmem:[%s10 + $0x90] sm:$0xff]
    %v6067 = vld [vmem:[%s10 + $0x98] sm:$0xff]
    %v6068 = vld [vmem:[%s10 + $0xa0] sm:$0xff]
    %v6069 = vld [vmem:[%s10 + $0xa8] sm:$0xff]
    %v6070 = vld [vmem:[%s10 + $0xb0] sm:$0xff]
    %v6071 = vld [vmem:[%s10 + $0xb8] sm:$0xff]
    %v6072 = vld [vmem:[%s10 + $0xc0] sm:$0xff]
    %v6073 = vld [vmem:[%s10 + $0xc8] sm:$0xff]
    %v6074 = vld [vmem:[%s10 + $0xd0] sm:$0xff]
    %v6075 = vld [vmem:[%s10 + $0xd8] sm:$0xff]
    %v6076 = vld [vmem:[%s10 + $0xe0] sm:$0xff]
    %v6077 = vld [vmem:[%s10 + $0xe8] sm:$0xff]
    %v6078 = vld [vmem:[%s10 + $0xf0] sm:$0xff]
    %v6079 = vld [vmem:[%s10 + $0xf8] sm:$0xff]
    %v6112 = vunpack.c.l.b16 %v6048
    %v6113 = vunpack.c.h.b16 %v6048
    %v6114 = vunpack.c.l.b16 %v6049
    %v6115 = vunpack.c.h.b16 %v6049
    %v6116 = vunpack.c.l.b16 %v6050
    %v6117 = vunpack.c.h.b16 %v6050
    %v6118 = vunpack.c.l.b16 %v6051
    %v6119 = vunpack.c.h.b16 %v6051
    %v6120 = vunpack.c.l.b16 %v6052
    %v6121 = vunpack.c.h.b16 %v6052
    %v6122 = vunpack.c.l.b16 %v6053
    %v6123 = vunpack.c.h.b16 %v6053
    %v6124 = vunpack.c.l.b16 %v6054
    %v6125 = vunpack.c.h.b16 %v6054
    %v6126 = vunpack.c.l.b16 %v6055
    %v6127 = vunpack.c.h.b16 %v6055
    %v6128 = vunpack.c.l.b16 %v6056
    %v6129 = vunpack.c.h.b16 %v6056
    %v6130 = vunpack.c.l.b16 %v6057
    %v6131 = vunpack.c.h.b16 %v6057
    %v6132 = vunpack.c.l.b16 %v6058
    %v6133 = vunpack.c.h.b16 %v6058
    %v6134 = vunpack.c.l.b16 %v6059
    %v6135 = vunpack.c.h.b16 %v6059
    %v6136 = vunpack.c.l.b16 %v6060
    %v6137 = vunpack.c.h.b16 %v6060
    %v6138 = vunpack.c.l.b16 %v6061
    %v6139 = vunpack.c.h.b16 %v6061
    %v6140 = vunpack.c.l.b16 %v6062
    %v6141 = vunpack.c.h.b16 %v6062
    %v6142 = vunpack.c.l.b16 %v6063
    %v6143 = vunpack.c.h.b16 %v6063
    %v6144 = vunpack.c.l.b16 %v6064
    %v6145 = vunpack.c.h.b16 %v6064
    %v6146 = vunpack.c.l.b16 %v6065
    %v6147 = vunpack.c.h.b16 %v6065
    %v6148 = vunpack.c.l.b16 %v6066
    %v6149 = vunpack.c.h.b16 %v6066
    %v6150 = vunpack.c.l.b16 %v6067
    %v6151 = vunpack.c.h.b16 %v6067
    %v6152 = vunpack.c.l.b16 %v6068
    %v6153 = vunpack.c.h.b16 %v6068
    %v6154 = vunpack.c.l.b16 %v6069
    %v6155 = vunpack.c.h.b16 %v6069
    %v6156 = vunpack.c.l.b16 %v6070
    %v6157 = vunpack.c.h.b16 %v6070
    %v6158 = vunpack.c.l.b16 %v6071
    %v6159 = vunpack.c.h.b16 %v6071
    %v6160 = vunpack.c.l.b16 %v6072
    %v6161 = vunpack.c.h.b16 %v6072
    %v6162 = vunpack.c.l.b16 %v6073
    %v6163 = vunpack.c.h.b16 %v6073
    %v6164 = vunpack.c.l.b16 %v6074
    %v6165 = vunpack.c.h.b16 %v6074
    %v6166 = vunpack.c.l.b16 %v6075
    %v6167 = vunpack.c.h.b16 %v6075
    %v6168 = vunpack.c.l.b16 %v6076
    %v6169 = vunpack.c.h.b16 %v6076
    %v6170 = vunpack.c.l.b16 %v6077
    %v6171 = vunpack.c.h.b16 %v6077
    %v6172 = vunpack.c.l.b16 %v6078
    %v6173 = vunpack.c.h.b16 %v6078
    %v6174 = vunpack.c.l.b16 %v6079
    %v6175 = vunpack.c.h.b16 %v6079
    %v6176 = vpack.c.b16 %v6116, %v6112
    %v6177 = vpack.c.b16 %v6117, %v6113
    %v6178 = vpack.c.b16 %v6118, %v6114
    %v6179 = vpack.c.b16 %v6119, %v6115
    %v6180 = vpack.c.b16 %v6124, %v6120
    %v6181 = vpack.c.b16 %v6125, %v6121
    %v6182 = vpack.c.b16 %v6126, %v6122
    %v6183 = vpack.c.b16 %v6127, %v6123
    %v6184 = vpack.c.b16 %v6132, %v6128
    %v6185 = vpack.c.b16 %v6133, %v6129
    %v6186 = vpack.c.b16 %v6134, %v6130
    %v6187 = vpack.c.b16 %v6135, %v6131
    %v6188 = vpack.c.b16 %v6140, %v6136
    %v6189 = vpack.c.b16 %v6141, %v6137
    %v6190 = vpack.c.b16 %v6142, %v6138
    %v6191 = vpack.c.b16 %v6143, %v6139
    %v6192 = vpack.c.b16 %v6148, %v6144
    %v6193 = vpack.c.b16 %v6149, %v6145
    %v6194 = vpack.c.b16 %v6150, %v6146
    %v6195 = vpack.c.b16 %v6151, %v6147
    %v6196 = vpack.c.b16 %v6156, %v6152
    %v6197 = vpack.c.b16 %v6157, %v6153
    %v6198 = vpack.c.b16 %v6158, %v6154
    %v6199 = vpack.c.b16 %v6159, %v6155
    %v6200 = vpack.c.b16 %v6164, %v6160
    %v6201 = vpack.c.b16 %v6165, %v6161
    %v6202 = vpack.c.b16 %v6166, %v6162
    %v6203 = vpack.c.b16 %v6167, %v6163
    %v6204 = vpack.c.b16 %v6172, %v6168
    %v6205 = vpack.c.b16 %v6173, %v6169
    %v6206 = vpack.c.b16 %v6174, %v6170
    %v6207 = vpack.c.b16 %v6175, %v6171
    %6240 = vmatprep.subr.bf16.mxu0 %v6177
    %6241 = vmatpush1.bf16.msra.mxu0 %v6176
    %6242 = vmatprep.subr.bf16.mxu0 %v6181
    %6243 = vmatpush1.bf16.msra.mxu0 %v6180
    %6244 = vmatprep.subr.bf16.mxu0 %v6185
    %6245 = vmatpush1.bf16.msra.mxu0 %v6184
    %6246 = vmatprep.subr.bf16.mxu0 %v6189
    %6247 = vmatpush1.bf16.msra.mxu0 %v6188
    %6248 = vmatprep.subr.bf16.mxu0 %v6193
    %6249 = vmatpush1.bf16.msra.mxu0 %v6192
    %6250 = vmatprep.subr.bf16.mxu0 %v6197
    %6251 = vmatpush1.bf16.msra.mxu0 %v6196
    %6252 = vmatprep.subr.bf16.mxu0 %v6201
    %6253 = vmatpush1.bf16.msra.mxu0 %v6200
    %6254 = vmatprep.subr.bf16.mxu0 %v6205
    %6255 = vmatpush1.bf16.msra.mxu0 %v6204
    %6256 = vmatprep.subr.bf16.mxu0 0
    %6257 = vmatpush1.bf16.msra.mxu0 0
    %6258 = vmatprep.subr.bf16.mxu0 0
    %6259 = vmatpush1.bf16.msra.mxu0 0
    %6260 = vmatprep.subr.bf16.mxu0 0
    %6261 = vmatpush1.bf16.msra.mxu0 0
    %6262 = vmatprep.subr.bf16.mxu0 0
    %6263 = vmatpush1.bf16.msra.mxu0 0
    %6264 = vmatprep.subr.bf16.mxu0 0
    %6265 = vmatpush1.bf16.msra.mxu0 0
    %6266 = vmatprep.subr.bf16.mxu0 0
    %6267 = vmatpush1.bf16.msra.mxu0 0
    %6268 = vmatprep.subr.bf16.mxu0 0
    %6269 = vmatpush1.bf16.msra.mxu0 0
    %6270 = vmatprep.subr.bf16.mxu0 0
    %6271 = vmatpush1.bf16.msra.mxu0 0
    %6272 = vmatprep.mubr.bf16.mxu0 0
    %6273 = vmatmul.mubr.bf16.gmra.mrb[0].mxu0 %v6047
    %v6274 = vpop.f32.mrb[0].mxu0
    %v6275 = vadd.f32 0.0, %v6274
    %v6276 = vpop.f32.mrb[0].mxu0
    %v6277 = vadd.f32 0.0, %v6276
    %v6278 = vpop.f32.mrb[0].mxu0
    %v6279 = vpop.f32.mrb[0].mxu0
    %6280 = vdwg.mxu0
    %6281 = vmatprep.subr.bf16.mxu0 %v6179
    %6282 = vmatpush1.bf16.msra.mxu0 %v6178
    %6283 = vmatprep.subr.bf16.mxu0 %v6183
    %6284 = vmatpush1.bf16.msra.mxu0 %v6182
    %6285 = vmatprep.subr.bf16.mxu0 %v6187
    %6286 = vmatpush1.bf16.msra.mxu0 %v6186
    %6287 = vmatprep.subr.bf16.mxu0 %v6191
    %6288 = vmatpush1.bf16.msra.mxu0 %v6190
    %6289 = vmatprep.subr.bf16.mxu0 %v6195
    %6290 = vmatpush1.bf16.msra.mxu0 %v6194
    %6291 = vmatprep.subr.bf16.mxu0 %v6199
    %6292 = vmatpush1.bf16.msra.mxu0 %v6198
    %6293 = vmatprep.subr.bf16.mxu0 %v6203
    %6294 = vmatpush1.bf16.msra.mxu0 %v6202
    %6295 = vmatprep.subr.bf16.mxu0 %v6207
    %6296 = vmatpush1.bf16.msra.mxu0 %v6206
    %6297 = vmatprep.subr.bf16.mxu0 0
    %6298 = vmatpush1.bf16.msra.mxu0 0
    %6299 = vmatprep.subr.bf16.mxu0 0
    %6300 = vmatpush1.bf16.msra.mxu0 0
    %6301 = vmatprep.subr.bf16.mxu0 0
    %6302 = vmatpush1.bf16.msra.mxu0 0
    %6303 = vmatprep.subr.bf16.mxu0 0
    %6304 = vmatpush1.bf16.msra.mxu0 0
    %6305 = vmatprep.subr.bf16.mxu0 0
    %6306 = vmatpush1.bf16.msra.mxu0 0
    %6307 = vmatprep.subr.bf16.mxu0 0
    %6308 = vmatpush1.bf16.msra.mxu0 0
    %6309 = vmatprep.subr.bf16.mxu0 0
    %6310 = vmatpush1.bf16.msra.mxu0 0
    %6311 = vmatprep.subr.bf16.mxu0 0
    %6312 = vmatpush1.bf16.msra.mxu0 0
    %6313 = vmatprep.mubr.bf16.mxu0 0
    %6314 = vmatmul.mubr.bf16.gmra.mrb[0].mxu0 %v6047
    %v6315 = vpop.f32.mrb[0].mxu0
    %v6316 = vadd.f32 0.0, %v6315
    %v6317 = vpop.f32.mrb[0].mxu0
    %v6318 = vadd.f32 0.0, %v6317
    %v6319 = vpop.f32.mrb[0].mxu0
    %v6320 = vpop.f32.mrb[0].mxu0
    %6321 = vdwg.mxu0
    %v6322 = vadd.f32 %v6043, %v6275
    %v6323 = vadd.f32 %v6044, %v6277
    %v6324 = vadd.f32 %v6045, %v6316
    %v6325 = vadd.f32 %v6046, %v6318
    %v6326 = vxor.u32 %v6322, 2147483648
    %v6327 = vmul.f32 %v6326, 1.442695
    %v6328 = vpow.pop %v6327
    %v6329 = vadd.f32 %v6328, 1.0
    %v6330 = vrcp.pop %v6329
    %v6331 = vmul.f32 1.0, %v6330
    %v6332 = vxor.u32 %v6323, 2147483648
    %v6333 = vmul.f32 %v6332, 1.442695
    %v6334 = vpow.pop %v6333
    %v6335 = vadd.f32 %v6334, 1.0
    %v6336 = vrcp.pop %v6335
    %v6337 = vmul.f32 1.0, %v6336
    %v6338 = vtanh.pop %v6324
    %v6339 = vxor.u32 %v6325, 2147483648
    %v6340 = vmul.f32 %v6339, 1.442695
    %v6341 = vpow.pop %v6340
    %v6342 = vadd.f32 %v6341, 1.0
    %v6343 = vrcp.pop %v6342
    %v6344 = vmul.f32 1.0, %v6343
    %v6345 = vmul.f32 %v6337, %v6031
    %v6346 = vmul.f32 %v6331, %v6338
    %v6347 = vadd.f32 %v6345, %v6346
    %v6348 = vtanh.pop %v6347
    %v6349 = vmul.f32 %v6344, %v6348
    %s6350 = scalar_lea.vmem [#allocation4], 56
    %6351 = vst [vmem:[%s6350] sm:$0xff] %v6349
    %v6352 = vld [vmem:[#allocation4] sm:$0xff]
    %v6353 = vld [vmem:[#allocation4 + $0x8] sm:$0xff]
    %v6354 = vld [vmem:[#allocation4 + $0x10] sm:$0xff]
    %v6355 = vld [vmem:[#allocation4 + $0x18] sm:$0xff]
    %v6356 = vld [vmem:[#allocation4 + $0x20] sm:$0xff]
    %v6357 = vld [vmem:[#allocation4 + $0x28] sm:$0xff]
    %v6358 = vld [vmem:[#allocation4 + $0x30] sm:$0xff]
    %v6359 = vld [vmem:[#allocation4 + $0x38] sm:$0xff]
    %v6360 = vpack.c.bf16 %v6353, %v6352
    %v6361 = vpack.c.bf16 %v6355, %v6354
    %v6362 = vpack.c.bf16 %v6357, %v6356
    %v6363 = vpack.c.bf16 %v6359, %v6358
    %v6364 = vld [vmem:[%s12] sm:$0xf]
    %v6365 = vld [vmem:[%s12 + $0x4] sm:$0xf]
    %v6366 = vld [vmem:[%s12 + $0x8] sm:$0xf]
    %v6367 = vld [vmem:[%s12 + $0xc] sm:$0xf]
    %v6368 = vld [vmem:[%s12 + $0x10] sm:$0xf]
    %v6369 = vld [vmem:[%s12 + $0x14] sm:$0xf]
    %v6370 = vld [vmem:[%s12 + $0x18] sm:$0xf]
    %v6371 = vld [vmem:[%s12 + $0x1c] sm:$0xf]
    %v6372 = vld [vmem:[%s12 + $0x20] sm:$0xf]
    %v6373 = vld [vmem:[%s12 + $0x24] sm:$0xf]
    %v6374 = vld [vmem:[%s12 + $0x28] sm:$0xf]
    %v6375 = vld [vmem:[%s12 + $0x2c] sm:$0xf]
    %v6376 = vld [vmem:[%s12 + $0x30] sm:$0xf]
    %v6377 = vld [vmem:[%s12 + $0x34] sm:$0xf]
    %v6378 = vld [vmem:[%s12 + $0x38] sm:$0xf]
    %v6379 = vld [vmem:[%s12 + $0x3c] sm:$0xf]
    %v6380 = vld [vmem:[%s13] sm:$0x1]
    %v6382 = vlaneseq
    %v6383 = vshrl.u32 %v6382, 7
    %v6384 = vsub.s32 0, %v6383
    %v6385 = vrot.slane %v6380, %v6384
    %v6403 = vunpack.c.l.b16 %v6364
    %v6404 = vunpack.c.l.b16 %v6365
    %v6405 = vunpack.c.l.b16 %v6366
    %v6406 = vunpack.c.l.b16 %v6367
    %v6407 = vunpack.c.l.b16 %v6368
    %v6408 = vunpack.c.l.b16 %v6369
    %v6409 = vunpack.c.l.b16 %v6370
    %v6410 = vunpack.c.l.b16 %v6371
    %v6411 = vunpack.c.l.b16 %v6372
    %v6412 = vunpack.c.l.b16 %v6373
    %v6413 = vunpack.c.l.b16 %v6374
    %v6414 = vunpack.c.l.b16 %v6375
    %v6415 = vunpack.c.l.b16 %v6376
    %v6416 = vunpack.c.l.b16 %v6377
    %v6417 = vunpack.c.l.b16 %v6378
    %v6418 = vunpack.c.l.b16 %v6379
    %v6419 = vpack.c.b16 %v6404, %v6403
    %v6420 = vpack.c.b16 %v6406, %v6405
    %v6421 = vpack.c.b16 %v6408, %v6407
    %v6422 = vpack.c.b16 %v6410, %v6409
    %v6423 = vpack.c.b16 %v6412, %v6411
    %v6424 = vpack.c.b16 %v6414, %v6413
    %v6425 = vpack.c.b16 %v6416, %v6415
    %v6426 = vpack.c.b16 %v6418, %v6417
    %6435 = vmatprep.subr.bf16.mxu0 0
    %6436 = vmatpush1.bf16.msra.mxu0 %v6419
    %6437 = vmatprep.subr.bf16.mxu0 0
    %6438 = vmatpush1.bf16.msra.mxu0 %v6420
    %6439 = vmatprep.subr.bf16.mxu0 0
    %6440 = vmatpush1.bf16.msra.mxu0 %v6421
    %6441 = vmatprep.subr.bf16.mxu0 0
    %6442 = vmatpush1.bf16.msra.mxu0 %v6422
    %6443 = vmatprep.subr.bf16.mxu0 0
    %6444 = vmatpush1.bf16.msra.mxu0 %v6423
    %6445 = vmatprep.subr.bf16.mxu0 0
    %6446 = vmatpush1.bf16.msra.mxu0 %v6424
    %6447 = vmatprep.subr.bf16.mxu0 0
    %6448 = vmatpush1.bf16.msra.mxu0 %v6425
    %6449 = vmatprep.subr.bf16.mxu0 0
    %6450 = vmatpush1.bf16.msra.mxu0 %v6426
    %6451 = vmatprep.subr.bf16.mxu0 0
    %6452 = vmatpush1.bf16.msra.mxu0 0
    %6453 = vmatprep.subr.bf16.mxu0 0
    %6454 = vmatpush1.bf16.msra.mxu0 0
    %6455 = vmatprep.subr.bf16.mxu0 0
    %6456 = vmatpush1.bf16.msra.mxu0 0
    %6457 = vmatprep.subr.bf16.mxu0 0
    %6458 = vmatpush1.bf16.msra.mxu0 0
    %6459 = vmatprep.subr.bf16.mxu0 0
    %6460 = vmatpush1.bf16.msra.mxu0 0
    %6461 = vmatprep.subr.bf16.mxu0 0
    %6462 = vmatpush1.bf16.msra.mxu0 0
    %6463 = vmatprep.subr.bf16.mxu0 0
    %6464 = vmatpush1.bf16.msra.mxu0 0
    %6465 = vmatprep.subr.bf16.mxu0 0
    %6466 = vmatpush1.bf16.msra.mxu0 0
    %6467 = vmatprep.mubr.bf16.mxu0 0
    %6468 = vmatmul.mubr.bf16.gmra.mrb[0].mxu0 %v6360
    %v6469 = vpop.f32.mrb[0].mxu0
    %v6470 = vadd.f32 %v6385, %v6469
    %v6471 = vpop.f32.mrb[0].mxu0
    %v6472 = vpop.f32.mrb[0].mxu0
    %v6473 = vadd.f32 %v6385, %v6472
    %v6474 = vpop.f32.mrb[0].mxu0
    %6475 = vmatprep.mubr.bf16.mxu0 0
    %6476 = vmatmul.mubr.bf16.gmra.mrb[0].mxu0 %v6361
    %v6477 = vpop.f32.mrb[0].mxu0
    %v6478 = vadd.f32 %v6385, %v6477
    %v6479 = vpop.f32.mrb[0].mxu0
    %v6480 = vpop.f32.mrb[0].mxu0
    %v6481 = vadd.f32 %v6385, %v6480
    %v6482 = vpop.f32.mrb[0].mxu0
    %6483 = vmatprep.mubr.bf16.mxu0 0
    %6484 = vmatmul.mubr.bf16.gmra.mrb[0].mxu0 %v6362
    %v6485 = vpop.f32.mrb[0].mxu0
    %v6486 = vadd.f32 %v6385, %v6485
    %v6487 = vpop.f32.mrb[0].mxu0
    %v6488 = vpop.f32.mrb[0].mxu0
    %v6489 = vadd.f32 %v6385, %v6488
    %v6490 = vpop.f32.mrb[0].mxu0
    %6491 = vmatprep.mubr.bf16.mxu0 0
    %6492 = vmatmul.mubr.bf16.gmra.mrb[0].mxu0 %v6363
    %v6493 = vpop.f32.mrb[0].mxu0
    %v6494 = vadd.f32 %v6385, %v6493
    %v6495 = vpop.f32.mrb[0].mxu0
    %v6496 = vpop.f32.mrb[0].mxu0
    %v6497 = vadd.f32 %v6385, %v6496
    %v6498 = vpop.f32.mrb[0].mxu0
    %6499 = vdwg.mxu0
    %6500 = vst [vmem:[%s17] sm:$0xff] %v6470
    %6501 = vst [vmem:[%s17 + $0x8] sm:$0xff] %v6473
    %6502 = vst [vmem:[%s17 + $0x10] sm:$0xff] %v6478
    %6503 = vst [vmem:[%s17 + $0x18] sm:$0xff] %v6481
    %6504 = vst [vmem:[%s17 + $0x20] sm:$0xff] %v6486
    %6505 = vst [vmem:[%s17 + $0x28] sm:$0xff] %v6489
    %6506 = vst [vmem:[%s17 + $0x30] sm:$0xff] %v6494
    %6507 = vst [vmem:[%s17 + $0x38] sm:$0xff] %v6497
    // Predicated region
    $region66: #{dae_forward.1} parent=1 // pred_check
      _
    $region67: #{dae_forward.1} parent=1 // pred_check_branch
      %6509 = sbr.rel (0) target = $region69
    $region68: #{dae_forward.1} parent=1 // pred_region
      _
    $region69: #{dae_forward.1} parent=1 // pred_fallthru
      _
    // Predicated region
    $region70: #{dae_forward.1} parent=1 // pred_check
      _
    $region71: #{dae_forward.1} parent=1 // pred_check_branch
      %6511 = sbr.rel (0) target = $region73
    $region72: #{dae_forward.1} parent=1 // pred_region
      _
    $region73: #{dae_forward.1} parent=1 // pred_fallthru
      _
    // Predicated region
    $region74: #{dae_forward.1} parent=1 // pred_check
      _
    $region75: #{dae_forward.1} parent=1 // pred_check_branch
      %6513 = sbr.rel (0) target = $region77
    $region76: #{dae_forward.1} parent=1 // pred_region
      _
    $region77: #{dae_forward.1} parent=1 // pred_fallthru
      _
    // Predicated region
    $region78: #{dae_forward.1} parent=1 // pred_check
      _
    $region79: #{dae_forward.1} parent=1 // pred_check_branch
      %6515 = sbr.rel (0) target = $region81
    $region80: #{dae_forward.1} parent=1 // pred_region
      _
    $region81: #{dae_forward.1} parent=1 // pred_fallthru
      _
    // Predicated region
    $region82: #{dae_forward.1} parent=1 // pred_check
      _
    $region83: #{dae_forward.1} parent=1 // pred_check_branch
      %6517 = sbr.rel (0) target = $region85
    $region84: #{dae_forward.1} parent=1 // pred_region
      _
    $region85: #{dae_forward.1} parent=1 // pred_fallthru
      _
    // Predicated region
    $region86: #{dae_forward.1} parent=1 // pred_check
      _
    $region87: #{dae_forward.1} parent=1 // pred_check_branch
      %6519 = sbr.rel (0) target = $region89
    $region88: #{dae_forward.1} parent=1 // pred_region
      _
    $region89: #{dae_forward.1} parent=1 // pred_fallthru
      _
    // Predicated region
    $region90: #{dae_forward.1} parent=1 // pred_check
      _
    $region91: #{dae_forward.1} parent=1 // pred_check_branch
      %6521 = sbr.rel (0) target = $region93
    $region92: #{dae_forward.1} parent=1 // pred_region
      _
    $region93: #{dae_forward.1} parent=1 // pred_fallthru
      _
    // Predicated region
    $region94: #{dae_forward.1} parent=1 // pred_check
      _
    $region95: #{dae_forward.1} parent=1 // pred_check_branch
      %6523 = sbr.rel (0) target = $region97
    $region96: #{dae_forward.1} parent=1 // pred_region
      _
    $region97: #{dae_forward.1} parent=1 // pred_fallthru
      _
    %6524 = vsyncpa [#allocation6], 1
    %6525 = vsyncpa [#allocation8], 1

</llo_original>
